<compile_context>
chip_gen: v6e
topology: v6e:2x2x1
jax: 0.10.0
libtpu: 0.0.40
codegen_flags: <defaults>
</compile_context>

<pallas_src>
import functools

import numpy as np
import jax
import jax.numpy as jnp
from jax.experimental import pallas as pl
from jax.experimental.pallas import tpu as pltpu


# ------------------------------------------------------------------
# Fused kernel: conv3x3+BN+ReLU (x2) -> depthwise corr -> 1x1+BN+ReLU -> 1x1
# ------------------------------------------------------------------
def _fused_maskcorr_kernel(z_ref, x_ref,
                           wk_ref, sk_ref, bk_ref,
                           ws_ref, ss_ref, bs_ref,
                           w1_ref, s1_ref, b1_ref,
                           w2_ref, b2_ref,
                           o_ref, h_ref):
    # Grid axis 0 tiles the head's wide output.  Step 0 computes the stem
    # once into the persistent VMEM scratch h_ref; every step multiplies
    # h_ref by its streamed (C, TN) slice of w2.

    @pl.when(pl.program_id(0) == 0)
    def _stem():
        def conv3x3_bn_relu(x4d_ref, w2d_ref, scale, shift):
            # x4d_ref: (B, H, W, Cin); w2d_ref: (9*Cin, Cout) f32
            xv = x4d_ref[...]
            Bb, H, W, Cin = xv.shape
            Ho_, Wo_ = H - 2, W - 2
            # im2col: one deep-K matmul instead of 9 short ones.
            cols = []
            for dy in range(3):
                for dx in range(3):
                    cols.append(xv[:, dy:dy + Ho_, dx:dx + Wo_, :]
                                .reshape(Bb * Ho_ * Wo_, Cin))
            patches = jnp.concatenate(cols, axis=1)           # (M, 9*Cin)
            acc = jnp.dot(patches, w2d_ref[...],
                          preferred_element_type=jnp.float32)
            y = jnp.maximum(acc * scale + shift, 0.0)          # folded BN + ReLU
            return y.reshape(Bb, Ho_, Wo_, -1)                 # (B, Ho, Wo, C)

        zf = conv3x3_bn_relu(z_ref, wk_ref, sk_ref[...], bk_ref[...])
        xf = conv3x3_bn_relu(x_ref, ws_ref, ss_ref[...], bs_ref[...])

        # depthwise cross-correlation (conv2d_dw_group), f32 on the VPU
        Bb, Hk, Wk, C = zf.shape
        Ho = xf.shape[1] - Hk + 1
        Wo = xf.shape[2] - Wk + 1
        feat = jnp.zeros((Bb, Ho, Wo, C), jnp.float32)
        for pp in range(Hk):
            for qq in range(Wk):
                feat = feat + (xf[:, pp:pp + Ho, qq:qq + Wo, :] *
                               zf[:, pp:pp + 1, qq:qq + 1, :])

        # head, first 1x1 conv + BN + ReLU, rows padded to Mpad
        Mreal = Bb * Ho * Wo
        Mpad = h_ref.shape[0]
        feat2 = feat.reshape(Mreal, C)
        if Mpad > Mreal:
            feat2 = jnp.concatenate(
                [feat2, jnp.zeros((Mpad - Mreal, C), jnp.float32)], axis=0)
        h = jnp.dot(feat2, w1_ref[...], preferred_element_type=jnp.float32)
        h_ref[...] = jnp.maximum(h * s1_ref[...] + b1_ref[...], 0.0)

    # head, second 1x1 conv (with bias) — one N-tile per grid step
    o_ref[...] = (jnp.dot(h_ref[...], w2_ref[...],
                          preferred_element_type=jnp.float32)
                  + b2_ref[...]).astype(o_ref.dtype)


def maskcorr_forward(z_nchw, x_nchw, p, *, nout):
    # NCHW -> NHWC glue (channels on the 128-lane axis inside the kernel)
    z = jnp.transpose(z_nchw, (0, 2, 3, 1))
    x = jnp.transpose(x_nchw, (0, 2, 3, 1))

    B, Hz, Wz, Cin = z.shape
    _, Hx, Wx, _ = x.shape
    C = p["sk"].shape[1]
    Hk, Wk = Hz - 2, Wz - 2                     # zf spatial size
    Ho, Wo = (Hx - 2) - Hk + 1, (Wx - 2) - Wk + 1
    Mreal = B * Ho * Wo
    Mpad = ((Mreal + 15) // 16) * 16            # padded rows -> unmasked stores
    nout_pad = p["w2p"].shape[1]
    TN = min(1024, nout_pad)
    NT = nout_pad // TN

    out = pl.pallas_call(
        _fused_maskcorr_kernel,
        out_shape=jax.ShapeDtypeStruct((Mpad, nout_pad), jnp.float32),
        grid=(NT,),
        in_specs=[
            pl.BlockSpec((B, Hz, Wz, Cin), lambda n: (0, 0, 0, 0)),   # z
            pl.BlockSpec((B, Hx, Wx, Cin), lambda n: (0, 0, 0, 0)),   # x
            pl.BlockSpec((9 * Cin, C), lambda n: (0, 0)),             # wk (im2col)
            pl.BlockSpec((1, C), lambda n: (0, 0)),                   # sk
            pl.BlockSpec((1, C), lambda n: (0, 0)),                   # bk
            pl.BlockSpec((9 * Cin, C), lambda n: (0, 0)),             # ws (im2col)
            pl.BlockSpec((1, C), lambda n: (0, 0)),                   # ss
            pl.BlockSpec((1, C), lambda n: (0, 0)),                   # bs
            pl.BlockSpec((C, C), lambda n: (0, 0)),                   # w1
            pl.BlockSpec((1, C), lambda n: (0, 0)),                   # s1
            pl.BlockSpec((1, C), lambda n: (0, 0)),                   # b1
            pl.BlockSpec((C, TN), lambda n: (0, n)),                  # w2 tile
            pl.BlockSpec((1, TN), lambda n: (0, n)),                  # b2 tile
        ],
        out_specs=pl.BlockSpec((Mpad, TN), lambda n: (0, n)),
        scratch_shapes=[pltpu.VMEM((Mpad, C), jnp.float32)],
        compiler_params=pltpu.CompilerParams(
            # must be "arbitrary": h scratch is written at step 0 and
            # carried across the N tiles (can't shard across cores).
            dimension_semantics=("arbitrary",),
            vmem_limit_bytes=32 * 1024 * 1024),
    )(z, x,
      p["wk2d"], p["sk"], p["bk"],
      p["ws2d"], p["ss"], p["bs"],
      p["w1"], p["s1"], p["b1"],
      p["w2p"], p["b2p"])

    out = out[:Mreal, :nout].reshape(B, Ho, Wo, nout)
    return jnp.transpose(out, (0, 3, 1, 2))        # NCHW (B, oSz^2, Ho, Wo)


# ------------------------------------------------------------------
# Parameter setup (deterministic)
# ------------------------------------------------------------------
def fold_bn(gamma, beta, rmean, rvar, eps=1e-5):
    scale = gamma / jnp.sqrt(rvar + eps)
    shift = beta - rmean * scale
    return scale, shift


def make_params(key, in_channels=256, hidden=256, oSz=63):
    nout = oSz * oSz
    nout_pad = ((nout + 1023) // 1024) * 1024
    ks = jax.random.split(key, 8)

    def bn_params(k, c):
        k1, k2, k3, k4 = jax.random.split(k, 4)
        gamma = 1.0 + 0.1 * jax.random.normal(k1, (c,), jnp.float32)
        beta = 0.1 * jax.random.normal(k2, (c,), jnp.float32)
        rmean = 0.1 * jax.random.normal(k3, (c,), jnp.float32)
        rvar = 1.0 + 0.1 * jax.random.uniform(k4, (c,), jnp.float32)
        return fold_bn(gamma, beta, rmean, rvar)

    # conv_kernel / conv_search branches (3x3, no bias) + BN
    wk_oihw = 0.05 * jax.random.normal(ks[0], (hidden, in_channels, 3, 3), jnp.float32)
    sk, bk = bn_params(ks[1], hidden)
    ws_oihw = 0.05 * jax.random.normal(ks[2], (hidden, in_channels, 3, 3), jnp.float32)
    ss, bs = bn_params(ks[3], hidden)
    # head: 1x1 (no bias) + BN + ReLU + 1x1 (with bias)
    w1_oihw = 0.05 * jax.random.normal(ks[4], (hidden, hidden, 1, 1), jnp.float32)
    s1, b1 = bn_params(ks[5], hidden)
    w2_oihw = 0.05 * jax.random.normal(ks[6], (nout, hidden, 1, 1), jnp.float32)
    b2 = 0.1 * jax.random.normal(ks[7], (nout,), jnp.float32)

    # im2col weight layout: OIHW -> HWIO -> (9*Cin, Cout), all f32
    wk2d = jnp.transpose(wk_oihw, (2, 3, 1, 0)).reshape(9 * in_channels, hidden)
    ws2d = jnp.transpose(ws_oihw, (2, 3, 1, 0)).reshape(9 * in_channels, hidden)
    w1 = w1_oihw[:, :, 0, 0].T                    # (Cin, Cout)
    w2 = w2_oihw[:, :, 0, 0].T                    # (C, nout)
    w2p = jnp.zeros((hidden, nout_pad), jnp.float32).at[:, :nout].set(w2)
    b2p = jnp.zeros((1, nout_pad), jnp.float32).at[0, :nout].set(b2)

    return dict(
        # originals (for the reference)
        wk_oihw=wk_oihw, ws_oihw=ws_oihw, w2_f32=w2, b2_f32=b2,
        # kernel-side tensors (f32 throughout)
        wk2d=wk2d, ws2d=ws2d, w1=w1, w2p=w2p, b2p=b2p,
        sk=sk.reshape(1, -1), bk=bk.reshape(1, -1),
        ss=ss.reshape(1, -1), bs=bs.reshape(1, -1),
        s1=s1.reshape(1, -1), b1=b1.reshape(1, -1),
    )


# ------------------------------------------------------------------
# Pure-JAX reference (lax conv / grouped conv), pure f32 — no bf16 dots.
# ------------------------------------------------------------------
def ref_forward(z_nchw, x_nchw, p):
    HIGH = jax.lax.Precision.HIGHEST

    def cbr(inp, w_oihw, scale, shift):
        y = jax.lax.conv_general_dilated(
            inp, w_oihw, (1, 1), "VALID",
            dimension_numbers=("NCHW", "OIHW", "NCHW"),
            precision=HIGH)
        y = y * scale[None, :, None, None] + shift[None, :, None, None]
        return jnp.maximum(y, 0.0)

    zf = cbr(z_nchw, p["wk_oihw"], p["sk"][0], p["bk"][0])
    xf = cbr(x_nchw, p["ws_oihw"], p["ss"][0], p["bs"][0])

    # conv2d_dw_group: grouped conv, f32
    B, C, hk, wk = zf.shape
    xg = xf.reshape(1, B * C, xf.shape[2], xf.shape[3])
    kg = zf.reshape(B * C, 1, hk, wk)
    feat = jax.lax.conv_general_dilated(
        xg, kg, (1, 1), "VALID",
        dimension_numbers=("NCHW", "OIHW", "NCHW"),
        feature_group_count=B * C, precision=HIGH)
    feat = feat.reshape(B, C, feat.shape[2], feat.shape[3])

    h = jnp.einsum("bchw,cd->bdhw", feat, p["w1"], precision=HIGH)
    h = jnp.maximum(h * p["s1"][0][None, :, None, None]
                    + p["b1"][0][None, :, None, None], 0.0)
    o = jnp.einsum("bchw,cd->bdhw", h, p["w2_f32"], precision=HIGH)
    return o + p["b2_f32"][None, :, None, None]


if __name__ == "__main__":
    key = jax.random.PRNGKey(0)
    kp, kz, kx = jax.random.split(key, 3)
    oSz = 63
    nout = oSz * oSz
    params = make_params(kp, in_channels=256, hidden=256, oSz=oSz)

    # small NCHW inputs (SiamMask-style template z / search x), 256 channels
    z = jax.random.normal(kz, (2, 256, 6, 6), jnp.float32)
    x = jax.random.normal(kx, (2, 256, 10, 10), jnp.float32)

    fwd = jax.jit(functools.partial(maskcorr_forward, nout=nout))
    out = jax.block_until_ready(fwd(z, x, params))

    ref = jax.block_until_ready(ref_forward(z, x, params))
    assert out.shape == ref.shape == (2, nout, 5, 5), out.shape
    np.testing.assert_allclose(np.asarray(out, dtype=np.float32),
                               np.asarray(ref, dtype=np.float32),
                               rtol=2e-2, atol=1e-2)
    print("KERNEL_OK")
</pallas_src>

<mosaic_0001>
module attributes {stable_mosaic.version = 11 : i64} {
  func.func @_fused_maskcorr_kernel(%arg0: i32, %arg1: memref<2x6x6x256xf32, #tpu.memory_space<vmem>>, %arg2: memref<2x10x10x256xf32, #tpu.memory_space<vmem>>, %arg3: memref<2304x256xf32, #tpu.memory_space<vmem>>, %arg4: memref<1x256xf32, #tpu.memory_space<vmem>>, %arg5: memref<1x256xf32, #tpu.memory_space<vmem>>, %arg6: memref<2304x256xf32, #tpu.memory_space<vmem>>, %arg7: memref<1x256xf32, #tpu.memory_space<vmem>>, %arg8: memref<1x256xf32, #tpu.memory_space<vmem>>, %arg9: memref<256x256xf32, #tpu.memory_space<vmem>>, %arg10: memref<1x256xf32, #tpu.memory_space<vmem>>, %arg11: memref<1x256xf32, #tpu.memory_space<vmem>>, %arg12: memref<256x1024xf32, #tpu.memory_space<vmem>>, %arg13: memref<1x1024xf32, #tpu.memory_space<vmem>>, %arg14: memref<64x1024xf32, #tpu.memory_space<vmem>>, %arg15: memref<64x256xf32, #tpu.memory_space<vmem>>) attributes {dimension_semantics = [#tpu.dimension_semantics<arbitrary>], iteration_bounds = array<i64: 4>, scalar_prefetch = 0 : i64, scratch_operands = 1 : i64, tpu.core_type = #tpu.core_type<tc>, window_params = [{pipeline_mode = #tpu.pipeline_mode<synchronous>, transform_indices = @transform_0, window_bounds = array<i64: 2, 6, 6, 256>}, {pipeline_mode = #tpu.pipeline_mode<synchronous>, transform_indices = @transform_1, window_bounds = array<i64: 2, 10, 10, 256>}, {pipeline_mode = #tpu.pipeline_mode<synchronous>, transform_indices = @transform_2, window_bounds = array<i64: 2304, 256>}, {pipeline_mode = #tpu.pipeline_mode<synchronous>, transform_indices = @transform_3, window_bounds = array<i64: 1, 256>}, {pipeline_mode = #tpu.pipeline_mode<synchronous>, transform_indices = @transform_4, window_bounds = array<i64: 1, 256>}, {pipeline_mode = #tpu.pipeline_mode<synchronous>, transform_indices = @transform_5, window_bounds = array<i64: 2304, 256>}, {pipeline_mode = #tpu.pipeline_mode<synchronous>, transform_indices = @transform_6, window_bounds = array<i64: 1, 256>}, {pipeline_mode = #tpu.pipeline_mode<synchronous>, transform_indices = @transform_7, window_bounds = array<i64: 1, 256>}, {pipeline_mode = #tpu.pipeline_mode<synchronous>, transform_indices = @transform_8, window_bounds = array<i64: 256, 256>}, {pipeline_mode = #tpu.pipeline_mode<synchronous>, transform_indices = @transform_9, window_bounds = array<i64: 1, 256>}, {pipeline_mode = #tpu.pipeline_mode<synchronous>, transform_indices = @transform_10, window_bounds = array<i64: 1, 256>}, {transform_indices = @transform_11, window_bounds = array<i64: 256, 1024>}, {transform_indices = @transform_12, window_bounds = array<i64: 1, 1024>}, {transform_indices = @transform_13, window_bounds = array<i64: 64, 1024>}]} {
    %c0_i32 = arith.constant 0 : i32
    %0 = arith.cmpi eq, %arg0, %c0_i32 : i32
    %1 = arith.extui %0 : i1 to i32
    %c0_i32_0 = arith.constant 0 : i32
    %2 = arith.cmpi ne, %1, %c0_i32_0 : i32
    scf.if %2 {
      %c0_8 = arith.constant 0 : index
      %c0_9 = arith.constant 0 : index
      %10 = vector.load %arg4[%c0_8, %c0_9] : memref<1x256xf32, #tpu.memory_space<vmem>>, vector<1x256xf32>
      %c0_10 = arith.constant 0 : index
      %c0_11 = arith.constant 0 : index
      %11 = vector.load %arg5[%c0_10, %c0_11] : memref<1x256xf32, #tpu.memory_space<vmem>>, vector<1x256xf32>
      %c0_12 = arith.constant 0 : index
      %c0_13 = arith.constant 0 : index
      %c0_14 = arith.constant 0 : index
      %c0_15 = arith.constant 0 : index
      %12 = vector.load %arg1[%c0_12, %c0_13, %c0_14, %c0_15] : memref<2x6x6x256xf32, #tpu.memory_space<vmem>>, vector<2x6x6x256xf32>
      %13 = vector.extract_strided_slice %12 {offsets = [0, 0, 0, 0], sizes = [2, 4, 4, 256], strides = [1, 1, 1, 1]} : vector<2x6x6x256xf32> to vector<2x4x4x256xf32>
      %14 = vector.shape_cast %13 : vector<2x4x4x256xf32> to vector<32x256xf32>
      %15 = vector.extract_strided_slice %12 {offsets = [0, 0, 1, 0], sizes = [2, 4, 4, 256], strides = [1, 1, 1, 1]} : vector<2x6x6x256xf32> to vector<2x4x4x256xf32>
      %16 = vector.shape_cast %15 : vector<2x4x4x256xf32> to vector<32x256xf32>
      %17 = vector.extract_strided_slice %12 {offsets = [0, 0, 2, 0], sizes = [2, 4, 4, 256], strides = [1, 1, 1, 1]} : vector<2x6x6x256xf32> to vector<2x4x4x256xf32>
      %18 = vector.shape_cast %17 : vector<2x4x4x256xf32> to vector<32x256xf32>
      %19 = vector.extract_strided_slice %12 {offsets = [0, 1, 0, 0], sizes = [2, 4, 4, 256], strides = [1, 1, 1, 1]} : vector<2x6x6x256xf32> to vector<2x4x4x256xf32>
      %20 = vector.shape_cast %19 : vector<2x4x4x256xf32> to vector<32x256xf32>
      %21 = vector.extract_strided_slice %12 {offsets = [0, 1, 1, 0], sizes = [2, 4, 4, 256], strides = [1, 1, 1, 1]} : vector<2x6x6x256xf32> to vector<2x4x4x256xf32>
      %22 = vector.shape_cast %21 : vector<2x4x4x256xf32> to vector<32x256xf32>
      %23 = vector.extract_strided_slice %12 {offsets = [0, 1, 2, 0], sizes = [2, 4, 4, 256], strides = [1, 1, 1, 1]} : vector<2x6x6x256xf32> to vector<2x4x4x256xf32>
      %24 = vector.shape_cast %23 : vector<2x4x4x256xf32> to vector<32x256xf32>
      %25 = vector.extract_strided_slice %12 {offsets = [0, 2, 0, 0], sizes = [2, 4, 4, 256], strides = [1, 1, 1, 1]} : vector<2x6x6x256xf32> to vector<2x4x4x256xf32>
      %26 = vector.shape_cast %25 : vector<2x4x4x256xf32> to vector<32x256xf32>
      %27 = vector.extract_strided_slice %12 {offsets = [0, 2, 1, 0], sizes = [2, 4, 4, 256], strides = [1, 1, 1, 1]} : vector<2x6x6x256xf32> to vector<2x4x4x256xf32>
      %28 = vector.shape_cast %27 : vector<2x4x4x256xf32> to vector<32x256xf32>
      %29 = vector.extract_strided_slice %12 {offsets = [0, 2, 2, 0], sizes = [2, 4, 4, 256], strides = [1, 1, 1, 1]} : vector<2x6x6x256xf32> to vector<2x4x4x256xf32>
      %30 = vector.shape_cast %29 : vector<2x4x4x256xf32> to vector<32x256xf32>
      %31 = tpu.concatenate %14, %16, %18, %20, %22, %24, %26, %28, %30 in 1 : vector<32x256xf32>, vector<32x256xf32>, vector<32x256xf32>, vector<32x256xf32>, vector<32x256xf32>, vector<32x256xf32>, vector<32x256xf32>, vector<32x256xf32>, vector<32x256xf32> -> vector<32x2304xf32>
      %c0_16 = arith.constant 0 : index
      %c0_17 = arith.constant 0 : index
      %32 = vector.load %arg3[%c0_16, %c0_17] : memref<2304x256xf32, #tpu.memory_space<vmem>>, vector<2304x256xf32>
      %cst_18 = arith.constant dense<0.000000e+00> : vector<32x256xf32>
      %33 = tpu.matmul %31, %32, %cst_18 {dimension_numbers = #tpu.dot_dimension_numbers<[1], [0], [0], [1], [0, 0, 1, 1], [], []>} : vector<32x2304xf32>, vector<2304x256xf32>, vector<32x256xf32> -> vector<32x256xf32>
      %34 = vector.broadcast %10 : vector<1x256xf32> to vector<32x256xf32>
      %35 = arith.mulf %33, %34 : vector<32x256xf32>
      %36 = vector.broadcast %11 : vector<1x256xf32> to vector<32x256xf32>
      %37 = arith.addf %35, %36 : vector<32x256xf32>
      %cst_19 = arith.constant 0.000000e+00 : f32
      %38 = vector.broadcast %cst_19 : f32 to vector<32x256xf32>
      %39 = arith.maximumf %37, %38 : vector<32x256xf32>
      %40 = vector.shape_cast %39 : vector<32x256xf32> to vector<2x4x4x256xf32>
      %c0_20 = arith.constant 0 : index
      %c0_21 = arith.constant 0 : index
      %41 = vector.load %arg7[%c0_20, %c0_21] : memref<1x256xf32, #tpu.memory_space<vmem>>, vector<1x256xf32>
      %c0_22 = arith.constant 0 : index
      %c0_23 = arith.constant 0 : index
      %42 = vector.load %arg8[%c0_22, %c0_23] : memref<1x256xf32, #tpu.memory_space<vmem>>, vector<1x256xf32>
      %c0_24 = arith.constant 0 : index
      %c0_25 = arith.constant 0 : index
      %c0_26 = arith.constant 0 : index
      %c0_27 = arith.constant 0 : index
      %43 = vector.load %arg2[%c0_24, %c0_25, %c0_26, %c0_27] : memref<2x10x10x256xf32, #tpu.memory_space<vmem>>, vector<2x10x10x256xf32>
      %44 = vector.extract_strided_slice %43 {offsets = [0, 0, 0, 0], sizes = [2, 8, 8, 256], strides = [1, 1, 1, 1]} : vector<2x10x10x256xf32> to vector<2x8x8x256xf32>
      %45 = vector.shape_cast %44 : vector<2x8x8x256xf32> to vector<128x256xf32>
      %46 = vector.extract_strided_slice %43 {offsets = [0, 0, 1, 0], sizes = [2, 8, 8, 256], strides = [1, 1, 1, 1]} : vector<2x10x10x256xf32> to vector<2x8x8x256xf32>
      %47 = vector.shape_cast %46 : vector<2x8x8x256xf32> to vector<128x256xf32>
      %48 = vector.extract_strided_slice %43 {offsets = [0, 0, 2, 0], sizes = [2, 8, 8, 256], strides = [1, 1, 1, 1]} : vector<2x10x10x256xf32> to vector<2x8x8x256xf32>
      %49 = vector.shape_cast %48 : vector<2x8x8x256xf32> to vector<128x256xf32>
      %50 = vector.extract_strided_slice %43 {offsets = [0, 1, 0, 0], sizes = [2, 8, 8, 256], strides = [1, 1, 1, 1]} : vector<2x10x10x256xf32> to vector<2x8x8x256xf32>
      %51 = vector.shape_cast %50 : vector<2x8x8x256xf32> to vector<128x256xf32>
      %52 = vector.extract_strided_slice %43 {offsets = [0, 1, 1, 0], sizes = [2, 8, 8, 256], strides = [1, 1, 1, 1]} : vector<2x10x10x256xf32> to vector<2x8x8x256xf32>
      %53 = vector.shape_cast %52 : vector<2x8x8x256xf32> to vector<128x256xf32>
      %54 = vector.extract_strided_slice %43 {offsets = [0, 1, 2, 0], sizes = [2, 8, 8, 256], strides = [1, 1, 1, 1]} : vector<2x10x10x256xf32> to vector<2x8x8x256xf32>
      %55 = vector.shape_cast %54 : vector<2x8x8x256xf32> to vector<128x256xf32>
      %56 = vector.extract_strided_slice %43 {offsets = [0, 2, 0, 0], sizes = [2, 8, 8, 256], strides = [1, 1, 1, 1]} : vector<2x10x10x256xf32> to vector<2x8x8x256xf32>
      %57 = vector.shape_cast %56 : vector<2x8x8x256xf32> to vector<128x256xf32>
      %58 = vector.extract_strided_slice %43 {offsets = [0, 2, 1, 0], sizes = [2, 8, 8, 256], strides = [1, 1, 1, 1]} : vector<2x10x10x256xf32> to vector<2x8x8x256xf32>
      %59 = vector.shape_cast %58 : vector<2x8x8x256xf32> to vector<128x256xf32>
      %60 = vector.extract_strided_slice %43 {offsets = [0, 2, 2, 0], sizes = [2, 8, 8, 256], strides = [1, 1, 1, 1]} : vector<2x10x10x256xf32> to vector<2x8x8x256xf32>
      %61 = vector.shape_cast %60 : vector<2x8x8x256xf32> to vector<128x256xf32>
      %62 = tpu.concatenate %45, %47, %49, %51, %53, %55, %57, %59, %61 in 1 : vector<128x256xf32>, vector<128x256xf32>, vector<128x256xf32>, vector<128x256xf32>, vector<128x256xf32>, vector<128x256xf32>, vector<128x256xf32>, vector<128x256xf32>, vector<128x256xf32> -> vector<128x2304xf32>
      %c0_28 = arith.constant 0 : index
      %c0_29 = arith.constant 0 : index
      %63 = vector.load %arg6[%c0_28, %c0_29] : memref<2304x256xf32, #tpu.memory_space<vmem>>, vector<2304x256xf32>
      %cst_30 = arith.constant dense<0.000000e+00> : vector<128x256xf32>
      %64 = tpu.matmul %62, %63, %cst_30 {dimension_numbers = #tpu.dot_dimension_numbers<[1], [0], [0], [1], [0, 0, 1, 1], [], []>} : vector<128x2304xf32>, vector<2304x256xf32>, vector<128x256xf32> -> vector<128x256xf32>
      %65 = vector.broadcast %41 : vector<1x256xf32> to vector<128x256xf32>
      %66 = arith.mulf %64, %65 : vector<128x256xf32>
      %67 = vector.broadcast %42 : vector<1x256xf32> to vector<128x256xf32>
      %68 = arith.addf %66, %67 : vector<128x256xf32>
      %cst_31 = arith.constant 0.000000e+00 : f32
      %69 = vector.broadcast %cst_31 : f32 to vector<128x256xf32>
      %70 = arith.maximumf %68, %69 : vector<128x256xf32>
      %71 = vector.shape_cast %70 : vector<128x256xf32> to vector<2x8x8x256xf32>
      %cst_32 = arith.constant 0.000000e+00 : f32
      %72 = vector.broadcast %cst_32 : f32 to vector<2x5x5x256xf32>
      %73 = vector.extract_strided_slice %71 {offsets = [0, 0, 0, 0], sizes = [2, 5, 5, 256], strides = [1, 1, 1, 1]} : vector<2x8x8x256xf32> to vector<2x5x5x256xf32>
      %74 = vector.extract_strided_slice %40 {offsets = [0, 0, 0, 0], sizes = [2, 1, 1, 256], strides = [1, 1, 1, 1]} : vector<2x4x4x256xf32> to vector<2x1x1x256xf32>
      %75 = vector.broadcast %74 : vector<2x1x1x256xf32> to vector<2x5x5x256xf32>
      %76 = arith.mulf %73, %75 : vector<2x5x5x256xf32>
      %77 = arith.addf %72, %76 : vector<2x5x5x256xf32>
      %78 = vector.extract_strided_slice %71 {offsets = [0, 0, 1, 0], sizes = [2, 5, 5, 256], strides = [1, 1, 1, 1]} : vector<2x8x8x256xf32> to vector<2x5x5x256xf32>
      %79 = vector.extract_strided_slice %40 {offsets = [0, 0, 1, 0], sizes = [2, 1, 1, 256], strides = [1, 1, 1, 1]} : vector<2x4x4x256xf32> to vector<2x1x1x256xf32>
      %80 = vector.broadcast %79 : vector<2x1x1x256xf32> to vector<2x5x5x256xf32>
      %81 = arith.mulf %78, %80 : vector<2x5x5x256xf32>
      %82 = arith.addf %77, %81 : vector<2x5x5x256xf32>
      %83 = vector.extract_strided_slice %71 {offsets = [0, 0, 2, 0], sizes = [2, 5, 5, 256], strides = [1, 1, 1, 1]} : vector<2x8x8x256xf32> to vector<2x5x5x256xf32>
      %84 = vector.extract_strided_slice %40 {offsets = [0, 0, 2, 0], sizes = [2, 1, 1, 256], strides = [1, 1, 1, 1]} : vector<2x4x4x256xf32> to vector<2x1x1x256xf32>
      %85 = vector.broadcast %84 : vector<2x1x1x256xf32> to vector<2x5x5x256xf32>
      %86 = arith.mulf %83, %85 : vector<2x5x5x256xf32>
      %87 = arith.addf %82, %86 : vector<2x5x5x256xf32>
      %88 = vector.extract_strided_slice %71 {offsets = [0, 0, 3, 0], sizes = [2, 5, 5, 256], strides = [1, 1, 1, 1]} : vector<2x8x8x256xf32> to vector<2x5x5x256xf32>
      %89 = vector.extract_strided_slice %40 {offsets = [0, 0, 3, 0], sizes = [2, 1, 1, 256], strides = [1, 1, 1, 1]} : vector<2x4x4x256xf32> to vector<2x1x1x256xf32>
      %90 = vector.broadcast %89 : vector<2x1x1x256xf32> to vector<2x5x5x256xf32>
      %91 = arith.mulf %88, %90 : vector<2x5x5x256xf32>
      %92 = arith.addf %87, %91 : vector<2x5x5x256xf32>
      %93 = vector.extract_strided_slice %71 {offsets = [0, 1, 0, 0], sizes = [2, 5, 5, 256], strides = [1, 1, 1, 1]} : vector<2x8x8x256xf32> to vector<2x5x5x256xf32>
      %94 = vector.extract_strided_slice %40 {offsets = [0, 1, 0, 0], sizes = [2, 1, 1, 256], strides = [1, 1, 1, 1]} : vector<2x4x4x256xf32> to vector<2x1x1x256xf32>
      %95 = vector.broadcast %94 : vector<2x1x1x256xf32> to vector<2x5x5x256xf32>
      %96 = arith.mulf %93, %95 : vector<2x5x5x256xf32>
      %97 = arith.addf %92, %96 : vector<2x5x5x256xf32>
      %98 = vector.extract_strided_slice %71 {offsets = [0, 1, 1, 0], sizes = [2, 5, 5, 256], strides = [1, 1, 1, 1]} : vector<2x8x8x256xf32> to vector<2x5x5x256xf32>
      %99 = vector.extract_strided_slice %40 {offsets = [0, 1, 1, 0], sizes = [2, 1, 1, 256], strides = [1, 1, 1, 1]} : vector<2x4x4x256xf32> to vector<2x1x1x256xf32>
      %100 = vector.broadcast %99 : vector<2x1x1x256xf32> to vector<2x5x5x256xf32>
      %101 = arith.mulf %98, %100 : vector<2x5x5x256xf32>
      %102 = arith.addf %97, %101 : vector<2x5x5x256xf32>
      %103 = vector.extract_strided_slice %71 {offsets = [0, 1, 2, 0], sizes = [2, 5, 5, 256], strides = [1, 1, 1, 1]} : vector<2x8x8x256xf32> to vector<2x5x5x256xf32>
      %104 = vector.extract_strided_slice %40 {offsets = [0, 1, 2, 0], sizes = [2, 1, 1, 256], strides = [1, 1, 1, 1]} : vector<2x4x4x256xf32> to vector<2x1x1x256xf32>
      %105 = vector.broadcast %104 : vector<2x1x1x256xf32> to vector<2x5x5x256xf32>
      %106 = arith.mulf %103, %105 : vector<2x5x5x256xf32>
      %107 = arith.addf %102, %106 : vector<2x5x5x256xf32>
      %108 = vector.extract_strided_slice %71 {offsets = [0, 1, 3, 0], sizes = [2, 5, 5, 256], strides = [1, 1, 1, 1]} : vector<2x8x8x256xf32> to vector<2x5x5x256xf32>
      %109 = vector.extract_strided_slice %40 {offsets = [0, 1, 3, 0], sizes = [2, 1, 1, 256], strides = [1, 1, 1, 1]} : vector<2x4x4x256xf32> to vector<2x1x1x256xf32>
      %110 = vector.broadcast %109 : vector<2x1x1x256xf32> to vector<2x5x5x256xf32>
      %111 = arith.mulf %108, %110 : vector<2x5x5x256xf32>
      %112 = arith.addf %107, %111 : vector<2x5x5x256xf32>
      %113 = vector.extract_strided_slice %71 {offsets = [0, 2, 0, 0], sizes = [2, 5, 5, 256], strides = [1, 1, 1, 1]} : vector<2x8x8x256xf32> to vector<2x5x5x256xf32>
      %114 = vector.extract_strided_slice %40 {offsets = [0, 2, 0, 0], sizes = [2, 1, 1, 256], strides = [1, 1, 1, 1]} : vector<2x4x4x256xf32> to vector<2x1x1x256xf32>
      %115 = vector.broadcast %114 : vector<2x1x1x256xf32> to vector<2x5x5x256xf32>
      %116 = arith.mulf %113, %115 : vector<2x5x5x256xf32>
      %117 = arith.addf %112, %116 : vector<2x5x5x256xf32>
      %118 = vector.extract_strided_slice %71 {offsets = [0, 2, 1, 0], sizes = [2, 5, 5, 256], strides = [1, 1, 1, 1]} : vector<2x8x8x256xf32> to vector<2x5x5x256xf32>
      %119 = vector.extract_strided_slice %40 {offsets = [0, 2, 1, 0], sizes = [2, 1, 1, 256], strides = [1, 1, 1, 1]} : vector<2x4x4x256xf32> to vector<2x1x1x256xf32>
      %120 = vector.broadcast %119 : vector<2x1x1x256xf32> to vector<2x5x5x256xf32>
      %121 = arith.mulf %118, %120 : vector<2x5x5x256xf32>
      %122 = arith.addf %117, %121 : vector<2x5x5x256xf32>
      %123 = vector.extract_strided_slice %71 {offsets = [0, 2, 2, 0], sizes = [2, 5, 5, 256], strides = [1, 1, 1, 1]} : vector<2x8x8x256xf32> to vector<2x5x5x256xf32>
      %124 = vector.extract_strided_slice %40 {offsets = [0, 2, 2, 0], sizes = [2, 1, 1, 256], strides = [1, 1, 1, 1]} : vector<2x4x4x256xf32> to vector<2x1x1x256xf32>
      %125 = vector.broadcast %124 : vector<2x1x1x256xf32> to vector<2x5x5x256xf32>
      %126 = arith.mulf %123, %125 : vector<2x5x5x256xf32>
      %127 = arith.addf %122, %126 : vector<2x5x5x256xf32>
      %128 = vector.extract_strided_slice %71 {offsets = [0, 2, 3, 0], sizes = [2, 5, 5, 256], strides = [1, 1, 1, 1]} : vector<2x8x8x256xf32> to vector<2x5x5x256xf32>
      %129 = vector.extract_strided_slice %40 {offsets = [0, 2, 3, 0], sizes = [2, 1, 1, 256], strides = [1, 1, 1, 1]} : vector<2x4x4x256xf32> to vector<2x1x1x256xf32>
      %130 = vector.broadcast %129 : vector<2x1x1x256xf32> to vector<2x5x5x256xf32>
      %131 = arith.mulf %128, %130 : vector<2x5x5x256xf32>
      %132 = arith.addf %127, %131 : vector<2x5x5x256xf32>
      %133 = vector.extract_strided_slice %71 {offsets = [0, 3, 0, 0], sizes = [2, 5, 5, 256], strides = [1, 1, 1, 1]} : vector<2x8x8x256xf32> to vector<2x5x5x256xf32>
      %134 = vector.extract_strided_slice %40 {offsets = [0, 3, 0, 0], sizes = [2, 1, 1, 256], strides = [1, 1, 1, 1]} : vector<2x4x4x256xf32> to vector<2x1x1x256xf32>
      %135 = vector.broadcast %134 : vector<2x1x1x256xf32> to vector<2x5x5x256xf32>
      %136 = arith.mulf %133, %135 : vector<2x5x5x256xf32>
      %137 = arith.addf %132, %136 : vector<2x5x5x256xf32>
      %138 = vector.extract_strided_slice %71 {offsets = [0, 3, 1, 0], sizes = [2, 5, 5, 256], strides = [1, 1, 1, 1]} : vector<2x8x8x256xf32> to vector<2x5x5x256xf32>
      %139 = vector.extract_strided_slice %40 {offsets = [0, 3, 1, 0], sizes = [2, 1, 1, 256], strides = [1, 1, 1, 1]} : vector<2x4x4x256xf32> to vector<2x1x1x256xf32>
      %140 = vector.broadcast %139 : vector<2x1x1x256xf32> to vector<2x5x5x256xf32>
      %141 = arith.mulf %138, %140 : vector<2x5x5x256xf32>
      %142 = arith.addf %137, %141 : vector<2x5x5x256xf32>
      %143 = vector.extract_strided_slice %71 {offsets = [0, 3, 2, 0], sizes = [2, 5, 5, 256], strides = [1, 1, 1, 1]} : vector<2x8x8x256xf32> to vector<2x5x5x256xf32>
      %144 = vector.extract_strided_slice %40 {offsets = [0, 3, 2, 0], sizes = [2, 1, 1, 256], strides = [1, 1, 1, 1]} : vector<2x4x4x256xf32> to vector<2x1x1x256xf32>
      %145 = vector.broadcast %144 : vector<2x1x1x256xf32> to vector<2x5x5x256xf32>
      %146 = arith.mulf %143, %145 : vector<2x5x5x256xf32>
      %147 = arith.addf %142, %146 : vector<2x5x5x256xf32>
      %148 = vector.extract_strided_slice %71 {offsets = [0, 3, 3, 0], sizes = [2, 5, 5, 256], strides = [1, 1, 1, 1]} : vector<2x8x8x256xf32> to vector<2x5x5x256xf32>
      %149 = vector.extract_strided_slice %40 {offsets = [0, 3, 3, 0], sizes = [2, 1, 1, 256], strides = [1, 1, 1, 1]} : vector<2x4x4x256xf32> to vector<2x1x1x256xf32>
      %150 = vector.broadcast %149 : vector<2x1x1x256xf32> to vector<2x5x5x256xf32>
      %151 = arith.mulf %148, %150 : vector<2x5x5x256xf32>
      %152 = arith.addf %147, %151 : vector<2x5x5x256xf32>
      %153 = vector.shape_cast %152 : vector<2x5x5x256xf32> to vector<50x256xf32>
      %cst_33 = arith.constant 0.000000e+00 : f32
      %154 = vector.broadcast %cst_33 : f32 to vector<14x256xf32>
      %155 = tpu.concatenate %153, %154 in 0 : vector<50x256xf32>, vector<14x256xf32> -> vector<64x256xf32>
      %c0_34 = arith.constant 0 : index
      %c0_35 = arith.constant 0 : index
      %156 = vector.load %arg9[%c0_34, %c0_35] : memref<256x256xf32, #tpu.memory_space<vmem>>, vector<256x256xf32>
      %cst_36 = arith.constant dense<0.000000e+00> : vector<64x256xf32>
      %157 = tpu.matmul %155, %156, %cst_36 {dimension_numbers = #tpu.dot_dimension_numbers<[1], [0], [0], [1], [0, 0, 1, 1], [], []>} : vector<64x256xf32>, vector<256x256xf32>, vector<64x256xf32> -> vector<64x256xf32>
      %c0_37 = arith.constant 0 : index
      %c0_38 = arith.constant 0 : index
      %158 = vector.load %arg10[%c0_37, %c0_38] : memref<1x256xf32, #tpu.memory_space<vmem>>, vector<1x256xf32>
      %159 = vector.broadcast %158 : vector<1x256xf32> to vector<64x256xf32>
      %160 = arith.mulf %157, %159 : vector<64x256xf32>
      %c0_39 = arith.constant 0 : index
      %c0_40 = arith.constant 0 : index
      %161 = vector.load %arg11[%c0_39, %c0_40] : memref<1x256xf32, #tpu.memory_space<vmem>>, vector<1x256xf32>
      %162 = vector.broadcast %161 : vector<1x256xf32> to vector<64x256xf32>
      %163 = arith.addf %160, %162 : vector<64x256xf32>
      %cst_41 = arith.constant 0.000000e+00 : f32
      %164 = vector.broadcast %cst_41 : f32 to vector<64x256xf32>
      %165 = arith.maximumf %163, %164 : vector<64x256xf32>
      %c0_42 = arith.constant 0 : index
      %c0_43 = arith.constant 0 : index
      %166 = vector.load %arg15[%c0_42, %c0_43] : memref<64x256xf32, #tpu.memory_space<vmem>>, vector<64x256xf32>
      tpu.vector_store %arg15[%c0_42, %c0_43], %165 {strides = array<i32>} : memref<64x256xf32, #tpu.memory_space<vmem>>, vector<64x256xf32>,
    } else {
    }
    %c0 = arith.constant 0 : index
    %c0_1 = arith.constant 0 : index
    %3 = vector.load %arg15[%c0, %c0_1] : memref<64x256xf32, #tpu.memory_space<vmem>>, vector<64x256xf32>
    %c0_2 = arith.constant 0 : index
    %c0_3 = arith.constant 0 : index
    %4 = vector.load %arg12[%c0_2, %c0_3] : memref<256x1024xf32, #tpu.memory_space<vmem>>, vector<256x1024xf32>
    %cst = arith.constant dense<0.000000e+00> : vector<64x1024xf32>
    %5 = tpu.matmul %3, %4, %cst {dimension_numbers = #tpu.dot_dimension_numbers<[1], [0], [0], [1], [0, 0, 1, 1], [], []>} : vector<64x256xf32>, vector<256x1024xf32>, vector<64x1024xf32> -> vector<64x1024xf32>
    %c0_4 = arith.constant 0 : index
    %c0_5 = arith.constant 0 : index
    %6 = vector.load %arg13[%c0_4, %c0_5] : memref<1x1024xf32, #tpu.memory_space<vmem>>, vector<1x1024xf32>
    %7 = vector.broadcast %6 : vector<1x1024xf32> to vector<64x1024xf32>
    %8 = arith.addf %5, %7 : vector<64x1024xf32>
    %c0_6 = arith.constant 0 : index
    %c0_7 = arith.constant 0 : index
    %9 = vector.load %arg14[%c0_6, %c0_7] : memref<64x1024xf32, #tpu.memory_space<vmem>>, vector<64x1024xf32>
    tpu.vector_store %arg14[%c0_6, %c0_7], %8 {strides = array<i32>} : memref<64x1024xf32, #tpu.memory_space<vmem>>, vector<64x1024xf32>,
    return
  }
  func.func @transform_0(%arg0: i32) -> (i32, i32, i32, i32) {
    %c0_i32 = arith.constant 0 : i32
    %c0_i32_0 = arith.constant 0 : i32
    %c0_i32_1 = arith.constant 0 : i32
    %c0_i32_2 = arith.constant 0 : i32
    %c0_i32_3 = arith.constant 0 : i32
    return %c0_i32, %c0_i32_0, %c0_i32_1, %c0_i32_2 : i32, i32, i32, i32
  }
  func.func @transform_1(%arg0: i32) -> (i32, i32, i32, i32) {
    %c0_i32 = arith.constant 0 : i32
    %c0_i32_0 = arith.constant 0 : i32
    %c0_i32_1 = arith.constant 0 : i32
    %c0_i32_2 = arith.constant 0 : i32
    %c0_i32_3 = arith.constant 0 : i32
    return %c0_i32, %c0_i32_0, %c0_i32_1, %c0_i32_2 : i32, i32, i32, i32
  }
  func.func @transform_2(%arg0: i32) -> (i32, i32) {
    %c0_i32 = arith.constant 0 : i32
    %c0_i32_0 = arith.constant 0 : i32
    %c0_i32_1 = arith.constant 0 : i32
    return %c0_i32, %c0_i32_0 : i32, i32
  }
  func.func @transform_3(%arg0: i32) -> (i32, i32) {
    %c0_i32 = arith.constant 0 : i32
    %c0_i32_0 = arith.constant 0 : i32
    %c0_i32_1 = arith.constant 0 : i32
    return %c0_i32, %c0_i32_0 : i32, i32
  }
  func.func @transform_4(%arg0: i32) -> (i32, i32) {
    %c0_i32 = arith.constant 0 : i32
    %c0_i32_0 = arith.constant 0 : i32
    %c0_i32_1 = arith.constant 0 : i32
    return %c0_i32, %c0_i32_0 : i32, i32
  }
  func.func @transform_5(%arg0: i32) -> (i32, i32) {
    %c0_i32 = arith.constant 0 : i32
    %c0_i32_0 = arith.constant 0 : i32
    %c0_i32_1 = arith.constant 0 : i32
    return %c0_i32, %c0_i32_0 : i32, i32
  }
  func.func @transform_6(%arg0: i32) -> (i32, i32) {
    %c0_i32 = arith.constant 0 : i32
    %c0_i32_0 = arith.constant 0 : i32
    %c0_i32_1 = arith.constant 0 : i32
    return %c0_i32, %c0_i32_0 : i32, i32
  }
  func.func @transform_7(%arg0: i32) -> (i32, i32) {
    %c0_i32 = arith.constant 0 : i32
    %c0_i32_0 = arith.constant 0 : i32
    %c0_i32_1 = arith.constant 0 : i32
    return %c0_i32, %c0_i32_0 : i32, i32
  }
  func.func @transform_8(%arg0: i32) -> (i32, i32) {
    %c0_i32 = arith.constant 0 : i32
    %c0_i32_0 = arith.constant 0 : i32
    %c0_i32_1 = arith.constant 0 : i32
    return %c0_i32, %c0_i32_0 : i32, i32
  }
  func.func @transform_9(%arg0: i32) -> (i32, i32) {
    %c0_i32 = arith.constant 0 : i32
    %c0_i32_0 = arith.constant 0 : i32
    %c0_i32_1 = arith.constant 0 : i32
    return %c0_i32, %c0_i32_0 : i32, i32
  }
  func.func @transform_10(%arg0: i32) -> (i32, i32) {
    %c0_i32 = arith.constant 0 : i32
    %c0_i32_0 = arith.constant 0 : i32
    %c0_i32_1 = arith.constant 0 : i32
    return %c0_i32, %c0_i32_0 : i32, i32
  }
  func.func @transform_11(%arg0: i32) -> (i32, i32) {
    %c0_i32 = arith.constant 0 : i32
    %c0_i32_0 = arith.constant 0 : i32
    return %c0_i32, %arg0 : i32, i32
  }
  func.func @transform_12(%arg0: i32) -> (i32, i32) {
    %c0_i32 = arith.constant 0 : i32
    %c0_i32_0 = arith.constant 0 : i32
    return %c0_i32, %arg0 : i32, i32
  }
  func.func @transform_13(%arg0: i32) -> (i32, i32) {
    %c0_i32 = arith.constant 0 : i32
    %c0_i32_0 = arith.constant 0 : i32
    return %c0_i32, %arg0 : i32, i32
  }
}

</mosaic_0001>

<llo_original>
// kernel: maskcorr_forward.1
$region0: #{maskcorr_forward.1}
  #allocation0 [shape = 'u32[]', space=smem, size = 0x4, offset = 0x4, fixed_abs, tag = 'smem constant byte address 0x4 - core index']
  #allocation1 [shape = 'u32[144,128]{1,0:T(1,128)}', space=vmem, size = 0x12000, scoped, tag = 'internal scratch']
  #allocation2 [shape = 'f32[64,256]{1,0:T(8,128)}', space=vmem, size = 0x10000, scoped, tag = 'scratch operand']
  %s0 = inlined_call_operand.vmem [shape: f32[2,6,6,256], index: 0, kind: input, shape index: {}]
  %s1 = inlined_call_operand.vmem [shape: f32[2,10,10,256], index: 1, kind: input, shape index: {}]
  %s2 = inlined_call_operand.hbm [shape: f32[2304,256], index: 2, kind: input, shape index: {}]
  %s3 = inlined_call_operand.hbm [shape: f32[1,256], index: 3, kind: input, shape index: {}]
  %s4 = inlined_call_operand.hbm [shape: f32[1,256], index: 4, kind: input, shape index: {}]
  %s5 = inlined_call_operand.hbm [shape: f32[2304,256], index: 5, kind: input, shape index: {}]
  %s6 = inlined_call_operand.hbm [shape: f32[1,256], index: 6, kind: input, shape index: {}]
  %s7 = inlined_call_operand.hbm [shape: f32[1,256], index: 7, kind: input, shape index: {}]
  %s8 = inlined_call_operand.hbm [shape: f32[256,256], index: 8, kind: input, shape index: {}]
  %s9 = inlined_call_operand.hbm [shape: f32[1,256], index: 9, kind: input, shape index: {}]
  %s10 = inlined_call_operand.hbm [shape: f32[1,256], index: 10, kind: input, shape index: {}]
  %s11 = inlined_call_operand.hbm [shape: f32[256,4096], index: 11, kind: input, shape index: {}]
  %s12 = inlined_call_operand.hbm [shape: f32[1,4096], index: 12, kind: input, shape index: {}]
  %s13 = inlined_call_operand.vmem [shape: f32[64,4096], index: 13, kind: output, shape index: {}]
  %s14 = sld [smem:[#allocation0]]
  $region152: #{maskcorr_forward.1} parent=0
    _
  %s16 = ssub.s32 1, %s14
  %s17 = scalar_select 0, %s16, %s14
  $region1: #{maskcorr_forward.1} parent=0
    #allocation3 [shape = 'u8[2359296]{0}', space=vmem, size = 0x240000, scoped, tag = 'input window, operand 2, single buffered']
    #allocation4 [shape = 's32[2]{0}', space=sflag, size = 0x8, scoped, tag = 'scoped memory for maskcorr_forward.1']
    #allocation5 [shape = 'u8[1024]{0}', space=vmem, size = 0x400, scoped, tag = 'input window, operand 3, single buffered']
    #allocation6 [shape = 's32[1]{0}', space=sflag, size = 0x4, scoped, tag = 'scoped memory for maskcorr_forward.1']
    #allocation7 [shape = 'u8[1024]{0}', space=vmem, size = 0x400, scoped, tag = 'input window, operand 4, single buffered']
    #allocation8 [shape = 'u8[2359296]{0}', space=vmem, size = 0x240000, scoped, tag = 'input window, operand 5, single buffered']
    #allocation9 [shape = 's32[1]{0}', space=sflag, size = 0x4, scoped, tag = 'scoped memory for maskcorr_forward.1']
    #allocation10 [shape = 'u8[1024]{0}', space=vmem, size = 0x400, scoped, tag = 'input window, operand 6, single buffered']
    #allocation11 [shape = 'u8[1024]{0}', space=vmem, size = 0x400, scoped, tag = 'input window, operand 7, single buffered']
    #allocation12 [shape = 's32[1]{0}', space=sflag, size = 0x4, scoped, tag = 'scoped memory for maskcorr_forward.1']
    #allocation13 [shape = 'u8[262144]{0}', space=vmem, size = 0x40000, scoped, tag = 'input window, operand 8, single buffered']
    #allocation14 [shape = 'u8[1024]{0}', space=vmem, size = 0x400, scoped, tag = 'input window, operand 9, single buffered']
    #allocation15 [shape = 's32[1]{0}', space=sflag, size = 0x4, scoped, tag = 'scoped memory for maskcorr_forward.1']
    #allocation16 [shape = 'u8[1024]{0}', space=vmem, size = 0x400, scoped, tag = 'input window, operand 10, single buffered']
    #allocation17 [shape = 'u8[2097152]{0}', space=vmem, size = 0x200000, scoped, tag = 'input window, operand 11']
    #allocation18 [shape = 's32[2]{0}', space=sflag, size = 0x8, scoped, tag = 'scoped memory for maskcorr_forward.1']
    #allocation19 [shape = 'u8[8192]{0}', space=vmem, size = 0x2000, scoped, tag = 'input window, operand 12']
    #allocation20 [shape = 'u8[524288]{0}', space=vmem, size = 0x80000, scoped, tag = 'output window, operand 0']
    %18 = vsyncpa [#allocation4], 0
    %19 = vsyncpa [#allocation6], 0
    %20 = vsyncpa [#allocation9], 0
    %21 = vsyncpa [#allocation12], 0
    %22 = vsyncpa [#allocation15], 0
    %23 = vsyncpa [#allocation18], 0
    %s24 = scalar_lea.sflag [#allocation18], 1
    %25 = vsyncpa %s24, 0
    loop: start=0, step=1, limit=6
    $region2: #{maskcorr_forward.1} parent=1 // loop_pre_header
      _
    $region3: #{maskcorr_forward.1} parent=1 // loop_header
      %s27 = sphi 0, %s31
      %p28 = scmp.ge.s32.totalorder %s27, 6
      %s35 = sphi 0, %s35
      %s37 = sphi 0, %s35
      %s38 = sphi 0, %s37
      %s52 = sphi 0, %s38
      %s56 = sphi 0, %s56
      %s58 = sphi 0, %s56
      %s59 = sphi 0, %s58
      %s73 = sphi 0, %s59
      %s77 = sphi 0, %s77
      %s79 = sphi 0, %s77
      %s80 = sphi 0, %s79
      %s94 = sphi 0, %s80
      %s98 = sphi 0, %s98
      %s100 = sphi 0, %s98
      %s101 = sphi 0, %s100
      %s115 = sphi 0, %s101
      %s119 = sphi 0, %s119
      %s121 = sphi 0, %s119
      %s122 = sphi 0, %s121
      %s136 = sphi 0, %s122
      %s140 = sphi 0, %s140
      %s142 = sphi 0, %s140
      %s143 = sphi 0, %s142
      %s157 = sphi 0, %s143
      %s161 = sphi 0, %s161
      %s163 = sphi 0, %s161
      %s164 = sphi 0, %s163
      %s178 = sphi 0, %s164
      %s182 = sphi 0, %s182
      %s184 = sphi 0, %s182
      %s185 = sphi 0, %s184
      %s199 = sphi 0, %s185
      %s203 = sphi 0, %s203
      %s205 = sphi 0, %s203
      %s206 = sphi 0, %s205
      %s220 = sphi 0, %s206
      %s224 = sphi 0, %s224
      %s226 = sphi 0, %s224
      %s227 = sphi 0, %s226
      %s241 = sphi 0, %s227
      %s245 = sphi 0, %s245
      %s247 = sphi 0, %s245
      %s248 = sphi 0, %s247
      %s262 = sphi 0, %s248
      %s268 = sphi 0, %s270
      %s271 = sphi 0, %s268
      %s272 = sphi 0, %s271
      %s288 = sphi 0, %s272
      %s294 = sphi 0, %s296
      %s297 = sphi 0, %s294
      %s298 = sphi 0, %s297
      %s314 = sphi 0, %s298
      %s320 = sphi 0, %s322
      %s323 = sphi 0, %s320
      %s324 = sphi 0, %s323
      %s340 = sphi 0, %s324
    $region4: #{maskcorr_forward.1} parent=1 // loop_header_branch
      %30 = sbr.rel (%p28) target = $region8
    $region5: #{maskcorr_forward.1} parent=1 // loop_body
      %s32 = ssub.s32 %s27, 1
      %s33 = ssub.s32 %s27, 2
      %s34 = sadd.s32 %s27, 1
      %s36 = sadd.s32 %s35, 1
      %p39 = scmp.eq.s32.totalorder %s27, 3
      %p40 = scmp.ne.s32.totalorder %s35, %s37
      %p41 = scmp.eq.s32.totalorder %s27, 0
      %p42 = por %p40, %p41
      %p43 = scmp.ne.s32.totalorder %s35, %s37
      %p44 = scmp.eq.s32.totalorder %s32, 3
      %p45 = por %p43, %p44
      %p46 = scmp.ne.s32.totalorder %s37, %s38
      %p47 = scmp.eq.s32.totalorder %s32, 0
      %p48 = por %p46, %p47
      %p49 = scmp.ne.s32.totalorder %s37, %s38
      %p50 = scmp.eq.s32.totalorder %s33, 3
      %p51 = por %p49, %p50
      %p53 = scmp.ne.s32.totalorder %s38, %s52
      %p54 = scmp.eq.s32.totalorder %s33, 0
      %p55 = por %p53, %p54
      %s57 = sadd.s32 %s56, 1
      %p60 = scmp.eq.s32.totalorder %s27, 3
      %p61 = scmp.ne.s32.totalorder %s56, %s58
      %p62 = scmp.eq.s32.totalorder %s27, 0
      %p63 = por %p61, %p62
      %p64 = scmp.ne.s32.totalorder %s56, %s58
      %p65 = scmp.eq.s32.totalorder %s32, 3
      %p66 = por %p64, %p65
      %p67 = scmp.ne.s32.totalorder %s58, %s59
      %p68 = scmp.eq.s32.totalorder %s32, 0
      %p69 = por %p67, %p68
      %p70 = scmp.ne.s32.totalorder %s58, %s59
      %p71 = scmp.eq.s32.totalorder %s33, 3
      %p72 = por %p70, %p71
      %p74 = scmp.ne.s32.totalorder %s59, %s73
      %p75 = scmp.eq.s32.totalorder %s33, 0
      %p76 = por %p74, %p75
      %s78 = sadd.s32 %s77, 1
      %p81 = scmp.eq.s32.totalorder %s27, 3
      %p82 = scmp.ne.s32.totalorder %s77, %s79
      %p83 = scmp.eq.s32.totalorder %s27, 0
      %p84 = por %p82, %p83
      %p85 = scmp.ne.s32.totalorder %s77, %s79
      %p86 = scmp.eq.s32.totalorder %s32, 3
      %p87 = por %p85, %p86
      %p88 = scmp.ne.s32.totalorder %s79, %s80
      %p89 = scmp.eq.s32.totalorder %s32, 0
      %p90 = por %p88, %p89
      %p91 = scmp.ne.s32.totalorder %s79, %s80
      %p92 = scmp.eq.s32.totalorder %s33, 3
      %p93 = por %p91, %p92
      %p95 = scmp.ne.s32.totalorder %s80, %s94
      %p96 = scmp.eq.s32.totalorder %s33, 0
      %p97 = por %p95, %p96
      %s99 = sadd.s32 %s98, 1
      %p102 = scmp.eq.s32.totalorder %s27, 3
      %p103 = scmp.ne.s32.totalorder %s98, %s100
      %p104 = scmp.eq.s32.totalorder %s27, 0
      %p105 = por %p103, %p104
      %p106 = scmp.ne.s32.totalorder %s98, %s100
      %p107 = scmp.eq.s32.totalorder %s32, 3
      %p108 = por %p106, %p107
      %p109 = scmp.ne.s32.totalorder %s100, %s101
      %p110 = scmp.eq.s32.totalorder %s32, 0
      %p111 = por %p109, %p110
      %p112 = scmp.ne.s32.totalorder %s100, %s101
      %p113 = scmp.eq.s32.totalorder %s33, 3
      %p114 = por %p112, %p113
      %p116 = scmp.ne.s32.totalorder %s101, %s115
      %p117 = scmp.eq.s32.totalorder %s33, 0
      %p118 = por %p116, %p117
      %s120 = sadd.s32 %s119, 1
      %p123 = scmp.eq.s32.totalorder %s27, 3
      %p124 = scmp.ne.s32.totalorder %s119, %s121
      %p125 = scmp.eq.s32.totalorder %s27, 0
      %p126 = por %p124, %p125
      %p127 = scmp.ne.s32.totalorder %s119, %s121
      %p128 = scmp.eq.s32.totalorder %s32, 3
      %p129 = por %p127, %p128
      %p130 = scmp.ne.s32.totalorder %s121, %s122
      %p131 = scmp.eq.s32.totalorder %s32, 0
      %p132 = por %p130, %p131
      %p133 = scmp.ne.s32.totalorder %s121, %s122
      %p134 = scmp.eq.s32.totalorder %s33, 3
      %p135 = por %p133, %p134
      %p137 = scmp.ne.s32.totalorder %s122, %s136
      %p138 = scmp.eq.s32.totalorder %s33, 0
      %p139 = por %p137, %p138
      %s141 = sadd.s32 %s140, 1
      %p144 = scmp.eq.s32.totalorder %s27, 3
      %p145 = scmp.ne.s32.totalorder %s140, %s142
      %p146 = scmp.eq.s32.totalorder %s27, 0
      %p147 = por %p145, %p146
      %p148 = scmp.ne.s32.totalorder %s140, %s142
      %p149 = scmp.eq.s32.totalorder %s32, 3
      %p150 = por %p148, %p149
      %p151 = scmp.ne.s32.totalorder %s142, %s143
      %p152 = scmp.eq.s32.totalorder %s32, 0
      %p153 = por %p151, %p152
      %p154 = scmp.ne.s32.totalorder %s142, %s143
      %p155 = scmp.eq.s32.totalorder %s33, 3
      %p156 = por %p154, %p155
      %p158 = scmp.ne.s32.totalorder %s143, %s157
      %p159 = scmp.eq.s32.totalorder %s33, 0
      %p160 = por %p158, %p159
      %s162 = sadd.s32 %s161, 1
      %p165 = scmp.eq.s32.totalorder %s27, 3
      %p166 = scmp.ne.s32.totalorder %s161, %s163
      %p167 = scmp.eq.s32.totalorder %s27, 0
      %p168 = por %p166, %p167
      %p169 = scmp.ne.s32.totalorder %s161, %s163
      %p170 = scmp.eq.s32.totalorder %s32, 3
      %p171 = por %p169, %p170
      %p172 = scmp.ne.s32.totalorder %s163, %s164
      %p173 = scmp.eq.s32.totalorder %s32, 0
      %p174 = por %p172, %p173
      %p175 = scmp.ne.s32.totalorder %s163, %s164
      %p176 = scmp.eq.s32.totalorder %s33, 3
      %p177 = por %p175, %p176
      %p179 = scmp.ne.s32.totalorder %s164, %s178
      %p180 = scmp.eq.s32.totalorder %s33, 0
      %p181 = por %p179, %p180
      %s183 = sadd.s32 %s182, 1
      %p186 = scmp.eq.s32.totalorder %s27, 3
      %p187 = scmp.ne.s32.totalorder %s182, %s184
      %p188 = scmp.eq.s32.totalorder %s27, 0
      %p189 = por %p187, %p188
      %p190 = scmp.ne.s32.totalorder %s182, %s184
      %p191 = scmp.eq.s32.totalorder %s32, 3
      %p192 = por %p190, %p191
      %p193 = scmp.ne.s32.totalorder %s184, %s185
      %p194 = scmp.eq.s32.totalorder %s32, 0
      %p195 = por %p193, %p194
      %p196 = scmp.ne.s32.totalorder %s184, %s185
      %p197 = scmp.eq.s32.totalorder %s33, 3
      %p198 = por %p196, %p197
      %p200 = scmp.ne.s32.totalorder %s185, %s199
      %p201 = scmp.eq.s32.totalorder %s33, 0
      %p202 = por %p200, %p201
      %s204 = sadd.s32 %s203, 1
      %p207 = scmp.eq.s32.totalorder %s27, 3
      %p208 = scmp.ne.s32.totalorder %s203, %s205
      %p209 = scmp.eq.s32.totalorder %s27, 0
      %p210 = por %p208, %p209
      %p211 = scmp.ne.s32.totalorder %s203, %s205
      %p212 = scmp.eq.s32.totalorder %s32, 3
      %p213 = por %p211, %p212
      %p214 = scmp.ne.s32.totalorder %s205, %s206
      %p215 = scmp.eq.s32.totalorder %s32, 0
      %p216 = por %p214, %p215
      %p217 = scmp.ne.s32.totalorder %s205, %s206
      %p218 = scmp.eq.s32.totalorder %s33, 3
      %p219 = por %p217, %p218
      %p221 = scmp.ne.s32.totalorder %s206, %s220
      %p222 = scmp.eq.s32.totalorder %s33, 0
      %p223 = por %p221, %p222
      %s225 = sadd.s32 %s224, 1
      %p228 = scmp.eq.s32.totalorder %s27, 3
      %p229 = scmp.ne.s32.totalorder %s224, %s226
      %p230 = scmp.eq.s32.totalorder %s27, 0
      %p231 = por %p229, %p230
      %p232 = scmp.ne.s32.totalorder %s224, %s226
      %p233 = scmp.eq.s32.totalorder %s32, 3
      %p234 = por %p232, %p233
      %p235 = scmp.ne.s32.totalorder %s226, %s227
      %p236 = scmp.eq.s32.totalorder %s32, 0
      %p237 = por %p235, %p236
      %p238 = scmp.ne.s32.totalorder %s226, %s227
      %p239 = scmp.eq.s32.totalorder %s33, 3
      %p240 = por %p238, %p239
      %p242 = scmp.ne.s32.totalorder %s227, %s241
      %p243 = scmp.eq.s32.totalorder %s33, 0
      %p244 = por %p242, %p243
      %s246 = sadd.s32 %s245, 1
      %p249 = scmp.eq.s32.totalorder %s27, 3
      %p250 = scmp.ne.s32.totalorder %s245, %s247
      %p251 = scmp.eq.s32.totalorder %s27, 0
      %p252 = por %p250, %p251
      %p253 = scmp.ne.s32.totalorder %s245, %s247
      %p254 = scmp.eq.s32.totalorder %s32, 3
      %p255 = por %p253, %p254
      %p256 = scmp.ne.s32.totalorder %s247, %s248
      %p257 = scmp.eq.s32.totalorder %s32, 0
      %p258 = por %p256, %p257
      %p259 = scmp.ne.s32.totalorder %s247, %s248
      %p260 = scmp.eq.s32.totalorder %s33, 3
      %p261 = por %p259, %p260
      %p263 = scmp.ne.s32.totalorder %s248, %s262
      %p264 = scmp.eq.s32.totalorder %s33, 0
      %p265 = por %p263, %p264
      %s266 = ssub.s32 %s27, %s34
      %p267 = scmp.eq.s32.totalorder %s266, 0
      %s269 = sadd.s32 %s268, 1
      %s270 = scalar_select %p267, %s268, %s269
      %p273 = pneg %p267
      %p274 = scmp.eq.s32.totalorder %s27, 3
      %p275 = por %p273, %p274
      %p276 = scmp.ne.s32.totalorder %s268, %s271
      %p277 = scmp.eq.s32.totalorder %s27, 0
      %p278 = por %p276, %p277
      %p279 = scmp.ne.s32.totalorder %s268, %s271
      %p280 = scmp.eq.s32.totalorder %s32, 3
      %p281 = por %p279, %p280
      %p282 = scmp.ne.s32.totalorder %s271, %s272
      %p283 = scmp.eq.s32.totalorder %s32, 0
      %p284 = por %p282, %p283
      %p285 = scmp.ne.s32.totalorder %s271, %s272
      %p286 = scmp.eq.s32.totalorder %s33, 3
      %p287 = por %p285, %p286
      %p289 = scmp.ne.s32.totalorder %s272, %s288
      %p290 = scmp.eq.s32.totalorder %s33, 0
      %p291 = por %p289, %p290
      %s292 = ssub.s32 %s27, %s34
      %p293 = scmp.eq.s32.totalorder %s292, 0
      %s295 = sadd.s32 %s294, 1
      %s296 = scalar_select %p293, %s294, %s295
      %p299 = pneg %p293
      %p300 = scmp.eq.s32.totalorder %s27, 3
      %p301 = por %p299, %p300
      %p302 = scmp.ne.s32.totalorder %s294, %s297
      %p303 = scmp.eq.s32.totalorder %s27, 0
      %p304 = por %p302, %p303
      %p305 = scmp.ne.s32.totalorder %s294, %s297
      %p306 = scmp.eq.s32.totalorder %s32, 3
      %p307 = por %p305, %p306
      %p308 = scmp.ne.s32.totalorder %s297, %s298
      %p309 = scmp.eq.s32.totalorder %s32, 0
      %p310 = por %p308, %p309
      %p311 = scmp.ne.s32.totalorder %s297, %s298
      %p312 = scmp.eq.s32.totalorder %s33, 3
      %p313 = por %p311, %p312
      %p315 = scmp.ne.s32.totalorder %s298, %s314
      %p316 = scmp.eq.s32.totalorder %s33, 0
      %p317 = por %p315, %p316
      %s318 = ssub.s32 %s27, %s34
      %p319 = scmp.eq.s32.totalorder %s318, 0
      %s321 = sadd.s32 %s320, 1
      %s322 = scalar_select %p319, %s320, %s321
      %p325 = pneg %p319
      %p326 = scmp.eq.s32.totalorder %s27, 3
      %p327 = por %p325, %p326
      %p328 = scmp.ne.s32.totalorder %s320, %s323
      %p329 = scmp.eq.s32.totalorder %s27, 0
      %p330 = por %p328, %p329
      %p331 = scmp.ne.s32.totalorder %s320, %s323
      %p332 = scmp.eq.s32.totalorder %s32, 3
      %p333 = por %p331, %p332
      %p334 = scmp.ne.s32.totalorder %s323, %s324
      %p335 = scmp.eq.s32.totalorder %s32, 0
      %p336 = por %p334, %p335
      %p337 = scmp.ne.s32.totalorder %s323, %s324
      %p338 = scmp.eq.s32.totalorder %s33, 3
      %p339 = por %p337, %p338
      %p341 = scmp.ne.s32.totalorder %s324, %s340
      %p342 = scmp.eq.s32.totalorder %s33, 0
      %p343 = por %p341, %p342
      %p344 = scmp.le.s32.totalorder 1, %s27
      %p345 = scmp.lt.s32.totalorder %s27, 5
      %p346 = pnand %p344, %p345
      %p347 = pneg %p346
      // Predicated region
      $region9: #{maskcorr_forward.1} parent=5 // pred_check
        _
      $region10: #{maskcorr_forward.1} parent=5 // pred_check_branch
        %349 = sbr.rel (%p346) target = $region12
      $region11: #{maskcorr_forward.1} parent=5 // pred_region
        %s350 = ssub.s32 %s27, 1
        // Predicated region
        $region13: #{maskcorr_forward.1} parent=11 // pred_check
          %p351 = pneg %p48
        $region14: #{maskcorr_forward.1} parent=11 // pred_check_branch
          %353 = sbr.rel (%p351) target = $region16
        $region15: #{maskcorr_forward.1} parent=11 // pred_region
          _
        $region16: #{maskcorr_forward.1} parent=11 // pred_fallthru
          _
        // Predicated region
        $region17: #{maskcorr_forward.1} parent=11 // pred_check
          %p354 = pneg %p69
        $region18: #{maskcorr_forward.1} parent=11 // pred_check_branch
          %356 = sbr.rel (%p354) target = $region20
        $region19: #{maskcorr_forward.1} parent=11 // pred_region
          _
        $region20: #{maskcorr_forward.1} parent=11 // pred_fallthru
          _
        // Predicated region
        $region21: #{maskcorr_forward.1} parent=11 // pred_check
          %p357 = pneg %p90
        $region22: #{maskcorr_forward.1} parent=11 // pred_check_branch
          %359 = sbr.rel (%p357) target = $region24
        $region23: #{maskcorr_forward.1} parent=11 // pred_region
          %s361 = ssub.s32 73728, 73728
          %362 = vsyncadd [#allocation4], %s361
          %s363 = sshll.u32 [#allocation3], 4
          %s364 = int_to_ptr.vmem [resolvable:$true] %s363
          %369 = dma.hbm_to_vmem [thread:$0]  %s2, 73728, %s364, [#allocation4], 256, 256, 16
        $region24: #{maskcorr_forward.1} parent=11 // pred_fallthru
          _
        // Predicated region
        $region25: #{maskcorr_forward.1} parent=11 // pred_check
          %p370 = pneg %p111
        $region26: #{maskcorr_forward.1} parent=11 // pred_check_branch
          %372 = sbr.rel (%p370) target = $region28
        $region27: #{maskcorr_forward.1} parent=11 // pred_region
          %s374 = ssub.s32 32, 32
          %375 = vsyncadd [#allocation6], %s374
          %s377 = sshll.u32 [#allocation5], 4
          %s378 = int_to_ptr.vmem [resolvable:$true] %s377
          %380 = dma.hbm_to_vmem [thread:$0]  %s3, 32, %s378, [#allocation6]
        $region28: #{maskcorr_forward.1} parent=11 // pred_fallthru
          _
        // Predicated region
        $region29: #{maskcorr_forward.1} parent=11 // pred_check
          %p381 = pneg %p132
        $region30: #{maskcorr_forward.1} parent=11 // pred_check_branch
          %383 = sbr.rel (%p381) target = $region32
        $region31: #{maskcorr_forward.1} parent=11 // pred_region
          %s385 = ssub.s32 32, 32
          %386 = vsyncadd [#allocation6], %s385
          %s388 = sshll.u32 [#allocation7], 4
          %s389 = int_to_ptr.vmem [resolvable:$true] %s388
          %391 = dma.hbm_to_vmem [thread:$0]  %s4, 32, %s389, [#allocation6]
        $region32: #{maskcorr_forward.1} parent=11 // pred_fallthru
          _
        // Predicated region
        $region33: #{maskcorr_forward.1} parent=11 // pred_check
          %p392 = pneg %p153
        $region34: #{maskcorr_forward.1} parent=11 // pred_check_branch
          %394 = sbr.rel (%p392) target = $region36
        $region35: #{maskcorr_forward.1} parent=11 // pred_region
          %s396 = ssub.s32 73728, 73728
          %397 = vsyncadd [#allocation9], %s396
          %s398 = sshll.u32 [#allocation8], 4
          %s399 = int_to_ptr.vmem [resolvable:$true] %s398
          %404 = dma.hbm_to_vmem [thread:$0]  %s5, 73728, %s399, [#allocation9], 256, 256, 16
        $region36: #{maskcorr_forward.1} parent=11 // pred_fallthru
          _
        // Predicated region
        $region37: #{maskcorr_forward.1} parent=11 // pred_check
          %p405 = pneg %p174
        $region38: #{maskcorr_forward.1} parent=11 // pred_check_branch
          %407 = sbr.rel (%p405) target = $region40
        $region39: #{maskcorr_forward.1} parent=11 // pred_region
          %s409 = ssub.s32 32, 32
          %410 = vsyncadd [#allocation9], %s409
          %s412 = sshll.u32 [#allocation10], 4
          %s413 = int_to_ptr.vmem [resolvable:$true] %s412
          %415 = dma.hbm_to_vmem [thread:$0]  %s6, 32, %s413, [#allocation9]
        $region40: #{maskcorr_forward.1} parent=11 // pred_fallthru
          _
        // Predicated region
        $region41: #{maskcorr_forward.1} parent=11 // pred_check
          %p416 = pneg %p195
        $region42: #{maskcorr_forward.1} parent=11 // pred_check_branch
          %418 = sbr.rel (%p416) target = $region44
        $region43: #{maskcorr_forward.1} parent=11 // pred_region
          %s420 = ssub.s32 32, 32
          %421 = vsyncadd [#allocation12], %s420
          %s423 = sshll.u32 [#allocation11], 4
          %s424 = int_to_ptr.vmem [resolvable:$true] %s423
          %426 = dma.hbm_to_vmem [thread:$0]  %s7, 32, %s424, [#allocation12]
        $region44: #{maskcorr_forward.1} parent=11 // pred_fallthru
          _
        // Predicated region
        $region45: #{maskcorr_forward.1} parent=11 // pred_check
          %p427 = pneg %p216
        $region46: #{maskcorr_forward.1} parent=11 // pred_check_branch
          %429 = sbr.rel (%p427) target = $region48
        $region47: #{maskcorr_forward.1} parent=11 // pred_region
          %s431 = ssub.s32 8192, 8192
          %432 = vsyncadd [#allocation12], %s431
          %s433 = sshll.u32 [#allocation13], 4
          %s434 = int_to_ptr.vmem [resolvable:$true] %s433
          %439 = dma.hbm_to_vmem [thread:$0]  %s8, 8192, %s434, [#allocation12], 256, 256, 16
        $region48: #{maskcorr_forward.1} parent=11 // pred_fallthru
          _
        // Predicated region
        $region49: #{maskcorr_forward.1} parent=11 // pred_check
          %p440 = pneg %p237
        $region50: #{maskcorr_forward.1} parent=11 // pred_check_branch
          %442 = sbr.rel (%p440) target = $region52
        $region51: #{maskcorr_forward.1} parent=11 // pred_region
          %s444 = ssub.s32 32, 32
          %445 = vsyncadd [#allocation15], %s444
          %s447 = sshll.u32 [#allocation14], 4
          %s448 = int_to_ptr.vmem [resolvable:$true] %s447
          %450 = dma.hbm_to_vmem [thread:$0]  %s9, 32, %s448, [#allocation15]
        $region52: #{maskcorr_forward.1} parent=11 // pred_fallthru
          _
        // Predicated region
        $region53: #{maskcorr_forward.1} parent=11 // pred_check
          %p451 = pneg %p258
        $region54: #{maskcorr_forward.1} parent=11 // pred_check_branch
          %453 = sbr.rel (%p451) target = $region56
        $region55: #{maskcorr_forward.1} parent=11 // pred_region
          %s455 = ssub.s32 32, 32
          %456 = vsyncadd [#allocation15], %s455
          %s458 = sshll.u32 [#allocation16], 4
          %s459 = int_to_ptr.vmem [resolvable:$true] %s458
          %461 = dma.hbm_to_vmem [thread:$0]  %s10, 32, %s459, [#allocation15]
        $region56: #{maskcorr_forward.1} parent=11 // pred_fallthru
          _
      $region12: #{maskcorr_forward.1} parent=5 // pred_fallthru
        _
      %p462 = scmp.lt.s32.totalorder %s27, 4
      // Predicated region
      $region57: #{maskcorr_forward.1} parent=5 // pred_check
        %p463 = pneg %p462
      $region58: #{maskcorr_forward.1} parent=5 // pred_check_branch
        %465 = sbr.rel (%p463) target = $region60
      $region59: #{maskcorr_forward.1} parent=5 // pred_region
        // Predicated region
        $region61: #{maskcorr_forward.1} parent=59 // pred_check
          %p466 = pneg %p278
        $region62: #{maskcorr_forward.1} parent=59 // pred_check_branch
          %468 = sbr.rel (%p466) target = $region64
        $region63: #{maskcorr_forward.1} parent=59 // pred_region
          %s469 = sand.u32 %s27, 1
          %s470 = scalar_lea.sflag [#allocation18], %s469
          %s471 = sand.u32 %s268, 1
          %s472 = smul.addr %s471, 2048
          %s473 = scalar_lea.vmem [#allocation17], %s472
          %s474 = smul.u32 8, %s27
          %s476 = ssub.s32 32768, 32768
          %477 = vsyncadd %s470, %s476
          %s478 = smul.addr %s474, 128
          %s479 = scalar_lea.hbm %s11, %s478
          %s480 = sshll.u32 %s473, 4
          %s481 = int_to_ptr.vmem [resolvable:$true] %s480
          %486 = dma.hbm_to_vmem [thread:$0]  %s479, 32768, %s481, %s470, 4096, 1024, 64
        $region64: #{maskcorr_forward.1} parent=59 // pred_fallthru
          _
        // Predicated region
        $region65: #{maskcorr_forward.1} parent=59 // pred_check
          %p487 = pneg %p304
        $region66: #{maskcorr_forward.1} parent=59 // pred_check_branch
          %489 = sbr.rel (%p487) target = $region68
        $region67: #{maskcorr_forward.1} parent=59 // pred_region
          %s490 = sand.u32 %s27, 1
          %s491 = scalar_lea.sflag [#allocation18], %s490
          %s492 = sand.u32 %s294, 1
          %s493 = smul.addr %s492, 8
          %s494 = scalar_lea.vmem [#allocation19], %s493
          %s495 = smul.u32 8, %s27
          %s497 = ssub.s32 128, 128
          %498 = vsyncadd %s491, %s497
          %s499 = smul.addr %s495, 16
          %s500 = scalar_lea.hbm %s12, %s499
          %s502 = sshll.u32 %s494, 4
          %s503 = int_to_ptr.vmem [resolvable:$true] %s502
          %505 = dma.hbm_to_vmem [thread:$0]  %s500, 128, %s503, %s491
        $region68: #{maskcorr_forward.1} parent=59 // pred_fallthru
          _
      $region60: #{maskcorr_forward.1} parent=5 // pred_fallthru
        _
      %p506 = scmp.le.s32.totalorder 1, %s27
      %p507 = scmp.lt.s32.totalorder %s27, 5
      %p508 = pnand %p506, %p507
      %p509 = pneg %p508
      // Predicated region
      $region69: #{maskcorr_forward.1} parent=5 // pred_check
        _
      $region70: #{maskcorr_forward.1} parent=5 // pred_check_branch
        %511 = sbr.rel (%p508) target = $region72
      $region71: #{maskcorr_forward.1} parent=5 // pred_region
        %s512 = ssub.s32 %s27, 1
        // Predicated region
        $region73: #{maskcorr_forward.1} parent=71 // pred_check
          %p513 = pneg %p90
        $region74: #{maskcorr_forward.1} parent=71 // pred_check_branch
          %515 = sbr.rel (%p513) target = $region76
        $region75: #{maskcorr_forward.1} parent=71 // pred_region
          %516 = dma.done [#allocation4], 73728
        $region76: #{maskcorr_forward.1} parent=71 // pred_fallthru
          _
        // Predicated region
        $region77: #{maskcorr_forward.1} parent=71 // pred_check
          %p517 = pneg %p111
        $region78: #{maskcorr_forward.1} parent=71 // pred_check_branch
          %519 = sbr.rel (%p517) target = $region80
        $region79: #{maskcorr_forward.1} parent=71 // pred_region
          %520 = dma.done [#allocation6], 32
        $region80: #{maskcorr_forward.1} parent=71 // pred_fallthru
          _
        // Predicated region
        $region81: #{maskcorr_forward.1} parent=71 // pred_check
          %p521 = pneg %p132
        $region82: #{maskcorr_forward.1} parent=71 // pred_check_branch
          %523 = sbr.rel (%p521) target = $region84
        $region83: #{maskcorr_forward.1} parent=71 // pred_region
          %524 = dma.done [#allocation6], 32
        $region84: #{maskcorr_forward.1} parent=71 // pred_fallthru
          _
        // Predicated region
        $region85: #{maskcorr_forward.1} parent=71 // pred_check
          %p525 = pneg %p153
        $region86: #{maskcorr_forward.1} parent=71 // pred_check_branch
          %527 = sbr.rel (%p525) target = $region88
        $region87: #{maskcorr_forward.1} parent=71 // pred_region
          %528 = dma.done [#allocation9], 73728
        $region88: #{maskcorr_forward.1} parent=71 // pred_fallthru
          _
        // Predicated region
        $region89: #{maskcorr_forward.1} parent=71 // pred_check
          %p529 = pneg %p174
        $region90: #{maskcorr_forward.1} parent=71 // pred_check_branch
          %531 = sbr.rel (%p529) target = $region92
        $region91: #{maskcorr_forward.1} parent=71 // pred_region
          %532 = dma.done [#allocation9], 32
        $region92: #{maskcorr_forward.1} parent=71 // pred_fallthru
          _
        // Predicated region
        $region93: #{maskcorr_forward.1} parent=71 // pred_check
          %p533 = pneg %p195
        $region94: #{maskcorr_forward.1} parent=71 // pred_check_branch
          %535 = sbr.rel (%p533) target = $region96
        $region95: #{maskcorr_forward.1} parent=71 // pred_region
          %536 = dma.done [#allocation12], 32
        $region96: #{maskcorr_forward.1} parent=71 // pred_fallthru
          _
        // Predicated region
        $region97: #{maskcorr_forward.1} parent=71 // pred_check
          %p537 = pneg %p216
        $region98: #{maskcorr_forward.1} parent=71 // pred_check_branch
          %539 = sbr.rel (%p537) target = $region100
        $region99: #{maskcorr_forward.1} parent=71 // pred_region
          %540 = dma.done [#allocation12], 8192
        $region100: #{maskcorr_forward.1} parent=71 // pred_fallthru
          _
        // Predicated region
        $region101: #{maskcorr_forward.1} parent=71 // pred_check
          %p541 = pneg %p237
        $region102: #{maskcorr_forward.1} parent=71 // pred_check_branch
          %543 = sbr.rel (%p541) target = $region104
        $region103: #{maskcorr_forward.1} parent=71 // pred_region
          %544 = dma.done [#allocation15], 32
        $region104: #{maskcorr_forward.1} parent=71 // pred_fallthru
          _
        // Predicated region
        $region105: #{maskcorr_forward.1} parent=71 // pred_check
          %p545 = pneg %p258
        $region106: #{maskcorr_forward.1} parent=71 // pred_check_branch
          %547 = sbr.rel (%p545) target = $region108
        $region107: #{maskcorr_forward.1} parent=71 // pred_region
          %548 = dma.done [#allocation15], 32
        $region108: #{maskcorr_forward.1} parent=71 // pred_fallthru
          _
        %s549 = sand.u32 %s32, 1
        %s550 = scalar_lea.sflag [#allocation18], %s549
        %s551 = sand.u32 %s271, 1
        %s552 = smul.addr %s551, 2048
        %s553 = scalar_lea.vmem [#allocation17], %s552
        // Predicated region
        $region109: #{maskcorr_forward.1} parent=71 // pred_check
          %p554 = pneg %p284
        $region110: #{maskcorr_forward.1} parent=71 // pred_check_branch
          %556 = sbr.rel (%p554) target = $region112
        $region111: #{maskcorr_forward.1} parent=71 // pred_region
          %557 = dma.done %s550, 32768
        $region112: #{maskcorr_forward.1} parent=71 // pred_fallthru
          _
        %s558 = sand.u32 %s32, 1
        %s559 = scalar_lea.sflag [#allocation18], %s558
        %s560 = sand.u32 %s297, 1
        %s561 = smul.addr %s560, 8
        %s562 = scalar_lea.vmem [#allocation19], %s561
        // Predicated region
        $region113: #{maskcorr_forward.1} parent=71 // pred_check
          %p563 = pneg %p310
        $region114: #{maskcorr_forward.1} parent=71 // pred_check_branch
          %565 = sbr.rel (%p563) target = $region116
        $region115: #{maskcorr_forward.1} parent=71 // pred_region
          %566 = dma.done %s559, 128
        $region116: #{maskcorr_forward.1} parent=71 // pred_fallthru
          _
        %p567 = pneg %p48
        %p568 = pneg %p45
        %p569 = pneg %p69
        %p570 = pneg %p66
        %p571 = pneg %p90
        %p572 = pneg %p87
        %p573 = pneg %p111
        %p574 = pneg %p108
        %p575 = pneg %p132
        %p576 = pneg %p129
        %p577 = pneg %p153
        %p578 = pneg %p150
        %p579 = pneg %p174
        %p580 = pneg %p171
        %p581 = pneg %p195
        %p582 = pneg %p192
        %p583 = pneg %p216
        %p584 = pneg %p213
        %p585 = pneg %p237
        %p586 = pneg %p234
        %p587 = pneg %p258
        %p588 = pneg %p255
        %s589 = sand.u32 %s32, 1
        %s590 = scalar_lea.sflag [#allocation18], %s589
        %s591 = sand.u32 %s271, 1
        %s592 = smul.addr %s591, 2048
        %s593 = scalar_lea.vmem [#allocation17], %s592
        %p594 = pneg %p284
        %p595 = pneg %p281
        %s596 = sand.u32 %s32, 1
        %s597 = scalar_lea.sflag [#allocation18], %s596
        %s598 = sand.u32 %s297, 1
        %s599 = smul.addr %s598, 8
        %s600 = scalar_lea.vmem [#allocation19], %s599
        %p601 = pneg %p310
        %p602 = pneg %p307
        %p603 = pneg %p336
        %p604 = pneg %p333
        %s605 = sand.u32 %s323, 1
        %s606 = sand.u32 %s323, 1
        %s607 = smul.addr %s606, 512
        %s608 = scalar_lea.vmem [#allocation20], %s607
        %s609 = smul.u32 8, %s32
        %s610 = smul.u32 8, %s32
        %s611 = smul.u32 8, %s32
        %p612 = scmp.eq.s32.totalorder %s32, 0
        // Predicated region
        $region117: #{maskcorr_forward.1} parent=71 // pred_check
          %p613 = pneg %p612
        $region118: #{maskcorr_forward.1} parent=71 // pred_check_branch
          %615 = sbr.rel (%p613) target = $region120
        $region119: #{maskcorr_forward.1} parent=71 // pred_region
          %v616 = vld [vmem:[#allocation5] sm:$0x3]
          %v617 = vld [vmem:[#allocation7] sm:$0x3]
          %v618 = vld [vmem:[%s0] sm:$0x3f]
          %v619 = vld [vmem:[%s0 + $0x8] sm:$0x3f]
          %v620 = vld [vmem:[%s0 + $0x10] sm:$0x3f]
          %v621 = vld [vmem:[%s0 + $0x18] sm:$0x3f]
          %v622 = vld [vmem:[%s0 + $0x20] sm:$0x3f]
          %v623 = vld [vmem:[%s0 + $0x28] sm:$0x3f]
          %v624 = vld [vmem:[%s0 + $0x30] sm:$0x3f]
          %v625 = vld [vmem:[%s0 + $0x38] sm:$0x3f]
          %v626 = vld [vmem:[%s0 + $0x40] sm:$0x3f]
          %v627 = vld [vmem:[%s0 + $0x48] sm:$0x3f]
          %v628 = vld [vmem:[%s0 + $0x50] sm:$0x3f]
          %v629 = vld [vmem:[%s0 + $0x58] sm:$0x3f]
          %v630 = vld [vmem:[%s0 + $0x60] sm:$0x3f]
          %v631 = vld [vmem:[%s0 + $0x68] sm:$0x3f]
          %v632 = vld [vmem:[%s0 + $0x70] sm:$0x3f]
          %v633 = vld [vmem:[%s0 + $0x78] sm:$0x3f]
          %v634 = vld [vmem:[%s0 + $0x80] sm:$0x3f]
          %v635 = vld [vmem:[%s0 + $0x88] sm:$0x3f]
          %v636 = vld [vmem:[%s0 + $0x90] sm:$0x3f]
          %v637 = vld [vmem:[%s0 + $0x98] sm:$0x3f]
          %v638 = vld [vmem:[%s0 + $0xa0] sm:$0x3f]
          %v639 = vld [vmem:[%s0 + $0xa8] sm:$0x3f]
          %v640 = vld [vmem:[%s0 + $0xb0] sm:$0x3f]
          %v641 = vld [vmem:[%s0 + $0xb8] sm:$0x3f]
          %v658 = vcombine.low %v618, %v619
          %v659 = vcombine.low %v620, %v621
          %v660 = vcombine.low %v622, %v623
          %v661 = vcombine.low %v624, %v625
          %v662 = vcombine.low %v630, %v631
          %v663 = vcombine.low %v632, %v633
          %v664 = vcombine.low %v634, %v635
          %v665 = vcombine.low %v636, %v637
          %v666 = vcombine.high %v618, %v619
          %v667 = vcombine.high %v620, %v621
          %v668 = vcombine.high %v622, %v623
          %v669 = vcombine.high %v624, %v625
          %v670 = vcombine.high %v630, %v631
          %v671 = vcombine.high %v632, %v633
          %v672 = vcombine.high %v634, %v635
          %v673 = vcombine.high %v636, %v637
          %vm674 = vcmask 1042432
          %vm675 = vcmask 1046532
          %vm676 = vmor %vm674, %vm675
          %v677 = vrot.slane %v658, 5
          %v678 = vrot.slane %v677, 4
          %v679 = vrot.slane %v666, 5
          %v680 = vsel %vm676, %v678, %v679
          %v681 = vrot.slane %v659, 5
          %v682 = vrot.slane %v681, 4
          %v683 = vrot.slane %v667, 5
          %v684 = vsel %vm676, %v682, %v683
          %v685 = vrot.slane %v660, 5
          %v686 = vrot.slane %v685, 4
          %v687 = vrot.slane %v668, 5
          %v688 = vsel %vm676, %v686, %v687
          %v689 = vrot.slane %v661, 5
          %v690 = vrot.slane %v689, 4
          %v691 = vrot.slane %v669, 5
          %v692 = vsel %vm676, %v690, %v691
          %v693 = vrot.slane %v662, 5
          %v694 = vrot.slane %v693, 4
          %v695 = vrot.slane %v670, 5
          %v696 = vsel %vm676, %v694, %v695
          %v697 = vrot.slane %v663, 5
          %v698 = vrot.slane %v697, 4
          %v699 = vrot.slane %v671, 5
          %v700 = vsel %vm676, %v698, %v699
          %v701 = vrot.slane %v664, 5
          %v702 = vrot.slane %v701, 4
          %v703 = vrot.slane %v672, 5
          %v704 = vsel %vm676, %v702, %v703
          %v705 = vrot.slane %v665, 5
          %v706 = vrot.slane %v705, 4
          %v707 = vrot.slane %v673, 5
          %v708 = vsel %vm676, %v706, %v707
          %vm709 = vcmask 1041408
          %vm710 = vcmask 1045508
          %vm711 = vmor %vm709, %vm710
          %v712 = vrot.slane %v658, 6
          %v713 = vrot.slane %v712, 4
          %v714 = vrot.slane %v666, 6
          %v715 = vsel %vm711, %v713, %v714
          %v716 = vrot.slane %v659, 6
          %v717 = vrot.slane %v716, 4
          %v718 = vrot.slane %v667, 6
          %v719 = vsel %vm711, %v717, %v718
          %v720 = vrot.slane %v660, 6
          %v721 = vrot.slane %v720, 4
          %v722 = vrot.slane %v668, 6
          %v723 = vsel %vm711, %v721, %v722
          %v724 = vrot.slane %v661, 6
          %v725 = vrot.slane %v724, 4
          %v726 = vrot.slane %v669, 6
          %v727 = vsel %vm711, %v725, %v726
          %v728 = vrot.slane %v662, 6
          %v729 = vrot.slane %v728, 4
          %v730 = vrot.slane %v670, 6
          %v731 = vsel %vm711, %v729, %v730
          %v732 = vrot.slane %v663, 6
          %v733 = vrot.slane %v732, 4
          %v734 = vrot.slane %v671, 6
          %v735 = vsel %vm711, %v733, %v734
          %v736 = vrot.slane %v664, 6
          %v737 = vrot.slane %v736, 4
          %v738 = vrot.slane %v672, 6
          %v739 = vsel %vm711, %v737, %v738
          %v740 = vrot.slane %v665, 6
          %v741 = vrot.slane %v740, 4
          %v742 = vrot.slane %v673, 6
          %v743 = vsel %vm711, %v741, %v742
          %v748 = vcombine.low %v626, %v627
          %v749 = vcombine.low %v638, %v639
          %v750 = vcombine.high %v626, %v627
          %v751 = vcombine.high %v638, %v639
          %v752 = vrot.slane %v748, 5
          %v753 = vrot.slane %v752, 4
          %v754 = vrot.slane %v750, 5
          %v755 = vsel %vm676, %v753, %v754
          %v756 = vrot.slane %v749, 5
          %v757 = vrot.slane %v756, 4
          %v758 = vrot.slane %v751, 5
          %v759 = vsel %vm676, %v757, %v758
          %v760 = vrot.slane %v748, 6
          %v761 = vrot.slane %v760, 4
          %v762 = vrot.slane %v750, 6
          %v763 = vsel %vm711, %v761, %v762
          %v764 = vrot.slane %v749, 6
          %v765 = vrot.slane %v764, 4
          %v766 = vrot.slane %v751, 6
          %v767 = vsel %vm711, %v765, %v766
          %v772 = vcombine.low %v628, %v629
          %v773 = vcombine.low %v640, %v641
          %v774 = vcombine.high %v628, %v629
          %v775 = vcombine.high %v640, %v641
          %v776 = vrot.slane %v772, 5
          %v777 = vrot.slane %v776, 4
          %v778 = vrot.slane %v774, 5
          %v779 = vsel %vm676, %v777, %v778
          %v780 = vrot.slane %v773, 5
          %v781 = vrot.slane %v780, 4
          %v782 = vrot.slane %v775, 5
          %v783 = vsel %vm676, %v781, %v782
          %v784 = vrot.slane %v772, 6
          %v785 = vrot.slane %v784, 4
          %v786 = vrot.slane %v774, 6
          %v787 = vsel %vm711, %v785, %v786
          %v788 = vrot.slane %v773, 6
          %v789 = vrot.slane %v788, 4
          %v790 = vrot.slane %v775, 6
          %v791 = vsel %vm711, %v789, %v790
          %v792 = vcombine.low %v658, %v659
          %v793 = vcombine.high %v658, %v659
          %v794 = vcombine.low %v660, %v661
          %v795 = vcombine.high %v660, %v661
          %v796 = vcombine.low %v662, %v663
          %v797 = vcombine.high %v662, %v663
          %v798 = vcombine.low %v664, %v665
          %v799 = vcombine.high %v664, %v665
          %v808 = vcombine.low %v680, %v684
          %v809 = vcombine.high %v680, %v684
          %v810 = vcombine.low %v688, %v692
          %v811 = vcombine.high %v688, %v692
          %v812 = vcombine.low %v696, %v700
          %v813 = vcombine.high %v696, %v700
          %v814 = vcombine.low %v704, %v708
          %v815 = vcombine.high %v704, %v708
          %v824 = vcombine.low %v715, %v719
          %v825 = vcombine.high %v715, %v719
          %v826 = vcombine.low %v723, %v727
          %v827 = vcombine.high %v723, %v727
          %v828 = vcombine.low %v731, %v735
          %v829 = vcombine.high %v731, %v735
          %v830 = vcombine.low %v739, %v743
          %v831 = vcombine.high %v739, %v743
          %v840 = vcombine.low %v659, %v660
          %v841 = vcombine.high %v659, %v660
          %v842 = vcombine.low %v661, %v748
          %v843 = vcombine.high %v661, %v748
          %v844 = vcombine.low %v663, %v664
          %v845 = vcombine.high %v663, %v664
          %v846 = vcombine.low %v665, %v749
          %v847 = vcombine.high %v665, %v749
          %v856 = vcombine.low %v684, %v688
          %v857 = vcombine.high %v684, %v688
          %v858 = vcombine.low %v692, %v755
          %v859 = vcombine.high %v692, %v755
          %v860 = vcombine.low %v700, %v704
          %v861 = vcombine.high %v700, %v704
          %v862 = vcombine.low %v708, %v759
          %v863 = vcombine.high %v708, %v759
          %v872 = vcombine.low %v719, %v723
          %v873 = vcombine.high %v719, %v723
          %v874 = vcombine.low %v727, %v763
          %v875 = vcombine.high %v727, %v763
          %v876 = vcombine.low %v735, %v739
          %v877 = vcombine.high %v735, %v739
          %v878 = vcombine.low %v743, %v767
          %v879 = vcombine.high %v743, %v767
          %v888 = vcombine.low %v748, %v772
          %v889 = vcombine.high %v748, %v772
          %v890 = vcombine.low %v749, %v773
          %v891 = vcombine.high %v749, %v773
          %v896 = vcombine.low %v755, %v779
          %v897 = vcombine.high %v755, %v779
          %v898 = vcombine.low %v759, %v783
          %v899 = vcombine.high %v759, %v783
          %v904 = vcombine.low %v763, %v787
          %v905 = vcombine.high %v763, %v787
          %v906 = vcombine.low %v767, %v791
          %v907 = vcombine.high %v767, %v791
          %v912 = vld [vmem:[#allocation3] sm:$0xff]
          %v913 = vld [vmem:[#allocation3 + $0x8] sm:$0xff]
          %v914 = vld [vmem:[#allocation3 + $0x10] sm:$0xff]
          %v915 = vld [vmem:[#allocation3 + $0x18] sm:$0xff]
          %v916 = vld [vmem:[#allocation3 + $0x20] sm:$0xff]
          %v917 = vld [vmem:[#allocation3 + $0x28] sm:$0xff]
          %v918 = vld [vmem:[#allocation3 + $0x30] sm:$0xff]
          %v919 = vld [vmem:[#allocation3 + $0x38] sm:$0xff]
          %v920 = vld [vmem:[#allocation3 + $0x40] sm:$0xff]
          %v921 = vld [vmem:[#allocation3 + $0x48] sm:$0xff]
          %v922 = vld [vmem:[#allocation3 + $0x50] sm:$0xff]
          %v923 = vld [vmem:[#allocation3 + $0x58] sm:$0xff]
          %v924 = vld [vmem:[#allocation3 + $0x60] sm:$0xff]
          %v925 = vld [vmem:[#allocation3 + $0x68] sm:$0xff]
          %v926 = vld [vmem:[#allocation3 + $0x70] sm:$0xff]
          %v927 = vld [vmem:[#allocation3 + $0x78] sm:$0xff]
          %v928 = vld [vmem:[#allocation3 + $0x80] sm:$0xff]
          %v929 = vld [vmem:[#allocation3 + $0x88] sm:$0xff]
          %v930 = vld [vmem:[#allocation3 + $0x90] sm:$0xff]
          %v931 = vld [vmem:[#allocation3 + $0x98] sm:$0xff]
          %v932 = vld [vmem:[#allocation3 + $0xa0] sm:$0xff]
          %v933 = vld [vmem:[#allocation3 + $0xa8] sm:$0xff]
          %v934 = vld [vmem:[#allocation3 + $0xb0] sm:$0xff]
          %v935 = vld [vmem:[#allocation3 + $0xb8] sm:$0xff]
          %v936 = vld [vmem:[#allocation3 + $0xc0] sm:$0xff]
          %v937 = vld [vmem:[#allocation3 + $0xc8] sm:$0xff]
          %v938 = vld [vmem:[#allocation3 + $0xd0] sm:$0xff]
          %v939 = vld [vmem:[#allocation3 + $0xd8] sm:$0xff]
          %v940 = vld [vmem:[#allocation3 + $0xe0] sm:$0xff]
          %v941 = vld [vmem:[#allocation3 + $0xe8] sm:$0xff]
          %v942 = vld [vmem:[#allocation3 + $0xf0] sm:$0xff]
          %v943 = vld [vmem:[#allocation3 + $0xf8] sm:$0xff]
          %v944 = vld [vmem:[#allocation3 + $0x100] sm:$0xff]
          %v945 = vld [vmem:[#allocation3 + $0x108] sm:$0xff]
          %v946 = vld [vmem:[#allocation3 + $0x110] sm:$0xff]
          %v947 = vld [vmem:[#allocation3 + $0x118] sm:$0xff]
          %v948 = vld [vmem:[#allocation3 + $0x120] sm:$0xff]
          %v949 = vld [vmem:[#allocation3 + $0x128] sm:$0xff]
          %v950 = vld [vmem:[#allocation3 + $0x130] sm:$0xff]
          %v951 = vld [vmem:[#allocation3 + $0x138] sm:$0xff]
          %v952 = vld [vmem:[#allocation3 + $0x140] sm:$0xff]
          %v953 = vld [vmem:[#allocation3 + $0x148] sm:$0xff]
          %v954 = vld [vmem:[#allocation3 + $0x150] sm:$0xff]
          %v955 = vld [vmem:[#allocation3 + $0x158] sm:$0xff]
          %v956 = vld [vmem:[#allocation3 + $0x160] sm:$0xff]
          %v957 = vld [vmem:[#allocation3 + $0x168] sm:$0xff]
          %v958 = vld [vmem:[#allocation3 + $0x170] sm:$0xff]
          %v959 = vld [vmem:[#allocation3 + $0x178] sm:$0xff]
          %v960 = vld [vmem:[#allocation3 + $0x180] sm:$0xff]
          %v961 = vld [vmem:[#allocation3 + $0x188] sm:$0xff]
          %v962 = vld [vmem:[#allocation3 + $0x190] sm:$0xff]
          %v963 = vld [vmem:[#allocation3 + $0x198] sm:$0xff]
          %v964 = vld [vmem:[#allocation3 + $0x1a0] sm:$0xff]
          %v965 = vld [vmem:[#allocation3 + $0x1a8] sm:$0xff]
          %v966 = vld [vmem:[#allocation3 + $0x1b0] sm:$0xff]
          %v967 = vld [vmem:[#allocation3 + $0x1b8] sm:$0xff]
          %v968 = vld [vmem:[#allocation3 + $0x1c0] sm:$0xff]
          %v969 = vld [vmem:[#allocation3 + $0x1c8] sm:$0xff]
          %v970 = vld [vmem:[#allocation3 + $0x1d0] sm:$0xff]
          %v971 = vld [vmem:[#allocation3 + $0x1d8] sm:$0xff]
          %v972 = vld [vmem:[#allocation3 + $0x1e0] sm:$0xff]
          %v973 = vld [vmem:[#allocation3 + $0x1e8] sm:$0xff]
          %v974 = vld [vmem:[#allocation3 + $0x1f0] sm:$0xff]
          %v975 = vld [vmem:[#allocation3 + $0x1f8] sm:$0xff]
          %v976 = vld [vmem:[#allocation3 + $0x200] sm:$0xff]
          %v977 = vld [vmem:[#allocation3 + $0x208] sm:$0xff]
          %v978 = vld [vmem:[#allocation3 + $0x210] sm:$0xff]
          %v979 = vld [vmem:[#allocation3 + $0x218] sm:$0xff]
          %v980 = vld [vmem:[#allocation3 + $0x220] sm:$0xff]
          %v981 = vld [vmem:[#allocation3 + $0x228] sm:$0xff]
          %v982 = vld [vmem:[#allocation3 + $0x230] sm:$0xff]
          %v983 = vld [vmem:[#allocation3 + $0x238] sm:$0xff]
          %v984 = vld [vmem:[#allocation3 + $0x240] sm:$0xff]
          %v985 = vld [vmem:[#allocation3 + $0x248] sm:$0xff]
          %v986 = vld [vmem:[#allocation3 + $0x250] sm:$0xff]
          %v987 = vld [vmem:[#allocation3 + $0x258] sm:$0xff]
          %v988 = vld [vmem:[#allocation3 + $0x260] sm:$0xff]
          %v989 = vld [vmem:[#allocation3 + $0x268] sm:$0xff]
          %v990 = vld [vmem:[#allocation3 + $0x270] sm:$0xff]
          %v991 = vld [vmem:[#allocation3 + $0x278] sm:$0xff]
          %v992 = vld [vmem:[#allocation3 + $0x280] sm:$0xff]
          %v993 = vld [vmem:[#allocation3 + $0x288] sm:$0xff]
          %v994 = vld [vmem:[#allocation3 + $0x290] sm:$0xff]
          %v995 = vld [vmem:[#allocation3 + $0x298] sm:$0xff]
          %v996 = vld [vmem:[#allocation3 + $0x2a0] sm:$0xff]
          %v997 = vld [vmem:[#allocation3 + $0x2a8] sm:$0xff]
          %v998 = vld [vmem:[#allocation3 + $0x2b0] sm:$0xff]
          %v999 = vld [vmem:[#allocation3 + $0x2b8] sm:$0xff]
          %v1000 = vld [vmem:[#allocation3 + $0x2c0] sm:$0xff]
          %v1001 = vld [vmem:[#allocation3 + $0x2c8] sm:$0xff]
          %v1002 = vld [vmem:[#allocation3 + $0x2d0] sm:$0xff]
          %v1003 = vld [vmem:[#allocation3 + $0x2d8] sm:$0xff]
          %v1004 = vld [vmem:[#allocation3 + $0x2e0] sm:$0xff]
          %v1005 = vld [vmem:[#allocation3 + $0x2e8] sm:$0xff]
          %v1006 = vld [vmem:[#allocation3 + $0x2f0] sm:$0xff]
          %v1007 = vld [vmem:[#allocation3 + $0x2f8] sm:$0xff]
          %v1008 = vld [vmem:[#allocation3 + $0x300] sm:$0xff]
          %v1009 = vld [vmem:[#allocation3 + $0x308] sm:$0xff]
          %v1010 = vld [vmem:[#allocation3 + $0x310] sm:$0xff]
          %v1011 = vld [vmem:[#allocation3 + $0x318] sm:$0xff]
          %v1012 = vld [vmem:[#allocation3 + $0x320] sm:$0xff]
          %v1013 = vld [vmem:[#allocation3 + $0x328] sm:$0xff]
          %v1014 = vld [vmem:[#allocation3 + $0x330] sm:$0xff]
          %v1015 = vld [vmem:[#allocation3 + $0x338] sm:$0xff]
          %v1016 = vld [vmem:[#allocation3 + $0x340] sm:$0xff]
          %v1017 = vld [vmem:[#allocation3 + $0x348] sm:$0xff]
          %v1018 = vld [vmem:[#allocation3 + $0x350] sm:$0xff]
          %v1019 = vld [vmem:[#allocation3 + $0x358] sm:$0xff]
          %v1020 = vld [vmem:[#allocation3 + $0x360] sm:$0xff]
          %v1021 = vld [vmem:[#allocation3 + $0x368] sm:$0xff]
          %v1022 = vld [vmem:[#allocation3 + $0x370] sm:$0xff]
          %v1023 = vld [vmem:[#allocation3 + $0x378] sm:$0xff]
          %v1024 = vld [vmem:[#allocation3 + $0x380] sm:$0xff]
          %v1025 = vld [vmem:[#allocation3 + $0x388] sm:$0xff]
          %v1026 = vld [vmem:[#allocation3 + $0x390] sm:$0xff]
          %v1027 = vld [vmem:[#allocation3 + $0x398] sm:$0xff]
          %v1028 = vld [vmem:[#allocation3 + $0x3a0] sm:$0xff]
          %v1029 = vld [vmem:[#allocation3 + $0x3a8] sm:$0xff]
          %v1030 = vld [vmem:[#allocation3 + $0x3b0] sm:$0xff]
          %v1031 = vld [vmem:[#allocation3 + $0x3b8] sm:$0xff]
          %v1032 = vld [vmem:[#allocation3 + $0x3c0] sm:$0xff]
          %v1033 = vld [vmem:[#allocation3 + $0x3c8] sm:$0xff]
          %v1034 = vld [vmem:[#allocation3 + $0x3d0] sm:$0xff]
          %v1035 = vld [vmem:[#allocation3 + $0x3d8] sm:$0xff]
          %v1036 = vld [vmem:[#allocation3 + $0x3e0] sm:$0xff]
          %v1037 = vld [vmem:[#allocation3 + $0x3e8] sm:$0xff]
          %v1038 = vld [vmem:[#allocation3 + $0x3f0] sm:$0xff]
          %v1039 = vld [vmem:[#allocation3 + $0x3f8] sm:$0xff]
          %v1040 = vld [vmem:[#allocation3 + $0x400] sm:$0xff]
          %v1041 = vld [vmem:[#allocation3 + $0x408] sm:$0xff]
          %v1042 = vld [vmem:[#allocation3 + $0x410] sm:$0xff]
          %v1043 = vld [vmem:[#allocation3 + $0x418] sm:$0xff]
          %v1044 = vld [vmem:[#allocation3 + $0x420] sm:$0xff]
          %v1045 = vld [vmem:[#allocation3 + $0x428] sm:$0xff]
          %v1046 = vld [vmem:[#allocation3 + $0x430] sm:$0xff]
          %v1047 = vld [vmem:[#allocation3 + $0x438] sm:$0xff]
          %v1048 = vld [vmem:[#allocation3 + $0x440] sm:$0xff]
          %v1049 = vld [vmem:[#allocation3 + $0x448] sm:$0xff]
          %v1050 = vld [vmem:[#allocation3 + $0x450] sm:$0xff]
          %v1051 = vld [vmem:[#allocation3 + $0x458] sm:$0xff]
          %v1052 = vld [vmem:[#allocation3 + $0x460] sm:$0xff]
          %v1053 = vld [vmem:[#allocation3 + $0x468] sm:$0xff]
          %v1054 = vld [vmem:[#allocation3 + $0x470] sm:$0xff]
          %v1055 = vld [vmem:[#allocation3 + $0x478] sm:$0xff]
          %v1056 = vld [vmem:[#allocation3 + $0x480] sm:$0xff]
          %v1057 = vld [vmem:[#allocation3 + $0x488] sm:$0xff]
          %v1058 = vld [vmem:[#allocation3 + $0x490] sm:$0xff]
          %v1059 = vld [vmem:[#allocation3 + $0x498] sm:$0xff]
          %v1060 = vld [vmem:[#allocation3 + $0x4a0] sm:$0xff]
          %v1061 = vld [vmem:[#allocation3 + $0x4a8] sm:$0xff]
          %v1062 = vld [vmem:[#allocation3 + $0x4b0] sm:$0xff]
          %v1063 = vld [vmem:[#allocation3 + $0x4b8] sm:$0xff]
          %v1064 = vld [vmem:[#allocation3 + $0x4c0] sm:$0xff]
          %v1065 = vld [vmem:[#allocation3 + $0x4c8] sm:$0xff]
          %v1066 = vld [vmem:[#allocation3 + $0x4d0] sm:$0xff]
          %v1067 = vld [vmem:[#allocation3 + $0x4d8] sm:$0xff]
          %v1068 = vld [vmem:[#allocation3 + $0x4e0] sm:$0xff]
          %v1069 = vld [vmem:[#allocation3 + $0x4e8] sm:$0xff]
          %v1070 = vld [vmem:[#allocation3 + $0x4f0] sm:$0xff]
          %v1071 = vld [vmem:[#allocation3 + $0x4f8] sm:$0xff]
          %v1072 = vld [vmem:[#allocation3 + $0x500] sm:$0xff]
          %v1073 = vld [vmem:[#allocation3 + $0x508] sm:$0xff]
          %v1074 = vld [vmem:[#allocation3 + $0x510] sm:$0xff]
          %v1075 = vld [vmem:[#allocation3 + $0x518] sm:$0xff]
          %v1076 = vld [vmem:[#allocation3 + $0x520] sm:$0xff]
          %v1077 = vld [vmem:[#allocation3 + $0x528] sm:$0xff]
          %v1078 = vld [vmem:[#allocation3 + $0x530] sm:$0xff]
          %v1079 = vld [vmem:[#allocation3 + $0x538] sm:$0xff]
          %v1080 = vld [vmem:[#allocation3 + $0x540] sm:$0xff]
          %v1081 = vld [vmem:[#allocation3 + $0x548] sm:$0xff]
          %v1082 = vld [vmem:[#allocation3 + $0x550] sm:$0xff]
          %v1083 = vld [vmem:[#allocation3 + $0x558] sm:$0xff]
          %v1084 = vld [vmem:[#allocation3 + $0x560] sm:$0xff]
          %v1085 = vld [vmem:[#allocation3 + $0x568] sm:$0xff]
          %v1086 = vld [vmem:[#allocation3 + $0x570] sm:$0xff]
          %v1087 = vld [vmem:[#allocation3 + $0x578] sm:$0xff]
          %v1088 = vld [vmem:[#allocation3 + $0x580] sm:$0xff]
          %v1089 = vld [vmem:[#allocation3 + $0x588] sm:$0xff]
          %v1090 = vld [vmem:[#allocation3 + $0x590] sm:$0xff]
          %v1091 = vld [vmem:[#allocation3 + $0x598] sm:$0xff]
          %v1092 = vld [vmem:[#allocation3 + $0x5a0] sm:$0xff]
          %v1093 = vld [vmem:[#allocation3 + $0x5a8] sm:$0xff]
          %v1094 = vld [vmem:[#allocation3 + $0x5b0] sm:$0xff]
          %v1095 = vld [vmem:[#allocation3 + $0x5b8] sm:$0xff]
          %v1096 = vld [vmem:[#allocation3 + $0x5c0] sm:$0xff]
          %v1097 = vld [vmem:[#allocation3 + $0x5c8] sm:$0xff]
          %v1098 = vld [vmem:[#allocation3 + $0x5d0] sm:$0xff]
          %v1099 = vld [vmem:[#allocation3 + $0x5d8] sm:$0xff]
          %v1100 = vld [vmem:[#allocation3 + $0x5e0] sm:$0xff]
          %v1101 = vld [vmem:[#allocation3 + $0x5e8] sm:$0xff]
          %v1102 = vld [vmem:[#allocation3 + $0x5f0] sm:$0xff]
          %v1103 = vld [vmem:[#allocation3 + $0x5f8] sm:$0xff]
          %v1104 = vld [vmem:[#allocation3 + $0x600] sm:$0xff]
          %v1105 = vld [vmem:[#allocation3 + $0x608] sm:$0xff]
          %v1106 = vld [vmem:[#allocation3 + $0x610] sm:$0xff]
          %v1107 = vld [vmem:[#allocation3 + $0x618] sm:$0xff]
          %v1108 = vld [vmem:[#allocation3 + $0x620] sm:$0xff]
          %v1109 = vld [vmem:[#allocation3 + $0x628] sm:$0xff]
          %v1110 = vld [vmem:[#allocation3 + $0x630] sm:$0xff]
          %v1111 = vld [vmem:[#allocation3 + $0x638] sm:$0xff]
          %v1112 = vld [vmem:[#allocation3 + $0x640] sm:$0xff]
          %v1113 = vld [vmem:[#allocation3 + $0x648] sm:$0xff]
          %v1114 = vld [vmem:[#allocation3 + $0x650] sm:$0xff]
          %v1115 = vld [vmem:[#allocation3 + $0x658] sm:$0xff]
          %v1116 = vld [vmem:[#allocation3 + $0x660] sm:$0xff]
          %v1117 = vld [vmem:[#allocation3 + $0x668] sm:$0xff]
          %v1118 = vld [vmem:[#allocation3 + $0x670] sm:$0xff]
          %v1119 = vld [vmem:[#allocation3 + $0x678] sm:$0xff]
          %v1120 = vld [vmem:[#allocation3 + $0x680] sm:$0xff]
          %v1121 = vld [vmem:[#allocation3 + $0x688] sm:$0xff]
          %v1122 = vld [vmem:[#allocation3 + $0x690] sm:$0xff]
          %v1123 = vld [vmem:[#allocation3 + $0x698] sm:$0xff]
          %v1124 = vld [vmem:[#allocation3 + $0x6a0] sm:$0xff]
          %v1125 = vld [vmem:[#allocation3 + $0x6a8] sm:$0xff]
          %v1126 = vld [vmem:[#allocation3 + $0x6b0] sm:$0xff]
          %v1127 = vld [vmem:[#allocation3 + $0x6b8] sm:$0xff]
          %v1128 = vld [vmem:[#allocation3 + $0x6c0] sm:$0xff]
          %v1129 = vld [vmem:[#allocation3 + $0x6c8] sm:$0xff]
          %v1130 = vld [vmem:[#allocation3 + $0x6d0] sm:$0xff]
          %v1131 = vld [vmem:[#allocation3 + $0x6d8] sm:$0xff]
          %v1132 = vld [vmem:[#allocation3 + $0x6e0] sm:$0xff]
          %v1133 = vld [vmem:[#allocation3 + $0x6e8] sm:$0xff]
          %v1134 = vld [vmem:[#allocation3 + $0x6f0] sm:$0xff]
          %v1135 = vld [vmem:[#allocation3 + $0x6f8] sm:$0xff]
          %v1136 = vld [vmem:[#allocation3 + $0x700] sm:$0xff]
          %v1137 = vld [vmem:[#allocation3 + $0x708] sm:$0xff]
          %v1138 = vld [vmem:[#allocation3 + $0x710] sm:$0xff]
          %v1139 = vld [vmem:[#allocation3 + $0x718] sm:$0xff]
          %v1140 = vld [vmem:[#allocation3 + $0x720] sm:$0xff]
          %v1141 = vld [vmem:[#allocation3 + $0x728] sm:$0xff]
          %v1142 = vld [vmem:[#allocation3 + $0x730] sm:$0xff]
          %v1143 = vld [vmem:[#allocation3 + $0x738] sm:$0xff]
          %v1144 = vld [vmem:[#allocation3 + $0x740] sm:$0xff]
          %v1145 = vld [vmem:[#allocation3 + $0x748] sm:$0xff]
          %v1146 = vld [vmem:[#allocation3 + $0x750] sm:$0xff]
          %v1147 = vld [vmem:[#allocation3 + $0x758] sm:$0xff]
          %v1148 = vld [vmem:[#allocation3 + $0x760] sm:$0xff]
          %v1149 = vld [vmem:[#allocation3 + $0x768] sm:$0xff]
          %v1150 = vld [vmem:[#allocation3 + $0x770] sm:$0xff]
          %v1151 = vld [vmem:[#allocation3 + $0x778] sm:$0xff]
          %v1152 = vld [vmem:[#allocation3 + $0x780] sm:$0xff]
          %v1153 = vld [vmem:[#allocation3 + $0x788] sm:$0xff]
          %v1154 = vld [vmem:[#allocation3 + $0x790] sm:$0xff]
          %v1155 = vld [vmem:[#allocation3 + $0x798] sm:$0xff]
          %v1156 = vld [vmem:[#allocation3 + $0x7a0] sm:$0xff]
          %v1157 = vld [vmem:[#allocation3 + $0x7a8] sm:$0xff]
          %v1158 = vld [vmem:[#allocation3 + $0x7b0] sm:$0xff]
          %v1159 = vld [vmem:[#allocation3 + $0x7b8] sm:$0xff]
          %v1160 = vld [vmem:[#allocation3 + $0x7c0] sm:$0xff]
          %v1161 = vld [vmem:[#allocation3 + $0x7c8] sm:$0xff]
          %v1162 = vld [vmem:[#allocation3 + $0x7d0] sm:$0xff]
          %v1163 = vld [vmem:[#allocation3 + $0x7d8] sm:$0xff]
          %v1164 = vld [vmem:[#allocation3 + $0x7e0] sm:$0xff]
          %v1165 = vld [vmem:[#allocation3 + $0x7e8] sm:$0xff]
          %v1166 = vld [vmem:[#allocation3 + $0x7f0] sm:$0xff]
          %v1167 = vld [vmem:[#allocation3 + $0x7f8] sm:$0xff]
          %v1168 = vld [vmem:[#allocation3 + $0x800] sm:$0xff]
          %v1169 = vld [vmem:[#allocation3 + $0x808] sm:$0xff]
          %v1170 = vld [vmem:[#allocation3 + $0x810] sm:$0xff]
          %v1171 = vld [vmem:[#allocation3 + $0x818] sm:$0xff]
          %v1172 = vld [vmem:[#allocation3 + $0x820] sm:$0xff]
          %v1173 = vld [vmem:[#allocation3 + $0x828] sm:$0xff]
          %v1174 = vld [vmem:[#allocation3 + $0x830] sm:$0xff]
          %v1175 = vld [vmem:[#allocation3 + $0x838] sm:$0xff]
          %v1176 = vld [vmem:[#allocation3 + $0x840] sm:$0xff]
          %v1177 = vld [vmem:[#allocation3 + $0x848] sm:$0xff]
          %v1178 = vld [vmem:[#allocation3 + $0x850] sm:$0xff]
          %v1179 = vld [vmem:[#allocation3 + $0x858] sm:$0xff]
          %v1180 = vld [vmem:[#allocation3 + $0x860] sm:$0xff]
          %v1181 = vld [vmem:[#allocation3 + $0x868] sm:$0xff]
          %v1182 = vld [vmem:[#allocation3 + $0x870] sm:$0xff]
          %v1183 = vld [vmem:[#allocation3 + $0x878] sm:$0xff]
          %v1184 = vld [vmem:[#allocation3 + $0x880] sm:$0xff]
          %v1185 = vld [vmem:[#allocation3 + $0x888] sm:$0xff]
          %v1186 = vld [vmem:[#allocation3 + $0x890] sm:$0xff]
          %v1187 = vld [vmem:[#allocation3 + $0x898] sm:$0xff]
          %v1188 = vld [vmem:[#allocation3 + $0x8a0] sm:$0xff]
          %v1189 = vld [vmem:[#allocation3 + $0x8a8] sm:$0xff]
          %v1190 = vld [vmem:[#allocation3 + $0x8b0] sm:$0xff]
          %v1191 = vld [vmem:[#allocation3 + $0x8b8] sm:$0xff]
          %v1192 = vld [vmem:[#allocation3 + $0x8c0] sm:$0xff]
          %v1193 = vld [vmem:[#allocation3 + $0x8c8] sm:$0xff]
          %v1194 = vld [vmem:[#allocation3 + $0x8d0] sm:$0xff]
          %v1195 = vld [vmem:[#allocation3 + $0x8d8] sm:$0xff]
          %v1196 = vld [vmem:[#allocation3 + $0x8e0] sm:$0xff]
          %v1197 = vld [vmem:[#allocation3 + $0x8e8] sm:$0xff]
          %v1198 = vld [vmem:[#allocation3 + $0x8f0] sm:$0xff]
          %v1199 = vld [vmem:[#allocation3 + $0x8f8] sm:$0xff]
          %v1200 = vld [vmem:[#allocation3 + $0x900] sm:$0xff]
          %v1201 = vld [vmem:[#allocation3 + $0x908] sm:$0xff]
          %v1202 = vld [vmem:[#allocation3 + $0x910] sm:$0xff]
          %v1203 = vld [vmem:[#allocation3 + $0x918] sm:$0xff]
          %v1204 = vld [vmem:[#allocation3 + $0x920] sm:$0xff]
          %v1205 = vld [vmem:[#allocation3 + $0x928] sm:$0xff]
          %v1206 = vld [vmem:[#allocation3 + $0x930] sm:$0xff]
          %v1207 = vld [vmem:[#allocation3 + $0x938] sm:$0xff]
          %v1208 = vld [vmem:[#allocation3 + $0x940] sm:$0xff]
          %v1209 = vld [vmem:[#allocation3 + $0x948] sm:$0xff]
          %v1210 = vld [vmem:[#allocation3 + $0x950] sm:$0xff]
          %v1211 = vld [vmem:[#allocation3 + $0x958] sm:$0xff]
          %v1212 = vld [vmem:[#allocation3 + $0x960] sm:$0xff]
          %v1213 = vld [vmem:[#allocation3 + $0x968] sm:$0xff]
          %v1214 = vld [vmem:[#allocation3 + $0x970] sm:$0xff]
          %v1215 = vld [vmem:[#allocation3 + $0x978] sm:$0xff]
          %v1216 = vld [vmem:[#allocation3 + $0x980] sm:$0xff]
          %v1217 = vld [vmem:[#allocation3 + $0x988] sm:$0xff]
          %v1218 = vld [vmem:[#allocation3 + $0x990] sm:$0xff]
          %v1219 = vld [vmem:[#allocation3 + $0x998] sm:$0xff]
          %v1220 = vld [vmem:[#allocation3 + $0x9a0] sm:$0xff]
          %v1221 = vld [vmem:[#allocation3 + $0x9a8] sm:$0xff]
          %v1222 = vld [vmem:[#allocation3 + $0x9b0] sm:$0xff]
          %v1223 = vld [vmem:[#allocation3 + $0x9b8] sm:$0xff]
          %v1224 = vld [vmem:[#allocation3 + $0x9c0] sm:$0xff]
          %v1225 = vld [vmem:[#allocation3 + $0x9c8] sm:$0xff]
          %v1226 = vld [vmem:[#allocation3 + $0x9d0] sm:$0xff]
          %v1227 = vld [vmem:[#allocation3 + $0x9d8] sm:$0xff]
          %v1228 = vld [vmem:[#allocation3 + $0x9e0] sm:$0xff]
          %v1229 = vld [vmem:[#allocation3 + $0x9e8] sm:$0xff]
          %v1230 = vld [vmem:[#allocation3 + $0x9f0] sm:$0xff]
          %v1231 = vld [vmem:[#allocation3 + $0x9f8] sm:$0xff]
          %v1232 = vld [vmem:[#allocation3 + $0xa00] sm:$0xff]
          %v1233 = vld [vmem:[#allocation3 + $0xa08] sm:$0xff]
          %v1234 = vld [vmem:[#allocation3 + $0xa10] sm:$0xff]
          %v1235 = vld [vmem:[#allocation3 + $0xa18] sm:$0xff]
          %v1236 = vld [vmem:[#allocation3 + $0xa20] sm:$0xff]
          %v1237 = vld [vmem:[#allocation3 + $0xa28] sm:$0xff]
          %v1238 = vld [vmem:[#allocation3 + $0xa30] sm:$0xff]
          %v1239 = vld [vmem:[#allocation3 + $0xa38] sm:$0xff]
          %v1240 = vld [vmem:[#allocation3 + $0xa40] sm:$0xff]
          %v1241 = vld [vmem:[#allocation3 + $0xa48] sm:$0xff]
          %v1242 = vld [vmem:[#allocation3 + $0xa50] sm:$0xff]
          %v1243 = vld [vmem:[#allocation3 + $0xa58] sm:$0xff]
          %v1244 = vld [vmem:[#allocation3 + $0xa60] sm:$0xff]
          %v1245 = vld [vmem:[#allocation3 + $0xa68] sm:$0xff]
          %v1246 = vld [vmem:[#allocation3 + $0xa70] sm:$0xff]
          %v1247 = vld [vmem:[#allocation3 + $0xa78] sm:$0xff]
          %v1248 = vld [vmem:[#allocation3 + $0xa80] sm:$0xff]
          %v1249 = vld [vmem:[#allocation3 + $0xa88] sm:$0xff]
          %v1250 = vld [vmem:[#allocation3 + $0xa90] sm:$0xff]
          %v1251 = vld [vmem:[#allocation3 + $0xa98] sm:$0xff]
          %v1252 = vld [vmem:[#allocation3 + $0xaa0] sm:$0xff]
          %v1253 = vld [vmem:[#allocation3 + $0xaa8] sm:$0xff]
          %v1254 = vld [vmem:[#allocation3 + $0xab0] sm:$0xff]
          %v1255 = vld [vmem:[#allocation3 + $0xab8] sm:$0xff]
          %v1256 = vld [vmem:[#allocation3 + $0xac0] sm:$0xff]
          %v1257 = vld [vmem:[#allocation3 + $0xac8] sm:$0xff]
          %v1258 = vld [vmem:[#allocation3 + $0xad0] sm:$0xff]
          %v1259 = vld [vmem:[#allocation3 + $0xad8] sm:$0xff]
          %v1260 = vld [vmem:[#allocation3 + $0xae0] sm:$0xff]
          %v1261 = vld [vmem:[#allocation3 + $0xae8] sm:$0xff]
          %v1262 = vld [vmem:[#allocation3 + $0xaf0] sm:$0xff]
          %v1263 = vld [vmem:[#allocation3 + $0xaf8] sm:$0xff]
          %v1264 = vld [vmem:[#allocation3 + $0xb00] sm:$0xff]
          %v1265 = vld [vmem:[#allocation3 + $0xb08] sm:$0xff]
          %v1266 = vld [vmem:[#allocation3 + $0xb10] sm:$0xff]
          %v1267 = vld [vmem:[#allocation3 + $0xb18] sm:$0xff]
          %v1268 = vld [vmem:[#allocation3 + $0xb20] sm:$0xff]
          %v1269 = vld [vmem:[#allocation3 + $0xb28] sm:$0xff]
          %v1270 = vld [vmem:[#allocation3 + $0xb30] sm:$0xff]
          %v1271 = vld [vmem:[#allocation3 + $0xb38] sm:$0xff]
          %v1272 = vld [vmem:[#allocation3 + $0xb40] sm:$0xff]
          %v1273 = vld [vmem:[#allocation3 + $0xb48] sm:$0xff]
          %v1274 = vld [vmem:[#allocation3 + $0xb50] sm:$0xff]
          %v1275 = vld [vmem:[#allocation3 + $0xb58] sm:$0xff]
          %v1276 = vld [vmem:[#allocation3 + $0xb60] sm:$0xff]
          %v1277 = vld [vmem:[#allocation3 + $0xb68] sm:$0xff]
          %v1278 = vld [vmem:[#allocation3 + $0xb70] sm:$0xff]
          %v1279 = vld [vmem:[#allocation3 + $0xb78] sm:$0xff]
          %v1280 = vld [vmem:[#allocation3 + $0xb80] sm:$0xff]
          %v1281 = vld [vmem:[#allocation3 + $0xb88] sm:$0xff]
          %v1282 = vld [vmem:[#allocation3 + $0xb90] sm:$0xff]
          %v1283 = vld [vmem:[#allocation3 + $0xb98] sm:$0xff]
          %v1284 = vld [vmem:[#allocation3 + $0xba0] sm:$0xff]
          %v1285 = vld [vmem:[#allocation3 + $0xba8] sm:$0xff]
          %v1286 = vld [vmem:[#allocation3 + $0xbb0] sm:$0xff]
          %v1287 = vld [vmem:[#allocation3 + $0xbb8] sm:$0xff]
          %v1288 = vld [vmem:[#allocation3 + $0xbc0] sm:$0xff]
          %v1289 = vld [vmem:[#allocation3 + $0xbc8] sm:$0xff]
          %v1290 = vld [vmem:[#allocation3 + $0xbd0] sm:$0xff]
          %v1291 = vld [vmem:[#allocation3 + $0xbd8] sm:$0xff]
          %v1292 = vld [vmem:[#allocation3 + $0xbe0] sm:$0xff]
          %v1293 = vld [vmem:[#allocation3 + $0xbe8] sm:$0xff]
          %v1294 = vld [vmem:[#allocation3 + $0xbf0] sm:$0xff]
          %v1295 = vld [vmem:[#allocation3 + $0xbf8] sm:$0xff]
          %v1296 = vld [vmem:[#allocation3 + $0xc00] sm:$0xff]
          %v1297 = vld [vmem:[#allocation3 + $0xc08] sm:$0xff]
          %v1298 = vld [vmem:[#allocation3 + $0xc10] sm:$0xff]
          %v1299 = vld [vmem:[#allocation3 + $0xc18] sm:$0xff]
          %v1300 = vld [vmem:[#allocation3 + $0xc20] sm:$0xff]
          %v1301 = vld [vmem:[#allocation3 + $0xc28] sm:$0xff]
          %v1302 = vld [vmem:[#allocation3 + $0xc30] sm:$0xff]
          %v1303 = vld [vmem:[#allocation3 + $0xc38] sm:$0xff]
          %v1304 = vld [vmem:[#allocation3 + $0xc40] sm:$0xff]
          %v1305 = vld [vmem:[#allocation3 + $0xc48] sm:$0xff]
          %v1306 = vld [vmem:[#allocation3 + $0xc50] sm:$0xff]
          %v1307 = vld [vmem:[#allocation3 + $0xc58] sm:$0xff]
          %v1308 = vld [vmem:[#allocation3 + $0xc60] sm:$0xff]
          %v1309 = vld [vmem:[#allocation3 + $0xc68] sm:$0xff]
          %v1310 = vld [vmem:[#allocation3 + $0xc70] sm:$0xff]
          %v1311 = vld [vmem:[#allocation3 + $0xc78] sm:$0xff]
          %v1312 = vld [vmem:[#allocation3 + $0xc80] sm:$0xff]
          %v1313 = vld [vmem:[#allocation3 + $0xc88] sm:$0xff]
          %v1314 = vld [vmem:[#allocation3 + $0xc90] sm:$0xff]
          %v1315 = vld [vmem:[#allocation3 + $0xc98] sm:$0xff]
          %v1316 = vld [vmem:[#allocation3 + $0xca0] sm:$0xff]
          %v1317 = vld [vmem:[#allocation3 + $0xca8] sm:$0xff]
          %v1318 = vld [vmem:[#allocation3 + $0xcb0] sm:$0xff]
          %v1319 = vld [vmem:[#allocation3 + $0xcb8] sm:$0xff]
          %v1320 = vld [vmem:[#allocation3 + $0xcc0] sm:$0xff]
          %v1321 = vld [vmem:[#allocation3 + $0xcc8] sm:$0xff]
          %v1322 = vld [vmem:[#allocation3 + $0xcd0] sm:$0xff]
          %v1323 = vld [vmem:[#allocation3 + $0xcd8] sm:$0xff]
          %v1324 = vld [vmem:[#allocation3 + $0xce0] sm:$0xff]
          %v1325 = vld [vmem:[#allocation3 + $0xce8] sm:$0xff]
          %v1326 = vld [vmem:[#allocation3 + $0xcf0] sm:$0xff]
          %v1327 = vld [vmem:[#allocation3 + $0xcf8] sm:$0xff]
          %v1328 = vld [vmem:[#allocation3 + $0xd00] sm:$0xff]
          %v1329 = vld [vmem:[#allocation3 + $0xd08] sm:$0xff]
          %v1330 = vld [vmem:[#allocation3 + $0xd10] sm:$0xff]
          %v1331 = vld [vmem:[#allocation3 + $0xd18] sm:$0xff]
          %v1332 = vld [vmem:[#allocation3 + $0xd20] sm:$0xff]
          %v1333 = vld [vmem:[#allocation3 + $0xd28] sm:$0xff]
          %v1334 = vld [vmem:[#allocation3 + $0xd30] sm:$0xff]
          %v1335 = vld [vmem:[#allocation3 + $0xd38] sm:$0xff]
          %v1336 = vld [vmem:[#allocation3 + $0xd40] sm:$0xff]
          %v1337 = vld [vmem:[#allocation3 + $0xd48] sm:$0xff]
          %v1338 = vld [vmem:[#allocation3 + $0xd50] sm:$0xff]
          %v1339 = vld [vmem:[#allocation3 + $0xd58] sm:$0xff]
          %v1340 = vld [vmem:[#allocation3 + $0xd60] sm:$0xff]
          %v1341 = vld [vmem:[#allocation3 + $0xd68] sm:$0xff]
          %v1342 = vld [vmem:[#allocation3 + $0xd70] sm:$0xff]
          %v1343 = vld [vmem:[#allocation3 + $0xd78] sm:$0xff]
          %v1344 = vld [vmem:[#allocation3 + $0xd80] sm:$0xff]
          %v1345 = vld [vmem:[#allocation3 + $0xd88] sm:$0xff]
          %v1346 = vld [vmem:[#allocation3 + $0xd90] sm:$0xff]
          %v1347 = vld [vmem:[#allocation3 + $0xd98] sm:$0xff]
          %v1348 = vld [vmem:[#allocation3 + $0xda0] sm:$0xff]
          %v1349 = vld [vmem:[#allocation3 + $0xda8] sm:$0xff]
          %v1350 = vld [vmem:[#allocation3 + $0xdb0] sm:$0xff]
          %v1351 = vld [vmem:[#allocation3 + $0xdb8] sm:$0xff]
          %v1352 = vld [vmem:[#allocation3 + $0xdc0] sm:$0xff]
          %v1353 = vld [vmem:[#allocation3 + $0xdc8] sm:$0xff]
          %v1354 = vld [vmem:[#allocation3 + $0xdd0] sm:$0xff]
          %v1355 = vld [vmem:[#allocation3 + $0xdd8] sm:$0xff]
          %v1356 = vld [vmem:[#allocation3 + $0xde0] sm:$0xff]
          %v1357 = vld [vmem:[#allocation3 + $0xde8] sm:$0xff]
          %v1358 = vld [vmem:[#allocation3 + $0xdf0] sm:$0xff]
          %v1359 = vld [vmem:[#allocation3 + $0xdf8] sm:$0xff]
          %v1360 = vld [vmem:[#allocation3 + $0xe00] sm:$0xff]
          %v1361 = vld [vmem:[#allocation3 + $0xe08] sm:$0xff]
          %v1362 = vld [vmem:[#allocation3 + $0xe10] sm:$0xff]
          %v1363 = vld [vmem:[#allocation3 + $0xe18] sm:$0xff]
          %v1364 = vld [vmem:[#allocation3 + $0xe20] sm:$0xff]
          %v1365 = vld [vmem:[#allocation3 + $0xe28] sm:$0xff]
          %v1366 = vld [vmem:[#allocation3 + $0xe30] sm:$0xff]
          %v1367 = vld [vmem:[#allocation3 + $0xe38] sm:$0xff]
          %v1368 = vld [vmem:[#allocation3 + $0xe40] sm:$0xff]
          %v1369 = vld [vmem:[#allocation3 + $0xe48] sm:$0xff]
          %v1370 = vld [vmem:[#allocation3 + $0xe50] sm:$0xff]
          %v1371 = vld [vmem:[#allocation3 + $0xe58] sm:$0xff]
          %v1372 = vld [vmem:[#allocation3 + $0xe60] sm:$0xff]
          %v1373 = vld [vmem:[#allocation3 + $0xe68] sm:$0xff]
          %v1374 = vld [vmem:[#allocation3 + $0xe70] sm:$0xff]
          %v1375 = vld [vmem:[#allocation3 + $0xe78] sm:$0xff]
          %v1376 = vld [vmem:[#allocation3 + $0xe80] sm:$0xff]
          %v1377 = vld [vmem:[#allocation3 + $0xe88] sm:$0xff]
          %v1378 = vld [vmem:[#allocation3 + $0xe90] sm:$0xff]
          %v1379 = vld [vmem:[#allocation3 + $0xe98] sm:$0xff]
          %v1380 = vld [vmem:[#allocation3 + $0xea0] sm:$0xff]
          %v1381 = vld [vmem:[#allocation3 + $0xea8] sm:$0xff]
          %v1382 = vld [vmem:[#allocation3 + $0xeb0] sm:$0xff]
          %v1383 = vld [vmem:[#allocation3 + $0xeb8] sm:$0xff]
          %v1384 = vld [vmem:[#allocation3 + $0xec0] sm:$0xff]
          %v1385 = vld [vmem:[#allocation3 + $0xec8] sm:$0xff]
          %v1386 = vld [vmem:[#allocation3 + $0xed0] sm:$0xff]
          %v1387 = vld [vmem:[#allocation3 + $0xed8] sm:$0xff]
          %v1388 = vld [vmem:[#allocation3 + $0xee0] sm:$0xff]
          %v1389 = vld [vmem:[#allocation3 + $0xee8] sm:$0xff]
          %v1390 = vld [vmem:[#allocation3 + $0xef0] sm:$0xff]
          %v1391 = vld [vmem:[#allocation3 + $0xef8] sm:$0xff]
          %v1392 = vld [vmem:[#allocation3 + $0xf00] sm:$0xff]
          %v1393 = vld [vmem:[#allocation3 + $0xf08] sm:$0xff]
          %v1394 = vld [vmem:[#allocation3 + $0xf10] sm:$0xff]
          %v1395 = vld [vmem:[#allocation3 + $0xf18] sm:$0xff]
          %v1396 = vld [vmem:[#allocation3 + $0xf20] sm:$0xff]
          %v1397 = vld [vmem:[#allocation3 + $0xf28] sm:$0xff]
          %v1398 = vld [vmem:[#allocation3 + $0xf30] sm:$0xff]
          %v1399 = vld [vmem:[#allocation3 + $0xf38] sm:$0xff]
          %v1400 = vld [vmem:[#allocation3 + $0xf40] sm:$0xff]
          %v1401 = vld [vmem:[#allocation3 + $0xf48] sm:$0xff]
          %v1402 = vld [vmem:[#allocation3 + $0xf50] sm:$0xff]
          %v1403 = vld [vmem:[#allocation3 + $0xf58] sm:$0xff]
          %v1404 = vld [vmem:[#allocation3 + $0xf60] sm:$0xff]
          %v1405 = vld [vmem:[#allocation3 + $0xf68] sm:$0xff]
          %v1406 = vld [vmem:[#allocation3 + $0xf70] sm:$0xff]
          %v1407 = vld [vmem:[#allocation3 + $0xf78] sm:$0xff]
          %v1408 = vld [vmem:[#allocation3 + $0xf80] sm:$0xff]
          %v1409 = vld [vmem:[#allocation3 + $0xf88] sm:$0xff]
          %v1410 = vld [vmem:[#allocation3 + $0xf90] sm:$0xff]
          %v1411 = vld [vmem:[#allocation3 + $0xf98] sm:$0xff]
          %v1412 = vld [vmem:[#allocation3 + $0xfa0] sm:$0xff]
          %v1413 = vld [vmem:[#allocation3 + $0xfa8] sm:$0xff]
          %v1414 = vld [vmem:[#allocation3 + $0xfb0] sm:$0xff]
          %v1415 = vld [vmem:[#allocation3 + $0xfb8] sm:$0xff]
          %v1416 = vld [vmem:[#allocation3 + $0xfc0] sm:$0xff]
          %v1417 = vld [vmem:[#allocation3 + $0xfc8] sm:$0xff]
          %v1418 = vld [vmem:[#allocation3 + $0xfd0] sm:$0xff]
          %v1419 = vld [vmem:[#allocation3 + $0xfd8] sm:$0xff]
          %v1420 = vld [vmem:[#allocation3 + $0xfe0] sm:$0xff]
          %v1421 = vld [vmem:[#allocation3 + $0xfe8] sm:$0xff]
          %v1422 = vld [vmem:[#allocation3 + $0xff0] sm:$0xff]
          %v1423 = vld [vmem:[#allocation3 + $0xff8] sm:$0xff]
          %v1424 = vld [vmem:[#allocation3 + $0x1000] sm:$0xff]
          %v1425 = vld [vmem:[#allocation3 + $0x1008] sm:$0xff]
          %v1426 = vld [vmem:[#allocation3 + $0x1010] sm:$0xff]
          %v1427 = vld [vmem:[#allocation3 + $0x1018] sm:$0xff]
          %v1428 = vld [vmem:[#allocation3 + $0x1020] sm:$0xff]
          %v1429 = vld [vmem:[#allocation3 + $0x1028] sm:$0xff]
          %v1430 = vld [vmem:[#allocation3 + $0x1030] sm:$0xff]
          %v1431 = vld [vmem:[#allocation3 + $0x1038] sm:$0xff]
          %v1432 = vld [vmem:[#allocation3 + $0x1040] sm:$0xff]
          %v1433 = vld [vmem:[#allocation3 + $0x1048] sm:$0xff]
          %v1434 = vld [vmem:[#allocation3 + $0x1050] sm:$0xff]
          %v1435 = vld [vmem:[#allocation3 + $0x1058] sm:$0xff]
          %v1436 = vld [vmem:[#allocation3 + $0x1060] sm:$0xff]
          %v1437 = vld [vmem:[#allocation3 + $0x1068] sm:$0xff]
          %v1438 = vld [vmem:[#allocation3 + $0x1070] sm:$0xff]
          %v1439 = vld [vmem:[#allocation3 + $0x1078] sm:$0xff]
          %v1440 = vld [vmem:[#allocation3 + $0x1080] sm:$0xff]
          %v1441 = vld [vmem:[#allocation3 + $0x1088] sm:$0xff]
          %v1442 = vld [vmem:[#allocation3 + $0x1090] sm:$0xff]
          %v1443 = vld [vmem:[#allocation3 + $0x1098] sm:$0xff]
          %v1444 = vld [vmem:[#allocation3 + $0x10a0] sm:$0xff]
          %v1445 = vld [vmem:[#allocation3 + $0x10a8] sm:$0xff]
          %v1446 = vld [vmem:[#allocation3 + $0x10b0] sm:$0xff]
          %v1447 = vld [vmem:[#allocation3 + $0x10b8] sm:$0xff]
          %v1448 = vld [vmem:[#allocation3 + $0x10c0] sm:$0xff]
          %v1449 = vld [vmem:[#allocation3 + $0x10c8] sm:$0xff]
          %v1450 = vld [vmem:[#allocation3 + $0x10d0] sm:$0xff]
          %v1451 = vld [vmem:[#allocation3 + $0x10d8] sm:$0xff]
          %v1452 = vld [vmem:[#allocation3 + $0x10e0] sm:$0xff]
          %v1453 = vld [vmem:[#allocation3 + $0x10e8] sm:$0xff]
          %v1454 = vld [vmem:[#allocation3 + $0x10f0] sm:$0xff]
          %v1455 = vld [vmem:[#allocation3 + $0x10f8] sm:$0xff]
          %v1456 = vld [vmem:[#allocation3 + $0x1100] sm:$0xff]
          %v1457 = vld [vmem:[#allocation3 + $0x1108] sm:$0xff]
          %v1458 = vld [vmem:[#allocation3 + $0x1110] sm:$0xff]
          %v1459 = vld [vmem:[#allocation3 + $0x1118] sm:$0xff]
          %v1460 = vld [vmem:[#allocation3 + $0x1120] sm:$0xff]
          %v1461 = vld [vmem:[#allocation3 + $0x1128] sm:$0xff]
          %v1462 = vld [vmem:[#allocation3 + $0x1130] sm:$0xff]
          %v1463 = vld [vmem:[#allocation3 + $0x1138] sm:$0xff]
          %v1464 = vld [vmem:[#allocation3 + $0x1140] sm:$0xff]
          %v1465 = vld [vmem:[#allocation3 + $0x1148] sm:$0xff]
          %v1466 = vld [vmem:[#allocation3 + $0x1150] sm:$0xff]
          %v1467 = vld [vmem:[#allocation3 + $0x1158] sm:$0xff]
          %v1468 = vld [vmem:[#allocation3 + $0x1160] sm:$0xff]
          %v1469 = vld [vmem:[#allocation3 + $0x1168] sm:$0xff]
          %v1470 = vld [vmem:[#allocation3 + $0x1170] sm:$0xff]
          %v1471 = vld [vmem:[#allocation3 + $0x1178] sm:$0xff]
          %v1472 = vld [vmem:[#allocation3 + $0x1180] sm:$0xff]
          %v1473 = vld [vmem:[#allocation3 + $0x1188] sm:$0xff]
          %v1474 = vld [vmem:[#allocation3 + $0x1190] sm:$0xff]
          %v1475 = vld [vmem:[#allocation3 + $0x1198] sm:$0xff]
          %v1476 = vld [vmem:[#allocation3 + $0x11a0] sm:$0xff]
          %v1477 = vld [vmem:[#allocation3 + $0x11a8] sm:$0xff]
          %v1478 = vld [vmem:[#allocation3 + $0x11b0] sm:$0xff]
          %v1479 = vld [vmem:[#allocation3 + $0x11b8] sm:$0xff]
          %v1480 = vld [vmem:[#allocation3 + $0x11c0] sm:$0xff]
          %v1481 = vld [vmem:[#allocation3 + $0x11c8] sm:$0xff]
          %v1482 = vld [vmem:[#allocation3 + $0x11d0] sm:$0xff]
          %v1483 = vld [vmem:[#allocation3 + $0x11d8] sm:$0xff]
          %v1484 = vld [vmem:[#allocation3 + $0x11e0] sm:$0xff]
          %v1485 = vld [vmem:[#allocation3 + $0x11e8] sm:$0xff]
          %v1486 = vld [vmem:[#allocation3 + $0x11f0] sm:$0xff]
          %v1487 = vld [vmem:[#allocation3 + $0x11f8] sm:$0xff]
          %1488 = vmatprep.subr.mxu0 %v943
          %1489 = vmatpush1.msra.mxu0 %v942
          %1490 = vmatprep.subr.mxu0 %v941
          %1491 = vmatpush1.msra.mxu0 %v940
          %1492 = vmatprep.subr.mxu0 %v939
          %1493 = vmatpush1.msra.mxu0 %v938
          %1494 = vmatprep.subr.mxu0 %v937
          %1495 = vmatpush1.msra.mxu0 %v936
          %1496 = vmatprep.subr.mxu0 %v935
          %1497 = vmatpush1.msra.mxu0 %v934
          %1498 = vmatprep.subr.mxu0 %v933
          %1499 = vmatpush1.msra.mxu0 %v932
          %1500 = vmatprep.subr.mxu0 %v931
          %1501 = vmatpush1.msra.mxu0 %v930
          %1502 = vmatprep.subr.mxu0 %v929
          %1503 = vmatpush1.msra.mxu0 %v928
          %1504 = vmatprep.subr.mxu0 %v927
          %1505 = vmatpush1.msra.mxu0 %v926
          %1506 = vmatprep.subr.mxu0 %v925
          %1507 = vmatpush1.msra.mxu0 %v924
          %1508 = vmatprep.subr.mxu0 %v923
          %1509 = vmatpush1.msra.mxu0 %v922
          %1510 = vmatprep.subr.mxu0 %v921
          %1511 = vmatpush1.msra.mxu0 %v920
          %1512 = vmatprep.subr.mxu0 %v919
          %1513 = vmatpush1.msra.mxu0 %v918
          %1514 = vmatprep.subr.mxu0 %v917
          %1515 = vmatpush1.msra.mxu0 %v916
          %1516 = vmatprep.subr.mxu0 %v915
          %1517 = vmatpush1.msra.mxu0 %v914
          %1518 = vmatprep.subr.mxu0 %v913
          %1519 = vmatpush1.msra.mxu0 %v912
          %1520 = vmatprep.subr.mxu0 %v975
          %1521 = vmatpush2.msra.mxu0 %v974
          %1522 = vmatprep.subr.mxu0 %v973
          %1523 = vmatpush2.msra.mxu0 %v972
          %1524 = vmatprep.subr.mxu0 %v971
          %1525 = vmatpush2.msra.mxu0 %v970
          %1526 = vmatprep.subr.mxu0 %v969
          %1527 = vmatpush2.msra.mxu0 %v968
          %1528 = vmatprep.subr.mxu0 %v967
          %1529 = vmatpush2.msra.mxu0 %v966
          %1530 = vmatprep.subr.mxu0 %v965
          %1531 = vmatpush2.msra.mxu0 %v964
          %1532 = vmatprep.subr.mxu0 %v963
          %1533 = vmatpush2.msra.mxu0 %v962
          %1534 = vmatprep.subr.mxu0 %v961
          %1535 = vmatpush2.msra.mxu0 %v960
          %1536 = vmatprep.subr.mxu0 %v959
          %1537 = vmatpush2.msra.mxu0 %v958
          %1538 = vmatprep.subr.mxu0 %v957
          %1539 = vmatpush2.msra.mxu0 %v956
          %1540 = vmatprep.subr.mxu0 %v955
          %1541 = vmatpush2.msra.mxu0 %v954
          %1542 = vmatprep.subr.mxu0 %v953
          %1543 = vmatpush2.msra.mxu0 %v952
          %1544 = vmatprep.subr.mxu0 %v951
          %1545 = vmatpush2.msra.mxu0 %v950
          %1546 = vmatprep.subr.mxu0 %v949
          %1547 = vmatpush2.msra.mxu0 %v948
          %1548 = vmatprep.subr.mxu0 %v947
          %1549 = vmatpush2.msra.mxu0 %v946
          %1550 = vmatprep.subr.mxu0 %v945
          %1551 = vmatpush2.msra.mxu0 %v944
          %1552 = vmatprep.mubr.f32.mxu0 %v793
          %1553 = vmatmul.mubr.f32.gmra.mxu0 %v792
          %v1554 = vpop.f32.mrf.mxu0
          %v1555 = vadd.f32 0.0, %v1554
          %v1556 = vpop.f32.mrf.mxu0
          %v1557 = vadd.f32 0.0, %v1556
          %1558 = vmatprep.mubr.f32.mxu0 %v795
          %1559 = vmatmul.mubr.f32.gmra.mxu0 %v794
          %v1560 = vpop.f32.mrf.mxu0
          %v1561 = vadd.f32 0.0, %v1560
          %v1562 = vpop.f32.mrf.mxu0
          %v1563 = vadd.f32 0.0, %v1562
          %1564 = vmatprep.mubr.f32.mxu0 %v797
          %1565 = vmatmul.mubr.f32.gmra.mxu0 %v796
          %v1566 = vpop.f32.mrf.mxu0
          %v1567 = vadd.f32 0.0, %v1566
          %v1568 = vpop.f32.mrf.mxu0
          %v1569 = vadd.f32 0.0, %v1568
          %1570 = vmatprep.mubr.f32.mxu0 %v799
          %1571 = vmatmul.mubr.f32.gmra.mxu0 %v798
          %v1572 = vpop.f32.mrf.mxu0
          %v1573 = vadd.f32 0.0, %v1572
          %v1574 = vpop.f32.mrf.mxu0
          %v1575 = vadd.f32 0.0, %v1574
          %1576 = vdwg.mxu0
          %1577 = vmatprep.subr.mxu0 %v1007
          %1578 = vmatpush1.msra.mxu0 %v1006
          %1579 = vmatprep.subr.mxu0 %v1005
          %1580 = vmatpush1.msra.mxu0 %v1004
          %1581 = vmatprep.subr.mxu0 %v1003
          %1582 = vmatpush1.msra.mxu0 %v1002
          %1583 = vmatprep.subr.mxu0 %v1001
          %1584 = vmatpush1.msra.mxu0 %v1000
          %1585 = vmatprep.subr.mxu0 %v999
          %1586 = vmatpush1.msra.mxu0 %v998
          %1587 = vmatprep.subr.mxu0 %v997
          %1588 = vmatpush1.msra.mxu0 %v996
          %1589 = vmatprep.subr.mxu0 %v995
          %1590 = vmatpush1.msra.mxu0 %v994
          %1591 = vmatprep.subr.mxu0 %v993
          %1592 = vmatpush1.msra.mxu0 %v992
          %1593 = vmatprep.subr.mxu0 %v991
          %1594 = vmatpush1.msra.mxu0 %v990
          %1595 = vmatprep.subr.mxu0 %v989
          %1596 = vmatpush1.msra.mxu0 %v988
          %1597 = vmatprep.subr.mxu0 %v987
          %1598 = vmatpush1.msra.mxu0 %v986
          %1599 = vmatprep.subr.mxu0 %v985
          %1600 = vmatpush1.msra.mxu0 %v984
          %1601 = vmatprep.subr.mxu0 %v983
          %1602 = vmatpush1.msra.mxu0 %v982
          %1603 = vmatprep.subr.mxu0 %v981
          %1604 = vmatpush1.msra.mxu0 %v980
          %1605 = vmatprep.subr.mxu0 %v979
          %1606 = vmatpush1.msra.mxu0 %v978
          %1607 = vmatprep.subr.mxu0 %v977
          %1608 = vmatpush1.msra.mxu0 %v976
          %1609 = vmatprep.subr.mxu0 %v1039
          %1610 = vmatpush2.msra.mxu0 %v1038
          %1611 = vmatprep.subr.mxu0 %v1037
          %1612 = vmatpush2.msra.mxu0 %v1036
          %1613 = vmatprep.subr.mxu0 %v1035
          %1614 = vmatpush2.msra.mxu0 %v1034
          %1615 = vmatprep.subr.mxu0 %v1033
          %1616 = vmatpush2.msra.mxu0 %v1032
          %1617 = vmatprep.subr.mxu0 %v1031
          %1618 = vmatpush2.msra.mxu0 %v1030
          %1619 = vmatprep.subr.mxu0 %v1029
          %1620 = vmatpush2.msra.mxu0 %v1028
          %1621 = vmatprep.subr.mxu0 %v1027
          %1622 = vmatpush2.msra.mxu0 %v1026
          %1623 = vmatprep.subr.mxu0 %v1025
          %1624 = vmatpush2.msra.mxu0 %v1024
          %1625 = vmatprep.subr.mxu0 %v1023
          %1626 = vmatpush2.msra.mxu0 %v1022
          %1627 = vmatprep.subr.mxu0 %v1021
          %1628 = vmatpush2.msra.mxu0 %v1020
          %1629 = vmatprep.subr.mxu0 %v1019
          %1630 = vmatpush2.msra.mxu0 %v1018
          %1631 = vmatprep.subr.mxu0 %v1017
          %1632 = vmatpush2.msra.mxu0 %v1016
          %1633 = vmatprep.subr.mxu0 %v1015
          %1634 = vmatpush2.msra.mxu0 %v1014
          %1635 = vmatprep.subr.mxu0 %v1013
          %1636 = vmatpush2.msra.mxu0 %v1012
          %1637 = vmatprep.subr.mxu0 %v1011
          %1638 = vmatpush2.msra.mxu0 %v1010
          %1639 = vmatprep.subr.mxu0 %v1009
          %1640 = vmatpush2.msra.mxu0 %v1008
          %1641 = vmatprep.mubr.f32.mxu0 %v809
          %1642 = vmatmul.mubr.f32.gmra.mxu0 %v808
          %v1643 = vpop.f32.mrf.mxu0
          %v1644 = vadd.f32 %v1555, %v1643
          %v1645 = vpop.f32.mrf.mxu0
          %v1646 = vadd.f32 %v1557, %v1645
          %1647 = vmatprep.mubr.f32.mxu0 %v811
          %1648 = vmatmul.mubr.f32.gmra.mxu0 %v810
          %v1649 = vpop.f32.mrf.mxu0
          %v1650 = vadd.f32 %v1561, %v1649
          %v1651 = vpop.f32.mrf.mxu0
          %v1652 = vadd.f32 %v1563, %v1651
          %1653 = vmatprep.mubr.f32.mxu0 %v813
          %1654 = vmatmul.mubr.f32.gmra.mxu0 %v812
          %v1655 = vpop.f32.mrf.mxu0
          %v1656 = vadd.f32 %v1567, %v1655
          %v1657 = vpop.f32.mrf.mxu0
          %v1658 = vadd.f32 %v1569, %v1657
          %1659 = vmatprep.mubr.f32.mxu0 %v815
          %1660 = vmatmul.mubr.f32.gmra.mxu0 %v814
          %v1661 = vpop.f32.mrf.mxu0
          %v1662 = vadd.f32 %v1573, %v1661
          %v1663 = vpop.f32.mrf.mxu0
          %v1664 = vadd.f32 %v1575, %v1663
          %1665 = vdwg.mxu0
          %1666 = vmatprep.subr.mxu0 %v1071
          %1667 = vmatpush1.msra.mxu0 %v1070
          %1668 = vmatprep.subr.mxu0 %v1069
          %1669 = vmatpush1.msra.mxu0 %v1068
          %1670 = vmatprep.subr.mxu0 %v1067
          %1671 = vmatpush1.msra.mxu0 %v1066
          %1672 = vmatprep.subr.mxu0 %v1065
          %1673 = vmatpush1.msra.mxu0 %v1064
          %1674 = vmatprep.subr.mxu0 %v1063
          %1675 = vmatpush1.msra.mxu0 %v1062
          %1676 = vmatprep.subr.mxu0 %v1061
          %1677 = vmatpush1.msra.mxu0 %v1060
          %1678 = vmatprep.subr.mxu0 %v1059
          %1679 = vmatpush1.msra.mxu0 %v1058
          %1680 = vmatprep.subr.mxu0 %v1057
          %1681 = vmatpush1.msra.mxu0 %v1056
          %1682 = vmatprep.subr.mxu0 %v1055
          %1683 = vmatpush1.msra.mxu0 %v1054
          %1684 = vmatprep.subr.mxu0 %v1053
          %1685 = vmatpush1.msra.mxu0 %v1052
          %1686 = vmatprep.subr.mxu0 %v1051
          %1687 = vmatpush1.msra.mxu0 %v1050
          %1688 = vmatprep.subr.mxu0 %v1049
          %1689 = vmatpush1.msra.mxu0 %v1048
          %1690 = vmatprep.subr.mxu0 %v1047
          %1691 = vmatpush1.msra.mxu0 %v1046
          %1692 = vmatprep.subr.mxu0 %v1045
          %1693 = vmatpush1.msra.mxu0 %v1044
          %1694 = vmatprep.subr.mxu0 %v1043
          %1695 = vmatpush1.msra.mxu0 %v1042
          %1696 = vmatprep.subr.mxu0 %v1041
          %1697 = vmatpush1.msra.mxu0 %v1040
          %1698 = vmatprep.subr.mxu0 %v1103
          %1699 = vmatpush2.msra.mxu0 %v1102
          %1700 = vmatprep.subr.mxu0 %v1101
          %1701 = vmatpush2.msra.mxu0 %v1100
          %1702 = vmatprep.subr.mxu0 %v1099
          %1703 = vmatpush2.msra.mxu0 %v1098
          %1704 = vmatprep.subr.mxu0 %v1097
          %1705 = vmatpush2.msra.mxu0 %v1096
          %1706 = vmatprep.subr.mxu0 %v1095
          %1707 = vmatpush2.msra.mxu0 %v1094
          %1708 = vmatprep.subr.mxu0 %v1093
          %1709 = vmatpush2.msra.mxu0 %v1092
          %1710 = vmatprep.subr.mxu0 %v1091
          %1711 = vmatpush2.msra.mxu0 %v1090
          %1712 = vmatprep.subr.mxu0 %v1089
          %1713 = vmatpush2.msra.mxu0 %v1088
          %1714 = vmatprep.subr.mxu0 %v1087
          %1715 = vmatpush2.msra.mxu0 %v1086
          %1716 = vmatprep.subr.mxu0 %v1085
          %1717 = vmatpush2.msra.mxu0 %v1084
          %1718 = vmatprep.subr.mxu0 %v1083
          %1719 = vmatpush2.msra.mxu0 %v1082
          %1720 = vmatprep.subr.mxu0 %v1081
          %1721 = vmatpush2.msra.mxu0 %v1080
          %1722 = vmatprep.subr.mxu0 %v1079
          %1723 = vmatpush2.msra.mxu0 %v1078
          %1724 = vmatprep.subr.mxu0 %v1077
          %1725 = vmatpush2.msra.mxu0 %v1076
          %1726 = vmatprep.subr.mxu0 %v1075
          %1727 = vmatpush2.msra.mxu0 %v1074
          %1728 = vmatprep.subr.mxu0 %v1073
          %1729 = vmatpush2.msra.mxu0 %v1072
          %1730 = vmatprep.mubr.f32.mxu0 %v825
          %1731 = vmatmul.mubr.f32.gmra.mxu0 %v824
          %v1732 = vpop.f32.mrf.mxu0
          %v1733 = vadd.f32 %v1644, %v1732
          %v1734 = vpop.f32.mrf.mxu0
          %v1735 = vadd.f32 %v1646, %v1734
          %1736 = vmatprep.mubr.f32.mxu0 %v827
          %1737 = vmatmul.mubr.f32.gmra.mxu0 %v826
          %v1738 = vpop.f32.mrf.mxu0
          %v1739 = vadd.f32 %v1650, %v1738
          %v1740 = vpop.f32.mrf.mxu0
          %v1741 = vadd.f32 %v1652, %v1740
          %1742 = vmatprep.mubr.f32.mxu0 %v829
          %1743 = vmatmul.mubr.f32.gmra.mxu0 %v828
          %v1744 = vpop.f32.mrf.mxu0
          %v1745 = vadd.f32 %v1656, %v1744
          %v1746 = vpop.f32.mrf.mxu0
          %v1747 = vadd.f32 %v1658, %v1746
          %1748 = vmatprep.mubr.f32.mxu0 %v831
          %1749 = vmatmul.mubr.f32.gmra.mxu0 %v830
          %v1750 = vpop.f32.mrf.mxu0
          %v1751 = vadd.f32 %v1662, %v1750
          %v1752 = vpop.f32.mrf.mxu0
          %v1753 = vadd.f32 %v1664, %v1752
          %1754 = vdwg.mxu0
          %1755 = vmatprep.subr.mxu0 %v1135
          %1756 = vmatpush1.msra.mxu0 %v1134
          %1757 = vmatprep.subr.mxu0 %v1133
          %1758 = vmatpush1.msra.mxu0 %v1132
          %1759 = vmatprep.subr.mxu0 %v1131
          %1760 = vmatpush1.msra.mxu0 %v1130
          %1761 = vmatprep.subr.mxu0 %v1129
          %1762 = vmatpush1.msra.mxu0 %v1128
          %1763 = vmatprep.subr.mxu0 %v1127
          %1764 = vmatpush1.msra.mxu0 %v1126
          %1765 = vmatprep.subr.mxu0 %v1125
          %1766 = vmatpush1.msra.mxu0 %v1124
          %1767 = vmatprep.subr.mxu0 %v1123
          %1768 = vmatpush1.msra.mxu0 %v1122
          %1769 = vmatprep.subr.mxu0 %v1121
          %1770 = vmatpush1.msra.mxu0 %v1120
          %1771 = vmatprep.subr.mxu0 %v1119
          %1772 = vmatpush1.msra.mxu0 %v1118
          %1773 = vmatprep.subr.mxu0 %v1117
          %1774 = vmatpush1.msra.mxu0 %v1116
          %1775 = vmatprep.subr.mxu0 %v1115
          %1776 = vmatpush1.msra.mxu0 %v1114
          %1777 = vmatprep.subr.mxu0 %v1113
          %1778 = vmatpush1.msra.mxu0 %v1112
          %1779 = vmatprep.subr.mxu0 %v1111
          %1780 = vmatpush1.msra.mxu0 %v1110
          %1781 = vmatprep.subr.mxu0 %v1109
          %1782 = vmatpush1.msra.mxu0 %v1108
          %1783 = vmatprep.subr.mxu0 %v1107
          %1784 = vmatpush1.msra.mxu0 %v1106
          %1785 = vmatprep.subr.mxu0 %v1105
          %1786 = vmatpush1.msra.mxu0 %v1104
          %1787 = vmatprep.subr.mxu0 %v1167
          %1788 = vmatpush2.msra.mxu0 %v1166
          %1789 = vmatprep.subr.mxu0 %v1165
          %1790 = vmatpush2.msra.mxu0 %v1164
          %1791 = vmatprep.subr.mxu0 %v1163
          %1792 = vmatpush2.msra.mxu0 %v1162
          %1793 = vmatprep.subr.mxu0 %v1161
          %1794 = vmatpush2.msra.mxu0 %v1160
          %1795 = vmatprep.subr.mxu0 %v1159
          %1796 = vmatpush2.msra.mxu0 %v1158
          %1797 = vmatprep.subr.mxu0 %v1157
          %1798 = vmatpush2.msra.mxu0 %v1156
          %1799 = vmatprep.subr.mxu0 %v1155
          %1800 = vmatpush2.msra.mxu0 %v1154
          %1801 = vmatprep.subr.mxu0 %v1153
          %1802 = vmatpush2.msra.mxu0 %v1152
          %1803 = vmatprep.subr.mxu0 %v1151
          %1804 = vmatpush2.msra.mxu0 %v1150
          %1805 = vmatprep.subr.mxu0 %v1149
          %1806 = vmatpush2.msra.mxu0 %v1148
          %1807 = vmatprep.subr.mxu0 %v1147
          %1808 = vmatpush2.msra.mxu0 %v1146
          %1809 = vmatprep.subr.mxu0 %v1145
          %1810 = vmatpush2.msra.mxu0 %v1144
          %1811 = vmatprep.subr.mxu0 %v1143
          %1812 = vmatpush2.msra.mxu0 %v1142
          %1813 = vmatprep.subr.mxu0 %v1141
          %1814 = vmatpush2.msra.mxu0 %v1140
          %1815 = vmatprep.subr.mxu0 %v1139
          %1816 = vmatpush2.msra.mxu0 %v1138
          %1817 = vmatprep.subr.mxu0 %v1137
          %1818 = vmatpush2.msra.mxu0 %v1136
          %1819 = vmatprep.mubr.f32.mxu0 %v841
          %1820 = vmatmul.mubr.f32.gmra.mxu0 %v840
          %v1821 = vpop.f32.mrf.mxu0
          %v1822 = vadd.f32 %v1733, %v1821
          %v1823 = vpop.f32.mrf.mxu0
          %v1824 = vadd.f32 %v1735, %v1823
          %1825 = vmatprep.mubr.f32.mxu0 %v843
          %1826 = vmatmul.mubr.f32.gmra.mxu0 %v842
          %v1827 = vpop.f32.mrf.mxu0
          %v1828 = vadd.f32 %v1739, %v1827
          %v1829 = vpop.f32.mrf.mxu0
          %v1830 = vadd.f32 %v1741, %v1829
          %1831 = vmatprep.mubr.f32.mxu0 %v845
          %1832 = vmatmul.mubr.f32.gmra.mxu0 %v844
          %v1833 = vpop.f32.mrf.mxu0
          %v1834 = vadd.f32 %v1745, %v1833
          %v1835 = vpop.f32.mrf.mxu0
          %v1836 = vadd.f32 %v1747, %v1835
          %1837 = vmatprep.mubr.f32.mxu0 %v847
          %1838 = vmatmul.mubr.f32.gmra.mxu0 %v846
          %v1839 = vpop.f32.mrf.mxu0
          %v1840 = vadd.f32 %v1751, %v1839
          %v1841 = vpop.f32.mrf.mxu0
          %v1842 = vadd.f32 %v1753, %v1841
          %1843 = vdwg.mxu0
          %1844 = vmatprep.subr.mxu0 %v1199
          %1845 = vmatpush1.msra.mxu0 %v1198
          %1846 = vmatprep.subr.mxu0 %v1197
          %1847 = vmatpush1.msra.mxu0 %v1196
          %1848 = vmatprep.subr.mxu0 %v1195
          %1849 = vmatpush1.msra.mxu0 %v1194
          %1850 = vmatprep.subr.mxu0 %v1193
          %1851 = vmatpush1.msra.mxu0 %v1192
          %1852 = vmatprep.subr.mxu0 %v1191
          %1853 = vmatpush1.msra.mxu0 %v1190
          %1854 = vmatprep.subr.mxu0 %v1189
          %1855 = vmatpush1.msra.mxu0 %v1188
          %1856 = vmatprep.subr.mxu0 %v1187
          %1857 = vmatpush1.msra.mxu0 %v1186
          %1858 = vmatprep.subr.mxu0 %v1185
          %1859 = vmatpush1.msra.mxu0 %v1184
          %1860 = vmatprep.subr.mxu0 %v1183
          %1861 = vmatpush1.msra.mxu0 %v1182
          %1862 = vmatprep.subr.mxu0 %v1181
          %1863 = vmatpush1.msra.mxu0 %v1180
          %1864 = vmatprep.subr.mxu0 %v1179
          %1865 = vmatpush1.msra.mxu0 %v1178
          %1866 = vmatprep.subr.mxu0 %v1177
          %1867 = vmatpush1.msra.mxu0 %v1176
          %1868 = vmatprep.subr.mxu0 %v1175
          %1869 = vmatpush1.msra.mxu0 %v1174
          %1870 = vmatprep.subr.mxu0 %v1173
          %1871 = vmatpush1.msra.mxu0 %v1172
          %1872 = vmatprep.subr.mxu0 %v1171
          %1873 = vmatpush1.msra.mxu0 %v1170
          %1874 = vmatprep.subr.mxu0 %v1169
          %1875 = vmatpush1.msra.mxu0 %v1168
          %1876 = vmatprep.subr.mxu0 %v1231
          %1877 = vmatpush2.msra.mxu0 %v1230
          %1878 = vmatprep.subr.mxu0 %v1229
          %1879 = vmatpush2.msra.mxu0 %v1228
          %1880 = vmatprep.subr.mxu0 %v1227
          %1881 = vmatpush2.msra.mxu0 %v1226
          %1882 = vmatprep.subr.mxu0 %v1225
          %1883 = vmatpush2.msra.mxu0 %v1224
          %1884 = vmatprep.subr.mxu0 %v1223
          %1885 = vmatpush2.msra.mxu0 %v1222
          %1886 = vmatprep.subr.mxu0 %v1221
          %1887 = vmatpush2.msra.mxu0 %v1220
          %1888 = vmatprep.subr.mxu0 %v1219
          %1889 = vmatpush2.msra.mxu0 %v1218
          %1890 = vmatprep.subr.mxu0 %v1217
          %1891 = vmatpush2.msra.mxu0 %v1216
          %1892 = vmatprep.subr.mxu0 %v1215
          %1893 = vmatpush2.msra.mxu0 %v1214
          %1894 = vmatprep.subr.mxu0 %v1213
          %1895 = vmatpush2.msra.mxu0 %v1212
          %1896 = vmatprep.subr.mxu0 %v1211
          %1897 = vmatpush2.msra.mxu0 %v1210
          %1898 = vmatprep.subr.mxu0 %v1209
          %1899 = vmatpush2.msra.mxu0 %v1208
          %1900 = vmatprep.subr.mxu0 %v1207
          %1901 = vmatpush2.msra.mxu0 %v1206
          %1902 = vmatprep.subr.mxu0 %v1205
          %1903 = vmatpush2.msra.mxu0 %v1204
          %1904 = vmatprep.subr.mxu0 %v1203
          %1905 = vmatpush2.msra.mxu0 %v1202
          %1906 = vmatprep.subr.mxu0 %v1201
          %1907 = vmatpush2.msra.mxu0 %v1200
          %1908 = vmatprep.mubr.f32.mxu0 %v857
          %1909 = vmatmul.mubr.f32.gmra.mxu0 %v856
          %v1910 = vpop.f32.mrf.mxu0
          %v1911 = vadd.f32 %v1822, %v1910
          %v1912 = vpop.f32.mrf.mxu0
          %v1913 = vadd.f32 %v1824, %v1912
          %1914 = vmatprep.mubr.f32.mxu0 %v859
          %1915 = vmatmul.mubr.f32.gmra.mxu0 %v858
          %v1916 = vpop.f32.mrf.mxu0
          %v1917 = vadd.f32 %v1828, %v1916
          %v1918 = vpop.f32.mrf.mxu0
          %v1919 = vadd.f32 %v1830, %v1918
          %1920 = vmatprep.mubr.f32.mxu0 %v861
          %1921 = vmatmul.mubr.f32.gmra.mxu0 %v860
          %v1922 = vpop.f32.mrf.mxu0
          %v1923 = vadd.f32 %v1834, %v1922
          %v1924 = vpop.f32.mrf.mxu0
          %v1925 = vadd.f32 %v1836, %v1924
          %1926 = vmatprep.mubr.f32.mxu0 %v863
          %1927 = vmatmul.mubr.f32.gmra.mxu0 %v862
          %v1928 = vpop.f32.mrf.mxu0
          %v1929 = vadd.f32 %v1840, %v1928
          %v1930 = vpop.f32.mrf.mxu0
          %v1931 = vadd.f32 %v1842, %v1930
          %1932 = vdwg.mxu0
          %1933 = vmatprep.subr.mxu0 %v1263
          %1934 = vmatpush1.msra.mxu0 %v1262
          %1935 = vmatprep.subr.mxu0 %v1261
          %1936 = vmatpush1.msra.mxu0 %v1260
          %1937 = vmatprep.subr.mxu0 %v1259
          %1938 = vmatpush1.msra.mxu0 %v1258
          %1939 = vmatprep.subr.mxu0 %v1257
          %1940 = vmatpush1.msra.mxu0 %v1256
          %1941 = vmatprep.subr.mxu0 %v1255
          %1942 = vmatpush1.msra.mxu0 %v1254
          %1943 = vmatprep.subr.mxu0 %v1253
          %1944 = vmatpush1.msra.mxu0 %v1252
          %1945 = vmatprep.subr.mxu0 %v1251
          %1946 = vmatpush1.msra.mxu0 %v1250
          %1947 = vmatprep.subr.mxu0 %v1249
          %1948 = vmatpush1.msra.mxu0 %v1248
          %1949 = vmatprep.subr.mxu0 %v1247
          %1950 = vmatpush1.msra.mxu0 %v1246
          %1951 = vmatprep.subr.mxu0 %v1245
          %1952 = vmatpush1.msra.mxu0 %v1244
          %1953 = vmatprep.subr.mxu0 %v1243
          %1954 = vmatpush1.msra.mxu0 %v1242
          %1955 = vmatprep.subr.mxu0 %v1241
          %1956 = vmatpush1.msra.mxu0 %v1240
          %1957 = vmatprep.subr.mxu0 %v1239
          %1958 = vmatpush1.msra.mxu0 %v1238
          %1959 = vmatprep.subr.mxu0 %v1237
          %1960 = vmatpush1.msra.mxu0 %v1236
          %1961 = vmatprep.subr.mxu0 %v1235
          %1962 = vmatpush1.msra.mxu0 %v1234
          %1963 = vmatprep.subr.mxu0 %v1233
          %1964 = vmatpush1.msra.mxu0 %v1232
          %1965 = vmatprep.subr.mxu0 %v1295
          %1966 = vmatpush2.msra.mxu0 %v1294
          %1967 = vmatprep.subr.mxu0 %v1293
          %1968 = vmatpush2.msra.mxu0 %v1292
          %1969 = vmatprep.subr.mxu0 %v1291
          %1970 = vmatpush2.msra.mxu0 %v1290
          %1971 = vmatprep.subr.mxu0 %v1289
          %1972 = vmatpush2.msra.mxu0 %v1288
          %1973 = vmatprep.subr.mxu0 %v1287
          %1974 = vmatpush2.msra.mxu0 %v1286
          %1975 = vmatprep.subr.mxu0 %v1285
          %1976 = vmatpush2.msra.mxu0 %v1284
          %1977 = vmatprep.subr.mxu0 %v1283
          %1978 = vmatpush2.msra.mxu0 %v1282
          %1979 = vmatprep.subr.mxu0 %v1281
          %1980 = vmatpush2.msra.mxu0 %v1280
          %1981 = vmatprep.subr.mxu0 %v1279
          %1982 = vmatpush2.msra.mxu0 %v1278
          %1983 = vmatprep.subr.mxu0 %v1277
          %1984 = vmatpush2.msra.mxu0 %v1276
          %1985 = vmatprep.subr.mxu0 %v1275
          %1986 = vmatpush2.msra.mxu0 %v1274
          %1987 = vmatprep.subr.mxu0 %v1273
          %1988 = vmatpush2.msra.mxu0 %v1272
          %1989 = vmatprep.subr.mxu0 %v1271
          %1990 = vmatpush2.msra.mxu0 %v1270
          %1991 = vmatprep.subr.mxu0 %v1269
          %1992 = vmatpush2.msra.mxu0 %v1268
          %1993 = vmatprep.subr.mxu0 %v1267
          %1994 = vmatpush2.msra.mxu0 %v1266
          %1995 = vmatprep.subr.mxu0 %v1265
          %1996 = vmatpush2.msra.mxu0 %v1264
          %1997 = vmatprep.mubr.f32.mxu0 %v873
          %1998 = vmatmul.mubr.f32.gmra.mxu0 %v872
          %v1999 = vpop.f32.mrf.mxu0
          %v2000 = vadd.f32 %v1911, %v1999
          %v2001 = vpop.f32.mrf.mxu0
          %v2002 = vadd.f32 %v1913, %v2001
          %2003 = vmatprep.mubr.f32.mxu0 %v875
          %2004 = vmatmul.mubr.f32.gmra.mxu0 %v874
          %v2005 = vpop.f32.mrf.mxu0
          %v2006 = vadd.f32 %v1917, %v2005
          %v2007 = vpop.f32.mrf.mxu0
          %v2008 = vadd.f32 %v1919, %v2007
          %2009 = vmatprep.mubr.f32.mxu0 %v877
          %2010 = vmatmul.mubr.f32.gmra.mxu0 %v876
          %v2011 = vpop.f32.mrf.mxu0
          %v2012 = vadd.f32 %v1923, %v2011
          %v2013 = vpop.f32.mrf.mxu0
          %v2014 = vadd.f32 %v1925, %v2013
          %2015 = vmatprep.mubr.f32.mxu0 %v879
          %2016 = vmatmul.mubr.f32.gmra.mxu0 %v878
          %v2017 = vpop.f32.mrf.mxu0
          %v2018 = vadd.f32 %v1929, %v2017
          %v2019 = vpop.f32.mrf.mxu0
          %v2020 = vadd.f32 %v1931, %v2019
          %2021 = vdwg.mxu0
          %2022 = vmatprep.subr.mxu0 %v1327
          %2023 = vmatpush1.msra.mxu0 %v1326
          %2024 = vmatprep.subr.mxu0 %v1325
          %2025 = vmatpush1.msra.mxu0 %v1324
          %2026 = vmatprep.subr.mxu0 %v1323
          %2027 = vmatpush1.msra.mxu0 %v1322
          %2028 = vmatprep.subr.mxu0 %v1321
          %2029 = vmatpush1.msra.mxu0 %v1320
          %2030 = vmatprep.subr.mxu0 %v1319
          %2031 = vmatpush1.msra.mxu0 %v1318
          %2032 = vmatprep.subr.mxu0 %v1317
          %2033 = vmatpush1.msra.mxu0 %v1316
          %2034 = vmatprep.subr.mxu0 %v1315
          %2035 = vmatpush1.msra.mxu0 %v1314
          %2036 = vmatprep.subr.mxu0 %v1313
          %2037 = vmatpush1.msra.mxu0 %v1312
          %2038 = vmatprep.subr.mxu0 %v1311
          %2039 = vmatpush1.msra.mxu0 %v1310
          %2040 = vmatprep.subr.mxu0 %v1309
          %2041 = vmatpush1.msra.mxu0 %v1308
          %2042 = vmatprep.subr.mxu0 %v1307
          %2043 = vmatpush1.msra.mxu0 %v1306
          %2044 = vmatprep.subr.mxu0 %v1305
          %2045 = vmatpush1.msra.mxu0 %v1304
          %2046 = vmatprep.subr.mxu0 %v1303
          %2047 = vmatpush1.msra.mxu0 %v1302
          %2048 = vmatprep.subr.mxu0 %v1301
          %2049 = vmatpush1.msra.mxu0 %v1300
          %2050 = vmatprep.subr.mxu0 %v1299
          %2051 = vmatpush1.msra.mxu0 %v1298
          %2052 = vmatprep.subr.mxu0 %v1297
          %2053 = vmatpush1.msra.mxu0 %v1296
          %2054 = vmatprep.subr.mxu0 %v1359
          %2055 = vmatpush2.msra.mxu0 %v1358
          %2056 = vmatprep.subr.mxu0 %v1357
          %2057 = vmatpush2.msra.mxu0 %v1356
          %2058 = vmatprep.subr.mxu0 %v1355
          %2059 = vmatpush2.msra.mxu0 %v1354
          %2060 = vmatprep.subr.mxu0 %v1353
          %2061 = vmatpush2.msra.mxu0 %v1352
          %2062 = vmatprep.subr.mxu0 %v1351
          %2063 = vmatpush2.msra.mxu0 %v1350
          %2064 = vmatprep.subr.mxu0 %v1349
          %2065 = vmatpush2.msra.mxu0 %v1348
          %2066 = vmatprep.subr.mxu0 %v1347
          %2067 = vmatpush2.msra.mxu0 %v1346
          %2068 = vmatprep.subr.mxu0 %v1345
          %2069 = vmatpush2.msra.mxu0 %v1344
          %2070 = vmatprep.subr.mxu0 %v1343
          %2071 = vmatpush2.msra.mxu0 %v1342
          %2072 = vmatprep.subr.mxu0 %v1341
          %2073 = vmatpush2.msra.mxu0 %v1340
          %2074 = vmatprep.subr.mxu0 %v1339
          %2075 = vmatpush2.msra.mxu0 %v1338
          %2076 = vmatprep.subr.mxu0 %v1337
          %2077 = vmatpush2.msra.mxu0 %v1336
          %2078 = vmatprep.subr.mxu0 %v1335
          %2079 = vmatpush2.msra.mxu0 %v1334
          %2080 = vmatprep.subr.mxu0 %v1333
          %2081 = vmatpush2.msra.mxu0 %v1332
          %2082 = vmatprep.subr.mxu0 %v1331
          %2083 = vmatpush2.msra.mxu0 %v1330
          %2084 = vmatprep.subr.mxu0 %v1329
          %2085 = vmatpush2.msra.mxu0 %v1328
          %2086 = vmatprep.mubr.f32.mxu0 %v795
          %2087 = vmatmul.mubr.f32.gmra.mxu0 %v794
          %v2088 = vpop.f32.mrf.mxu0
          %v2089 = vadd.f32 %v2000, %v2088
          %v2090 = vpop.f32.mrf.mxu0
          %v2091 = vadd.f32 %v2002, %v2090
          %2092 = vmatprep.mubr.f32.mxu0 %v889
          %2093 = vmatmul.mubr.f32.gmra.mxu0 %v888
          %v2094 = vpop.f32.mrf.mxu0
          %v2095 = vadd.f32 %v2006, %v2094
          %v2096 = vpop.f32.mrf.mxu0
          %v2097 = vadd.f32 %v2008, %v2096
          %2098 = vmatprep.mubr.f32.mxu0 %v799
          %2099 = vmatmul.mubr.f32.gmra.mxu0 %v798
          %v2100 = vpop.f32.mrf.mxu0
          %v2101 = vadd.f32 %v2012, %v2100
          %v2102 = vpop.f32.mrf.mxu0
          %v2103 = vadd.f32 %v2014, %v2102
          %2104 = vmatprep.mubr.f32.mxu0 %v891
          %2105 = vmatmul.mubr.f32.gmra.mxu0 %v890
          %v2106 = vpop.f32.mrf.mxu0
          %v2107 = vadd.f32 %v2018, %v2106
          %v2108 = vpop.f32.mrf.mxu0
          %v2109 = vadd.f32 %v2020, %v2108
          %2110 = vdwg.mxu0
          %2111 = vmatprep.subr.mxu0 %v1391
          %2112 = vmatpush1.msra.mxu0 %v1390
          %2113 = vmatprep.subr.mxu0 %v1389
          %2114 = vmatpush1.msra.mxu0 %v1388
          %2115 = vmatprep.subr.mxu0 %v1387
          %2116 = vmatpush1.msra.mxu0 %v1386
          %2117 = vmatprep.subr.mxu0 %v1385
          %2118 = vmatpush1.msra.mxu0 %v1384
          %2119 = vmatprep.subr.mxu0 %v1383
          %2120 = vmatpush1.msra.mxu0 %v1382
          %2121 = vmatprep.subr.mxu0 %v1381
          %2122 = vmatpush1.msra.mxu0 %v1380
          %2123 = vmatprep.subr.mxu0 %v1379
          %2124 = vmatpush1.msra.mxu0 %v1378
          %2125 = vmatprep.subr.mxu0 %v1377
          %2126 = vmatpush1.msra.mxu0 %v1376
          %2127 = vmatprep.subr.mxu0 %v1375
          %2128 = vmatpush1.msra.mxu0 %v1374
          %2129 = vmatprep.subr.mxu0 %v1373
          %2130 = vmatpush1.msra.mxu0 %v1372
          %2131 = vmatprep.subr.mxu0 %v1371
          %2132 = vmatpush1.msra.mxu0 %v1370
          %2133 = vmatprep.subr.mxu0 %v1369
          %2134 = vmatpush1.msra.mxu0 %v1368
          %2135 = vmatprep.subr.mxu0 %v1367
          %2136 = vmatpush1.msra.mxu0 %v1366
          %2137 = vmatprep.subr.mxu0 %v1365
          %2138 = vmatpush1.msra.mxu0 %v1364
          %2139 = vmatprep.subr.mxu0 %v1363
          %2140 = vmatpush1.msra.mxu0 %v1362
          %2141 = vmatprep.subr.mxu0 %v1361
          %2142 = vmatpush1.msra.mxu0 %v1360
          %2143 = vmatprep.subr.mxu0 %v1423
          %2144 = vmatpush2.msra.mxu0 %v1422
          %2145 = vmatprep.subr.mxu0 %v1421
          %2146 = vmatpush2.msra.mxu0 %v1420
          %2147 = vmatprep.subr.mxu0 %v1419
          %2148 = vmatpush2.msra.mxu0 %v1418
          %2149 = vmatprep.subr.mxu0 %v1417
          %2150 = vmatpush2.msra.mxu0 %v1416
          %2151 = vmatprep.subr.mxu0 %v1415
          %2152 = vmatpush2.msra.mxu0 %v1414
          %2153 = vmatprep.subr.mxu0 %v1413
          %2154 = vmatpush2.msra.mxu0 %v1412
          %2155 = vmatprep.subr.mxu0 %v1411
          %2156 = vmatpush2.msra.mxu0 %v1410
          %2157 = vmatprep.subr.mxu0 %v1409
          %2158 = vmatpush2.msra.mxu0 %v1408
          %2159 = vmatprep.subr.mxu0 %v1407
          %2160 = vmatpush2.msra.mxu0 %v1406
          %2161 = vmatprep.subr.mxu0 %v1405
          %2162 = vmatpush2.msra.mxu0 %v1404
          %2163 = vmatprep.subr.mxu0 %v1403
          %2164 = vmatpush2.msra.mxu0 %v1402
          %2165 = vmatprep.subr.mxu0 %v1401
          %2166 = vmatpush2.msra.mxu0 %v1400
          %2167 = vmatprep.subr.mxu0 %v1399
          %2168 = vmatpush2.msra.mxu0 %v1398
          %2169 = vmatprep.subr.mxu0 %v1397
          %2170 = vmatpush2.msra.mxu0 %v1396
          %2171 = vmatprep.subr.mxu0 %v1395
          %2172 = vmatpush2.msra.mxu0 %v1394
          %2173 = vmatprep.subr.mxu0 %v1393
          %2174 = vmatpush2.msra.mxu0 %v1392
          %2175 = vmatprep.mubr.f32.mxu0 %v811
          %2176 = vmatmul.mubr.f32.gmra.mxu0 %v810
          %v2177 = vpop.f32.mrf.mxu0
          %v2178 = vadd.f32 %v2089, %v2177
          %v2179 = vpop.f32.mrf.mxu0
          %v2180 = vadd.f32 %v2091, %v2179
          %2181 = vmatprep.mubr.f32.mxu0 %v897
          %2182 = vmatmul.mubr.f32.gmra.mxu0 %v896
          %v2183 = vpop.f32.mrf.mxu0
          %v2184 = vadd.f32 %v2095, %v2183
          %v2185 = vpop.f32.mrf.mxu0
          %v2186 = vadd.f32 %v2097, %v2185
          %2187 = vmatprep.mubr.f32.mxu0 %v815
          %2188 = vmatmul.mubr.f32.gmra.mxu0 %v814
          %v2189 = vpop.f32.mrf.mxu0
          %v2190 = vadd.f32 %v2101, %v2189
          %v2191 = vpop.f32.mrf.mxu0
          %v2192 = vadd.f32 %v2103, %v2191
          %2193 = vmatprep.mubr.f32.mxu0 %v899
          %2194 = vmatmul.mubr.f32.gmra.mxu0 %v898
          %v2195 = vpop.f32.mrf.mxu0
          %v2196 = vadd.f32 %v2107, %v2195
          %v2197 = vpop.f32.mrf.mxu0
          %v2198 = vadd.f32 %v2109, %v2197
          %2199 = vdwg.mxu0
          %2200 = vmatprep.subr.mxu0 %v1455
          %2201 = vmatpush1.msra.mxu0 %v1454
          %2202 = vmatprep.subr.mxu0 %v1453
          %2203 = vmatpush1.msra.mxu0 %v1452
          %2204 = vmatprep.subr.mxu0 %v1451
          %2205 = vmatpush1.msra.mxu0 %v1450
          %2206 = vmatprep.subr.mxu0 %v1449
          %2207 = vmatpush1.msra.mxu0 %v1448
          %2208 = vmatprep.subr.mxu0 %v1447
          %2209 = vmatpush1.msra.mxu0 %v1446
          %2210 = vmatprep.subr.mxu0 %v1445
          %2211 = vmatpush1.msra.mxu0 %v1444
          %2212 = vmatprep.subr.mxu0 %v1443
          %2213 = vmatpush1.msra.mxu0 %v1442
          %2214 = vmatprep.subr.mxu0 %v1441
          %2215 = vmatpush1.msra.mxu0 %v1440
          %2216 = vmatprep.subr.mxu0 %v1439
          %2217 = vmatpush1.msra.mxu0 %v1438
          %2218 = vmatprep.subr.mxu0 %v1437
          %2219 = vmatpush1.msra.mxu0 %v1436
          %2220 = vmatprep.subr.mxu0 %v1435
          %2221 = vmatpush1.msra.mxu0 %v1434
          %2222 = vmatprep.subr.mxu0 %v1433
          %2223 = vmatpush1.msra.mxu0 %v1432
          %2224 = vmatprep.subr.mxu0 %v1431
          %2225 = vmatpush1.msra.mxu0 %v1430
          %2226 = vmatprep.subr.mxu0 %v1429
          %2227 = vmatpush1.msra.mxu0 %v1428
          %2228 = vmatprep.subr.mxu0 %v1427
          %2229 = vmatpush1.msra.mxu0 %v1426
          %2230 = vmatprep.subr.mxu0 %v1425
          %2231 = vmatpush1.msra.mxu0 %v1424
          %2232 = vmatprep.subr.mxu0 %v1487
          %2233 = vmatpush2.msra.mxu0 %v1486
          %2234 = vmatprep.subr.mxu0 %v1485
          %2235 = vmatpush2.msra.mxu0 %v1484
          %2236 = vmatprep.subr.mxu0 %v1483
          %2237 = vmatpush2.msra.mxu0 %v1482
          %2238 = vmatprep.subr.mxu0 %v1481
          %2239 = vmatpush2.msra.mxu0 %v1480
          %2240 = vmatprep.subr.mxu0 %v1479
          %2241 = vmatpush2.msra.mxu0 %v1478
          %2242 = vmatprep.subr.mxu0 %v1477
          %2243 = vmatpush2.msra.mxu0 %v1476
          %2244 = vmatprep.subr.mxu0 %v1475
          %2245 = vmatpush2.msra.mxu0 %v1474
          %2246 = vmatprep.subr.mxu0 %v1473
          %2247 = vmatpush2.msra.mxu0 %v1472
          %2248 = vmatprep.subr.mxu0 %v1471
          %2249 = vmatpush2.msra.mxu0 %v1470
          %2250 = vmatprep.subr.mxu0 %v1469
          %2251 = vmatpush2.msra.mxu0 %v1468
          %2252 = vmatprep.subr.mxu0 %v1467
          %2253 = vmatpush2.msra.mxu0 %v1466
          %2254 = vmatprep.subr.mxu0 %v1465
          %2255 = vmatpush2.msra.mxu0 %v1464
          %2256 = vmatprep.subr.mxu0 %v1463
          %2257 = vmatpush2.msra.mxu0 %v1462
          %2258 = vmatprep.subr.mxu0 %v1461
          %2259 = vmatpush2.msra.mxu0 %v1460
          %2260 = vmatprep.subr.mxu0 %v1459
          %2261 = vmatpush2.msra.mxu0 %v1458
          %2262 = vmatprep.subr.mxu0 %v1457
          %2263 = vmatpush2.msra.mxu0 %v1456
          %2264 = vmatprep.mubr.f32.mxu0 %v827
          %2265 = vmatmul.mubr.f32.gmra.mxu0 %v826
          %v2266 = vpop.f32.mrf.mxu0
          %v2267 = vadd.f32 %v2178, %v2266
          %v2268 = vpop.f32.mrf.mxu0
          %v2269 = vadd.f32 %v2180, %v2268
          %2270 = vmatprep.mubr.f32.mxu0 %v905
          %2271 = vmatmul.mubr.f32.gmra.mxu0 %v904
          %v2272 = vpop.f32.mrf.mxu0
          %v2273 = vadd.f32 %v2184, %v2272
          %v2274 = vpop.f32.mrf.mxu0
          %v2275 = vadd.f32 %v2186, %v2274
          %2276 = vmatprep.mubr.f32.mxu0 %v831
          %2277 = vmatmul.mubr.f32.gmra.mxu0 %v830
          %v2278 = vpop.f32.mrf.mxu0
          %v2279 = vadd.f32 %v2190, %v2278
          %v2280 = vpop.f32.mrf.mxu0
          %v2281 = vadd.f32 %v2192, %v2280
          %2282 = vmatprep.mubr.f32.mxu0 %v907
          %2283 = vmatmul.mubr.f32.gmra.mxu0 %v906
          %v2284 = vpop.f32.mrf.mxu0
          %v2285 = vadd.f32 %v2196, %v2284
          %v2286 = vpop.f32.mrf.mxu0
          %v2287 = vadd.f32 %v2198, %v2286
          %2288 = vdwg.mxu0
          %v2290 = vlaneseq
          %v2291 = vshrl.u32 %v2290, 7
          %v2292 = vsub.s32 0, %v2291
          %v2293 = vrot.slane %v616, %v2292
          %v2294 = vlaneseq
          %v2295 = vshrl.u32 %v2294, 7
          %v2296 = vsub.s32 1, %v2295
          %v2297 = vrot.slane %v616, %v2296
          %v2300 = vmul.f32 %v2267, %v2293
          %v2301 = vmul.f32 %v2269, %v2297
          %v2302 = vmul.f32 %v2273, %v2293
          %v2303 = vmul.f32 %v2275, %v2297
          %v2304 = vmul.f32 %v2279, %v2293
          %v2305 = vmul.f32 %v2281, %v2297
          %v2306 = vmul.f32 %v2285, %v2293
          %v2307 = vmul.f32 %v2287, %v2297
          %v2309 = vlaneseq
          %v2310 = vshrl.u32 %v2309, 7
          %v2311 = vsub.s32 0, %v2310
          %v2312 = vrot.slane %v617, %v2311
          %v2313 = vlaneseq
          %v2314 = vshrl.u32 %v2313, 7
          %v2315 = vsub.s32 1, %v2314
          %v2316 = vrot.slane %v617, %v2315
          %v2319 = vadd.f32 %v2300, %v2312
          %v2320 = vadd.f32 %v2301, %v2316
          %v2321 = vadd.f32 %v2302, %v2312
          %v2322 = vadd.f32 %v2303, %v2316
          %v2323 = vadd.f32 %v2304, %v2312
          %v2324 = vadd.f32 %v2305, %v2316
          %v2325 = vadd.f32 %v2306, %v2312
          %v2326 = vadd.f32 %v2307, %v2316
          %v2327 = vmax.f32 %v2319, 0.0
          %v2328 = vmax.f32 %v2320, 0.0
          %v2329 = vmax.f32 %v2321, 0.0
          %v2330 = vmax.f32 %v2322, 0.0
          %v2331 = vmax.f32 %v2323, 0.0
          %v2332 = vmax.f32 %v2324, 0.0
          %v2333 = vmax.f32 %v2325, 0.0
          %v2334 = vmax.f32 %v2326, 0.0
          %v2343 = vcombine.low %v2327, %v2328
          %v2344 = vcombine.high %v2327, %v2328
          %v2345 = vcombine.low %v2329, %v2330
          %v2346 = vcombine.high %v2329, %v2330
          %v2347 = vcombine.low %v2331, %v2332
          %v2348 = vcombine.high %v2331, %v2332
          %v2349 = vcombine.low %v2333, %v2334
          %v2350 = vcombine.high %v2333, %v2334
          %v2351 = vld [vmem:[#allocation10] sm:$0x3]
          %v2352 = vld [vmem:[#allocation11] sm:$0x3]
          %v2353 = vld [vmem:[%s1] sm:$0xff]
          %v2354 = vld [vmem:[%s1 + $0x8] sm:$0xff]
          %v2355 = vld [vmem:[%s1 + $0x10] sm:$0x3]
          %v2356 = vld [vmem:[%s1 + $0x18] sm:$0x3]
          %v2357 = vld [vmem:[%s1 + $0x20] sm:$0xff]
          %v2358 = vld [vmem:[%s1 + $0x28] sm:$0xff]
          %v2359 = vld [vmem:[%s1 + $0x30] sm:$0x3]
          %v2360 = vld [vmem:[%s1 + $0x38] sm:$0x3]
          %v2361 = vld [vmem:[%s1 + $0x40] sm:$0xff]
          %v2362 = vld [vmem:[%s1 + $0x48] sm:$0xff]
          %v2363 = vld [vmem:[%s1 + $0x50] sm:$0x3]
          %v2364 = vld [vmem:[%s1 + $0x58] sm:$0x3]
          %v2365 = vld [vmem:[%s1 + $0x60] sm:$0xff]
          %v2366 = vld [vmem:[%s1 + $0x68] sm:$0xff]
          %v2367 = vld [vmem:[%s1 + $0x70] sm:$0x3]
          %v2368 = vld [vmem:[%s1 + $0x78] sm:$0x3]
          %v2369 = vld [vmem:[%s1 + $0x80] sm:$0xff]
          %v2370 = vld [vmem:[%s1 + $0x88] sm:$0xff]
          %v2371 = vld [vmem:[%s1 + $0x90] sm:$0x3]
          %v2372 = vld [vmem:[%s1 + $0x98] sm:$0x3]
          %v2373 = vld [vmem:[%s1 + $0xa0] sm:$0xff]
          %v2374 = vld [vmem:[%s1 + $0xa8] sm:$0xff]
          %v2375 = vld [vmem:[%s1 + $0xb0] sm:$0x3]
          %v2376 = vld [vmem:[%s1 + $0xb8] sm:$0x3]
          %v2377 = vld [vmem:[%s1 + $0xc0] sm:$0xff]
          %v2378 = vld [vmem:[%s1 + $0xc8] sm:$0xff]
          %v2379 = vld [vmem:[%s1 + $0xd0] sm:$0x3]
          %v2380 = vld [vmem:[%s1 + $0xd8] sm:$0x3]
          %v2381 = vld [vmem:[%s1 + $0xe0] sm:$0xff]
          %v2382 = vld [vmem:[%s1 + $0xe8] sm:$0xff]
          %v2383 = vld [vmem:[%s1 + $0xf0] sm:$0x3]
          %v2384 = vld [vmem:[%s1 + $0xf8] sm:$0x3]
          %v2385 = vld [vmem:[%s1 + $0x100] sm:$0xff]
          %v2386 = vld [vmem:[%s1 + $0x108] sm:$0xff]
          %v2387 = vld [vmem:[%s1 + $0x110] sm:$0x3]
          %v2388 = vld [vmem:[%s1 + $0x118] sm:$0x3]
          %v2389 = vld [vmem:[%s1 + $0x120] sm:$0xff]
          %v2390 = vld [vmem:[%s1 + $0x128] sm:$0xff]
          %v2391 = vld [vmem:[%s1 + $0x130] sm:$0x3]
          %v2392 = vld [vmem:[%s1 + $0x138] sm:$0x3]
          %v2393 = vld [vmem:[%s1 + $0x140] sm:$0xff]
          %v2394 = vld [vmem:[%s1 + $0x148] sm:$0xff]
          %v2395 = vld [vmem:[%s1 + $0x150] sm:$0x3]
          %v2396 = vld [vmem:[%s1 + $0x158] sm:$0x3]
          %v2397 = vld [vmem:[%s1 + $0x160] sm:$0xff]
          %v2398 = vld [vmem:[%s1 + $0x168] sm:$0xff]
          %v2399 = vld [vmem:[%s1 + $0x170] sm:$0x3]
          %v2400 = vld [vmem:[%s1 + $0x178] sm:$0x3]
          %v2401 = vld [vmem:[%s1 + $0x180] sm:$0xff]
          %v2402 = vld [vmem:[%s1 + $0x188] sm:$0xff]
          %v2403 = vld [vmem:[%s1 + $0x190] sm:$0x3]
          %v2404 = vld [vmem:[%s1 + $0x198] sm:$0x3]
          %v2405 = vld [vmem:[%s1 + $0x1a0] sm:$0xff]
          %v2406 = vld [vmem:[%s1 + $0x1a8] sm:$0xff]
          %v2407 = vld [vmem:[%s1 + $0x1b0] sm:$0x3]
          %v2408 = vld [vmem:[%s1 + $0x1b8] sm:$0x3]
          %v2409 = vld [vmem:[%s1 + $0x1c0] sm:$0xff]
          %v2410 = vld [vmem:[%s1 + $0x1c8] sm:$0xff]
          %v2411 = vld [vmem:[%s1 + $0x1d0] sm:$0x3]
          %v2412 = vld [vmem:[%s1 + $0x1d8] sm:$0x3]
          %v2413 = vld [vmem:[%s1 + $0x1e0] sm:$0xff]
          %v2414 = vld [vmem:[%s1 + $0x1e8] sm:$0xff]
          %v2415 = vld [vmem:[%s1 + $0x1f0] sm:$0x3]
          %v2416 = vld [vmem:[%s1 + $0x1f8] sm:$0x3]
          %v2417 = vld [vmem:[%s1 + $0x200] sm:$0xff]
          %v2418 = vld [vmem:[%s1 + $0x208] sm:$0xff]
          %v2419 = vld [vmem:[%s1 + $0x210] sm:$0x3]
          %v2420 = vld [vmem:[%s1 + $0x218] sm:$0x3]
          %v2421 = vld [vmem:[%s1 + $0x220] sm:$0xff]
          %v2422 = vld [vmem:[%s1 + $0x228] sm:$0xff]
          %v2423 = vld [vmem:[%s1 + $0x230] sm:$0x3]
          %v2424 = vld [vmem:[%s1 + $0x238] sm:$0x3]
          %v2425 = vld [vmem:[%s1 + $0x240] sm:$0xff]
          %v2426 = vld [vmem:[%s1 + $0x248] sm:$0xff]
          %v2427 = vld [vmem:[%s1 + $0x250] sm:$0x3]
          %v2428 = vld [vmem:[%s1 + $0x258] sm:$0x3]
          %v2429 = vld [vmem:[%s1 + $0x260] sm:$0xff]
          %v2430 = vld [vmem:[%s1 + $0x268] sm:$0xff]
          %v2431 = vld [vmem:[%s1 + $0x270] sm:$0x3]
          %v2432 = vld [vmem:[%s1 + $0x278] sm:$0x3]
          %vm2497 = vcmask 1046528
          %v2498 = vrot.slane %v2353, 1
          %v2499 = vrot.slane %v2355, 1
          %v2500 = vsel %vm2497, %v2498, %v2499
          %v2501 = vrot.slane %v2354, 1
          %v2502 = vrot.slane %v2356, 1
          %v2503 = vsel %vm2497, %v2501, %v2502
          %v2504 = vrot.slane %v2357, 1
          %v2505 = vrot.slane %v2359, 1
          %v2506 = vsel %vm2497, %v2504, %v2505
          %v2507 = vrot.slane %v2358, 1
          %v2508 = vrot.slane %v2360, 1
          %v2509 = vsel %vm2497, %v2507, %v2508
          %v2510 = vrot.slane %v2361, 1
          %v2511 = vrot.slane %v2363, 1
          %v2512 = vsel %vm2497, %v2510, %v2511
          %v2513 = vrot.slane %v2362, 1
          %v2514 = vrot.slane %v2364, 1
          %v2515 = vsel %vm2497, %v2513, %v2514
          %v2516 = vrot.slane %v2365, 1
          %v2517 = vrot.slane %v2367, 1
          %v2518 = vsel %vm2497, %v2516, %v2517
          %v2519 = vrot.slane %v2366, 1
          %v2520 = vrot.slane %v2368, 1
          %v2521 = vsel %vm2497, %v2519, %v2520
          %v2522 = vrot.slane %v2369, 1
          %v2523 = vrot.slane %v2371, 1
          %v2524 = vsel %vm2497, %v2522, %v2523
          %v2525 = vrot.slane %v2370, 1
          %v2526 = vrot.slane %v2372, 1
          %v2527 = vsel %vm2497, %v2525, %v2526
          %v2528 = vrot.slane %v2373, 1
          %v2529 = vrot.slane %v2375, 1
          %v2530 = vsel %vm2497, %v2528, %v2529
          %v2531 = vrot.slane %v2374, 1
          %v2532 = vrot.slane %v2376, 1
          %v2533 = vsel %vm2497, %v2531, %v2532
          %v2534 = vrot.slane %v2377, 1
          %v2535 = vrot.slane %v2379, 1
          %v2536 = vsel %vm2497, %v2534, %v2535
          %v2537 = vrot.slane %v2378, 1
          %v2538 = vrot.slane %v2380, 1
          %v2539 = vsel %vm2497, %v2537, %v2538
          %v2540 = vrot.slane %v2381, 1
          %v2541 = vrot.slane %v2383, 1
          %v2542 = vsel %vm2497, %v2540, %v2541
          %v2543 = vrot.slane %v2382, 1
          %v2544 = vrot.slane %v2384, 1
          %v2545 = vsel %vm2497, %v2543, %v2544
          %v2546 = vrot.slane %v2393, 1
          %v2547 = vrot.slane %v2395, 1
          %v2548 = vsel %vm2497, %v2546, %v2547
          %v2549 = vrot.slane %v2394, 1
          %v2550 = vrot.slane %v2396, 1
          %v2551 = vsel %vm2497, %v2549, %v2550
          %v2552 = vrot.slane %v2397, 1
          %v2553 = vrot.slane %v2399, 1
          %v2554 = vsel %vm2497, %v2552, %v2553
          %v2555 = vrot.slane %v2398, 1
          %v2556 = vrot.slane %v2400, 1
          %v2557 = vsel %vm2497, %v2555, %v2556
          %v2558 = vrot.slane %v2401, 1
          %v2559 = vrot.slane %v2403, 1
          %v2560 = vsel %vm2497, %v2558, %v2559
          %v2561 = vrot.slane %v2402, 1
          %v2562 = vrot.slane %v2404, 1
          %v2563 = vsel %vm2497, %v2561, %v2562
          %v2564 = vrot.slane %v2405, 1
          %v2565 = vrot.slane %v2407, 1
          %v2566 = vsel %vm2497, %v2564, %v2565
          %v2567 = vrot.slane %v2406, 1
          %v2568 = vrot.slane %v2408, 1
          %v2569 = vsel %vm2497, %v2567, %v2568
          %v2570 = vrot.slane %v2409, 1
          %v2571 = vrot.slane %v2411, 1
          %v2572 = vsel %vm2497, %v2570, %v2571
          %v2573 = vrot.slane %v2410, 1
          %v2574 = vrot.slane %v2412, 1
          %v2575 = vsel %vm2497, %v2573, %v2574
          %v2576 = vrot.slane %v2413, 1
          %v2577 = vrot.slane %v2415, 1
          %v2578 = vsel %vm2497, %v2576, %v2577
          %v2579 = vrot.slane %v2414, 1
          %v2580 = vrot.slane %v2416, 1
          %v2581 = vsel %vm2497, %v2579, %v2580
          %v2582 = vrot.slane %v2417, 1
          %v2583 = vrot.slane %v2419, 1
          %v2584 = vsel %vm2497, %v2582, %v2583
          %v2585 = vrot.slane %v2418, 1
          %v2586 = vrot.slane %v2420, 1
          %v2587 = vsel %vm2497, %v2585, %v2586
          %v2588 = vrot.slane %v2421, 1
          %v2589 = vrot.slane %v2423, 1
          %v2590 = vsel %vm2497, %v2588, %v2589
          %v2591 = vrot.slane %v2422, 1
          %v2592 = vrot.slane %v2424, 1
          %v2593 = vsel %vm2497, %v2591, %v2592
          %vm2626 = vcmask 1045504
          %v2627 = vrot.slane %v2353, 2
          %v2628 = vrot.slane %v2355, 2
          %v2629 = vsel %vm2626, %v2627, %v2628
          %v2630 = vrot.slane %v2354, 2
          %v2631 = vrot.slane %v2356, 2
          %v2632 = vsel %vm2626, %v2630, %v2631
          %v2633 = vrot.slane %v2357, 2
          %v2634 = vrot.slane %v2359, 2
          %v2635 = vsel %vm2626, %v2633, %v2634
          %v2636 = vrot.slane %v2358, 2
          %v2637 = vrot.slane %v2360, 2
          %v2638 = vsel %vm2626, %v2636, %v2637
          %v2639 = vrot.slane %v2361, 2
          %v2640 = vrot.slane %v2363, 2
          %v2641 = vsel %vm2626, %v2639, %v2640
          %v2642 = vrot.slane %v2362, 2
          %v2643 = vrot.slane %v2364, 2
          %v2644 = vsel %vm2626, %v2642, %v2643
          %v2645 = vrot.slane %v2365, 2
          %v2646 = vrot.slane %v2367, 2
          %v2647 = vsel %vm2626, %v2645, %v2646
          %v2648 = vrot.slane %v2366, 2
          %v2649 = vrot.slane %v2368, 2
          %v2650 = vsel %vm2626, %v2648, %v2649
          %v2651 = vrot.slane %v2369, 2
          %v2652 = vrot.slane %v2371, 2
          %v2653 = vsel %vm2626, %v2651, %v2652
          %v2654 = vrot.slane %v2370, 2
          %v2655 = vrot.slane %v2372, 2
          %v2656 = vsel %vm2626, %v2654, %v2655
          %v2657 = vrot.slane %v2373, 2
          %v2658 = vrot.slane %v2375, 2
          %v2659 = vsel %vm2626, %v2657, %v2658
          %v2660 = vrot.slane %v2374, 2
          %v2661 = vrot.slane %v2376, 2
          %v2662 = vsel %vm2626, %v2660, %v2661
          %v2663 = vrot.slane %v2377, 2
          %v2664 = vrot.slane %v2379, 2
          %v2665 = vsel %vm2626, %v2663, %v2664
          %v2666 = vrot.slane %v2378, 2
          %v2667 = vrot.slane %v2380, 2
          %v2668 = vsel %vm2626, %v2666, %v2667
          %v2669 = vrot.slane %v2381, 2
          %v2670 = vrot.slane %v2383, 2
          %v2671 = vsel %vm2626, %v2669, %v2670
          %v2672 = vrot.slane %v2382, 2
          %v2673 = vrot.slane %v2384, 2
          %v2674 = vsel %vm2626, %v2672, %v2673
          %v2675 = vrot.slane %v2393, 2
          %v2676 = vrot.slane %v2395, 2
          %v2677 = vsel %vm2626, %v2675, %v2676
          %v2678 = vrot.slane %v2394, 2
          %v2679 = vrot.slane %v2396, 2
          %v2680 = vsel %vm2626, %v2678, %v2679
          %v2681 = vrot.slane %v2397, 2
          %v2682 = vrot.slane %v2399, 2
          %v2683 = vsel %vm2626, %v2681, %v2682
          %v2684 = vrot.slane %v2398, 2
          %v2685 = vrot.slane %v2400, 2
          %v2686 = vsel %vm2626, %v2684, %v2685
          %v2687 = vrot.slane %v2401, 2
          %v2688 = vrot.slane %v2403, 2
          %v2689 = vsel %vm2626, %v2687, %v2688
          %v2690 = vrot.slane %v2402, 2
          %v2691 = vrot.slane %v2404, 2
          %v2692 = vsel %vm2626, %v2690, %v2691
          %v2693 = vrot.slane %v2405, 2
          %v2694 = vrot.slane %v2407, 2
          %v2695 = vsel %vm2626, %v2693, %v2694
          %v2696 = vrot.slane %v2406, 2
          %v2697 = vrot.slane %v2408, 2
          %v2698 = vsel %vm2626, %v2696, %v2697
          %v2699 = vrot.slane %v2409, 2
          %v2700 = vrot.slane %v2411, 2
          %v2701 = vsel %vm2626, %v2699, %v2700
          %v2702 = vrot.slane %v2410, 2
          %v2703 = vrot.slane %v2412, 2
          %v2704 = vsel %vm2626, %v2702, %v2703
          %v2705 = vrot.slane %v2413, 2
          %v2706 = vrot.slane %v2415, 2
          %v2707 = vsel %vm2626, %v2705, %v2706
          %v2708 = vrot.slane %v2414, 2
          %v2709 = vrot.slane %v2416, 2
          %v2710 = vsel %vm2626, %v2708, %v2709
          %v2711 = vrot.slane %v2417, 2
          %v2712 = vrot.slane %v2419, 2
          %v2713 = vsel %vm2626, %v2711, %v2712
          %v2714 = vrot.slane %v2418, 2
          %v2715 = vrot.slane %v2420, 2
          %v2716 = vsel %vm2626, %v2714, %v2715
          %v2717 = vrot.slane %v2421, 2
          %v2718 = vrot.slane %v2423, 2
          %v2719 = vsel %vm2626, %v2717, %v2718
          %v2720 = vrot.slane %v2422, 2
          %v2721 = vrot.slane %v2424, 2
          %v2722 = vsel %vm2626, %v2720, %v2721
          %v2763 = vrot.slane %v2385, 1
          %v2764 = vrot.slane %v2387, 1
          %v2765 = vsel %vm2497, %v2763, %v2764
          %v2766 = vrot.slane %v2386, 1
          %v2767 = vrot.slane %v2388, 1
          %v2768 = vsel %vm2497, %v2766, %v2767
          %v2769 = vrot.slane %v2425, 1
          %v2770 = vrot.slane %v2427, 1
          %v2771 = vsel %vm2497, %v2769, %v2770
          %v2772 = vrot.slane %v2426, 1
          %v2773 = vrot.slane %v2428, 1
          %v2774 = vsel %vm2497, %v2772, %v2773
          %v2779 = vrot.slane %v2385, 2
          %v2780 = vrot.slane %v2387, 2
          %v2781 = vsel %vm2626, %v2779, %v2780
          %v2782 = vrot.slane %v2386, 2
          %v2783 = vrot.slane %v2388, 2
          %v2784 = vsel %vm2626, %v2782, %v2783
          %v2785 = vrot.slane %v2425, 2
          %v2786 = vrot.slane %v2427, 2
          %v2787 = vsel %vm2626, %v2785, %v2786
          %v2788 = vrot.slane %v2426, 2
          %v2789 = vrot.slane %v2428, 2
          %v2790 = vsel %vm2626, %v2788, %v2789
          %v2803 = vrot.slane %v2389, 1
          %v2804 = vrot.slane %v2391, 1
          %v2805 = vsel %vm2497, %v2803, %v2804
          %v2806 = vrot.slane %v2390, 1
          %v2807 = vrot.slane %v2392, 1
          %v2808 = vsel %vm2497, %v2806, %v2807
          %v2809 = vrot.slane %v2429, 1
          %v2810 = vrot.slane %v2431, 1
          %v2811 = vsel %vm2497, %v2809, %v2810
          %v2812 = vrot.slane %v2430, 1
          %v2813 = vrot.slane %v2432, 1
          %v2814 = vsel %vm2497, %v2812, %v2813
          %v2819 = vrot.slane %v2389, 2
          %v2820 = vrot.slane %v2391, 2
          %v2821 = vsel %vm2626, %v2819, %v2820
          %v2822 = vrot.slane %v2390, 2
          %v2823 = vrot.slane %v2392, 2
          %v2824 = vsel %vm2626, %v2822, %v2823
          %v2825 = vrot.slane %v2429, 2
          %v2826 = vrot.slane %v2431, 2
          %v2827 = vsel %vm2626, %v2825, %v2826
          %v2828 = vrot.slane %v2430, 2
          %v2829 = vrot.slane %v2432, 2
          %v2830 = vsel %vm2626, %v2828, %v2829
          %v2835 = vld [vmem:[#allocation8] sm:$0xff]
          %v2836 = vld [vmem:[#allocation8 + $0x8] sm:$0xff]
          %v2837 = vld [vmem:[#allocation8 + $0x10] sm:$0xff]
          %v2838 = vld [vmem:[#allocation8 + $0x18] sm:$0xff]
          %v2839 = vld [vmem:[#allocation8 + $0x20] sm:$0xff]
          %v2840 = vld [vmem:[#allocation8 + $0x28] sm:$0xff]
          %v2841 = vld [vmem:[#allocation8 + $0x30] sm:$0xff]
          %v2842 = vld [vmem:[#allocation8 + $0x38] sm:$0xff]
          %v2843 = vld [vmem:[#allocation8 + $0x40] sm:$0xff]
          %v2844 = vld [vmem:[#allocation8 + $0x48] sm:$0xff]
          %v2845 = vld [vmem:[#allocation8 + $0x50] sm:$0xff]
          %v2846 = vld [vmem:[#allocation8 + $0x58] sm:$0xff]
          %v2847 = vld [vmem:[#allocation8 + $0x60] sm:$0xff]
          %v2848 = vld [vmem:[#allocation8 + $0x68] sm:$0xff]
          %v2849 = vld [vmem:[#allocation8 + $0x70] sm:$0xff]
          %v2850 = vld [vmem:[#allocation8 + $0x78] sm:$0xff]
          %v2851 = vld [vmem:[#allocation8 + $0x80] sm:$0xff]
          %v2852 = vld [vmem:[#allocation8 + $0x88] sm:$0xff]
          %v2853 = vld [vmem:[#allocation8 + $0x90] sm:$0xff]
          %v2854 = vld [vmem:[#allocation8 + $0x98] sm:$0xff]
          %v2855 = vld [vmem:[#allocation8 + $0xa0] sm:$0xff]
          %v2856 = vld [vmem:[#allocation8 + $0xa8] sm:$0xff]
          %v2857 = vld [vmem:[#allocation8 + $0xb0] sm:$0xff]
          %v2858 = vld [vmem:[#allocation8 + $0xb8] sm:$0xff]
          %v2859 = vld [vmem:[#allocation8 + $0xc0] sm:$0xff]
          %v2860 = vld [vmem:[#allocation8 + $0xc8] sm:$0xff]
          %v2861 = vld [vmem:[#allocation8 + $0xd0] sm:$0xff]
          %v2862 = vld [vmem:[#allocation8 + $0xd8] sm:$0xff]
          %v2863 = vld [vmem:[#allocation8 + $0xe0] sm:$0xff]
          %v2864 = vld [vmem:[#allocation8 + $0xe8] sm:$0xff]
          %v2865 = vld [vmem:[#allocation8 + $0xf0] sm:$0xff]
          %v2866 = vld [vmem:[#allocation8 + $0xf8] sm:$0xff]
          %v2867 = vld [vmem:[#allocation8 + $0x100] sm:$0xff]
          %v2868 = vld [vmem:[#allocation8 + $0x108] sm:$0xff]
          %v2869 = vld [vmem:[#allocation8 + $0x110] sm:$0xff]
          %v2870 = vld [vmem:[#allocation8 + $0x118] sm:$0xff]
          %v2871 = vld [vmem:[#allocation8 + $0x120] sm:$0xff]
          %v2872 = vld [vmem:[#allocation8 + $0x128] sm:$0xff]
          %v2873 = vld [vmem:[#allocation8 + $0x130] sm:$0xff]
          %v2874 = vld [vmem:[#allocation8 + $0x138] sm:$0xff]
          %v2875 = vld [vmem:[#allocation8 + $0x140] sm:$0xff]
          %v2876 = vld [vmem:[#allocation8 + $0x148] sm:$0xff]
          %v2877 = vld [vmem:[#allocation8 + $0x150] sm:$0xff]
          %v2878 = vld [vmem:[#allocation8 + $0x158] sm:$0xff]
          %v2879 = vld [vmem:[#allocation8 + $0x160] sm:$0xff]
          %v2880 = vld [vmem:[#allocation8 + $0x168] sm:$0xff]
          %v2881 = vld [vmem:[#allocation8 + $0x170] sm:$0xff]
          %v2882 = vld [vmem:[#allocation8 + $0x178] sm:$0xff]
          %v2883 = vld [vmem:[#allocation8 + $0x180] sm:$0xff]
          %v2884 = vld [vmem:[#allocation8 + $0x188] sm:$0xff]
          %v2885 = vld [vmem:[#allocation8 + $0x190] sm:$0xff]
          %v2886 = vld [vmem:[#allocation8 + $0x198] sm:$0xff]
          %v2887 = vld [vmem:[#allocation8 + $0x1a0] sm:$0xff]
          %v2888 = vld [vmem:[#allocation8 + $0x1a8] sm:$0xff]
          %v2889 = vld [vmem:[#allocation8 + $0x1b0] sm:$0xff]
          %v2890 = vld [vmem:[#allocation8 + $0x1b8] sm:$0xff]
          %v2891 = vld [vmem:[#allocation8 + $0x1c0] sm:$0xff]
          %v2892 = vld [vmem:[#allocation8 + $0x1c8] sm:$0xff]
          %v2893 = vld [vmem:[#allocation8 + $0x1d0] sm:$0xff]
          %v2894 = vld [vmem:[#allocation8 + $0x1d8] sm:$0xff]
          %v2895 = vld [vmem:[#allocation8 + $0x1e0] sm:$0xff]
          %v2896 = vld [vmem:[#allocation8 + $0x1e8] sm:$0xff]
          %v2897 = vld [vmem:[#allocation8 + $0x1f0] sm:$0xff]
          %v2898 = vld [vmem:[#allocation8 + $0x1f8] sm:$0xff]
          %v2899 = vld [vmem:[#allocation8 + $0x200] sm:$0xff]
          %v2900 = vld [vmem:[#allocation8 + $0x208] sm:$0xff]
          %v2901 = vld [vmem:[#allocation8 + $0x210] sm:$0xff]
          %v2902 = vld [vmem:[#allocation8 + $0x218] sm:$0xff]
          %v2903 = vld [vmem:[#allocation8 + $0x220] sm:$0xff]
          %v2904 = vld [vmem:[#allocation8 + $0x228] sm:$0xff]
          %v2905 = vld [vmem:[#allocation8 + $0x230] sm:$0xff]
          %v2906 = vld [vmem:[#allocation8 + $0x238] sm:$0xff]
          %v2907 = vld [vmem:[#allocation8 + $0x240] sm:$0xff]
          %v2908 = vld [vmem:[#allocation8 + $0x248] sm:$0xff]
          %v2909 = vld [vmem:[#allocation8 + $0x250] sm:$0xff]
          %v2910 = vld [vmem:[#allocation8 + $0x258] sm:$0xff]
          %v2911 = vld [vmem:[#allocation8 + $0x260] sm:$0xff]
          %v2912 = vld [vmem:[#allocation8 + $0x268] sm:$0xff]
          %v2913 = vld [vmem:[#allocation8 + $0x270] sm:$0xff]
          %v2914 = vld [vmem:[#allocation8 + $0x278] sm:$0xff]
          %v2915 = vld [vmem:[#allocation8 + $0x280] sm:$0xff]
          %v2916 = vld [vmem:[#allocation8 + $0x288] sm:$0xff]
          %v2917 = vld [vmem:[#allocation8 + $0x290] sm:$0xff]
          %v2918 = vld [vmem:[#allocation8 + $0x298] sm:$0xff]
          %v2919 = vld [vmem:[#allocation8 + $0x2a0] sm:$0xff]
          %v2920 = vld [vmem:[#allocation8 + $0x2a8] sm:$0xff]
          %v2921 = vld [vmem:[#allocation8 + $0x2b0] sm:$0xff]
          %v2922 = vld [vmem:[#allocation8 + $0x2b8] sm:$0xff]
          %v2923 = vld [vmem:[#allocation8 + $0x2c0] sm:$0xff]
          %v2924 = vld [vmem:[#allocation8 + $0x2c8] sm:$0xff]
          %v2925 = vld [vmem:[#allocation8 + $0x2d0] sm:$0xff]
          %v2926 = vld [vmem:[#allocation8 + $0x2d8] sm:$0xff]
          %v2927 = vld [vmem:[#allocation8 + $0x2e0] sm:$0xff]
          %v2928 = vld [vmem:[#allocation8 + $0x2e8] sm:$0xff]
          %v2929 = vld [vmem:[#allocation8 + $0x2f0] sm:$0xff]
          %v2930 = vld [vmem:[#allocation8 + $0x2f8] sm:$0xff]
          %v2931 = vld [vmem:[#allocation8 + $0x300] sm:$0xff]
          %v2932 = vld [vmem:[#allocation8 + $0x308] sm:$0xff]
          %v2933 = vld [vmem:[#allocation8 + $0x310] sm:$0xff]
          %v2934 = vld [vmem:[#allocation8 + $0x318] sm:$0xff]
          %v2935 = vld [vmem:[#allocation8 + $0x320] sm:$0xff]
          %v2936 = vld [vmem:[#allocation8 + $0x328] sm:$0xff]
          %v2937 = vld [vmem:[#allocation8 + $0x330] sm:$0xff]
          %v2938 = vld [vmem:[#allocation8 + $0x338] sm:$0xff]
          %v2939 = vld [vmem:[#allocation8 + $0x340] sm:$0xff]
          %v2940 = vld [vmem:[#allocation8 + $0x348] sm:$0xff]
          %v2941 = vld [vmem:[#allocation8 + $0x350] sm:$0xff]
          %v2942 = vld [vmem:[#allocation8 + $0x358] sm:$0xff]
          %v2943 = vld [vmem:[#allocation8 + $0x360] sm:$0xff]
          %v2944 = vld [vmem:[#allocation8 + $0x368] sm:$0xff]
          %v2945 = vld [vmem:[#allocation8 + $0x370] sm:$0xff]
          %v2946 = vld [vmem:[#allocation8 + $0x378] sm:$0xff]
          %v2947 = vld [vmem:[#allocation8 + $0x380] sm:$0xff]
          %v2948 = vld [vmem:[#allocation8 + $0x388] sm:$0xff]
          %v2949 = vld [vmem:[#allocation8 + $0x390] sm:$0xff]
          %v2950 = vld [vmem:[#allocation8 + $0x398] sm:$0xff]
          %v2951 = vld [vmem:[#allocation8 + $0x3a0] sm:$0xff]
          %v2952 = vld [vmem:[#allocation8 + $0x3a8] sm:$0xff]
          %v2953 = vld [vmem:[#allocation8 + $0x3b0] sm:$0xff]
          %v2954 = vld [vmem:[#allocation8 + $0x3b8] sm:$0xff]
          %v2955 = vld [vmem:[#allocation8 + $0x3c0] sm:$0xff]
          %v2956 = vld [vmem:[#allocation8 + $0x3c8] sm:$0xff]
          %v2957 = vld [vmem:[#allocation8 + $0x3d0] sm:$0xff]
          %v2958 = vld [vmem:[#allocation8 + $0x3d8] sm:$0xff]
          %v2959 = vld [vmem:[#allocation8 + $0x3e0] sm:$0xff]
          %v2960 = vld [vmem:[#allocation8 + $0x3e8] sm:$0xff]
          %v2961 = vld [vmem:[#allocation8 + $0x3f0] sm:$0xff]
          %v2962 = vld [vmem:[#allocation8 + $0x3f8] sm:$0xff]
          %v2963 = vld [vmem:[#allocation8 + $0x400] sm:$0xff]
          %v2964 = vld [vmem:[#allocation8 + $0x408] sm:$0xff]
          %v2965 = vld [vmem:[#allocation8 + $0x410] sm:$0xff]
          %v2966 = vld [vmem:[#allocation8 + $0x418] sm:$0xff]
          %v2967 = vld [vmem:[#allocation8 + $0x420] sm:$0xff]
          %v2968 = vld [vmem:[#allocation8 + $0x428] sm:$0xff]
          %v2969 = vld [vmem:[#allocation8 + $0x430] sm:$0xff]
          %v2970 = vld [vmem:[#allocation8 + $0x438] sm:$0xff]
          %v2971 = vld [vmem:[#allocation8 + $0x440] sm:$0xff]
          %v2972 = vld [vmem:[#allocation8 + $0x448] sm:$0xff]
          %v2973 = vld [vmem:[#allocation8 + $0x450] sm:$0xff]
          %v2974 = vld [vmem:[#allocation8 + $0x458] sm:$0xff]
          %v2975 = vld [vmem:[#allocation8 + $0x460] sm:$0xff]
          %v2976 = vld [vmem:[#allocation8 + $0x468] sm:$0xff]
          %v2977 = vld [vmem:[#allocation8 + $0x470] sm:$0xff]
          %v2978 = vld [vmem:[#allocation8 + $0x478] sm:$0xff]
          %v2979 = vld [vmem:[#allocation8 + $0x480] sm:$0xff]
          %v2980 = vld [vmem:[#allocation8 + $0x488] sm:$0xff]
          %v2981 = vld [vmem:[#allocation8 + $0x490] sm:$0xff]
          %v2982 = vld [vmem:[#allocation8 + $0x498] sm:$0xff]
          %v2983 = vld [vmem:[#allocation8 + $0x4a0] sm:$0xff]
          %v2984 = vld [vmem:[#allocation8 + $0x4a8] sm:$0xff]
          %v2985 = vld [vmem:[#allocation8 + $0x4b0] sm:$0xff]
          %v2986 = vld [vmem:[#allocation8 + $0x4b8] sm:$0xff]
          %v2987 = vld [vmem:[#allocation8 + $0x4c0] sm:$0xff]
          %v2988 = vld [vmem:[#allocation8 + $0x4c8] sm:$0xff]
          %v2989 = vld [vmem:[#allocation8 + $0x4d0] sm:$0xff]
          %v2990 = vld [vmem:[#allocation8 + $0x4d8] sm:$0xff]
          %v2991 = vld [vmem:[#allocation8 + $0x4e0] sm:$0xff]
          %v2992 = vld [vmem:[#allocation8 + $0x4e8] sm:$0xff]
          %v2993 = vld [vmem:[#allocation8 + $0x4f0] sm:$0xff]
          %v2994 = vld [vmem:[#allocation8 + $0x4f8] sm:$0xff]
          %v2995 = vld [vmem:[#allocation8 + $0x500] sm:$0xff]
          %v2996 = vld [vmem:[#allocation8 + $0x508] sm:$0xff]
          %v2997 = vld [vmem:[#allocation8 + $0x510] sm:$0xff]
          %v2998 = vld [vmem:[#allocation8 + $0x518] sm:$0xff]
          %v2999 = vld [vmem:[#allocation8 + $0x520] sm:$0xff]
          %v3000 = vld [vmem:[#allocation8 + $0x528] sm:$0xff]
          %v3001 = vld [vmem:[#allocation8 + $0x530] sm:$0xff]
          %v3002 = vld [vmem:[#allocation8 + $0x538] sm:$0xff]
          %v3003 = vld [vmem:[#allocation8 + $0x540] sm:$0xff]
          %v3004 = vld [vmem:[#allocation8 + $0x548] sm:$0xff]
          %v3005 = vld [vmem:[#allocation8 + $0x550] sm:$0xff]
          %v3006 = vld [vmem:[#allocation8 + $0x558] sm:$0xff]
          %v3007 = vld [vmem:[#allocation8 + $0x560] sm:$0xff]
          %v3008 = vld [vmem:[#allocation8 + $0x568] sm:$0xff]
          %v3009 = vld [vmem:[#allocation8 + $0x570] sm:$0xff]
          %v3010 = vld [vmem:[#allocation8 + $0x578] sm:$0xff]
          %v3011 = vld [vmem:[#allocation8 + $0x580] sm:$0xff]
          %v3012 = vld [vmem:[#allocation8 + $0x588] sm:$0xff]
          %v3013 = vld [vmem:[#allocation8 + $0x590] sm:$0xff]
          %v3014 = vld [vmem:[#allocation8 + $0x598] sm:$0xff]
          %v3015 = vld [vmem:[#allocation8 + $0x5a0] sm:$0xff]
          %v3016 = vld [vmem:[#allocation8 + $0x5a8] sm:$0xff]
          %v3017 = vld [vmem:[#allocation8 + $0x5b0] sm:$0xff]
          %v3018 = vld [vmem:[#allocation8 + $0x5b8] sm:$0xff]
          %v3019 = vld [vmem:[#allocation8 + $0x5c0] sm:$0xff]
          %v3020 = vld [vmem:[#allocation8 + $0x5c8] sm:$0xff]
          %v3021 = vld [vmem:[#allocation8 + $0x5d0] sm:$0xff]
          %v3022 = vld [vmem:[#allocation8 + $0x5d8] sm:$0xff]
          %v3023 = vld [vmem:[#allocation8 + $0x5e0] sm:$0xff]
          %v3024 = vld [vmem:[#allocation8 + $0x5e8] sm:$0xff]
          %v3025 = vld [vmem:[#allocation8 + $0x5f0] sm:$0xff]
          %v3026 = vld [vmem:[#allocation8 + $0x5f8] sm:$0xff]
          %v3027 = vld [vmem:[#allocation8 + $0x600] sm:$0xff]
          %v3028 = vld [vmem:[#allocation8 + $0x608] sm:$0xff]
          %v3029 = vld [vmem:[#allocation8 + $0x610] sm:$0xff]
          %v3030 = vld [vmem:[#allocation8 + $0x618] sm:$0xff]
          %v3031 = vld [vmem:[#allocation8 + $0x620] sm:$0xff]
          %v3032 = vld [vmem:[#allocation8 + $0x628] sm:$0xff]
          %v3033 = vld [vmem:[#allocation8 + $0x630] sm:$0xff]
          %v3034 = vld [vmem:[#allocation8 + $0x638] sm:$0xff]
          %v3035 = vld [vmem:[#allocation8 + $0x640] sm:$0xff]
          %v3036 = vld [vmem:[#allocation8 + $0x648] sm:$0xff]
          %v3037 = vld [vmem:[#allocation8 + $0x650] sm:$0xff]
          %v3038 = vld [vmem:[#allocation8 + $0x658] sm:$0xff]
          %v3039 = vld [vmem:[#allocation8 + $0x660] sm:$0xff]
          %v3040 = vld [vmem:[#allocation8 + $0x668] sm:$0xff]
          %v3041 = vld [vmem:[#allocation8 + $0x670] sm:$0xff]
          %v3042 = vld [vmem:[#allocation8 + $0x678] sm:$0xff]
          %v3043 = vld [vmem:[#allocation8 + $0x680] sm:$0xff]
          %v3044 = vld [vmem:[#allocation8 + $0x688] sm:$0xff]
          %v3045 = vld [vmem:[#allocation8 + $0x690] sm:$0xff]
          %v3046 = vld [vmem:[#allocation8 + $0x698] sm:$0xff]
          %v3047 = vld [vmem:[#allocation8 + $0x6a0] sm:$0xff]
          %v3048 = vld [vmem:[#allocation8 + $0x6a8] sm:$0xff]
          %v3049 = vld [vmem:[#allocation8 + $0x6b0] sm:$0xff]
          %v3050 = vld [vmem:[#allocation8 + $0x6b8] sm:$0xff]
          %v3051 = vld [vmem:[#allocation8 + $0x6c0] sm:$0xff]
          %v3052 = vld [vmem:[#allocation8 + $0x6c8] sm:$0xff]
          %v3053 = vld [vmem:[#allocation8 + $0x6d0] sm:$0xff]
          %v3054 = vld [vmem:[#allocation8 + $0x6d8] sm:$0xff]
          %v3055 = vld [vmem:[#allocation8 + $0x6e0] sm:$0xff]
          %v3056 = vld [vmem:[#allocation8 + $0x6e8] sm:$0xff]
          %v3057 = vld [vmem:[#allocation8 + $0x6f0] sm:$0xff]
          %v3058 = vld [vmem:[#allocation8 + $0x6f8] sm:$0xff]
          %v3059 = vld [vmem:[#allocation8 + $0x700] sm:$0xff]
          %v3060 = vld [vmem:[#allocation8 + $0x708] sm:$0xff]
          %v3061 = vld [vmem:[#allocation8 + $0x710] sm:$0xff]
          %v3062 = vld [vmem:[#allocation8 + $0x718] sm:$0xff]
          %v3063 = vld [vmem:[#allocation8 + $0x720] sm:$0xff]
          %v3064 = vld [vmem:[#allocation8 + $0x728] sm:$0xff]
          %v3065 = vld [vmem:[#allocation8 + $0x730] sm:$0xff]
          %v3066 = vld [vmem:[#allocation8 + $0x738] sm:$0xff]
          %v3067 = vld [vmem:[#allocation8 + $0x740] sm:$0xff]
          %v3068 = vld [vmem:[#allocation8 + $0x748] sm:$0xff]
          %v3069 = vld [vmem:[#allocation8 + $0x750] sm:$0xff]
          %v3070 = vld [vmem:[#allocation8 + $0x758] sm:$0xff]
          %v3071 = vld [vmem:[#allocation8 + $0x760] sm:$0xff]
          %v3072 = vld [vmem:[#allocation8 + $0x768] sm:$0xff]
          %v3073 = vld [vmem:[#allocation8 + $0x770] sm:$0xff]
          %v3074 = vld [vmem:[#allocation8 + $0x778] sm:$0xff]
          %v3075 = vld [vmem:[#allocation8 + $0x780] sm:$0xff]
          %v3076 = vld [vmem:[#allocation8 + $0x788] sm:$0xff]
          %v3077 = vld [vmem:[#allocation8 + $0x790] sm:$0xff]
          %v3078 = vld [vmem:[#allocation8 + $0x798] sm:$0xff]
          %v3079 = vld [vmem:[#allocation8 + $0x7a0] sm:$0xff]
          %v3080 = vld [vmem:[#allocation8 + $0x7a8] sm:$0xff]
          %v3081 = vld [vmem:[#allocation8 + $0x7b0] sm:$0xff]
          %v3082 = vld [vmem:[#allocation8 + $0x7b8] sm:$0xff]
          %v3083 = vld [vmem:[#allocation8 + $0x7c0] sm:$0xff]
          %v3084 = vld [vmem:[#allocation8 + $0x7c8] sm:$0xff]
          %v3085 = vld [vmem:[#allocation8 + $0x7d0] sm:$0xff]
          %v3086 = vld [vmem:[#allocation8 + $0x7d8] sm:$0xff]
          %v3087 = vld [vmem:[#allocation8 + $0x7e0] sm:$0xff]
          %v3088 = vld [vmem:[#allocation8 + $0x7e8] sm:$0xff]
          %v3089 = vld [vmem:[#allocation8 + $0x7f0] sm:$0xff]
          %v3090 = vld [vmem:[#allocation8 + $0x7f8] sm:$0xff]
          %v3091 = vld [vmem:[#allocation8 + $0x800] sm:$0xff]
          %v3092 = vld [vmem:[#allocation8 + $0x808] sm:$0xff]
          %v3093 = vld [vmem:[#allocation8 + $0x810] sm:$0xff]
          %v3094 = vld [vmem:[#allocation8 + $0x818] sm:$0xff]
          %v3095 = vld [vmem:[#allocation8 + $0x820] sm:$0xff]
          %v3096 = vld [vmem:[#allocation8 + $0x828] sm:$0xff]
          %v3097 = vld [vmem:[#allocation8 + $0x830] sm:$0xff]
          %v3098 = vld [vmem:[#allocation8 + $0x838] sm:$0xff]
          %v3099 = vld [vmem:[#allocation8 + $0x840] sm:$0xff]
          %v3100 = vld [vmem:[#allocation8 + $0x848] sm:$0xff]
          %v3101 = vld [vmem:[#allocation8 + $0x850] sm:$0xff]
          %v3102 = vld [vmem:[#allocation8 + $0x858] sm:$0xff]
          %v3103 = vld [vmem:[#allocation8 + $0x860] sm:$0xff]
          %v3104 = vld [vmem:[#allocation8 + $0x868] sm:$0xff]
          %v3105 = vld [vmem:[#allocation8 + $0x870] sm:$0xff]
          %v3106 = vld [vmem:[#allocation8 + $0x878] sm:$0xff]
          %v3107 = vld [vmem:[#allocation8 + $0x880] sm:$0xff]
          %v3108 = vld [vmem:[#allocation8 + $0x888] sm:$0xff]
          %v3109 = vld [vmem:[#allocation8 + $0x890] sm:$0xff]
          %v3110 = vld [vmem:[#allocation8 + $0x898] sm:$0xff]
          %v3111 = vld [vmem:[#allocation8 + $0x8a0] sm:$0xff]
          %v3112 = vld [vmem:[#allocation8 + $0x8a8] sm:$0xff]
          %v3113 = vld [vmem:[#allocation8 + $0x8b0] sm:$0xff]
          %v3114 = vld [vmem:[#allocation8 + $0x8b8] sm:$0xff]
          %v3115 = vld [vmem:[#allocation8 + $0x8c0] sm:$0xff]
          %v3116 = vld [vmem:[#allocation8 + $0x8c8] sm:$0xff]
          %v3117 = vld [vmem:[#allocation8 + $0x8d0] sm:$0xff]
          %v3118 = vld [vmem:[#allocation8 + $0x8d8] sm:$0xff]
          %v3119 = vld [vmem:[#allocation8 + $0x8e0] sm:$0xff]
          %v3120 = vld [vmem:[#allocation8 + $0x8e8] sm:$0xff]
          %v3121 = vld [vmem:[#allocation8 + $0x8f0] sm:$0xff]
          %v3122 = vld [vmem:[#allocation8 + $0x8f8] sm:$0xff]
          %v3123 = vld [vmem:[#allocation8 + $0x900] sm:$0xff]
          %v3124 = vld [vmem:[#allocation8 + $0x908] sm:$0xff]
          %v3125 = vld [vmem:[#allocation8 + $0x910] sm:$0xff]
          %v3126 = vld [vmem:[#allocation8 + $0x918] sm:$0xff]
          %v3127 = vld [vmem:[#allocation8 + $0x920] sm:$0xff]
          %v3128 = vld [vmem:[#allocation8 + $0x928] sm:$0xff]
          %v3129 = vld [vmem:[#allocation8 + $0x930] sm:$0xff]
          %v3130 = vld [vmem:[#allocation8 + $0x938] sm:$0xff]
          %v3131 = vld [vmem:[#allocation8 + $0x940] sm:$0xff]
          %v3132 = vld [vmem:[#allocation8 + $0x948] sm:$0xff]
          %v3133 = vld [vmem:[#allocation8 + $0x950] sm:$0xff]
          %v3134 = vld [vmem:[#allocation8 + $0x958] sm:$0xff]
          %v3135 = vld [vmem:[#allocation8 + $0x960] sm:$0xff]
          %v3136 = vld [vmem:[#allocation8 + $0x968] sm:$0xff]
          %v3137 = vld [vmem:[#allocation8 + $0x970] sm:$0xff]
          %v3138 = vld [vmem:[#allocation8 + $0x978] sm:$0xff]
          %v3139 = vld [vmem:[#allocation8 + $0x980] sm:$0xff]
          %v3140 = vld [vmem:[#allocation8 + $0x988] sm:$0xff]
          %v3141 = vld [vmem:[#allocation8 + $0x990] sm:$0xff]
          %v3142 = vld [vmem:[#allocation8 + $0x998] sm:$0xff]
          %v3143 = vld [vmem:[#allocation8 + $0x9a0] sm:$0xff]
          %v3144 = vld [vmem:[#allocation8 + $0x9a8] sm:$0xff]
          %v3145 = vld [vmem:[#allocation8 + $0x9b0] sm:$0xff]
          %v3146 = vld [vmem:[#allocation8 + $0x9b8] sm:$0xff]
          %v3147 = vld [vmem:[#allocation8 + $0x9c0] sm:$0xff]
          %v3148 = vld [vmem:[#allocation8 + $0x9c8] sm:$0xff]
          %v3149 = vld [vmem:[#allocation8 + $0x9d0] sm:$0xff]
          %v3150 = vld [vmem:[#allocation8 + $0x9d8] sm:$0xff]
          %v3151 = vld [vmem:[#allocation8 + $0x9e0] sm:$0xff]
          %v3152 = vld [vmem:[#allocation8 + $0x9e8] sm:$0xff]
          %v3153 = vld [vmem:[#allocation8 + $0x9f0] sm:$0xff]
          %v3154 = vld [vmem:[#allocation8 + $0x9f8] sm:$0xff]
          %v3155 = vld [vmem:[#allocation8 + $0xa00] sm:$0xff]
          %v3156 = vld [vmem:[#allocation8 + $0xa08] sm:$0xff]
          %v3157 = vld [vmem:[#allocation8 + $0xa10] sm:$0xff]
          %v3158 = vld [vmem:[#allocation8 + $0xa18] sm:$0xff]
          %v3159 = vld [vmem:[#allocation8 + $0xa20] sm:$0xff]
          %v3160 = vld [vmem:[#allocation8 + $0xa28] sm:$0xff]
          %v3161 = vld [vmem:[#allocation8 + $0xa30] sm:$0xff]
          %v3162 = vld [vmem:[#allocation8 + $0xa38] sm:$0xff]
          %v3163 = vld [vmem:[#allocation8 + $0xa40] sm:$0xff]
          %v3164 = vld [vmem:[#allocation8 + $0xa48] sm:$0xff]
          %v3165 = vld [vmem:[#allocation8 + $0xa50] sm:$0xff]
          %v3166 = vld [vmem:[#allocation8 + $0xa58] sm:$0xff]
          %v3167 = vld [vmem:[#allocation8 + $0xa60] sm:$0xff]
          %v3168 = vld [vmem:[#allocation8 + $0xa68] sm:$0xff]
          %v3169 = vld [vmem:[#allocation8 + $0xa70] sm:$0xff]
          %v3170 = vld [vmem:[#allocation8 + $0xa78] sm:$0xff]
          %v3171 = vld [vmem:[#allocation8 + $0xa80] sm:$0xff]
          %v3172 = vld [vmem:[#allocation8 + $0xa88] sm:$0xff]
          %v3173 = vld [vmem:[#allocation8 + $0xa90] sm:$0xff]
          %v3174 = vld [vmem:[#allocation8 + $0xa98] sm:$0xff]
          %v3175 = vld [vmem:[#allocation8 + $0xaa0] sm:$0xff]
          %v3176 = vld [vmem:[#allocation8 + $0xaa8] sm:$0xff]
          %v3177 = vld [vmem:[#allocation8 + $0xab0] sm:$0xff]
          %v3178 = vld [vmem:[#allocation8 + $0xab8] sm:$0xff]
          %v3179 = vld [vmem:[#allocation8 + $0xac0] sm:$0xff]
          %v3180 = vld [vmem:[#allocation8 + $0xac8] sm:$0xff]
          %v3181 = vld [vmem:[#allocation8 + $0xad0] sm:$0xff]
          %v3182 = vld [vmem:[#allocation8 + $0xad8] sm:$0xff]
          %v3183 = vld [vmem:[#allocation8 + $0xae0] sm:$0xff]
          %v3184 = vld [vmem:[#allocation8 + $0xae8] sm:$0xff]
          %v3185 = vld [vmem:[#allocation8 + $0xaf0] sm:$0xff]
          %v3186 = vld [vmem:[#allocation8 + $0xaf8] sm:$0xff]
          %v3187 = vld [vmem:[#allocation8 + $0xb00] sm:$0xff]
          %v3188 = vld [vmem:[#allocation8 + $0xb08] sm:$0xff]
          %v3189 = vld [vmem:[#allocation8 + $0xb10] sm:$0xff]
          %v3190 = vld [vmem:[#allocation8 + $0xb18] sm:$0xff]
          %v3191 = vld [vmem:[#allocation8 + $0xb20] sm:$0xff]
          %v3192 = vld [vmem:[#allocation8 + $0xb28] sm:$0xff]
          %v3193 = vld [vmem:[#allocation8 + $0xb30] sm:$0xff]
          %v3194 = vld [vmem:[#allocation8 + $0xb38] sm:$0xff]
          %v3195 = vld [vmem:[#allocation8 + $0xb40] sm:$0xff]
          %v3196 = vld [vmem:[#allocation8 + $0xb48] sm:$0xff]
          %v3197 = vld [vmem:[#allocation8 + $0xb50] sm:$0xff]
          %v3198 = vld [vmem:[#allocation8 + $0xb58] sm:$0xff]
          %v3199 = vld [vmem:[#allocation8 + $0xb60] sm:$0xff]
          %v3200 = vld [vmem:[#allocation8 + $0xb68] sm:$0xff]
          %v3201 = vld [vmem:[#allocation8 + $0xb70] sm:$0xff]
          %v3202 = vld [vmem:[#allocation8 + $0xb78] sm:$0xff]
          %v3203 = vld [vmem:[#allocation8 + $0xb80] sm:$0xff]
          %v3204 = vld [vmem:[#allocation8 + $0xb88] sm:$0xff]
          %v3205 = vld [vmem:[#allocation8 + $0xb90] sm:$0xff]
          %v3206 = vld [vmem:[#allocation8 + $0xb98] sm:$0xff]
          %v3207 = vld [vmem:[#allocation8 + $0xba0] sm:$0xff]
          %v3208 = vld [vmem:[#allocation8 + $0xba8] sm:$0xff]
          %v3209 = vld [vmem:[#allocation8 + $0xbb0] sm:$0xff]
          %v3210 = vld [vmem:[#allocation8 + $0xbb8] sm:$0xff]
          %v3211 = vld [vmem:[#allocation8 + $0xbc0] sm:$0xff]
          %v3212 = vld [vmem:[#allocation8 + $0xbc8] sm:$0xff]
          %v3213 = vld [vmem:[#allocation8 + $0xbd0] sm:$0xff]
          %v3214 = vld [vmem:[#allocation8 + $0xbd8] sm:$0xff]
          %v3215 = vld [vmem:[#allocation8 + $0xbe0] sm:$0xff]
          %v3216 = vld [vmem:[#allocation8 + $0xbe8] sm:$0xff]
          %v3217 = vld [vmem:[#allocation8 + $0xbf0] sm:$0xff]
          %v3218 = vld [vmem:[#allocation8 + $0xbf8] sm:$0xff]
          %v3219 = vld [vmem:[#allocation8 + $0xc00] sm:$0xff]
          %v3220 = vld [vmem:[#allocation8 + $0xc08] sm:$0xff]
          %v3221 = vld [vmem:[#allocation8 + $0xc10] sm:$0xff]
          %v3222 = vld [vmem:[#allocation8 + $0xc18] sm:$0xff]
          %v3223 = vld [vmem:[#allocation8 + $0xc20] sm:$0xff]
          %v3224 = vld [vmem:[#allocation8 + $0xc28] sm:$0xff]
          %v3225 = vld [vmem:[#allocation8 + $0xc30] sm:$0xff]
          %v3226 = vld [vmem:[#allocation8 + $0xc38] sm:$0xff]
          %v3227 = vld [vmem:[#allocation8 + $0xc40] sm:$0xff]
          %v3228 = vld [vmem:[#allocation8 + $0xc48] sm:$0xff]
          %v3229 = vld [vmem:[#allocation8 + $0xc50] sm:$0xff]
          %v3230 = vld [vmem:[#allocation8 + $0xc58] sm:$0xff]
          %v3231 = vld [vmem:[#allocation8 + $0xc60] sm:$0xff]
          %v3232 = vld [vmem:[#allocation8 + $0xc68] sm:$0xff]
          %v3233 = vld [vmem:[#allocation8 + $0xc70] sm:$0xff]
          %v3234 = vld [vmem:[#allocation8 + $0xc78] sm:$0xff]
          %v3235 = vld [vmem:[#allocation8 + $0xc80] sm:$0xff]
          %v3236 = vld [vmem:[#allocation8 + $0xc88] sm:$0xff]
          %v3237 = vld [vmem:[#allocation8 + $0xc90] sm:$0xff]
          %v3238 = vld [vmem:[#allocation8 + $0xc98] sm:$0xff]
          %v3239 = vld [vmem:[#allocation8 + $0xca0] sm:$0xff]
          %v3240 = vld [vmem:[#allocation8 + $0xca8] sm:$0xff]
          %v3241 = vld [vmem:[#allocation8 + $0xcb0] sm:$0xff]
          %v3242 = vld [vmem:[#allocation8 + $0xcb8] sm:$0xff]
          %v3243 = vld [vmem:[#allocation8 + $0xcc0] sm:$0xff]
          %v3244 = vld [vmem:[#allocation8 + $0xcc8] sm:$0xff]
          %v3245 = vld [vmem:[#allocation8 + $0xcd0] sm:$0xff]
          %v3246 = vld [vmem:[#allocation8 + $0xcd8] sm:$0xff]
          %v3247 = vld [vmem:[#allocation8 + $0xce0] sm:$0xff]
          %v3248 = vld [vmem:[#allocation8 + $0xce8] sm:$0xff]
          %v3249 = vld [vmem:[#allocation8 + $0xcf0] sm:$0xff]
          %v3250 = vld [vmem:[#allocation8 + $0xcf8] sm:$0xff]
          %v3251 = vld [vmem:[#allocation8 + $0xd00] sm:$0xff]
          %v3252 = vld [vmem:[#allocation8 + $0xd08] sm:$0xff]
          %v3253 = vld [vmem:[#allocation8 + $0xd10] sm:$0xff]
          %v3254 = vld [vmem:[#allocation8 + $0xd18] sm:$0xff]
          %v3255 = vld [vmem:[#allocation8 + $0xd20] sm:$0xff]
          %v3256 = vld [vmem:[#allocation8 + $0xd28] sm:$0xff]
          %v3257 = vld [vmem:[#allocation8 + $0xd30] sm:$0xff]
          %v3258 = vld [vmem:[#allocation8 + $0xd38] sm:$0xff]
          %v3259 = vld [vmem:[#allocation8 + $0xd40] sm:$0xff]
          %v3260 = vld [vmem:[#allocation8 + $0xd48] sm:$0xff]
          %v3261 = vld [vmem:[#allocation8 + $0xd50] sm:$0xff]
          %v3262 = vld [vmem:[#allocation8 + $0xd58] sm:$0xff]
          %v3263 = vld [vmem:[#allocation8 + $0xd60] sm:$0xff]
          %v3264 = vld [vmem:[#allocation8 + $0xd68] sm:$0xff]
          %v3265 = vld [vmem:[#allocation8 + $0xd70] sm:$0xff]
          %v3266 = vld [vmem:[#allocation8 + $0xd78] sm:$0xff]
          %v3267 = vld [vmem:[#allocation8 + $0xd80] sm:$0xff]
          %v3268 = vld [vmem:[#allocation8 + $0xd88] sm:$0xff]
          %v3269 = vld [vmem:[#allocation8 + $0xd90] sm:$0xff]
          %v3270 = vld [vmem:[#allocation8 + $0xd98] sm:$0xff]
          %v3271 = vld [vmem:[#allocation8 + $0xda0] sm:$0xff]
          %v3272 = vld [vmem:[#allocation8 + $0xda8] sm:$0xff]
          %v3273 = vld [vmem:[#allocation8 + $0xdb0] sm:$0xff]
          %v3274 = vld [vmem:[#allocation8 + $0xdb8] sm:$0xff]
          %v3275 = vld [vmem:[#allocation8 + $0xdc0] sm:$0xff]
          %v3276 = vld [vmem:[#allocation8 + $0xdc8] sm:$0xff]
          %v3277 = vld [vmem:[#allocation8 + $0xdd0] sm:$0xff]
          %v3278 = vld [vmem:[#allocation8 + $0xdd8] sm:$0xff]
          %v3279 = vld [vmem:[#allocation8 + $0xde0] sm:$0xff]
          %v3280 = vld [vmem:[#allocation8 + $0xde8] sm:$0xff]
          %v3281 = vld [vmem:[#allocation8 + $0xdf0] sm:$0xff]
          %v3282 = vld [vmem:[#allocation8 + $0xdf8] sm:$0xff]
          %v3283 = vld [vmem:[#allocation8 + $0xe00] sm:$0xff]
          %v3284 = vld [vmem:[#allocation8 + $0xe08] sm:$0xff]
          %v3285 = vld [vmem:[#allocation8 + $0xe10] sm:$0xff]
          %v3286 = vld [vmem:[#allocation8 + $0xe18] sm:$0xff]
          %v3287 = vld [vmem:[#allocation8 + $0xe20] sm:$0xff]
          %v3288 = vld [vmem:[#allocation8 + $0xe28] sm:$0xff]
          %v3289 = vld [vmem:[#allocation8 + $0xe30] sm:$0xff]
          %v3290 = vld [vmem:[#allocation8 + $0xe38] sm:$0xff]
          %v3291 = vld [vmem:[#allocation8 + $0xe40] sm:$0xff]
          %v3292 = vld [vmem:[#allocation8 + $0xe48] sm:$0xff]
          %v3293 = vld [vmem:[#allocation8 + $0xe50] sm:$0xff]
          %v3294 = vld [vmem:[#allocation8 + $0xe58] sm:$0xff]
          %v3295 = vld [vmem:[#allocation8 + $0xe60] sm:$0xff]
          %v3296 = vld [vmem:[#allocation8 + $0xe68] sm:$0xff]
          %v3297 = vld [vmem:[#allocation8 + $0xe70] sm:$0xff]
          %v3298 = vld [vmem:[#allocation8 + $0xe78] sm:$0xff]
          %v3299 = vld [vmem:[#allocation8 + $0xe80] sm:$0xff]
          %v3300 = vld [vmem:[#allocation8 + $0xe88] sm:$0xff]
          %v3301 = vld [vmem:[#allocation8 + $0xe90] sm:$0xff]
          %v3302 = vld [vmem:[#allocation8 + $0xe98] sm:$0xff]
          %v3303 = vld [vmem:[#allocation8 + $0xea0] sm:$0xff]
          %v3304 = vld [vmem:[#allocation8 + $0xea8] sm:$0xff]
          %v3305 = vld [vmem:[#allocation8 + $0xeb0] sm:$0xff]
          %v3306 = vld [vmem:[#allocation8 + $0xeb8] sm:$0xff]
          %v3307 = vld [vmem:[#allocation8 + $0xec0] sm:$0xff]
          %v3308 = vld [vmem:[#allocation8 + $0xec8] sm:$0xff]
          %v3309 = vld [vmem:[#allocation8 + $0xed0] sm:$0xff]
          %v3310 = vld [vmem:[#allocation8 + $0xed8] sm:$0xff]
          %v3311 = vld [vmem:[#allocation8 + $0xee0] sm:$0xff]
          %v3312 = vld [vmem:[#allocation8 + $0xee8] sm:$0xff]
          %v3313 = vld [vmem:[#allocation8 + $0xef0] sm:$0xff]
          %v3314 = vld [vmem:[#allocation8 + $0xef8] sm:$0xff]
          %v3315 = vld [vmem:[#allocation8 + $0xf00] sm:$0xff]
          %v3316 = vld [vmem:[#allocation8 + $0xf08] sm:$0xff]
          %v3317 = vld [vmem:[#allocation8 + $0xf10] sm:$0xff]
          %v3318 = vld [vmem:[#allocation8 + $0xf18] sm:$0xff]
          %v3319 = vld [vmem:[#allocation8 + $0xf20] sm:$0xff]
          %v3320 = vld [vmem:[#allocation8 + $0xf28] sm:$0xff]
          %v3321 = vld [vmem:[#allocation8 + $0xf30] sm:$0xff]
          %v3322 = vld [vmem:[#allocation8 + $0xf38] sm:$0xff]
          %v3323 = vld [vmem:[#allocation8 + $0xf40] sm:$0xff]
          %v3324 = vld [vmem:[#allocation8 + $0xf48] sm:$0xff]
          %v3325 = vld [vmem:[#allocation8 + $0xf50] sm:$0xff]
          %v3326 = vld [vmem:[#allocation8 + $0xf58] sm:$0xff]
          %v3327 = vld [vmem:[#allocation8 + $0xf60] sm:$0xff]
          %v3328 = vld [vmem:[#allocation8 + $0xf68] sm:$0xff]
          %v3329 = vld [vmem:[#allocation8 + $0xf70] sm:$0xff]
          %v3330 = vld [vmem:[#allocation8 + $0xf78] sm:$0xff]
          %v3331 = vld [vmem:[#allocation8 + $0xf80] sm:$0xff]
          %v3332 = vld [vmem:[#allocation8 + $0xf88] sm:$0xff]
          %v3333 = vld [vmem:[#allocation8 + $0xf90] sm:$0xff]
          %v3334 = vld [vmem:[#allocation8 + $0xf98] sm:$0xff]
          %v3335 = vld [vmem:[#allocation8 + $0xfa0] sm:$0xff]
          %v3336 = vld [vmem:[#allocation8 + $0xfa8] sm:$0xff]
          %v3337 = vld [vmem:[#allocation8 + $0xfb0] sm:$0xff]
          %v3338 = vld [vmem:[#allocation8 + $0xfb8] sm:$0xff]
          %v3339 = vld [vmem:[#allocation8 + $0xfc0] sm:$0xff]
          %v3340 = vld [vmem:[#allocation8 + $0xfc8] sm:$0xff]
          %v3341 = vld [vmem:[#allocation8 + $0xfd0] sm:$0xff]
          %v3342 = vld [vmem:[#allocation8 + $0xfd8] sm:$0xff]
          %v3343 = vld [vmem:[#allocation8 + $0xfe0] sm:$0xff]
          %v3344 = vld [vmem:[#allocation8 + $0xfe8] sm:$0xff]
          %v3345 = vld [vmem:[#allocation8 + $0xff0] sm:$0xff]
          %v3346 = vld [vmem:[#allocation8 + $0xff8] sm:$0xff]
          %v3347 = vld [vmem:[#allocation8 + $0x1000] sm:$0xff]
          %v3348 = vld [vmem:[#allocation8 + $0x1008] sm:$0xff]
          %v3349 = vld [vmem:[#allocation8 + $0x1010] sm:$0xff]
          %v3350 = vld [vmem:[#allocation8 + $0x1018] sm:$0xff]
          %v3351 = vld [vmem:[#allocation8 + $0x1020] sm:$0xff]
          %v3352 = vld [vmem:[#allocation8 + $0x1028] sm:$0xff]
          %v3353 = vld [vmem:[#allocation8 + $0x1030] sm:$0xff]
          %v3354 = vld [vmem:[#allocation8 + $0x1038] sm:$0xff]
          %v3355 = vld [vmem:[#allocation8 + $0x1040] sm:$0xff]
          %v3356 = vld [vmem:[#allocation8 + $0x1048] sm:$0xff]
          %v3357 = vld [vmem:[#allocation8 + $0x1050] sm:$0xff]
          %v3358 = vld [vmem:[#allocation8 + $0x1058] sm:$0xff]
          %v3359 = vld [vmem:[#allocation8 + $0x1060] sm:$0xff]
          %v3360 = vld [vmem:[#allocation8 + $0x1068] sm:$0xff]
          %v3361 = vld [vmem:[#allocation8 + $0x1070] sm:$0xff]
          %v3362 = vld [vmem:[#allocation8 + $0x1078] sm:$0xff]
          %v3363 = vld [vmem:[#allocation8 + $0x1080] sm:$0xff]
          %v3364 = vld [vmem:[#allocation8 + $0x1088] sm:$0xff]
          %v3365 = vld [vmem:[#allocation8 + $0x1090] sm:$0xff]
          %v3366 = vld [vmem:[#allocation8 + $0x1098] sm:$0xff]
          %v3367 = vld [vmem:[#allocation8 + $0x10a0] sm:$0xff]
          %v3368 = vld [vmem:[#allocation8 + $0x10a8] sm:$0xff]
          %v3369 = vld [vmem:[#allocation8 + $0x10b0] sm:$0xff]
          %v3370 = vld [vmem:[#allocation8 + $0x10b8] sm:$0xff]
          %v3371 = vld [vmem:[#allocation8 + $0x10c0] sm:$0xff]
          %v3372 = vld [vmem:[#allocation8 + $0x10c8] sm:$0xff]
          %v3373 = vld [vmem:[#allocation8 + $0x10d0] sm:$0xff]
          %v3374 = vld [vmem:[#allocation8 + $0x10d8] sm:$0xff]
          %v3375 = vld [vmem:[#allocation8 + $0x10e0] sm:$0xff]
          %v3376 = vld [vmem:[#allocation8 + $0x10e8] sm:$0xff]
          %v3377 = vld [vmem:[#allocation8 + $0x10f0] sm:$0xff]
          %v3378 = vld [vmem:[#allocation8 + $0x10f8] sm:$0xff]
          %v3379 = vld [vmem:[#allocation8 + $0x1100] sm:$0xff]
          %v3380 = vld [vmem:[#allocation8 + $0x1108] sm:$0xff]
          %v3381 = vld [vmem:[#allocation8 + $0x1110] sm:$0xff]
          %v3382 = vld [vmem:[#allocation8 + $0x1118] sm:$0xff]
          %v3383 = vld [vmem:[#allocation8 + $0x1120] sm:$0xff]
          %v3384 = vld [vmem:[#allocation8 + $0x1128] sm:$0xff]
          %v3385 = vld [vmem:[#allocation8 + $0x1130] sm:$0xff]
          %v3386 = vld [vmem:[#allocation8 + $0x1138] sm:$0xff]
          %v3387 = vld [vmem:[#allocation8 + $0x1140] sm:$0xff]
          %v3388 = vld [vmem:[#allocation8 + $0x1148] sm:$0xff]
          %v3389 = vld [vmem:[#allocation8 + $0x1150] sm:$0xff]
          %v3390 = vld [vmem:[#allocation8 + $0x1158] sm:$0xff]
          %v3391 = vld [vmem:[#allocation8 + $0x1160] sm:$0xff]
          %v3392 = vld [vmem:[#allocation8 + $0x1168] sm:$0xff]
          %v3393 = vld [vmem:[#allocation8 + $0x1170] sm:$0xff]
          %v3394 = vld [vmem:[#allocation8 + $0x1178] sm:$0xff]
          %v3395 = vld [vmem:[#allocation8 + $0x1180] sm:$0xff]
          %v3396 = vld [vmem:[#allocation8 + $0x1188] sm:$0xff]
          %v3397 = vld [vmem:[#allocation8 + $0x1190] sm:$0xff]
          %v3398 = vld [vmem:[#allocation8 + $0x1198] sm:$0xff]
          %v3399 = vld [vmem:[#allocation8 + $0x11a0] sm:$0xff]
          %v3400 = vld [vmem:[#allocation8 + $0x11a8] sm:$0xff]
          %v3401 = vld [vmem:[#allocation8 + $0x11b0] sm:$0xff]
          %v3402 = vld [vmem:[#allocation8 + $0x11b8] sm:$0xff]
          %v3403 = vld [vmem:[#allocation8 + $0x11c0] sm:$0xff]
          %v3404 = vld [vmem:[#allocation8 + $0x11c8] sm:$0xff]
          %v3405 = vld [vmem:[#allocation8 + $0x11d0] sm:$0xff]
          %v3406 = vld [vmem:[#allocation8 + $0x11d8] sm:$0xff]
          %v3407 = vld [vmem:[#allocation8 + $0x11e0] sm:$0xff]
          %v3408 = vld [vmem:[#allocation8 + $0x11e8] sm:$0xff]
          %v3409 = vld [vmem:[#allocation8 + $0x11f0] sm:$0xff]
          %v3410 = vld [vmem:[#allocation8 + $0x11f8] sm:$0xff]
          %3411 = vmatprep.subr.mxu0 %v2866
          %3412 = vmatpush1.msra.mxu0 %v2865
          %3413 = vmatprep.subr.mxu0 %v2864
          %3414 = vmatpush1.msra.mxu0 %v2863
          %3415 = vmatprep.subr.mxu0 %v2862
          %3416 = vmatpush1.msra.mxu0 %v2861
          %3417 = vmatprep.subr.mxu0 %v2860
          %3418 = vmatpush1.msra.mxu0 %v2859
          %3419 = vmatprep.subr.mxu0 %v2858
          %3420 = vmatpush1.msra.mxu0 %v2857
          %3421 = vmatprep.subr.mxu0 %v2856
          %3422 = vmatpush1.msra.mxu0 %v2855
          %3423 = vmatprep.subr.mxu0 %v2854
          %3424 = vmatpush1.msra.mxu0 %v2853
          %3425 = vmatprep.subr.mxu0 %v2852
          %3426 = vmatpush1.msra.mxu0 %v2851
          %3427 = vmatprep.subr.mxu0 %v2850
          %3428 = vmatpush1.msra.mxu0 %v2849
          %3429 = vmatprep.subr.mxu0 %v2848
          %3430 = vmatpush1.msra.mxu0 %v2847
          %3431 = vmatprep.subr.mxu0 %v2846
          %3432 = vmatpush1.msra.mxu0 %v2845
          %3433 = vmatprep.subr.mxu0 %v2844
          %3434 = vmatpush1.msra.mxu0 %v2843
          %3435 = vmatprep.subr.mxu0 %v2842
          %3436 = vmatpush1.msra.mxu0 %v2841
          %3437 = vmatprep.subr.mxu0 %v2840
          %3438 = vmatpush1.msra.mxu0 %v2839
          %3439 = vmatprep.subr.mxu0 %v2838
          %3440 = vmatpush1.msra.mxu0 %v2837
          %3441 = vmatprep.subr.mxu0 %v2836
          %3442 = vmatpush1.msra.mxu0 %v2835
          %3443 = vmatprep.subr.mxu0 %v2898
          %3444 = vmatpush2.msra.mxu0 %v2897
          %3445 = vmatprep.subr.mxu0 %v2896
          %3446 = vmatpush2.msra.mxu0 %v2895
          %3447 = vmatprep.subr.mxu0 %v2894
          %3448 = vmatpush2.msra.mxu0 %v2893
          %3449 = vmatprep.subr.mxu0 %v2892
          %3450 = vmatpush2.msra.mxu0 %v2891
          %3451 = vmatprep.subr.mxu0 %v2890
          %3452 = vmatpush2.msra.mxu0 %v2889
          %3453 = vmatprep.subr.mxu0 %v2888
          %3454 = vmatpush2.msra.mxu0 %v2887
          %3455 = vmatprep.subr.mxu0 %v2886
          %3456 = vmatpush2.msra.mxu0 %v2885
          %3457 = vmatprep.subr.mxu0 %v2884
          %3458 = vmatpush2.msra.mxu0 %v2883
          %3459 = vmatprep.subr.mxu0 %v2882
          %3460 = vmatpush2.msra.mxu0 %v2881
          %3461 = vmatprep.subr.mxu0 %v2880
          %3462 = vmatpush2.msra.mxu0 %v2879
          %3463 = vmatprep.subr.mxu0 %v2878
          %3464 = vmatpush2.msra.mxu0 %v2877
          %3465 = vmatprep.subr.mxu0 %v2876
          %3466 = vmatpush2.msra.mxu0 %v2875
          %3467 = vmatprep.subr.mxu0 %v2874
          %3468 = vmatpush2.msra.mxu0 %v2873
          %3469 = vmatprep.subr.mxu0 %v2872
          %3470 = vmatpush2.msra.mxu0 %v2871
          %3471 = vmatprep.subr.mxu0 %v2870
          %3472 = vmatpush2.msra.mxu0 %v2869
          %3473 = vmatprep.subr.mxu0 %v2868
          %3474 = vmatpush2.msra.mxu0 %v2867
          %3475 = vmatprep.mubr.f32.mxu0 %v2354
          %3476 = vmatmul.mubr.f32.gmra.mxu0 %v2353
          %v3477 = vpop.f32.mrf.mxu0
          %v3478 = vadd.f32 0.0, %v3477
          %v3479 = vpop.f32.mrf.mxu0
          %v3480 = vadd.f32 0.0, %v3479
          %3481 = vmatprep.mubr.f32.mxu0 %v2358
          %3482 = vmatmul.mubr.f32.gmra.mxu0 %v2357
          %v3483 = vpop.f32.mrf.mxu0
          %v3484 = vadd.f32 0.0, %v3483
          %v3485 = vpop.f32.mrf.mxu0
          %v3486 = vadd.f32 0.0, %v3485
          %3487 = vmatprep.mubr.f32.mxu0 %v2362
          %3488 = vmatmul.mubr.f32.gmra.mxu0 %v2361
          %v3489 = vpop.f32.mrf.mxu0
          %v3490 = vadd.f32 0.0, %v3489
          %v3491 = vpop.f32.mrf.mxu0
          %v3492 = vadd.f32 0.0, %v3491
          %3493 = vmatprep.mubr.f32.mxu0 %v2366
          %3494 = vmatmul.mubr.f32.gmra.mxu0 %v2365
          %v3495 = vpop.f32.mrf.mxu0
          %v3496 = vadd.f32 0.0, %v3495
          %v3497 = vpop.f32.mrf.mxu0
          %v3498 = vadd.f32 0.0, %v3497
          %3499 = vmatprep.mubr.f32.mxu0 %v2370
          %3500 = vmatmul.mubr.f32.gmra.mxu0 %v2369
          %v3501 = vpop.f32.mrf.mxu0
          %v3502 = vadd.f32 0.0, %v3501
          %v3503 = vpop.f32.mrf.mxu0
          %v3504 = vadd.f32 0.0, %v3503
          %3505 = vmatprep.mubr.f32.mxu0 %v2374
          %3506 = vmatmul.mubr.f32.gmra.mxu0 %v2373
          %v3507 = vpop.f32.mrf.mxu0
          %v3508 = vadd.f32 0.0, %v3507
          %v3509 = vpop.f32.mrf.mxu0
          %v3510 = vadd.f32 0.0, %v3509
          %3511 = vmatprep.mubr.f32.mxu0 %v2378
          %3512 = vmatmul.mubr.f32.gmra.mxu0 %v2377
          %v3513 = vpop.f32.mrf.mxu0
          %v3514 = vadd.f32 0.0, %v3513
          %v3515 = vpop.f32.mrf.mxu0
          %v3516 = vadd.f32 0.0, %v3515
          %3517 = vmatprep.mubr.f32.mxu0 %v2382
          %3518 = vmatmul.mubr.f32.gmra.mxu0 %v2381
          %v3519 = vpop.f32.mrf.mxu0
          %v3520 = vadd.f32 0.0, %v3519
          %v3521 = vpop.f32.mrf.mxu0
          %v3522 = vadd.f32 0.0, %v3521
          %3523 = vmatprep.mubr.f32.mxu0 %v2394
          %3524 = vmatmul.mubr.f32.gmra.mxu0 %v2393
          %v3525 = vpop.f32.mrf.mxu0
          %v3526 = vadd.f32 0.0, %v3525
          %v3527 = vpop.f32.mrf.mxu0
          %v3528 = vadd.f32 0.0, %v3527
          %3529 = vmatprep.mubr.f32.mxu0 %v2398
          %3530 = vmatmul.mubr.f32.gmra.mxu0 %v2397
          %v3531 = vpop.f32.mrf.mxu0
          %v3532 = vadd.f32 0.0, %v3531
          %v3533 = vpop.f32.mrf.mxu0
          %v3534 = vadd.f32 0.0, %v3533
          %3535 = vmatprep.mubr.f32.mxu0 %v2402
          %3536 = vmatmul.mubr.f32.gmra.mxu0 %v2401
          %v3537 = vpop.f32.mrf.mxu0
          %v3538 = vadd.f32 0.0, %v3537
          %v3539 = vpop.f32.mrf.mxu0
          %v3540 = vadd.f32 0.0, %v3539
          %3541 = vmatprep.mubr.f32.mxu0 %v2406
          %3542 = vmatmul.mubr.f32.gmra.mxu0 %v2405
          %v3543 = vpop.f32.mrf.mxu0
          %v3544 = vadd.f32 0.0, %v3543
          %v3545 = vpop.f32.mrf.mxu0
          %v3546 = vadd.f32 0.0, %v3545
          %3547 = vmatprep.mubr.f32.mxu0 %v2410
          %3548 = vmatmul.mubr.f32.gmra.mxu0 %v2409
          %v3549 = vpop.f32.mrf.mxu0
          %v3550 = vadd.f32 0.0, %v3549
          %v3551 = vpop.f32.mrf.mxu0
          %v3552 = vadd.f32 0.0, %v3551
          %3553 = vmatprep.mubr.f32.mxu0 %v2414
          %3554 = vmatmul.mubr.f32.gmra.mxu0 %v2413
          %v3555 = vpop.f32.mrf.mxu0
          %v3556 = vadd.f32 0.0, %v3555
          %v3557 = vpop.f32.mrf.mxu0
          %v3558 = vadd.f32 0.0, %v3557
          %3559 = vmatprep.mubr.f32.mxu0 %v2418
          %3560 = vmatmul.mubr.f32.gmra.mxu0 %v2417
          %v3561 = vpop.f32.mrf.mxu0
          %v3562 = vadd.f32 0.0, %v3561
          %v3563 = vpop.f32.mrf.mxu0
          %v3564 = vadd.f32 0.0, %v3563
          %3565 = vmatprep.mubr.f32.mxu0 %v2422
          %3566 = vmatmul.mubr.f32.gmra.mxu0 %v2421
          %v3567 = vpop.f32.mrf.mxu0
          %v3568 = vadd.f32 0.0, %v3567
          %v3569 = vpop.f32.mrf.mxu0
          %v3570 = vadd.f32 0.0, %v3569
          %3571 = vdwg.mxu0
          %3572 = vmatprep.subr.mxu0 %v2930
          %3573 = vmatpush1.msra.mxu0 %v2929
          %3574 = vmatprep.subr.mxu0 %v2928
          %3575 = vmatpush1.msra.mxu0 %v2927
          %3576 = vmatprep.subr.mxu0 %v2926
          %3577 = vmatpush1.msra.mxu0 %v2925
          %3578 = vmatprep.subr.mxu0 %v2924
          %3579 = vmatpush1.msra.mxu0 %v2923
          %3580 = vmatprep.subr.mxu0 %v2922
          %3581 = vmatpush1.msra.mxu0 %v2921
          %3582 = vmatprep.subr.mxu0 %v2920
          %3583 = vmatpush1.msra.mxu0 %v2919
          %3584 = vmatprep.subr.mxu0 %v2918
          %3585 = vmatpush1.msra.mxu0 %v2917
          %3586 = vmatprep.subr.mxu0 %v2916
          %3587 = vmatpush1.msra.mxu0 %v2915
          %3588 = vmatprep.subr.mxu0 %v2914
          %3589 = vmatpush1.msra.mxu0 %v2913
          %3590 = vmatprep.subr.mxu0 %v2912
          %3591 = vmatpush1.msra.mxu0 %v2911
          %3592 = vmatprep.subr.mxu0 %v2910
          %3593 = vmatpush1.msra.mxu0 %v2909
          %3594 = vmatprep.subr.mxu0 %v2908
          %3595 = vmatpush1.msra.mxu0 %v2907
          %3596 = vmatprep.subr.mxu0 %v2906
          %3597 = vmatpush1.msra.mxu0 %v2905
          %3598 = vmatprep.subr.mxu0 %v2904
          %3599 = vmatpush1.msra.mxu0 %v2903
          %3600 = vmatprep.subr.mxu0 %v2902
          %3601 = vmatpush1.msra.mxu0 %v2901
          %3602 = vmatprep.subr.mxu0 %v2900
          %3603 = vmatpush1.msra.mxu0 %v2899
          %3604 = vmatprep.subr.mxu0 %v2962
          %3605 = vmatpush2.msra.mxu0 %v2961
          %3606 = vmatprep.subr.mxu0 %v2960
          %3607 = vmatpush2.msra.mxu0 %v2959
          %3608 = vmatprep.subr.mxu0 %v2958
          %3609 = vmatpush2.msra.mxu0 %v2957
          %3610 = vmatprep.subr.mxu0 %v2956
          %3611 = vmatpush2.msra.mxu0 %v2955
          %3612 = vmatprep.subr.mxu0 %v2954
          %3613 = vmatpush2.msra.mxu0 %v2953
          %3614 = vmatprep.subr.mxu0 %v2952
          %3615 = vmatpush2.msra.mxu0 %v2951
          %3616 = vmatprep.subr.mxu0 %v2950
          %3617 = vmatpush2.msra.mxu0 %v2949
          %3618 = vmatprep.subr.mxu0 %v2948
          %3619 = vmatpush2.msra.mxu0 %v2947
          %3620 = vmatprep.subr.mxu0 %v2946
          %3621 = vmatpush2.msra.mxu0 %v2945
          %3622 = vmatprep.subr.mxu0 %v2944
          %3623 = vmatpush2.msra.mxu0 %v2943
          %3624 = vmatprep.subr.mxu0 %v2942
          %3625 = vmatpush2.msra.mxu0 %v2941
          %3626 = vmatprep.subr.mxu0 %v2940
          %3627 = vmatpush2.msra.mxu0 %v2939
          %3628 = vmatprep.subr.mxu0 %v2938
          %3629 = vmatpush2.msra.mxu0 %v2937
          %3630 = vmatprep.subr.mxu0 %v2936
          %3631 = vmatpush2.msra.mxu0 %v2935
          %3632 = vmatprep.subr.mxu0 %v2934
          %3633 = vmatpush2.msra.mxu0 %v2933
          %3634 = vmatprep.subr.mxu0 %v2932
          %3635 = vmatpush2.msra.mxu0 %v2931
          %3636 = vmatprep.mubr.f32.mxu0 %v2503
          %3637 = vmatmul.mubr.f32.gmra.mxu0 %v2500
          %v3638 = vpop.f32.mrf.mxu0
          %v3639 = vadd.f32 %v3478, %v3638
          %v3640 = vpop.f32.mrf.mxu0
          %v3641 = vadd.f32 %v3480, %v3640
          %3642 = vmatprep.mubr.f32.mxu0 %v2509
          %3643 = vmatmul.mubr.f32.gmra.mxu0 %v2506
          %v3644 = vpop.f32.mrf.mxu0
          %v3645 = vadd.f32 %v3484, %v3644
          %v3646 = vpop.f32.mrf.mxu0
          %v3647 = vadd.f32 %v3486, %v3646
          %3648 = vmatprep.mubr.f32.mxu0 %v2515
          %3649 = vmatmul.mubr.f32.gmra.mxu0 %v2512
          %v3650 = vpop.f32.mrf.mxu0
          %v3651 = vadd.f32 %v3490, %v3650
          %v3652 = vpop.f32.mrf.mxu0
          %v3653 = vadd.f32 %v3492, %v3652
          %3654 = vmatprep.mubr.f32.mxu0 %v2521
          %3655 = vmatmul.mubr.f32.gmra.mxu0 %v2518
          %v3656 = vpop.f32.mrf.mxu0
          %v3657 = vadd.f32 %v3496, %v3656
          %v3658 = vpop.f32.mrf.mxu0
          %v3659 = vadd.f32 %v3498, %v3658
          %3660 = vmatprep.mubr.f32.mxu0 %v2527
          %3661 = vmatmul.mubr.f32.gmra.mxu0 %v2524
          %v3662 = vpop.f32.mrf.mxu0
          %v3663 = vadd.f32 %v3502, %v3662
          %v3664 = vpop.f32.mrf.mxu0
          %v3665 = vadd.f32 %v3504, %v3664
          %3666 = vmatprep.mubr.f32.mxu0 %v2533
          %3667 = vmatmul.mubr.f32.gmra.mxu0 %v2530
          %v3668 = vpop.f32.mrf.mxu0
          %v3669 = vadd.f32 %v3508, %v3668
          %v3670 = vpop.f32.mrf.mxu0
          %v3671 = vadd.f32 %v3510, %v3670
          %3672 = vmatprep.mubr.f32.mxu0 %v2539
          %3673 = vmatmul.mubr.f32.gmra.mxu0 %v2536
          %v3674 = vpop.f32.mrf.mxu0
          %v3675 = vadd.f32 %v3514, %v3674
          %v3676 = vpop.f32.mrf.mxu0
          %v3677 = vadd.f32 %v3516, %v3676
          %3678 = vmatprep.mubr.f32.mxu0 %v2545
          %3679 = vmatmul.mubr.f32.gmra.mxu0 %v2542
          %v3680 = vpop.f32.mrf.mxu0
          %v3681 = vadd.f32 %v3520, %v3680
          %v3682 = vpop.f32.mrf.mxu0
          %v3683 = vadd.f32 %v3522, %v3682
          %3684 = vmatprep.mubr.f32.mxu0 %v2551
          %3685 = vmatmul.mubr.f32.gmra.mxu0 %v2548
          %v3686 = vpop.f32.mrf.mxu0
          %v3687 = vadd.f32 %v3526, %v3686
          %v3688 = vpop.f32.mrf.mxu0
          %v3689 = vadd.f32 %v3528, %v3688
          %3690 = vmatprep.mubr.f32.mxu0 %v2557
          %3691 = vmatmul.mubr.f32.gmra.mxu0 %v2554
          %v3692 = vpop.f32.mrf.mxu0
          %v3693 = vadd.f32 %v3532, %v3692
          %v3694 = vpop.f32.mrf.mxu0
          %v3695 = vadd.f32 %v3534, %v3694
          %3696 = vmatprep.mubr.f32.mxu0 %v2563
          %3697 = vmatmul.mubr.f32.gmra.mxu0 %v2560
          %v3698 = vpop.f32.mrf.mxu0
          %v3699 = vadd.f32 %v3538, %v3698
          %v3700 = vpop.f32.mrf.mxu0
          %v3701 = vadd.f32 %v3540, %v3700
          %3702 = vmatprep.mubr.f32.mxu0 %v2569
          %3703 = vmatmul.mubr.f32.gmra.mxu0 %v2566
          %v3704 = vpop.f32.mrf.mxu0
          %v3705 = vadd.f32 %v3544, %v3704
          %v3706 = vpop.f32.mrf.mxu0
          %v3707 = vadd.f32 %v3546, %v3706
          %3708 = vmatprep.mubr.f32.mxu0 %v2575
          %3709 = vmatmul.mubr.f32.gmra.mxu0 %v2572
          %v3710 = vpop.f32.mrf.mxu0
          %v3711 = vadd.f32 %v3550, %v3710
          %v3712 = vpop.f32.mrf.mxu0
          %v3713 = vadd.f32 %v3552, %v3712
          %3714 = vmatprep.mubr.f32.mxu0 %v2581
          %3715 = vmatmul.mubr.f32.gmra.mxu0 %v2578
          %v3716 = vpop.f32.mrf.mxu0
          %v3717 = vadd.f32 %v3556, %v3716
          %v3718 = vpop.f32.mrf.mxu0
          %v3719 = vadd.f32 %v3558, %v3718
          %3720 = vmatprep.mubr.f32.mxu0 %v2587
          %3721 = vmatmul.mubr.f32.gmra.mxu0 %v2584
          %v3722 = vpop.f32.mrf.mxu0
          %v3723 = vadd.f32 %v3562, %v3722
          %v3724 = vpop.f32.mrf.mxu0
          %v3725 = vadd.f32 %v3564, %v3724
          %3726 = vmatprep.mubr.f32.mxu0 %v2593
          %3727 = vmatmul.mubr.f32.gmra.mxu0 %v2590
          %v3728 = vpop.f32.mrf.mxu0
          %v3729 = vadd.f32 %v3568, %v3728
          %v3730 = vpop.f32.mrf.mxu0
          %v3731 = vadd.f32 %v3570, %v3730
          %3732 = vdwg.mxu0
          %3733 = vmatprep.subr.mxu0 %v2994
          %3734 = vmatpush1.msra.mxu0 %v2993
          %3735 = vmatprep.subr.mxu0 %v2992
          %3736 = vmatpush1.msra.mxu0 %v2991
          %3737 = vmatprep.subr.mxu0 %v2990
          %3738 = vmatpush1.msra.mxu0 %v2989
          %3739 = vmatprep.subr.mxu0 %v2988
          %3740 = vmatpush1.msra.mxu0 %v2987
          %3741 = vmatprep.subr.mxu0 %v2986
          %3742 = vmatpush1.msra.mxu0 %v2985
          %3743 = vmatprep.subr.mxu0 %v2984
          %3744 = vmatpush1.msra.mxu0 %v2983
          %3745 = vmatprep.subr.mxu0 %v2982
          %3746 = vmatpush1.msra.mxu0 %v2981
          %3747 = vmatprep.subr.mxu0 %v2980
          %3748 = vmatpush1.msra.mxu0 %v2979
          %3749 = vmatprep.subr.mxu0 %v2978
          %3750 = vmatpush1.msra.mxu0 %v2977
          %3751 = vmatprep.subr.mxu0 %v2976
          %3752 = vmatpush1.msra.mxu0 %v2975
          %3753 = vmatprep.subr.mxu0 %v2974
          %3754 = vmatpush1.msra.mxu0 %v2973
          %3755 = vmatprep.subr.mxu0 %v2972
          %3756 = vmatpush1.msra.mxu0 %v2971
          %3757 = vmatprep.subr.mxu0 %v2970
          %3758 = vmatpush1.msra.mxu0 %v2969
          %3759 = vmatprep.subr.mxu0 %v2968
          %3760 = vmatpush1.msra.mxu0 %v2967
          %3761 = vmatprep.subr.mxu0 %v2966
          %3762 = vmatpush1.msra.mxu0 %v2965
          %3763 = vmatprep.subr.mxu0 %v2964
          %3764 = vmatpush1.msra.mxu0 %v2963
          %3765 = vmatprep.subr.mxu0 %v3026
          %3766 = vmatpush2.msra.mxu0 %v3025
          %3767 = vmatprep.subr.mxu0 %v3024
          %3768 = vmatpush2.msra.mxu0 %v3023
          %3769 = vmatprep.subr.mxu0 %v3022
          %3770 = vmatpush2.msra.mxu0 %v3021
          %3771 = vmatprep.subr.mxu0 %v3020
          %3772 = vmatpush2.msra.mxu0 %v3019
          %3773 = vmatprep.subr.mxu0 %v3018
          %3774 = vmatpush2.msra.mxu0 %v3017
          %3775 = vmatprep.subr.mxu0 %v3016
          %3776 = vmatpush2.msra.mxu0 %v3015
          %3777 = vmatprep.subr.mxu0 %v3014
          %3778 = vmatpush2.msra.mxu0 %v3013
          %3779 = vmatprep.subr.mxu0 %v3012
          %3780 = vmatpush2.msra.mxu0 %v3011
          %3781 = vmatprep.subr.mxu0 %v3010
          %3782 = vmatpush2.msra.mxu0 %v3009
          %3783 = vmatprep.subr.mxu0 %v3008
          %3784 = vmatpush2.msra.mxu0 %v3007
          %3785 = vmatprep.subr.mxu0 %v3006
          %3786 = vmatpush2.msra.mxu0 %v3005
          %3787 = vmatprep.subr.mxu0 %v3004
          %3788 = vmatpush2.msra.mxu0 %v3003
          %3789 = vmatprep.subr.mxu0 %v3002
          %3790 = vmatpush2.msra.mxu0 %v3001
          %3791 = vmatprep.subr.mxu0 %v3000
          %3792 = vmatpush2.msra.mxu0 %v2999
          %3793 = vmatprep.subr.mxu0 %v2998
          %3794 = vmatpush2.msra.mxu0 %v2997
          %3795 = vmatprep.subr.mxu0 %v2996
          %3796 = vmatpush2.msra.mxu0 %v2995
          %3797 = vmatprep.mubr.f32.mxu0 %v2632
          %3798 = vmatmul.mubr.f32.gmra.mxu0 %v2629
          %v3799 = vpop.f32.mrf.mxu0
          %v3800 = vadd.f32 %v3639, %v3799
          %v3801 = vpop.f32.mrf.mxu0
          %v3802 = vadd.f32 %v3641, %v3801
          %3803 = vmatprep.mubr.f32.mxu0 %v2638
          %3804 = vmatmul.mubr.f32.gmra.mxu0 %v2635
          %v3805 = vpop.f32.mrf.mxu0
          %v3806 = vadd.f32 %v3645, %v3805
          %v3807 = vpop.f32.mrf.mxu0
          %v3808 = vadd.f32 %v3647, %v3807
          %3809 = vmatprep.mubr.f32.mxu0 %v2644
          %3810 = vmatmul.mubr.f32.gmra.mxu0 %v2641
          %v3811 = vpop.f32.mrf.mxu0
          %v3812 = vadd.f32 %v3651, %v3811
          %v3813 = vpop.f32.mrf.mxu0
          %v3814 = vadd.f32 %v3653, %v3813
          %3815 = vmatprep.mubr.f32.mxu0 %v2650
          %3816 = vmatmul.mubr.f32.gmra.mxu0 %v2647
          %v3817 = vpop.f32.mrf.mxu0
          %v3818 = vadd.f32 %v3657, %v3817
          %v3819 = vpop.f32.mrf.mxu0
          %v3820 = vadd.f32 %v3659, %v3819
          %3821 = vmatprep.mubr.f32.mxu0 %v2656
          %3822 = vmatmul.mubr.f32.gmra.mxu0 %v2653
          %v3823 = vpop.f32.mrf.mxu0
          %v3824 = vadd.f32 %v3663, %v3823
          %v3825 = vpop.f32.mrf.mxu0
          %v3826 = vadd.f32 %v3665, %v3825
          %3827 = vmatprep.mubr.f32.mxu0 %v2662
          %3828 = vmatmul.mubr.f32.gmra.mxu0 %v2659
          %v3829 = vpop.f32.mrf.mxu0
          %v3830 = vadd.f32 %v3669, %v3829
          %v3831 = vpop.f32.mrf.mxu0
          %v3832 = vadd.f32 %v3671, %v3831
          %3833 = vmatprep.mubr.f32.mxu0 %v2668
          %3834 = vmatmul.mubr.f32.gmra.mxu0 %v2665
          %v3835 = vpop.f32.mrf.mxu0
          %v3836 = vadd.f32 %v3675, %v3835
          %v3837 = vpop.f32.mrf.mxu0
          %v3838 = vadd.f32 %v3677, %v3837
          %3839 = vmatprep.mubr.f32.mxu0 %v2674
          %3840 = vmatmul.mubr.f32.gmra.mxu0 %v2671
          %v3841 = vpop.f32.mrf.mxu0
          %v3842 = vadd.f32 %v3681, %v3841
          %v3843 = vpop.f32.mrf.mxu0
          %v3844 = vadd.f32 %v3683, %v3843
          %3845 = vmatprep.mubr.f32.mxu0 %v2680
          %3846 = vmatmul.mubr.f32.gmra.mxu0 %v2677
          %v3847 = vpop.f32.mrf.mxu0
          %v3848 = vadd.f32 %v3687, %v3847
          %v3849 = vpop.f32.mrf.mxu0
          %v3850 = vadd.f32 %v3689, %v3849
          %3851 = vmatprep.mubr.f32.mxu0 %v2686
          %3852 = vmatmul.mubr.f32.gmra.mxu0 %v2683
          %v3853 = vpop.f32.mrf.mxu0
          %v3854 = vadd.f32 %v3693, %v3853
          %v3855 = vpop.f32.mrf.mxu0
          %v3856 = vadd.f32 %v3695, %v3855
          %3857 = vmatprep.mubr.f32.mxu0 %v2692
          %3858 = vmatmul.mubr.f32.gmra.mxu0 %v2689
          %v3859 = vpop.f32.mrf.mxu0
          %v3860 = vadd.f32 %v3699, %v3859
          %v3861 = vpop.f32.mrf.mxu0
          %v3862 = vadd.f32 %v3701, %v3861
          %3863 = vmatprep.mubr.f32.mxu0 %v2698
          %3864 = vmatmul.mubr.f32.gmra.mxu0 %v2695
          %v3865 = vpop.f32.mrf.mxu0
          %v3866 = vadd.f32 %v3705, %v3865
          %v3867 = vpop.f32.mrf.mxu0
          %v3868 = vadd.f32 %v3707, %v3867
          %3869 = vmatprep.mubr.f32.mxu0 %v2704
          %3870 = vmatmul.mubr.f32.gmra.mxu0 %v2701
          %v3871 = vpop.f32.mrf.mxu0
          %v3872 = vadd.f32 %v3711, %v3871
          %v3873 = vpop.f32.mrf.mxu0
          %v3874 = vadd.f32 %v3713, %v3873
          %3875 = vmatprep.mubr.f32.mxu0 %v2710
          %3876 = vmatmul.mubr.f32.gmra.mxu0 %v2707
          %v3877 = vpop.f32.mrf.mxu0
          %v3878 = vadd.f32 %v3717, %v3877
          %v3879 = vpop.f32.mrf.mxu0
          %v3880 = vadd.f32 %v3719, %v3879
          %3881 = vmatprep.mubr.f32.mxu0 %v2716
          %3882 = vmatmul.mubr.f32.gmra.mxu0 %v2713
          %v3883 = vpop.f32.mrf.mxu0
          %v3884 = vadd.f32 %v3723, %v3883
          %v3885 = vpop.f32.mrf.mxu0
          %v3886 = vadd.f32 %v3725, %v3885
          %3887 = vmatprep.mubr.f32.mxu0 %v2722
          %3888 = vmatmul.mubr.f32.gmra.mxu0 %v2719
          %v3889 = vpop.f32.mrf.mxu0
          %v3890 = vadd.f32 %v3729, %v3889
          %v3891 = vpop.f32.mrf.mxu0
          %v3892 = vadd.f32 %v3731, %v3891
          %3893 = vdwg.mxu0
          %3894 = vmatprep.subr.mxu0 %v3058
          %3895 = vmatpush1.msra.mxu0 %v3057
          %3896 = vmatprep.subr.mxu0 %v3056
          %3897 = vmatpush1.msra.mxu0 %v3055
          %3898 = vmatprep.subr.mxu0 %v3054
          %3899 = vmatpush1.msra.mxu0 %v3053
          %3900 = vmatprep.subr.mxu0 %v3052
          %3901 = vmatpush1.msra.mxu0 %v3051
          %3902 = vmatprep.subr.mxu0 %v3050
          %3903 = vmatpush1.msra.mxu0 %v3049
          %3904 = vmatprep.subr.mxu0 %v3048
          %3905 = vmatpush1.msra.mxu0 %v3047
          %3906 = vmatprep.subr.mxu0 %v3046
          %3907 = vmatpush1.msra.mxu0 %v3045
          %3908 = vmatprep.subr.mxu0 %v3044
          %3909 = vmatpush1.msra.mxu0 %v3043
          %3910 = vmatprep.subr.mxu0 %v3042
          %3911 = vmatpush1.msra.mxu0 %v3041
          %3912 = vmatprep.subr.mxu0 %v3040
          %3913 = vmatpush1.msra.mxu0 %v3039
          %3914 = vmatprep.subr.mxu0 %v3038
          %3915 = vmatpush1.msra.mxu0 %v3037
          %3916 = vmatprep.subr.mxu0 %v3036
          %3917 = vmatpush1.msra.mxu0 %v3035
          %3918 = vmatprep.subr.mxu0 %v3034
          %3919 = vmatpush1.msra.mxu0 %v3033
          %3920 = vmatprep.subr.mxu0 %v3032
          %3921 = vmatpush1.msra.mxu0 %v3031
          %3922 = vmatprep.subr.mxu0 %v3030
          %3923 = vmatpush1.msra.mxu0 %v3029
          %3924 = vmatprep.subr.mxu0 %v3028
          %3925 = vmatpush1.msra.mxu0 %v3027
          %3926 = vmatprep.subr.mxu0 %v3090
          %3927 = vmatpush2.msra.mxu0 %v3089
          %3928 = vmatprep.subr.mxu0 %v3088
          %3929 = vmatpush2.msra.mxu0 %v3087
          %3930 = vmatprep.subr.mxu0 %v3086
          %3931 = vmatpush2.msra.mxu0 %v3085
          %3932 = vmatprep.subr.mxu0 %v3084
          %3933 = vmatpush2.msra.mxu0 %v3083
          %3934 = vmatprep.subr.mxu0 %v3082
          %3935 = vmatpush2.msra.mxu0 %v3081
          %3936 = vmatprep.subr.mxu0 %v3080
          %3937 = vmatpush2.msra.mxu0 %v3079
          %3938 = vmatprep.subr.mxu0 %v3078
          %3939 = vmatpush2.msra.mxu0 %v3077
          %3940 = vmatprep.subr.mxu0 %v3076
          %3941 = vmatpush2.msra.mxu0 %v3075
          %3942 = vmatprep.subr.mxu0 %v3074
          %3943 = vmatpush2.msra.mxu0 %v3073
          %3944 = vmatprep.subr.mxu0 %v3072
          %3945 = vmatpush2.msra.mxu0 %v3071
          %3946 = vmatprep.subr.mxu0 %v3070
          %3947 = vmatpush2.msra.mxu0 %v3069
          %3948 = vmatprep.subr.mxu0 %v3068
          %3949 = vmatpush2.msra.mxu0 %v3067
          %3950 = vmatprep.subr.mxu0 %v3066
          %3951 = vmatpush2.msra.mxu0 %v3065
          %3952 = vmatprep.subr.mxu0 %v3064
          %3953 = vmatpush2.msra.mxu0 %v3063
          %3954 = vmatprep.subr.mxu0 %v3062
          %3955 = vmatpush2.msra.mxu0 %v3061
          %3956 = vmatprep.subr.mxu0 %v3060
          %3957 = vmatpush2.msra.mxu0 %v3059
          %3958 = vmatprep.mubr.f32.mxu0 %v2358
          %3959 = vmatmul.mubr.f32.gmra.mxu0 %v2357
          %v3960 = vpop.f32.mrf.mxu0
          %v3961 = vadd.f32 %v3800, %v3960
          %v3962 = vpop.f32.mrf.mxu0
          %v3963 = vadd.f32 %v3802, %v3962
          %3964 = vmatprep.mubr.f32.mxu0 %v2362
          %3965 = vmatmul.mubr.f32.gmra.mxu0 %v2361
          %v3966 = vpop.f32.mrf.mxu0
          %v3967 = vadd.f32 %v3806, %v3966
          %v3968 = vpop.f32.mrf.mxu0
          %v3969 = vadd.f32 %v3808, %v3968
          %3970 = vmatprep.mubr.f32.mxu0 %v2366
          %3971 = vmatmul.mubr.f32.gmra.mxu0 %v2365
          %v3972 = vpop.f32.mrf.mxu0
          %v3973 = vadd.f32 %v3812, %v3972
          %v3974 = vpop.f32.mrf.mxu0
          %v3975 = vadd.f32 %v3814, %v3974
          %3976 = vmatprep.mubr.f32.mxu0 %v2370
          %3977 = vmatmul.mubr.f32.gmra.mxu0 %v2369
          %v3978 = vpop.f32.mrf.mxu0
          %v3979 = vadd.f32 %v3818, %v3978
          %v3980 = vpop.f32.mrf.mxu0
          %v3981 = vadd.f32 %v3820, %v3980
          %3982 = vmatprep.mubr.f32.mxu0 %v2374
          %3983 = vmatmul.mubr.f32.gmra.mxu0 %v2373
          %v3984 = vpop.f32.mrf.mxu0
          %v3985 = vadd.f32 %v3824, %v3984
          %v3986 = vpop.f32.mrf.mxu0
          %v3987 = vadd.f32 %v3826, %v3986
          %3988 = vmatprep.mubr.f32.mxu0 %v2378
          %3989 = vmatmul.mubr.f32.gmra.mxu0 %v2377
          %v3990 = vpop.f32.mrf.mxu0
          %v3991 = vadd.f32 %v3830, %v3990
          %v3992 = vpop.f32.mrf.mxu0
          %v3993 = vadd.f32 %v3832, %v3992
          %3994 = vmatprep.mubr.f32.mxu0 %v2382
          %3995 = vmatmul.mubr.f32.gmra.mxu0 %v2381
          %v3996 = vpop.f32.mrf.mxu0
          %v3997 = vadd.f32 %v3836, %v3996
          %v3998 = vpop.f32.mrf.mxu0
          %v3999 = vadd.f32 %v3838, %v3998
          %4000 = vmatprep.mubr.f32.mxu0 %v2386
          %4001 = vmatmul.mubr.f32.gmra.mxu0 %v2385
          %v4002 = vpop.f32.mrf.mxu0
          %v4003 = vadd.f32 %v3842, %v4002
          %v4004 = vpop.f32.mrf.mxu0
          %v4005 = vadd.f32 %v3844, %v4004
          %4006 = vmatprep.mubr.f32.mxu0 %v2398
          %4007 = vmatmul.mubr.f32.gmra.mxu0 %v2397
          %v4008 = vpop.f32.mrf.mxu0
          %v4009 = vadd.f32 %v3848, %v4008
          %v4010 = vpop.f32.mrf.mxu0
          %v4011 = vadd.f32 %v3850, %v4010
          %4012 = vmatprep.mubr.f32.mxu0 %v2402
          %4013 = vmatmul.mubr.f32.gmra.mxu0 %v2401
          %v4014 = vpop.f32.mrf.mxu0
          %v4015 = vadd.f32 %v3854, %v4014
          %v4016 = vpop.f32.mrf.mxu0
          %v4017 = vadd.f32 %v3856, %v4016
          %4018 = vmatprep.mubr.f32.mxu0 %v2406
          %4019 = vmatmul.mubr.f32.gmra.mxu0 %v2405
          %v4020 = vpop.f32.mrf.mxu0
          %v4021 = vadd.f32 %v3860, %v4020
          %v4022 = vpop.f32.mrf.mxu0
          %v4023 = vadd.f32 %v3862, %v4022
          %4024 = vmatprep.mubr.f32.mxu0 %v2410
          %4025 = vmatmul.mubr.f32.gmra.mxu0 %v2409
          %v4026 = vpop.f32.mrf.mxu0
          %v4027 = vadd.f32 %v3866, %v4026
          %v4028 = vpop.f32.mrf.mxu0
          %v4029 = vadd.f32 %v3868, %v4028
          %4030 = vmatprep.mubr.f32.mxu0 %v2414
          %4031 = vmatmul.mubr.f32.gmra.mxu0 %v2413
          %v4032 = vpop.f32.mrf.mxu0
          %v4033 = vadd.f32 %v3872, %v4032
          %v4034 = vpop.f32.mrf.mxu0
          %v4035 = vadd.f32 %v3874, %v4034
          %4036 = vmatprep.mubr.f32.mxu0 %v2418
          %4037 = vmatmul.mubr.f32.gmra.mxu0 %v2417
          %v4038 = vpop.f32.mrf.mxu0
          %v4039 = vadd.f32 %v3878, %v4038
          %v4040 = vpop.f32.mrf.mxu0
          %v4041 = vadd.f32 %v3880, %v4040
          %4042 = vmatprep.mubr.f32.mxu0 %v2422
          %4043 = vmatmul.mubr.f32.gmra.mxu0 %v2421
          %v4044 = vpop.f32.mrf.mxu0
          %v4045 = vadd.f32 %v3884, %v4044
          %v4046 = vpop.f32.mrf.mxu0
          %v4047 = vadd.f32 %v3886, %v4046
          %4048 = vmatprep.mubr.f32.mxu0 %v2426
          %4049 = vmatmul.mubr.f32.gmra.mxu0 %v2425
          %v4050 = vpop.f32.mrf.mxu0
          %v4051 = vadd.f32 %v3890, %v4050
          %v4052 = vpop.f32.mrf.mxu0
          %v4053 = vadd.f32 %v3892, %v4052
          %4054 = vdwg.mxu0
          %4055 = vmatprep.subr.mxu0 %v3122
          %4056 = vmatpush1.msra.mxu0 %v3121
          %4057 = vmatprep.subr.mxu0 %v3120
          %4058 = vmatpush1.msra.mxu0 %v3119
          %4059 = vmatprep.subr.mxu0 %v3118
          %4060 = vmatpush1.msra.mxu0 %v3117
          %4061 = vmatprep.subr.mxu0 %v3116
          %4062 = vmatpush1.msra.mxu0 %v3115
          %4063 = vmatprep.subr.mxu0 %v3114
          %4064 = vmatpush1.msra.mxu0 %v3113
          %4065 = vmatprep.subr.mxu0 %v3112
          %4066 = vmatpush1.msra.mxu0 %v3111
          %4067 = vmatprep.subr.mxu0 %v3110
          %4068 = vmatpush1.msra.mxu0 %v3109
          %4069 = vmatprep.subr.mxu0 %v3108
          %4070 = vmatpush1.msra.mxu0 %v3107
          %4071 = vmatprep.subr.mxu0 %v3106
          %4072 = vmatpush1.msra.mxu0 %v3105
          %4073 = vmatprep.subr.mxu0 %v3104
          %4074 = vmatpush1.msra.mxu0 %v3103
          %4075 = vmatprep.subr.mxu0 %v3102
          %4076 = vmatpush1.msra.mxu0 %v3101
          %4077 = vmatprep.subr.mxu0 %v3100
          %4078 = vmatpush1.msra.mxu0 %v3099
          %4079 = vmatprep.subr.mxu0 %v3098
          %4080 = vmatpush1.msra.mxu0 %v3097
          %4081 = vmatprep.subr.mxu0 %v3096
          %4082 = vmatpush1.msra.mxu0 %v3095
          %4083 = vmatprep.subr.mxu0 %v3094
          %4084 = vmatpush1.msra.mxu0 %v3093
          %4085 = vmatprep.subr.mxu0 %v3092
          %4086 = vmatpush1.msra.mxu0 %v3091
          %4087 = vmatprep.subr.mxu0 %v3154
          %4088 = vmatpush2.msra.mxu0 %v3153
          %4089 = vmatprep.subr.mxu0 %v3152
          %4090 = vmatpush2.msra.mxu0 %v3151
          %4091 = vmatprep.subr.mxu0 %v3150
          %4092 = vmatpush2.msra.mxu0 %v3149
          %4093 = vmatprep.subr.mxu0 %v3148
          %4094 = vmatpush2.msra.mxu0 %v3147
          %4095 = vmatprep.subr.mxu0 %v3146
          %4096 = vmatpush2.msra.mxu0 %v3145
          %4097 = vmatprep.subr.mxu0 %v3144
          %4098 = vmatpush2.msra.mxu0 %v3143
          %4099 = vmatprep.subr.mxu0 %v3142
          %4100 = vmatpush2.msra.mxu0 %v3141
          %4101 = vmatprep.subr.mxu0 %v3140
          %4102 = vmatpush2.msra.mxu0 %v3139
          %4103 = vmatprep.subr.mxu0 %v3138
          %4104 = vmatpush2.msra.mxu0 %v3137
          %4105 = vmatprep.subr.mxu0 %v3136
          %4106 = vmatpush2.msra.mxu0 %v3135
          %4107 = vmatprep.subr.mxu0 %v3134
          %4108 = vmatpush2.msra.mxu0 %v3133
          %4109 = vmatprep.subr.mxu0 %v3132
          %4110 = vmatpush2.msra.mxu0 %v3131
          %4111 = vmatprep.subr.mxu0 %v3130
          %4112 = vmatpush2.msra.mxu0 %v3129
          %4113 = vmatprep.subr.mxu0 %v3128
          %4114 = vmatpush2.msra.mxu0 %v3127
          %4115 = vmatprep.subr.mxu0 %v3126
          %4116 = vmatpush2.msra.mxu0 %v3125
          %4117 = vmatprep.subr.mxu0 %v3124
          %4118 = vmatpush2.msra.mxu0 %v3123
          %4119 = vmatprep.mubr.f32.mxu0 %v2509
          %4120 = vmatmul.mubr.f32.gmra.mxu0 %v2506
          %v4121 = vpop.f32.mrf.mxu0
          %v4122 = vadd.f32 %v3961, %v4121
          %v4123 = vpop.f32.mrf.mxu0
          %v4124 = vadd.f32 %v3963, %v4123
          %4125 = vmatprep.mubr.f32.mxu0 %v2515
          %4126 = vmatmul.mubr.f32.gmra.mxu0 %v2512
          %v4127 = vpop.f32.mrf.mxu0
          %v4128 = vadd.f32 %v3967, %v4127
          %v4129 = vpop.f32.mrf.mxu0
          %v4130 = vadd.f32 %v3969, %v4129
          %4131 = vmatprep.mubr.f32.mxu0 %v2521
          %4132 = vmatmul.mubr.f32.gmra.mxu0 %v2518
          %v4133 = vpop.f32.mrf.mxu0
          %v4134 = vadd.f32 %v3973, %v4133
          %v4135 = vpop.f32.mrf.mxu0
          %v4136 = vadd.f32 %v3975, %v4135
          %4137 = vmatprep.mubr.f32.mxu0 %v2527
          %4138 = vmatmul.mubr.f32.gmra.mxu0 %v2524
          %v4139 = vpop.f32.mrf.mxu0
          %v4140 = vadd.f32 %v3979, %v4139
          %v4141 = vpop.f32.mrf.mxu0
          %v4142 = vadd.f32 %v3981, %v4141
          %4143 = vmatprep.mubr.f32.mxu0 %v2533
          %4144 = vmatmul.mubr.f32.gmra.mxu0 %v2530
          %v4145 = vpop.f32.mrf.mxu0
          %v4146 = vadd.f32 %v3985, %v4145
          %v4147 = vpop.f32.mrf.mxu0
          %v4148 = vadd.f32 %v3987, %v4147
          %4149 = vmatprep.mubr.f32.mxu0 %v2539
          %4150 = vmatmul.mubr.f32.gmra.mxu0 %v2536
          %v4151 = vpop.f32.mrf.mxu0
          %v4152 = vadd.f32 %v3991, %v4151
          %v4153 = vpop.f32.mrf.mxu0
          %v4154 = vadd.f32 %v3993, %v4153
          %4155 = vmatprep.mubr.f32.mxu0 %v2545
          %4156 = vmatmul.mubr.f32.gmra.mxu0 %v2542
          %v4157 = vpop.f32.mrf.mxu0
          %v4158 = vadd.f32 %v3997, %v4157
          %v4159 = vpop.f32.mrf.mxu0
          %v4160 = vadd.f32 %v3999, %v4159
          %4161 = vmatprep.mubr.f32.mxu0 %v2768
          %4162 = vmatmul.mubr.f32.gmra.mxu0 %v2765
          %v4163 = vpop.f32.mrf.mxu0
          %v4164 = vadd.f32 %v4003, %v4163
          %v4165 = vpop.f32.mrf.mxu0
          %v4166 = vadd.f32 %v4005, %v4165
          %4167 = vmatprep.mubr.f32.mxu0 %v2557
          %4168 = vmatmul.mubr.f32.gmra.mxu0 %v2554
          %v4169 = vpop.f32.mrf.mxu0
          %v4170 = vadd.f32 %v4009, %v4169
          %v4171 = vpop.f32.mrf.mxu0
          %v4172 = vadd.f32 %v4011, %v4171
          %4173 = vmatprep.mubr.f32.mxu0 %v2563
          %4174 = vmatmul.mubr.f32.gmra.mxu0 %v2560
          %v4175 = vpop.f32.mrf.mxu0
          %v4176 = vadd.f32 %v4015, %v4175
          %v4177 = vpop.f32.mrf.mxu0
          %v4178 = vadd.f32 %v4017, %v4177
          %4179 = vmatprep.mubr.f32.mxu0 %v2569
          %4180 = vmatmul.mubr.f32.gmra.mxu0 %v2566
          %v4181 = vpop.f32.mrf.mxu0
          %v4182 = vadd.f32 %v4021, %v4181
          %v4183 = vpop.f32.mrf.mxu0
          %v4184 = vadd.f32 %v4023, %v4183
          %4185 = vmatprep.mubr.f32.mxu0 %v2575
          %4186 = vmatmul.mubr.f32.gmra.mxu0 %v2572
          %v4187 = vpop.f32.mrf.mxu0
          %v4188 = vadd.f32 %v4027, %v4187
          %v4189 = vpop.f32.mrf.mxu0
          %v4190 = vadd.f32 %v4029, %v4189
          %4191 = vmatprep.mubr.f32.mxu0 %v2581
          %4192 = vmatmul.mubr.f32.gmra.mxu0 %v2578
          %v4193 = vpop.f32.mrf.mxu0
          %v4194 = vadd.f32 %v4033, %v4193
          %v4195 = vpop.f32.mrf.mxu0
          %v4196 = vadd.f32 %v4035, %v4195
          %4197 = vmatprep.mubr.f32.mxu0 %v2587
          %4198 = vmatmul.mubr.f32.gmra.mxu0 %v2584
          %v4199 = vpop.f32.mrf.mxu0
          %v4200 = vadd.f32 %v4039, %v4199
          %v4201 = vpop.f32.mrf.mxu0
          %v4202 = vadd.f32 %v4041, %v4201
          %4203 = vmatprep.mubr.f32.mxu0 %v2593
          %4204 = vmatmul.mubr.f32.gmra.mxu0 %v2590
          %v4205 = vpop.f32.mrf.mxu0
          %v4206 = vadd.f32 %v4045, %v4205
          %v4207 = vpop.f32.mrf.mxu0
          %v4208 = vadd.f32 %v4047, %v4207
          %4209 = vmatprep.mubr.f32.mxu0 %v2774
          %4210 = vmatmul.mubr.f32.gmra.mxu0 %v2771
          %v4211 = vpop.f32.mrf.mxu0
          %v4212 = vadd.f32 %v4051, %v4211
          %v4213 = vpop.f32.mrf.mxu0
          %v4214 = vadd.f32 %v4053, %v4213
          %4215 = vdwg.mxu0
          %4216 = vmatprep.subr.mxu0 %v3186
          %4217 = vmatpush1.msra.mxu0 %v3185
          %4218 = vmatprep.subr.mxu0 %v3184
          %4219 = vmatpush1.msra.mxu0 %v3183
          %4220 = vmatprep.subr.mxu0 %v3182
          %4221 = vmatpush1.msra.mxu0 %v3181
          %4222 = vmatprep.subr.mxu0 %v3180
          %4223 = vmatpush1.msra.mxu0 %v3179
          %4224 = vmatprep.subr.mxu0 %v3178
          %4225 = vmatpush1.msra.mxu0 %v3177
          %4226 = vmatprep.subr.mxu0 %v3176
          %4227 = vmatpush1.msra.mxu0 %v3175
          %4228 = vmatprep.subr.mxu0 %v3174
          %4229 = vmatpush1.msra.mxu0 %v3173
          %4230 = vmatprep.subr.mxu0 %v3172
          %4231 = vmatpush1.msra.mxu0 %v3171
          %4232 = vmatprep.subr.mxu0 %v3170
          %4233 = vmatpush1.msra.mxu0 %v3169
          %4234 = vmatprep.subr.mxu0 %v3168
          %4235 = vmatpush1.msra.mxu0 %v3167
          %4236 = vmatprep.subr.mxu0 %v3166
          %4237 = vmatpush1.msra.mxu0 %v3165
          %4238 = vmatprep.subr.mxu0 %v3164
          %4239 = vmatpush1.msra.mxu0 %v3163
          %4240 = vmatprep.subr.mxu0 %v3162
          %4241 = vmatpush1.msra.mxu0 %v3161
          %4242 = vmatprep.subr.mxu0 %v3160
          %4243 = vmatpush1.msra.mxu0 %v3159
          %4244 = vmatprep.subr.mxu0 %v3158
          %4245 = vmatpush1.msra.mxu0 %v3157
          %4246 = vmatprep.subr.mxu0 %v3156
          %4247 = vmatpush1.msra.mxu0 %v3155
          %4248 = vmatprep.subr.mxu0 %v3218
          %4249 = vmatpush2.msra.mxu0 %v3217
          %4250 = vmatprep.subr.mxu0 %v3216
          %4251 = vmatpush2.msra.mxu0 %v3215
          %4252 = vmatprep.subr.mxu0 %v3214
          %4253 = vmatpush2.msra.mxu0 %v3213
          %4254 = vmatprep.subr.mxu0 %v3212
          %4255 = vmatpush2.msra.mxu0 %v3211
          %4256 = vmatprep.subr.mxu0 %v3210
          %4257 = vmatpush2.msra.mxu0 %v3209
          %4258 = vmatprep.subr.mxu0 %v3208
          %4259 = vmatpush2.msra.mxu0 %v3207
          %4260 = vmatprep.subr.mxu0 %v3206
          %4261 = vmatpush2.msra.mxu0 %v3205
          %4262 = vmatprep.subr.mxu0 %v3204
          %4263 = vmatpush2.msra.mxu0 %v3203
          %4264 = vmatprep.subr.mxu0 %v3202
          %4265 = vmatpush2.msra.mxu0 %v3201
          %4266 = vmatprep.subr.mxu0 %v3200
          %4267 = vmatpush2.msra.mxu0 %v3199
          %4268 = vmatprep.subr.mxu0 %v3198
          %4269 = vmatpush2.msra.mxu0 %v3197
          %4270 = vmatprep.subr.mxu0 %v3196
          %4271 = vmatpush2.msra.mxu0 %v3195
          %4272 = vmatprep.subr.mxu0 %v3194
          %4273 = vmatpush2.msra.mxu0 %v3193
          %4274 = vmatprep.subr.mxu0 %v3192
          %4275 = vmatpush2.msra.mxu0 %v3191
          %4276 = vmatprep.subr.mxu0 %v3190
          %4277 = vmatpush2.msra.mxu0 %v3189
          %4278 = vmatprep.subr.mxu0 %v3188
          %4279 = vmatpush2.msra.mxu0 %v3187
          %4280 = vmatprep.mubr.f32.mxu0 %v2638
          %4281 = vmatmul.mubr.f32.gmra.mxu0 %v2635
          %v4282 = vpop.f32.mrf.mxu0
          %v4283 = vadd.f32 %v4122, %v4282
          %v4284 = vpop.f32.mrf.mxu0
          %v4285 = vadd.f32 %v4124, %v4284
          %4286 = vmatprep.mubr.f32.mxu0 %v2644
          %4287 = vmatmul.mubr.f32.gmra.mxu0 %v2641
          %v4288 = vpop.f32.mrf.mxu0
          %v4289 = vadd.f32 %v4128, %v4288
          %v4290 = vpop.f32.mrf.mxu0
          %v4291 = vadd.f32 %v4130, %v4290
          %4292 = vmatprep.mubr.f32.mxu0 %v2650
          %4293 = vmatmul.mubr.f32.gmra.mxu0 %v2647
          %v4294 = vpop.f32.mrf.mxu0
          %v4295 = vadd.f32 %v4134, %v4294
          %v4296 = vpop.f32.mrf.mxu0
          %v4297 = vadd.f32 %v4136, %v4296
          %4298 = vmatprep.mubr.f32.mxu0 %v2656
          %4299 = vmatmul.mubr.f32.gmra.mxu0 %v2653
          %v4300 = vpop.f32.mrf.mxu0
          %v4301 = vadd.f32 %v4140, %v4300
          %v4302 = vpop.f32.mrf.mxu0
          %v4303 = vadd.f32 %v4142, %v4302
          %4304 = vmatprep.mubr.f32.mxu0 %v2662
          %4305 = vmatmul.mubr.f32.gmra.mxu0 %v2659
          %v4306 = vpop.f32.mrf.mxu0
          %v4307 = vadd.f32 %v4146, %v4306
          %v4308 = vpop.f32.mrf.mxu0
          %v4309 = vadd.f32 %v4148, %v4308
          %4310 = vmatprep.mubr.f32.mxu0 %v2668
          %4311 = vmatmul.mubr.f32.gmra.mxu0 %v2665
          %v4312 = vpop.f32.mrf.mxu0
          %v4313 = vadd.f32 %v4152, %v4312
          %v4314 = vpop.f32.mrf.mxu0
          %v4315 = vadd.f32 %v4154, %v4314
          %4316 = vmatprep.mubr.f32.mxu0 %v2674
          %4317 = vmatmul.mubr.f32.gmra.mxu0 %v2671
          %v4318 = vpop.f32.mrf.mxu0
          %v4319 = vadd.f32 %v4158, %v4318
          %v4320 = vpop.f32.mrf.mxu0
          %v4321 = vadd.f32 %v4160, %v4320
          %4322 = vmatprep.mubr.f32.mxu0 %v2784
          %4323 = vmatmul.mubr.f32.gmra.mxu0 %v2781
          %v4324 = vpop.f32.mrf.mxu0
          %v4325 = vadd.f32 %v4164, %v4324
          %v4326 = vpop.f32.mrf.mxu0
          %v4327 = vadd.f32 %v4166, %v4326
          %4328 = vmatprep.mubr.f32.mxu0 %v2686
          %4329 = vmatmul.mubr.f32.gmra.mxu0 %v2683
          %v4330 = vpop.f32.mrf.mxu0
          %v4331 = vadd.f32 %v4170, %v4330
          %v4332 = vpop.f32.mrf.mxu0
          %v4333 = vadd.f32 %v4172, %v4332
          %4334 = vmatprep.mubr.f32.mxu0 %v2692
          %4335 = vmatmul.mubr.f32.gmra.mxu0 %v2689
          %v4336 = vpop.f32.mrf.mxu0
          %v4337 = vadd.f32 %v4176, %v4336
          %v4338 = vpop.f32.mrf.mxu0
          %v4339 = vadd.f32 %v4178, %v4338
          %4340 = vmatprep.mubr.f32.mxu0 %v2698
          %4341 = vmatmul.mubr.f32.gmra.mxu0 %v2695
          %v4342 = vpop.f32.mrf.mxu0
          %v4343 = vadd.f32 %v4182, %v4342
          %v4344 = vpop.f32.mrf.mxu0
          %v4345 = vadd.f32 %v4184, %v4344
          %4346 = vmatprep.mubr.f32.mxu0 %v2704
          %4347 = vmatmul.mubr.f32.gmra.mxu0 %v2701
          %v4348 = vpop.f32.mrf.mxu0
          %v4349 = vadd.f32 %v4188, %v4348
          %v4350 = vpop.f32.mrf.mxu0
          %v4351 = vadd.f32 %v4190, %v4350
          %4352 = vmatprep.mubr.f32.mxu0 %v2710
          %4353 = vmatmul.mubr.f32.gmra.mxu0 %v2707
          %v4354 = vpop.f32.mrf.mxu0
          %v4355 = vadd.f32 %v4194, %v4354
          %v4356 = vpop.f32.mrf.mxu0
          %v4357 = vadd.f32 %v4196, %v4356
          %4358 = vmatprep.mubr.f32.mxu0 %v2716
          %4359 = vmatmul.mubr.f32.gmra.mxu0 %v2713
          %v4360 = vpop.f32.mrf.mxu0
          %v4361 = vadd.f32 %v4200, %v4360
          %v4362 = vpop.f32.mrf.mxu0
          %v4363 = vadd.f32 %v4202, %v4362
          %4364 = vmatprep.mubr.f32.mxu0 %v2722
          %4365 = vmatmul.mubr.f32.gmra.mxu0 %v2719
          %v4366 = vpop.f32.mrf.mxu0
          %v4367 = vadd.f32 %v4206, %v4366
          %v4368 = vpop.f32.mrf.mxu0
          %v4369 = vadd.f32 %v4208, %v4368
          %4370 = vmatprep.mubr.f32.mxu0 %v2790
          %4371 = vmatmul.mubr.f32.gmra.mxu0 %v2787
          %v4372 = vpop.f32.mrf.mxu0
          %v4373 = vadd.f32 %v4212, %v4372
          %v4374 = vpop.f32.mrf.mxu0
          %v4375 = vadd.f32 %v4214, %v4374
          %4376 = vdwg.mxu0
          %4377 = vmatprep.subr.mxu0 %v3250
          %4378 = vmatpush1.msra.mxu0 %v3249
          %4379 = vmatprep.subr.mxu0 %v3248
          %4380 = vmatpush1.msra.mxu0 %v3247
          %4381 = vmatprep.subr.mxu0 %v3246
          %4382 = vmatpush1.msra.mxu0 %v3245
          %4383 = vmatprep.subr.mxu0 %v3244
          %4384 = vmatpush1.msra.mxu0 %v3243
          %4385 = vmatprep.subr.mxu0 %v3242
          %4386 = vmatpush1.msra.mxu0 %v3241
          %4387 = vmatprep.subr.mxu0 %v3240
          %4388 = vmatpush1.msra.mxu0 %v3239
          %4389 = vmatprep.subr.mxu0 %v3238
          %4390 = vmatpush1.msra.mxu0 %v3237
          %4391 = vmatprep.subr.mxu0 %v3236
          %4392 = vmatpush1.msra.mxu0 %v3235
          %4393 = vmatprep.subr.mxu0 %v3234
          %4394 = vmatpush1.msra.mxu0 %v3233
          %4395 = vmatprep.subr.mxu0 %v3232
          %4396 = vmatpush1.msra.mxu0 %v3231
          %4397 = vmatprep.subr.mxu0 %v3230
          %4398 = vmatpush1.msra.mxu0 %v3229
          %4399 = vmatprep.subr.mxu0 %v3228
          %4400 = vmatpush1.msra.mxu0 %v3227
          %4401 = vmatprep.subr.mxu0 %v3226
          %4402 = vmatpush1.msra.mxu0 %v3225
          %4403 = vmatprep.subr.mxu0 %v3224
          %4404 = vmatpush1.msra.mxu0 %v3223
          %4405 = vmatprep.subr.mxu0 %v3222
          %4406 = vmatpush1.msra.mxu0 %v3221
          %4407 = vmatprep.subr.mxu0 %v3220
          %4408 = vmatpush1.msra.mxu0 %v3219
          %4409 = vmatprep.subr.mxu0 %v3282
          %4410 = vmatpush2.msra.mxu0 %v3281
          %4411 = vmatprep.subr.mxu0 %v3280
          %4412 = vmatpush2.msra.mxu0 %v3279
          %4413 = vmatprep.subr.mxu0 %v3278
          %4414 = vmatpush2.msra.mxu0 %v3277
          %4415 = vmatprep.subr.mxu0 %v3276
          %4416 = vmatpush2.msra.mxu0 %v3275
          %4417 = vmatprep.subr.mxu0 %v3274
          %4418 = vmatpush2.msra.mxu0 %v3273
          %4419 = vmatprep.subr.mxu0 %v3272
          %4420 = vmatpush2.msra.mxu0 %v3271
          %4421 = vmatprep.subr.mxu0 %v3270
          %4422 = vmatpush2.msra.mxu0 %v3269
          %4423 = vmatprep.subr.mxu0 %v3268
          %4424 = vmatpush2.msra.mxu0 %v3267
          %4425 = vmatprep.subr.mxu0 %v3266
          %4426 = vmatpush2.msra.mxu0 %v3265
          %4427 = vmatprep.subr.mxu0 %v3264
          %4428 = vmatpush2.msra.mxu0 %v3263
          %4429 = vmatprep.subr.mxu0 %v3262
          %4430 = vmatpush2.msra.mxu0 %v3261
          %4431 = vmatprep.subr.mxu0 %v3260
          %4432 = vmatpush2.msra.mxu0 %v3259
          %4433 = vmatprep.subr.mxu0 %v3258
          %4434 = vmatpush2.msra.mxu0 %v3257
          %4435 = vmatprep.subr.mxu0 %v3256
          %4436 = vmatpush2.msra.mxu0 %v3255
          %4437 = vmatprep.subr.mxu0 %v3254
          %4438 = vmatpush2.msra.mxu0 %v3253
          %4439 = vmatprep.subr.mxu0 %v3252
          %4440 = vmatpush2.msra.mxu0 %v3251
          %4441 = vmatprep.mubr.f32.mxu0 %v2362
          %4442 = vmatmul.mubr.f32.gmra.mxu0 %v2361
          %v4443 = vpop.f32.mrf.mxu0
          %v4444 = vadd.f32 %v4283, %v4443
          %v4445 = vpop.f32.mrf.mxu0
          %v4446 = vadd.f32 %v4285, %v4445
          %4447 = vmatprep.mubr.f32.mxu0 %v2366
          %4448 = vmatmul.mubr.f32.gmra.mxu0 %v2365
          %v4449 = vpop.f32.mrf.mxu0
          %v4450 = vadd.f32 %v4289, %v4449
          %v4451 = vpop.f32.mrf.mxu0
          %v4452 = vadd.f32 %v4291, %v4451
          %4453 = vmatprep.mubr.f32.mxu0 %v2370
          %4454 = vmatmul.mubr.f32.gmra.mxu0 %v2369
          %v4455 = vpop.f32.mrf.mxu0
          %v4456 = vadd.f32 %v4295, %v4455
          %v4457 = vpop.f32.mrf.mxu0
          %v4458 = vadd.f32 %v4297, %v4457
          %4459 = vmatprep.mubr.f32.mxu0 %v2374
          %4460 = vmatmul.mubr.f32.gmra.mxu0 %v2373
          %v4461 = vpop.f32.mrf.mxu0
          %v4462 = vadd.f32 %v4301, %v4461
          %v4463 = vpop.f32.mrf.mxu0
          %v4464 = vadd.f32 %v4303, %v4463
          %4465 = vmatprep.mubr.f32.mxu0 %v2378
          %4466 = vmatmul.mubr.f32.gmra.mxu0 %v2377
          %v4467 = vpop.f32.mrf.mxu0
          %v4468 = vadd.f32 %v4307, %v4467
          %v4469 = vpop.f32.mrf.mxu0
          %v4470 = vadd.f32 %v4309, %v4469
          %4471 = vmatprep.mubr.f32.mxu0 %v2382
          %4472 = vmatmul.mubr.f32.gmra.mxu0 %v2381
          %v4473 = vpop.f32.mrf.mxu0
          %v4474 = vadd.f32 %v4313, %v4473
          %v4475 = vpop.f32.mrf.mxu0
          %v4476 = vadd.f32 %v4315, %v4475
          %4477 = vmatprep.mubr.f32.mxu0 %v2386
          %4478 = vmatmul.mubr.f32.gmra.mxu0 %v2385
          %v4479 = vpop.f32.mrf.mxu0
          %v4480 = vadd.f32 %v4319, %v4479
          %v4481 = vpop.f32.mrf.mxu0
          %v4482 = vadd.f32 %v4321, %v4481
          %4483 = vmatprep.mubr.f32.mxu0 %v2390
          %4484 = vmatmul.mubr.f32.gmra.mxu0 %v2389
          %v4485 = vpop.f32.mrf.mxu0
          %v4486 = vadd.f32 %v4325, %v4485
          %v4487 = vpop.f32.mrf.mxu0
          %v4488 = vadd.f32 %v4327, %v4487
          %4489 = vmatprep.mubr.f32.mxu0 %v2402
          %4490 = vmatmul.mubr.f32.gmra.mxu0 %v2401
          %v4491 = vpop.f32.mrf.mxu0
          %v4492 = vadd.f32 %v4331, %v4491
          %v4493 = vpop.f32.mrf.mxu0
          %v4494 = vadd.f32 %v4333, %v4493
          %4495 = vmatprep.mubr.f32.mxu0 %v2406
          %4496 = vmatmul.mubr.f32.gmra.mxu0 %v2405
          %v4497 = vpop.f32.mrf.mxu0
          %v4498 = vadd.f32 %v4337, %v4497
          %v4499 = vpop.f32.mrf.mxu0
          %v4500 = vadd.f32 %v4339, %v4499
          %4501 = vmatprep.mubr.f32.mxu0 %v2410
          %4502 = vmatmul.mubr.f32.gmra.mxu0 %v2409
          %v4503 = vpop.f32.mrf.mxu0
          %v4504 = vadd.f32 %v4343, %v4503
          %v4505 = vpop.f32.mrf.mxu0
          %v4506 = vadd.f32 %v4345, %v4505
          %4507 = vmatprep.mubr.f32.mxu0 %v2414
          %4508 = vmatmul.mubr.f32.gmra.mxu0 %v2413
          %v4509 = vpop.f32.mrf.mxu0
          %v4510 = vadd.f32 %v4349, %v4509
          %v4511 = vpop.f32.mrf.mxu0
          %v4512 = vadd.f32 %v4351, %v4511
          %4513 = vmatprep.mubr.f32.mxu0 %v2418
          %4514 = vmatmul.mubr.f32.gmra.mxu0 %v2417
          %v4515 = vpop.f32.mrf.mxu0
          %v4516 = vadd.f32 %v4355, %v4515
          %v4517 = vpop.f32.mrf.mxu0
          %v4518 = vadd.f32 %v4357, %v4517
          %4519 = vmatprep.mubr.f32.mxu0 %v2422
          %4520 = vmatmul.mubr.f32.gmra.mxu0 %v2421
          %v4521 = vpop.f32.mrf.mxu0
          %v4522 = vadd.f32 %v4361, %v4521
          %v4523 = vpop.f32.mrf.mxu0
          %v4524 = vadd.f32 %v4363, %v4523
          %4525 = vmatprep.mubr.f32.mxu0 %v2426
          %4526 = vmatmul.mubr.f32.gmra.mxu0 %v2425
          %v4527 = vpop.f32.mrf.mxu0
          %v4528 = vadd.f32 %v4367, %v4527
          %v4529 = vpop.f32.mrf.mxu0
          %v4530 = vadd.f32 %v4369, %v4529
          %4531 = vmatprep.mubr.f32.mxu0 %v2430
          %4532 = vmatmul.mubr.f32.gmra.mxu0 %v2429
          %v4533 = vpop.f32.mrf.mxu0
          %v4534 = vadd.f32 %v4373, %v4533
          %v4535 = vpop.f32.mrf.mxu0
          %v4536 = vadd.f32 %v4375, %v4535
          %4537 = vdwg.mxu0
          %4538 = vmatprep.subr.mxu0 %v3314
          %4539 = vmatpush1.msra.mxu0 %v3313
          %4540 = vmatprep.subr.mxu0 %v3312
          %4541 = vmatpush1.msra.mxu0 %v3311
          %4542 = vmatprep.subr.mxu0 %v3310
          %4543 = vmatpush1.msra.mxu0 %v3309
          %4544 = vmatprep.subr.mxu0 %v3308
          %4545 = vmatpush1.msra.mxu0 %v3307
          %4546 = vmatprep.subr.mxu0 %v3306
          %4547 = vmatpush1.msra.mxu0 %v3305
          %4548 = vmatprep.subr.mxu0 %v3304
          %4549 = vmatpush1.msra.mxu0 %v3303
          %4550 = vmatprep.subr.mxu0 %v3302
          %4551 = vmatpush1.msra.mxu0 %v3301
          %4552 = vmatprep.subr.mxu0 %v3300
          %4553 = vmatpush1.msra.mxu0 %v3299
          %4554 = vmatprep.subr.mxu0 %v3298
          %4555 = vmatpush1.msra.mxu0 %v3297
          %4556 = vmatprep.subr.mxu0 %v3296
          %4557 = vmatpush1.msra.mxu0 %v3295
          %4558 = vmatprep.subr.mxu0 %v3294
          %4559 = vmatpush1.msra.mxu0 %v3293
          %4560 = vmatprep.subr.mxu0 %v3292
          %4561 = vmatpush1.msra.mxu0 %v3291
          %4562 = vmatprep.subr.mxu0 %v3290
          %4563 = vmatpush1.msra.mxu0 %v3289
          %4564 = vmatprep.subr.mxu0 %v3288
          %4565 = vmatpush1.msra.mxu0 %v3287
          %4566 = vmatprep.subr.mxu0 %v3286
          %4567 = vmatpush1.msra.mxu0 %v3285
          %4568 = vmatprep.subr.mxu0 %v3284
          %4569 = vmatpush1.msra.mxu0 %v3283
          %4570 = vmatprep.subr.mxu0 %v3346
          %4571 = vmatpush2.msra.mxu0 %v3345
          %4572 = vmatprep.subr.mxu0 %v3344
          %4573 = vmatpush2.msra.mxu0 %v3343
          %4574 = vmatprep.subr.mxu0 %v3342
          %4575 = vmatpush2.msra.mxu0 %v3341
          %4576 = vmatprep.subr.mxu0 %v3340
          %4577 = vmatpush2.msra.mxu0 %v3339
          %4578 = vmatprep.subr.mxu0 %v3338
          %4579 = vmatpush2.msra.mxu0 %v3337
          %4580 = vmatprep.subr.mxu0 %v3336
          %4581 = vmatpush2.msra.mxu0 %v3335
          %4582 = vmatprep.subr.mxu0 %v3334
          %4583 = vmatpush2.msra.mxu0 %v3333
          %4584 = vmatprep.subr.mxu0 %v3332
          %4585 = vmatpush2.msra.mxu0 %v3331
          %4586 = vmatprep.subr.mxu0 %v3330
          %4587 = vmatpush2.msra.mxu0 %v3329
          %4588 = vmatprep.subr.mxu0 %v3328
          %4589 = vmatpush2.msra.mxu0 %v3327
          %4590 = vmatprep.subr.mxu0 %v3326
          %4591 = vmatpush2.msra.mxu0 %v3325
          %4592 = vmatprep.subr.mxu0 %v3324
          %4593 = vmatpush2.msra.mxu0 %v3323
          %4594 = vmatprep.subr.mxu0 %v3322
          %4595 = vmatpush2.msra.mxu0 %v3321
          %4596 = vmatprep.subr.mxu0 %v3320
          %4597 = vmatpush2.msra.mxu0 %v3319
          %4598 = vmatprep.subr.mxu0 %v3318
          %4599 = vmatpush2.msra.mxu0 %v3317
          %4600 = vmatprep.subr.mxu0 %v3316
          %4601 = vmatpush2.msra.mxu0 %v3315
          %4602 = vmatprep.mubr.f32.mxu0 %v2515
          %4603 = vmatmul.mubr.f32.gmra.mxu0 %v2512
          %v4604 = vpop.f32.mrf.mxu0
          %v4605 = vadd.f32 %v4444, %v4604
          %v4606 = vpop.f32.mrf.mxu0
          %v4607 = vadd.f32 %v4446, %v4606
          %4608 = vmatprep.mubr.f32.mxu0 %v2521
          %4609 = vmatmul.mubr.f32.gmra.mxu0 %v2518
          %v4610 = vpop.f32.mrf.mxu0
          %v4611 = vadd.f32 %v4450, %v4610
          %v4612 = vpop.f32.mrf.mxu0
          %v4613 = vadd.f32 %v4452, %v4612
          %4614 = vmatprep.mubr.f32.mxu0 %v2527
          %4615 = vmatmul.mubr.f32.gmra.mxu0 %v2524
          %v4616 = vpop.f32.mrf.mxu0
          %v4617 = vadd.f32 %v4456, %v4616
          %v4618 = vpop.f32.mrf.mxu0
          %v4619 = vadd.f32 %v4458, %v4618
          %4620 = vmatprep.mubr.f32.mxu0 %v2533
          %4621 = vmatmul.mubr.f32.gmra.mxu0 %v2530
          %v4622 = vpop.f32.mrf.mxu0
          %v4623 = vadd.f32 %v4462, %v4622
          %v4624 = vpop.f32.mrf.mxu0
          %v4625 = vadd.f32 %v4464, %v4624
          %4626 = vmatprep.mubr.f32.mxu0 %v2539
          %4627 = vmatmul.mubr.f32.gmra.mxu0 %v2536
          %v4628 = vpop.f32.mrf.mxu0
          %v4629 = vadd.f32 %v4468, %v4628
          %v4630 = vpop.f32.mrf.mxu0
          %v4631 = vadd.f32 %v4470, %v4630
          %4632 = vmatprep.mubr.f32.mxu0 %v2545
          %4633 = vmatmul.mubr.f32.gmra.mxu0 %v2542
          %v4634 = vpop.f32.mrf.mxu0
          %v4635 = vadd.f32 %v4474, %v4634
          %v4636 = vpop.f32.mrf.mxu0
          %v4637 = vadd.f32 %v4476, %v4636
          %4638 = vmatprep.mubr.f32.mxu0 %v2768
          %4639 = vmatmul.mubr.f32.gmra.mxu0 %v2765
          %v4640 = vpop.f32.mrf.mxu0
          %v4641 = vadd.f32 %v4480, %v4640
          %v4642 = vpop.f32.mrf.mxu0
          %v4643 = vadd.f32 %v4482, %v4642
          %4644 = vmatprep.mubr.f32.mxu0 %v2808
          %4645 = vmatmul.mubr.f32.gmra.mxu0 %v2805
          %v4646 = vpop.f32.mrf.mxu0
          %v4647 = vadd.f32 %v4486, %v4646
          %v4648 = vpop.f32.mrf.mxu0
          %v4649 = vadd.f32 %v4488, %v4648
          %4650 = vmatprep.mubr.f32.mxu0 %v2563
          %4651 = vmatmul.mubr.f32.gmra.mxu0 %v2560
          %v4652 = vpop.f32.mrf.mxu0
          %v4653 = vadd.f32 %v4492, %v4652
          %v4654 = vpop.f32.mrf.mxu0
          %v4655 = vadd.f32 %v4494, %v4654
          %4656 = vmatprep.mubr.f32.mxu0 %v2569
          %4657 = vmatmul.mubr.f32.gmra.mxu0 %v2566
          %v4658 = vpop.f32.mrf.mxu0
          %v4659 = vadd.f32 %v4498, %v4658
          %v4660 = vpop.f32.mrf.mxu0
          %v4661 = vadd.f32 %v4500, %v4660
          %4662 = vmatprep.mubr.f32.mxu0 %v2575
          %4663 = vmatmul.mubr.f32.gmra.mxu0 %v2572
          %v4664 = vpop.f32.mrf.mxu0
          %v4665 = vadd.f32 %v4504, %v4664
          %v4666 = vpop.f32.mrf.mxu0
          %v4667 = vadd.f32 %v4506, %v4666
          %4668 = vmatprep.mubr.f32.mxu0 %v2581
          %4669 = vmatmul.mubr.f32.gmra.mxu0 %v2578
          %v4670 = vpop.f32.mrf.mxu0
          %v4671 = vadd.f32 %v4510, %v4670
          %v4672 = vpop.f32.mrf.mxu0
          %v4673 = vadd.f32 %v4512, %v4672
          %4674 = vmatprep.mubr.f32.mxu0 %v2587
          %4675 = vmatmul.mubr.f32.gmra.mxu0 %v2584
          %v4676 = vpop.f32.mrf.mxu0
          %v4677 = vadd.f32 %v4516, %v4676
          %v4678 = vpop.f32.mrf.mxu0
          %v4679 = vadd.f32 %v4518, %v4678
          %4680 = vmatprep.mubr.f32.mxu0 %v2593
          %4681 = vmatmul.mubr.f32.gmra.mxu0 %v2590
          %v4682 = vpop.f32.mrf.mxu0
          %v4683 = vadd.f32 %v4522, %v4682
          %v4684 = vpop.f32.mrf.mxu0
          %v4685 = vadd.f32 %v4524, %v4684
          %4686 = vmatprep.mubr.f32.mxu0 %v2774
          %4687 = vmatmul.mubr.f32.gmra.mxu0 %v2771
          %v4688 = vpop.f32.mrf.mxu0
          %v4689 = vadd.f32 %v4528, %v4688
          %v4690 = vpop.f32.mrf.mxu0
          %v4691 = vadd.f32 %v4530, %v4690
          %4692 = vmatprep.mubr.f32.mxu0 %v2814
          %4693 = vmatmul.mubr.f32.gmra.mxu0 %v2811
          %v4694 = vpop.f32.mrf.mxu0
          %v4695 = vadd.f32 %v4534, %v4694
          %v4696 = vpop.f32.mrf.mxu0
          %v4697 = vadd.f32 %v4536, %v4696
          %4698 = vdwg.mxu0
          %4699 = vmatprep.subr.mxu0 %v3378
          %4700 = vmatpush1.msra.mxu0 %v3377
          %4701 = vmatprep.subr.mxu0 %v3376
          %4702 = vmatpush1.msra.mxu0 %v3375
          %4703 = vmatprep.subr.mxu0 %v3374
          %4704 = vmatpush1.msra.mxu0 %v3373
          %4705 = vmatprep.subr.mxu0 %v3372
          %4706 = vmatpush1.msra.mxu0 %v3371
          %4707 = vmatprep.subr.mxu0 %v3370
          %4708 = vmatpush1.msra.mxu0 %v3369
          %4709 = vmatprep.subr.mxu0 %v3368
          %4710 = vmatpush1.msra.mxu0 %v3367
          %4711 = vmatprep.subr.mxu0 %v3366
          %4712 = vmatpush1.msra.mxu0 %v3365
          %4713 = vmatprep.subr.mxu0 %v3364
          %4714 = vmatpush1.msra.mxu0 %v3363
          %4715 = vmatprep.subr.mxu0 %v3362
          %4716 = vmatpush1.msra.mxu0 %v3361
          %4717 = vmatprep.subr.mxu0 %v3360
          %4718 = vmatpush1.msra.mxu0 %v3359
          %4719 = vmatprep.subr.mxu0 %v3358
          %4720 = vmatpush1.msra.mxu0 %v3357
          %4721 = vmatprep.subr.mxu0 %v3356
          %4722 = vmatpush1.msra.mxu0 %v3355
          %4723 = vmatprep.subr.mxu0 %v3354
          %4724 = vmatpush1.msra.mxu0 %v3353
          %4725 = vmatprep.subr.mxu0 %v3352
          %4726 = vmatpush1.msra.mxu0 %v3351
          %4727 = vmatprep.subr.mxu0 %v3350
          %4728 = vmatpush1.msra.mxu0 %v3349
          %4729 = vmatprep.subr.mxu0 %v3348
          %4730 = vmatpush1.msra.mxu0 %v3347
          %4731 = vmatprep.subr.mxu0 %v3410
          %4732 = vmatpush2.msra.mxu0 %v3409
          %4733 = vmatprep.subr.mxu0 %v3408
          %4734 = vmatpush2.msra.mxu0 %v3407
          %4735 = vmatprep.subr.mxu0 %v3406
          %4736 = vmatpush2.msra.mxu0 %v3405
          %4737 = vmatprep.subr.mxu0 %v3404
          %4738 = vmatpush2.msra.mxu0 %v3403
          %4739 = vmatprep.subr.mxu0 %v3402
          %4740 = vmatpush2.msra.mxu0 %v3401
          %4741 = vmatprep.subr.mxu0 %v3400
          %4742 = vmatpush2.msra.mxu0 %v3399
          %4743 = vmatprep.subr.mxu0 %v3398
          %4744 = vmatpush2.msra.mxu0 %v3397
          %4745 = vmatprep.subr.mxu0 %v3396
          %4746 = vmatpush2.msra.mxu0 %v3395
          %4747 = vmatprep.subr.mxu0 %v3394
          %4748 = vmatpush2.msra.mxu0 %v3393
          %4749 = vmatprep.subr.mxu0 %v3392
          %4750 = vmatpush2.msra.mxu0 %v3391
          %4751 = vmatprep.subr.mxu0 %v3390
          %4752 = vmatpush2.msra.mxu0 %v3389
          %4753 = vmatprep.subr.mxu0 %v3388
          %4754 = vmatpush2.msra.mxu0 %v3387
          %4755 = vmatprep.subr.mxu0 %v3386
          %4756 = vmatpush2.msra.mxu0 %v3385
          %4757 = vmatprep.subr.mxu0 %v3384
          %4758 = vmatpush2.msra.mxu0 %v3383
          %4759 = vmatprep.subr.mxu0 %v3382
          %4760 = vmatpush2.msra.mxu0 %v3381
          %4761 = vmatprep.subr.mxu0 %v3380
          %4762 = vmatpush2.msra.mxu0 %v3379
          %4763 = vmatprep.mubr.f32.mxu0 %v2644
          %4764 = vmatmul.mubr.f32.gmra.mxu0 %v2641
          %v4765 = vpop.f32.mrf.mxu0
          %v4766 = vadd.f32 %v4605, %v4765
          %v4767 = vpop.f32.mrf.mxu0
          %v4768 = vadd.f32 %v4607, %v4767
          %4769 = vmatprep.mubr.f32.mxu0 %v2650
          %4770 = vmatmul.mubr.f32.gmra.mxu0 %v2647
          %v4771 = vpop.f32.mrf.mxu0
          %v4772 = vadd.f32 %v4611, %v4771
          %v4773 = vpop.f32.mrf.mxu0
          %v4774 = vadd.f32 %v4613, %v4773
          %4775 = vmatprep.mubr.f32.mxu0 %v2656
          %4776 = vmatmul.mubr.f32.gmra.mxu0 %v2653
          %v4777 = vpop.f32.mrf.mxu0
          %v4778 = vadd.f32 %v4617, %v4777
          %v4779 = vpop.f32.mrf.mxu0
          %v4780 = vadd.f32 %v4619, %v4779
          %4781 = vmatprep.mubr.f32.mxu0 %v2662
          %4782 = vmatmul.mubr.f32.gmra.mxu0 %v2659
          %v4783 = vpop.f32.mrf.mxu0
          %v4784 = vadd.f32 %v4623, %v4783
          %v4785 = vpop.f32.mrf.mxu0
          %v4786 = vadd.f32 %v4625, %v4785
          %4787 = vmatprep.mubr.f32.mxu0 %v2668
          %4788 = vmatmul.mubr.f32.gmra.mxu0 %v2665
          %v4789 = vpop.f32.mrf.mxu0
          %v4790 = vadd.f32 %v4629, %v4789
          %v4791 = vpop.f32.mrf.mxu0
          %v4792 = vadd.f32 %v4631, %v4791
          %4793 = vmatprep.mubr.f32.mxu0 %v2674
          %4794 = vmatmul.mubr.f32.gmra.mxu0 %v2671
          %v4795 = vpop.f32.mrf.mxu0
          %v4796 = vadd.f32 %v4635, %v4795
          %v4797 = vpop.f32.mrf.mxu0
          %v4798 = vadd.f32 %v4637, %v4797
          %4799 = vmatprep.mubr.f32.mxu0 %v2784
          %4800 = vmatmul.mubr.f32.gmra.mxu0 %v2781
          %v4801 = vpop.f32.mrf.mxu0
          %v4802 = vadd.f32 %v4641, %v4801
          %v4803 = vpop.f32.mrf.mxu0
          %v4804 = vadd.f32 %v4643, %v4803
          %4805 = vmatprep.mubr.f32.mxu0 %v2824
          %4806 = vmatmul.mubr.f32.gmra.mxu0 %v2821
          %v4807 = vpop.f32.mrf.mxu0
          %v4808 = vadd.f32 %v4647, %v4807
          %v4809 = vpop.f32.mrf.mxu0
          %v4810 = vadd.f32 %v4649, %v4809
          %4811 = vmatprep.mubr.f32.mxu0 %v2692
          %4812 = vmatmul.mubr.f32.gmra.mxu0 %v2689
          %v4813 = vpop.f32.mrf.mxu0
          %v4814 = vadd.f32 %v4653, %v4813
          %v4815 = vpop.f32.mrf.mxu0
          %v4816 = vadd.f32 %v4655, %v4815
          %4817 = vmatprep.mubr.f32.mxu0 %v2698
          %4818 = vmatmul.mubr.f32.gmra.mxu0 %v2695
          %v4819 = vpop.f32.mrf.mxu0
          %v4820 = vadd.f32 %v4659, %v4819
          %v4821 = vpop.f32.mrf.mxu0
          %v4822 = vadd.f32 %v4661, %v4821
          %4823 = vmatprep.mubr.f32.mxu0 %v2704
          %4824 = vmatmul.mubr.f32.gmra.mxu0 %v2701
          %v4825 = vpop.f32.mrf.mxu0
          %v4826 = vadd.f32 %v4665, %v4825
          %v4827 = vpop.f32.mrf.mxu0
          %v4828 = vadd.f32 %v4667, %v4827
          %4829 = vmatprep.mubr.f32.mxu0 %v2710
          %4830 = vmatmul.mubr.f32.gmra.mxu0 %v2707
          %v4831 = vpop.f32.mrf.mxu0
          %v4832 = vadd.f32 %v4671, %v4831
          %v4833 = vpop.f32.mrf.mxu0
          %v4834 = vadd.f32 %v4673, %v4833
          %4835 = vmatprep.mubr.f32.mxu0 %v2716
          %4836 = vmatmul.mubr.f32.gmra.mxu0 %v2713
          %v4837 = vpop.f32.mrf.mxu0
          %v4838 = vadd.f32 %v4677, %v4837
          %v4839 = vpop.f32.mrf.mxu0
          %v4840 = vadd.f32 %v4679, %v4839
          %4841 = vmatprep.mubr.f32.mxu0 %v2722
          %4842 = vmatmul.mubr.f32.gmra.mxu0 %v2719
          %v4843 = vpop.f32.mrf.mxu0
          %v4844 = vadd.f32 %v4683, %v4843
          %v4845 = vpop.f32.mrf.mxu0
          %v4846 = vadd.f32 %v4685, %v4845
          %4847 = vmatprep.mubr.f32.mxu0 %v2790
          %4848 = vmatmul.mubr.f32.gmra.mxu0 %v2787
          %v4849 = vpop.f32.mrf.mxu0
          %v4850 = vadd.f32 %v4689, %v4849
          %v4851 = vpop.f32.mrf.mxu0
          %v4852 = vadd.f32 %v4691, %v4851
          %4853 = vmatprep.mubr.f32.mxu0 %v2830
          %4854 = vmatmul.mubr.f32.gmra.mxu0 %v2827
          %v4855 = vpop.f32.mrf.mxu0
          %v4856 = vadd.f32 %v4695, %v4855
          %v4857 = vpop.f32.mrf.mxu0
          %v4858 = vadd.f32 %v4697, %v4857
          %4859 = vdwg.mxu0
          %v4861 = vlaneseq
          %v4862 = vshrl.u32 %v4861, 7
          %v4863 = vsub.s32 0, %v4862
          %v4864 = vrot.slane %v2351, %v4863
          %v4865 = vlaneseq
          %v4866 = vshrl.u32 %v4865, 7
          %v4867 = vsub.s32 1, %v4866
          %v4868 = vrot.slane %v2351, %v4867
          %v4871 = vmul.f32 %v4766, %v4864
          %v4872 = vmul.f32 %v4768, %v4868
          %v4873 = vmul.f32 %v4772, %v4864
          %v4874 = vmul.f32 %v4774, %v4868
          %v4875 = vmul.f32 %v4778, %v4864
          %v4876 = vmul.f32 %v4780, %v4868
          %v4877 = vmul.f32 %v4784, %v4864
          %v4878 = vmul.f32 %v4786, %v4868
          %v4879 = vmul.f32 %v4790, %v4864
          %v4880 = vmul.f32 %v4792, %v4868
          %v4881 = vmul.f32 %v4796, %v4864
          %v4882 = vmul.f32 %v4798, %v4868
          %v4883 = vmul.f32 %v4802, %v4864
          %v4884 = vmul.f32 %v4804, %v4868
          %v4885 = vmul.f32 %v4808, %v4864
          %v4886 = vmul.f32 %v4810, %v4868
          %v4887 = vmul.f32 %v4814, %v4864
          %v4888 = vmul.f32 %v4816, %v4868
          %v4889 = vmul.f32 %v4820, %v4864
          %v4890 = vmul.f32 %v4822, %v4868
          %v4891 = vmul.f32 %v4826, %v4864
          %v4892 = vmul.f32 %v4828, %v4868
          %v4893 = vmul.f32 %v4832, %v4864
          %v4894 = vmul.f32 %v4834, %v4868
          %v4895 = vmul.f32 %v4838, %v4864
          %v4896 = vmul.f32 %v4840, %v4868
          %v4897 = vmul.f32 %v4844, %v4864
          %v4898 = vmul.f32 %v4846, %v4868
          %v4899 = vmul.f32 %v4850, %v4864
          %v4900 = vmul.f32 %v4852, %v4868
          %v4901 = vmul.f32 %v4856, %v4864
          %v4902 = vmul.f32 %v4858, %v4868
          %v4904 = vlaneseq
          %v4905 = vshrl.u32 %v4904, 7
          %v4906 = vsub.s32 0, %v4905
          %v4907 = vrot.slane %v2352, %v4906
          %v4908 = vlaneseq
          %v4909 = vshrl.u32 %v4908, 7
          %v4910 = vsub.s32 1, %v4909
          %v4911 = vrot.slane %v2352, %v4910
          %v4914 = vadd.f32 %v4871, %v4907
          %v4915 = vadd.f32 %v4872, %v4911
          %v4916 = vadd.f32 %v4873, %v4907
          %v4917 = vadd.f32 %v4874, %v4911
          %v4918 = vadd.f32 %v4875, %v4907
          %v4919 = vadd.f32 %v4876, %v4911
          %v4920 = vadd.f32 %v4877, %v4907
          %v4921 = vadd.f32 %v4878, %v4911
          %v4922 = vadd.f32 %v4879, %v4907
          %v4923 = vadd.f32 %v4880, %v4911
          %v4924 = vadd.f32 %v4881, %v4907
          %v4925 = vadd.f32 %v4882, %v4911
          %v4926 = vadd.f32 %v4883, %v4907
          %v4927 = vadd.f32 %v4884, %v4911
          %v4928 = vadd.f32 %v4885, %v4907
          %v4929 = vadd.f32 %v4886, %v4911
          %v4930 = vadd.f32 %v4887, %v4907
          %v4931 = vadd.f32 %v4888, %v4911
          %v4932 = vadd.f32 %v4889, %v4907
          %v4933 = vadd.f32 %v4890, %v4911
          %v4934 = vadd.f32 %v4891, %v4907
          %v4935 = vadd.f32 %v4892, %v4911
          %v4936 = vadd.f32 %v4893, %v4907
          %v4937 = vadd.f32 %v4894, %v4911
          %v4938 = vadd.f32 %v4895, %v4907
          %v4939 = vadd.f32 %v4896, %v4911
          %v4940 = vadd.f32 %v4897, %v4907
          %v4941 = vadd.f32 %v4898, %v4911
          %v4942 = vadd.f32 %v4899, %v4907
          %v4943 = vadd.f32 %v4900, %v4911
          %v4944 = vadd.f32 %v4901, %v4907
          %v4945 = vadd.f32 %v4902, %v4911
          %v4946 = vmax.f32 %v4914, 0.0
          %v4947 = vmax.f32 %v4915, 0.0
          %v4948 = vmax.f32 %v4916, 0.0
          %v4949 = vmax.f32 %v4917, 0.0
          %v4950 = vmax.f32 %v4918, 0.0
          %v4951 = vmax.f32 %v4919, 0.0
          %v4952 = vmax.f32 %v4920, 0.0
          %v4953 = vmax.f32 %v4921, 0.0
          %v4954 = vmax.f32 %v4922, 0.0
          %v4955 = vmax.f32 %v4923, 0.0
          %v4956 = vmax.f32 %v4924, 0.0
          %v4957 = vmax.f32 %v4925, 0.0
          %v4958 = vmax.f32 %v4926, 0.0
          %v4959 = vmax.f32 %v4927, 0.0
          %v4960 = vmax.f32 %v4928, 0.0
          %v4961 = vmax.f32 %v4929, 0.0
          %v4962 = vmax.f32 %v4930, 0.0
          %v4963 = vmax.f32 %v4931, 0.0
          %v4964 = vmax.f32 %v4932, 0.0
          %v4965 = vmax.f32 %v4933, 0.0
          %v4966 = vmax.f32 %v4934, 0.0
          %v4967 = vmax.f32 %v4935, 0.0
          %v4968 = vmax.f32 %v4936, 0.0
          %v4969 = vmax.f32 %v4937, 0.0
          %v4970 = vmax.f32 %v4938, 0.0
          %v4971 = vmax.f32 %v4939, 0.0
          %v4972 = vmax.f32 %v4940, 0.0
          %v4973 = vmax.f32 %v4941, 0.0
          %v4974 = vmax.f32 %v4942, 0.0
          %v4975 = vmax.f32 %v4943, 0.0
          %v4976 = vmax.f32 %v4944, 0.0
          %v4977 = vmax.f32 %v4945, 0.0
          %v4978 = vlaneseq
          %v4979 = vshrl.u32 %v4978, 7
          %v4980 = vsub.s32 0, %v4979
          %v4981 = vrot.slane %v2343, %v4980
          %v4982 = vlaneseq
          %v4983 = vshrl.u32 %v4982, 7
          %v4984 = vsub.s32 4, %v4983
          %v4985 = vrot.slane %v2343, %v4984
          %v4986 = vlaneseq
          %v4987 = vshrl.u32 %v4986, 7
          %v4988 = vsub.s32 0, %v4987
          %v4989 = vrot.slane %v2347, %v4988
          %v4990 = vlaneseq
          %v4991 = vshrl.u32 %v4990, 7
          %v4992 = vsub.s32 4, %v4991
          %v4993 = vrot.slane %v2347, %v4992
          %v4998 = vlaneseq
          %v4999 = vshrl.u32 %v4998, 7
          %v5000 = vsub.s32 0, %v4999
          %v5001 = vrot.slane %v4981, %v5000
          %v5002 = vlaneseq
          %v5003 = vshrl.u32 %v5002, 7
          %v5004 = vsub.s32 0, %v5003
          %v5005 = vrot.slane %v4985, %v5004
          %v5006 = vlaneseq
          %v5007 = vshrl.u32 %v5006, 7
          %v5008 = vsub.s32 0, %v5007
          %v5009 = vrot.slane %v4989, %v5008
          %v5010 = vlaneseq
          %v5011 = vshrl.u32 %v5010, 7
          %v5012 = vsub.s32 0, %v5011
          %v5013 = vrot.slane %v4993, %v5012
          %v5014 = vmul.f32 %v4946, %v5001
          %v5015 = vmul.f32 %v4947, %v5005
          %v5016 = vmul.f32 %v4948, %v5001
          %v5017 = vmul.f32 %v4949, %v5005
          %v5018 = vmul.f32 %v4950, %v5001
          %v5019 = vmul.f32 %v4951, %v5005
          %v5020 = vmul.f32 %v4952, %v5001
          %v5021 = vmul.f32 %v4953, %v5005
          %v5022 = vmul.f32 %v4954, %v5001
          %v5023 = vmul.f32 %v4955, %v5005
          %v5024 = vmul.f32 %v4962, %v5009
          %v5025 = vmul.f32 %v4963, %v5013
          %v5026 = vmul.f32 %v4964, %v5009
          %v5027 = vmul.f32 %v4965, %v5013
          %v5028 = vmul.f32 %v4966, %v5009
          %v5029 = vmul.f32 %v4967, %v5013
          %v5030 = vmul.f32 %v4968, %v5009
          %v5031 = vmul.f32 %v4969, %v5013
          %v5032 = vmul.f32 %v4970, %v5009
          %v5033 = vmul.f32 %v4971, %v5013
          %v5034 = vadd.f32 %v5014, 0.0
          %v5035 = vadd.f32 %v5015, 0.0
          %v5036 = vadd.f32 %v5016, 0.0
          %v5037 = vadd.f32 %v5017, 0.0
          %v5038 = vadd.f32 %v5018, 0.0
          %v5039 = vadd.f32 %v5019, 0.0
          %v5040 = vadd.f32 %v5020, 0.0
          %v5041 = vadd.f32 %v5021, 0.0
          %v5042 = vadd.f32 %v5022, 0.0
          %v5043 = vadd.f32 %v5023, 0.0
          %v5044 = vadd.f32 %v5024, 0.0
          %v5045 = vadd.f32 %v5025, 0.0
          %v5046 = vadd.f32 %v5026, 0.0
          %v5047 = vadd.f32 %v5027, 0.0
          %v5048 = vadd.f32 %v5028, 0.0
          %v5049 = vadd.f32 %v5029, 0.0
          %v5050 = vadd.f32 %v5030, 0.0
          %v5051 = vadd.f32 %v5031, 0.0
          %v5052 = vadd.f32 %v5032, 0.0
          %v5053 = vadd.f32 %v5033, 0.0
          %v5054 = vlaneseq
          %v5055 = vshrl.u32 %v5054, 7
          %v5056 = vsub.s32 1, %v5055
          %v5057 = vrot.slane %v2343, %v5056
          %v5058 = vlaneseq
          %v5059 = vshrl.u32 %v5058, 7
          %v5060 = vsub.s32 5, %v5059
          %v5061 = vrot.slane %v2343, %v5060
          %v5062 = vlaneseq
          %v5063 = vshrl.u32 %v5062, 7
          %v5064 = vsub.s32 1, %v5063
          %v5065 = vrot.slane %v2347, %v5064
          %v5066 = vlaneseq
          %v5067 = vshrl.u32 %v5066, 7
          %v5068 = vsub.s32 5, %v5067
          %v5069 = vrot.slane %v2347, %v5068
          %v5074 = vlaneseq
          %v5075 = vshrl.u32 %v5074, 7
          %v5076 = vsub.s32 1, %v5075
          %v5077 = vrot.slane %v5057, %v5076
          %v5078 = vlaneseq
          %v5079 = vshrl.u32 %v5078, 7
          %v5080 = vsub.s32 1, %v5079
          %v5081 = vrot.slane %v5061, %v5080
          %v5082 = vlaneseq
          %v5083 = vshrl.u32 %v5082, 7
          %v5084 = vsub.s32 1, %v5083
          %v5085 = vrot.slane %v5065, %v5084
          %v5086 = vlaneseq
          %v5087 = vshrl.u32 %v5086, 7
          %v5088 = vsub.s32 1, %v5087
          %v5089 = vrot.slane %v5069, %v5088
          %v5090 = vmul.f32 %v4946, %v5077
          %v5091 = vmul.f32 %v4947, %v5081
          %v5092 = vmul.f32 %v4948, %v5077
          %v5093 = vmul.f32 %v4949, %v5081
          %v5094 = vmul.f32 %v4950, %v5077
          %v5095 = vmul.f32 %v4951, %v5081
          %v5096 = vmul.f32 %v4952, %v5077
          %v5097 = vmul.f32 %v4953, %v5081
          %v5098 = vmul.f32 %v4954, %v5077
          %v5099 = vmul.f32 %v4955, %v5081
          %v5100 = vmul.f32 %v4962, %v5085
          %v5101 = vmul.f32 %v4963, %v5089
          %v5102 = vmul.f32 %v4964, %v5085
          %v5103 = vmul.f32 %v4965, %v5089
          %v5104 = vmul.f32 %v4966, %v5085
          %v5105 = vmul.f32 %v4967, %v5089
          %v5106 = vmul.f32 %v4968, %v5085
          %v5107 = vmul.f32 %v4969, %v5089
          %v5108 = vmul.f32 %v4970, %v5085
          %v5109 = vmul.f32 %v4971, %v5089
          %v5130 = vrot.slane %v5090, 1
          %v5131 = vrot.slane %v5091, 1
          %v5132 = vrot.slane %v5092, 1
          %v5133 = vrot.slane %v5093, 1
          %v5134 = vrot.slane %v5094, 1
          %v5135 = vrot.slane %v5095, 1
          %v5136 = vrot.slane %v5096, 1
          %v5137 = vrot.slane %v5097, 1
          %v5138 = vrot.slane %v5098, 1
          %v5139 = vrot.slane %v5099, 1
          %v5140 = vrot.slane %v5100, 1
          %v5141 = vrot.slane %v5101, 1
          %v5142 = vrot.slane %v5102, 1
          %v5143 = vrot.slane %v5103, 1
          %v5144 = vrot.slane %v5104, 1
          %v5145 = vrot.slane %v5105, 1
          %v5146 = vrot.slane %v5106, 1
          %v5147 = vrot.slane %v5107, 1
          %v5148 = vrot.slane %v5108, 1
          %v5149 = vrot.slane %v5109, 1
          %v5170 = vadd.f32 %v5034, %v5130
          %v5171 = vadd.f32 %v5035, %v5131
          %v5172 = vadd.f32 %v5036, %v5132
          %v5173 = vadd.f32 %v5037, %v5133
          %v5174 = vadd.f32 %v5038, %v5134
          %v5175 = vadd.f32 %v5039, %v5135
          %v5176 = vadd.f32 %v5040, %v5136
          %v5177 = vadd.f32 %v5041, %v5137
          %v5178 = vadd.f32 %v5042, %v5138
          %v5179 = vadd.f32 %v5043, %v5139
          %v5180 = vadd.f32 %v5044, %v5140
          %v5181 = vadd.f32 %v5045, %v5141
          %v5182 = vadd.f32 %v5046, %v5142
          %v5183 = vadd.f32 %v5047, %v5143
          %v5184 = vadd.f32 %v5048, %v5144
          %v5185 = vadd.f32 %v5049, %v5145
          %v5186 = vadd.f32 %v5050, %v5146
          %v5187 = vadd.f32 %v5051, %v5147
          %v5188 = vadd.f32 %v5052, %v5148
          %v5189 = vadd.f32 %v5053, %v5149
          %v5190 = vlaneseq
          %v5191 = vshrl.u32 %v5190, 7
          %v5192 = vsub.s32 2, %v5191
          %v5193 = vrot.slane %v2343, %v5192
          %v5194 = vlaneseq
          %v5195 = vshrl.u32 %v5194, 7
          %v5196 = vsub.s32 6, %v5195
          %v5197 = vrot.slane %v2343, %v5196
          %v5198 = vlaneseq
          %v5199 = vshrl.u32 %v5198, 7
          %v5200 = vsub.s32 2, %v5199
          %v5201 = vrot.slane %v2347, %v5200
          %v5202 = vlaneseq
          %v5203 = vshrl.u32 %v5202, 7
          %v5204 = vsub.s32 6, %v5203
          %v5205 = vrot.slane %v2347, %v5204
          %v5210 = vlaneseq
          %v5211 = vshrl.u32 %v5210, 7
          %v5212 = vsub.s32 2, %v5211
          %v5213 = vrot.slane %v5193, %v5212
          %v5214 = vlaneseq
          %v5215 = vshrl.u32 %v5214, 7
          %v5216 = vsub.s32 2, %v5215
          %v5217 = vrot.slane %v5197, %v5216
          %v5218 = vlaneseq
          %v5219 = vshrl.u32 %v5218, 7
          %v5220 = vsub.s32 2, %v5219
          %v5221 = vrot.slane %v5201, %v5220
          %v5222 = vlaneseq
          %v5223 = vshrl.u32 %v5222, 7
          %v5224 = vsub.s32 2, %v5223
          %v5225 = vrot.slane %v5205, %v5224
          %v5226 = vmul.f32 %v4946, %v5213
          %v5227 = vmul.f32 %v4947, %v5217
          %v5228 = vmul.f32 %v4948, %v5213
          %v5229 = vmul.f32 %v4949, %v5217
          %v5230 = vmul.f32 %v4950, %v5213
          %v5231 = vmul.f32 %v4951, %v5217
          %v5232 = vmul.f32 %v4952, %v5213
          %v5233 = vmul.f32 %v4953, %v5217
          %v5234 = vmul.f32 %v4954, %v5213
          %v5235 = vmul.f32 %v4955, %v5217
          %v5236 = vmul.f32 %v4962, %v5221
          %v5237 = vmul.f32 %v4963, %v5225
          %v5238 = vmul.f32 %v4964, %v5221
          %v5239 = vmul.f32 %v4965, %v5225
          %v5240 = vmul.f32 %v4966, %v5221
          %v5241 = vmul.f32 %v4967, %v5225
          %v5242 = vmul.f32 %v4968, %v5221
          %v5243 = vmul.f32 %v4969, %v5225
          %v5244 = vmul.f32 %v4970, %v5221
          %v5245 = vmul.f32 %v4971, %v5225
          %v5266 = vrot.slane %v5226, 2
          %v5267 = vrot.slane %v5227, 2
          %v5268 = vrot.slane %v5228, 2
          %v5269 = vrot.slane %v5229, 2
          %v5270 = vrot.slane %v5230, 2
          %v5271 = vrot.slane %v5231, 2
          %v5272 = vrot.slane %v5232, 2
          %v5273 = vrot.slane %v5233, 2
          %v5274 = vrot.slane %v5234, 2
          %v5275 = vrot.slane %v5235, 2
          %v5276 = vrot.slane %v5236, 2
          %v5277 = vrot.slane %v5237, 2
          %v5278 = vrot.slane %v5238, 2
          %v5279 = vrot.slane %v5239, 2
          %v5280 = vrot.slane %v5240, 2
          %v5281 = vrot.slane %v5241, 2
          %v5282 = vrot.slane %v5242, 2
          %v5283 = vrot.slane %v5243, 2
          %v5284 = vrot.slane %v5244, 2
          %v5285 = vrot.slane %v5245, 2
          %v5306 = vadd.f32 %v5170, %v5266
          %v5307 = vadd.f32 %v5171, %v5267
          %v5308 = vadd.f32 %v5172, %v5268
          %v5309 = vadd.f32 %v5173, %v5269
          %v5310 = vadd.f32 %v5174, %v5270
          %v5311 = vadd.f32 %v5175, %v5271
          %v5312 = vadd.f32 %v5176, %v5272
          %v5313 = vadd.f32 %v5177, %v5273
          %v5314 = vadd.f32 %v5178, %v5274
          %v5315 = vadd.f32 %v5179, %v5275
          %v5316 = vadd.f32 %v5180, %v5276
          %v5317 = vadd.f32 %v5181, %v5277
          %v5318 = vadd.f32 %v5182, %v5278
          %v5319 = vadd.f32 %v5183, %v5279
          %v5320 = vadd.f32 %v5184, %v5280
          %v5321 = vadd.f32 %v5185, %v5281
          %v5322 = vadd.f32 %v5186, %v5282
          %v5323 = vadd.f32 %v5187, %v5283
          %v5324 = vadd.f32 %v5188, %v5284
          %v5325 = vadd.f32 %v5189, %v5285
          %v5326 = vlaneseq
          %v5327 = vshrl.u32 %v5326, 7
          %v5328 = vsub.s32 3, %v5327
          %v5329 = vrot.slane %v2343, %v5328
          %v5330 = vlaneseq
          %v5331 = vshrl.u32 %v5330, 7
          %v5332 = vsub.s32 7, %v5331
          %v5333 = vrot.slane %v2343, %v5332
          %v5334 = vlaneseq
          %v5335 = vshrl.u32 %v5334, 7
          %v5336 = vsub.s32 3, %v5335
          %v5337 = vrot.slane %v2347, %v5336
          %v5338 = vlaneseq
          %v5339 = vshrl.u32 %v5338, 7
          %v5340 = vsub.s32 7, %v5339
          %v5341 = vrot.slane %v2347, %v5340
          %v5346 = vlaneseq
          %v5347 = vshrl.u32 %v5346, 7
          %v5348 = vsub.s32 3, %v5347
          %v5349 = vrot.slane %v5329, %v5348
          %v5350 = vlaneseq
          %v5351 = vshrl.u32 %v5350, 7
          %v5352 = vsub.s32 3, %v5351
          %v5353 = vrot.slane %v5333, %v5352
          %v5354 = vlaneseq
          %v5355 = vshrl.u32 %v5354, 7
          %v5356 = vsub.s32 3, %v5355
          %v5357 = vrot.slane %v5337, %v5356
          %v5358 = vlaneseq
          %v5359 = vshrl.u32 %v5358, 7
          %v5360 = vsub.s32 3, %v5359
          %v5361 = vrot.slane %v5341, %v5360
          %v5362 = vmul.f32 %v4946, %v5349
          %v5363 = vmul.f32 %v4947, %v5353
          %v5364 = vmul.f32 %v4948, %v5349
          %v5365 = vmul.f32 %v4949, %v5353
          %v5366 = vmul.f32 %v4950, %v5349
          %v5367 = vmul.f32 %v4951, %v5353
          %v5368 = vmul.f32 %v4952, %v5349
          %v5369 = vmul.f32 %v4953, %v5353
          %v5370 = vmul.f32 %v4954, %v5349
          %v5371 = vmul.f32 %v4955, %v5353
          %v5372 = vmul.f32 %v4962, %v5357
          %v5373 = vmul.f32 %v4963, %v5361
          %v5374 = vmul.f32 %v4964, %v5357
          %v5375 = vmul.f32 %v4965, %v5361
          %v5376 = vmul.f32 %v4966, %v5357
          %v5377 = vmul.f32 %v4967, %v5361
          %v5378 = vmul.f32 %v4968, %v5357
          %v5379 = vmul.f32 %v4969, %v5361
          %v5380 = vmul.f32 %v4970, %v5357
          %v5381 = vmul.f32 %v4971, %v5361
          %v5402 = vrot.slane %v5362, 3
          %v5403 = vrot.slane %v5363, 3
          %v5404 = vrot.slane %v5364, 3
          %v5405 = vrot.slane %v5365, 3
          %v5406 = vrot.slane %v5366, 3
          %v5407 = vrot.slane %v5367, 3
          %v5408 = vrot.slane %v5368, 3
          %v5409 = vrot.slane %v5369, 3
          %v5410 = vrot.slane %v5370, 3
          %v5411 = vrot.slane %v5371, 3
          %v5412 = vrot.slane %v5372, 3
          %v5413 = vrot.slane %v5373, 3
          %v5414 = vrot.slane %v5374, 3
          %v5415 = vrot.slane %v5375, 3
          %v5416 = vrot.slane %v5376, 3
          %v5417 = vrot.slane %v5377, 3
          %v5418 = vrot.slane %v5378, 3
          %v5419 = vrot.slane %v5379, 3
          %v5420 = vrot.slane %v5380, 3
          %v5421 = vrot.slane %v5381, 3
          %v5442 = vadd.f32 %v5306, %v5402
          %v5443 = vadd.f32 %v5307, %v5403
          %v5444 = vadd.f32 %v5308, %v5404
          %v5445 = vadd.f32 %v5309, %v5405
          %v5446 = vadd.f32 %v5310, %v5406
          %v5447 = vadd.f32 %v5311, %v5407
          %v5448 = vadd.f32 %v5312, %v5408
          %v5449 = vadd.f32 %v5313, %v5409
          %v5450 = vadd.f32 %v5314, %v5410
          %v5451 = vadd.f32 %v5315, %v5411
          %v5452 = vadd.f32 %v5316, %v5412
          %v5453 = vadd.f32 %v5317, %v5413
          %v5454 = vadd.f32 %v5318, %v5414
          %v5455 = vadd.f32 %v5319, %v5415
          %v5456 = vadd.f32 %v5320, %v5416
          %v5457 = vadd.f32 %v5321, %v5417
          %v5458 = vadd.f32 %v5322, %v5418
          %v5459 = vadd.f32 %v5323, %v5419
          %v5460 = vadd.f32 %v5324, %v5420
          %v5461 = vadd.f32 %v5325, %v5421
          %v5462 = vlaneseq
          %v5463 = vshrl.u32 %v5462, 7
          %v5464 = vsub.s32 0, %v5463
          %v5465 = vrot.slane %v2344, %v5464
          %v5466 = vlaneseq
          %v5467 = vshrl.u32 %v5466, 7
          %v5468 = vsub.s32 4, %v5467
          %v5469 = vrot.slane %v2344, %v5468
          %v5470 = vlaneseq
          %v5471 = vshrl.u32 %v5470, 7
          %v5472 = vsub.s32 0, %v5471
          %v5473 = vrot.slane %v2348, %v5472
          %v5474 = vlaneseq
          %v5475 = vshrl.u32 %v5474, 7
          %v5476 = vsub.s32 4, %v5475
          %v5477 = vrot.slane %v2348, %v5476
          %v5482 = vlaneseq
          %v5483 = vshrl.u32 %v5482, 7
          %v5484 = vsub.s32 0, %v5483
          %v5485 = vrot.slane %v5465, %v5484
          %v5486 = vlaneseq
          %v5487 = vshrl.u32 %v5486, 7
          %v5488 = vsub.s32 0, %v5487
          %v5489 = vrot.slane %v5469, %v5488
          %v5490 = vlaneseq
          %v5491 = vshrl.u32 %v5490, 7
          %v5492 = vsub.s32 0, %v5491
          %v5493 = vrot.slane %v5473, %v5492
          %v5494 = vlaneseq
          %v5495 = vshrl.u32 %v5494, 7
          %v5496 = vsub.s32 0, %v5495
          %v5497 = vrot.slane %v5477, %v5496
          %v5498 = vmul.f32 %v4948, %v5485
          %v5499 = vmul.f32 %v4949, %v5489
          %v5500 = vmul.f32 %v4950, %v5485
          %v5501 = vmul.f32 %v4951, %v5489
          %v5502 = vmul.f32 %v4952, %v5485
          %v5503 = vmul.f32 %v4953, %v5489
          %v5504 = vmul.f32 %v4954, %v5485
          %v5505 = vmul.f32 %v4955, %v5489
          %v5506 = vmul.f32 %v4956, %v5485
          %v5507 = vmul.f32 %v4957, %v5489
          %v5508 = vmul.f32 %v4964, %v5493
          %v5509 = vmul.f32 %v4965, %v5497
          %v5510 = vmul.f32 %v4966, %v5493
          %v5511 = vmul.f32 %v4967, %v5497
          %v5512 = vmul.f32 %v4968, %v5493
          %v5513 = vmul.f32 %v4969, %v5497
          %v5514 = vmul.f32 %v4970, %v5493
          %v5515 = vmul.f32 %v4971, %v5497
          %v5516 = vmul.f32 %v4972, %v5493
          %v5517 = vmul.f32 %v4973, %v5497
          %v5518 = vadd.f32 %v5442, %v5498
          %v5519 = vadd.f32 %v5443, %v5499
          %v5520 = vadd.f32 %v5444, %v5500
          %v5521 = vadd.f32 %v5445, %v5501
          %v5522 = vadd.f32 %v5446, %v5502
          %v5523 = vadd.f32 %v5447, %v5503
          %v5524 = vadd.f32 %v5448, %v5504
          %v5525 = vadd.f32 %v5449, %v5505
          %v5526 = vadd.f32 %v5450, %v5506
          %v5527 = vadd.f32 %v5451, %v5507
          %v5528 = vadd.f32 %v5452, %v5508
          %v5529 = vadd.f32 %v5453, %v5509
          %v5530 = vadd.f32 %v5454, %v5510
          %v5531 = vadd.f32 %v5455, %v5511
          %v5532 = vadd.f32 %v5456, %v5512
          %v5533 = vadd.f32 %v5457, %v5513
          %v5534 = vadd.f32 %v5458, %v5514
          %v5535 = vadd.f32 %v5459, %v5515
          %v5536 = vadd.f32 %v5460, %v5516
          %v5537 = vadd.f32 %v5461, %v5517
          %v5538 = vlaneseq
          %v5539 = vshrl.u32 %v5538, 7
          %v5540 = vsub.s32 1, %v5539
          %v5541 = vrot.slane %v2344, %v5540
          %v5542 = vlaneseq
          %v5543 = vshrl.u32 %v5542, 7
          %v5544 = vsub.s32 5, %v5543
          %v5545 = vrot.slane %v2344, %v5544
          %v5546 = vlaneseq
          %v5547 = vshrl.u32 %v5546, 7
          %v5548 = vsub.s32 1, %v5547
          %v5549 = vrot.slane %v2348, %v5548
          %v5550 = vlaneseq
          %v5551 = vshrl.u32 %v5550, 7
          %v5552 = vsub.s32 5, %v5551
          %v5553 = vrot.slane %v2348, %v5552
          %v5558 = vlaneseq
          %v5559 = vshrl.u32 %v5558, 7
          %v5560 = vsub.s32 1, %v5559
          %v5561 = vrot.slane %v5541, %v5560
          %v5562 = vlaneseq
          %v5563 = vshrl.u32 %v5562, 7
          %v5564 = vsub.s32 1, %v5563
          %v5565 = vrot.slane %v5545, %v5564
          %v5566 = vlaneseq
          %v5567 = vshrl.u32 %v5566, 7
          %v5568 = vsub.s32 1, %v5567
          %v5569 = vrot.slane %v5549, %v5568
          %v5570 = vlaneseq
          %v5571 = vshrl.u32 %v5570, 7
          %v5572 = vsub.s32 1, %v5571
          %v5573 = vrot.slane %v5553, %v5572
          %v5574 = vmul.f32 %v4948, %v5561
          %v5575 = vmul.f32 %v4949, %v5565
          %v5576 = vmul.f32 %v4950, %v5561
          %v5577 = vmul.f32 %v4951, %v5565
          %v5578 = vmul.f32 %v4952, %v5561
          %v5579 = vmul.f32 %v4953, %v5565
          %v5580 = vmul.f32 %v4954, %v5561
          %v5581 = vmul.f32 %v4955, %v5565
          %v5582 = vmul.f32 %v4956, %v5561
          %v5583 = vmul.f32 %v4957, %v5565
          %v5584 = vmul.f32 %v4964, %v5569
          %v5585 = vmul.f32 %v4965, %v5573
          %v5586 = vmul.f32 %v4966, %v5569
          %v5587 = vmul.f32 %v4967, %v5573
          %v5588 = vmul.f32 %v4968, %v5569
          %v5589 = vmul.f32 %v4969, %v5573
          %v5590 = vmul.f32 %v4970, %v5569
          %v5591 = vmul.f32 %v4971, %v5573
          %v5592 = vmul.f32 %v4972, %v5569
          %v5593 = vmul.f32 %v4973, %v5573
          %v5614 = vrot.slane %v5574, 1
          %v5615 = vrot.slane %v5575, 1
          %v5616 = vrot.slane %v5576, 1
          %v5617 = vrot.slane %v5577, 1
          %v5618 = vrot.slane %v5578, 1
          %v5619 = vrot.slane %v5579, 1
          %v5620 = vrot.slane %v5580, 1
          %v5621 = vrot.slane %v5581, 1
          %v5622 = vrot.slane %v5582, 1
          %v5623 = vrot.slane %v5583, 1
          %v5624 = vrot.slane %v5584, 1
          %v5625 = vrot.slane %v5585, 1
          %v5626 = vrot.slane %v5586, 1
          %v5627 = vrot.slane %v5587, 1
          %v5628 = vrot.slane %v5588, 1
          %v5629 = vrot.slane %v5589, 1
          %v5630 = vrot.slane %v5590, 1
          %v5631 = vrot.slane %v5591, 1
          %v5632 = vrot.slane %v5592, 1
          %v5633 = vrot.slane %v5593, 1
          %v5654 = vadd.f32 %v5518, %v5614
          %v5655 = vadd.f32 %v5519, %v5615
          %v5656 = vadd.f32 %v5520, %v5616
          %v5657 = vadd.f32 %v5521, %v5617
          %v5658 = vadd.f32 %v5522, %v5618
          %v5659 = vadd.f32 %v5523, %v5619
          %v5660 = vadd.f32 %v5524, %v5620
          %v5661 = vadd.f32 %v5525, %v5621
          %v5662 = vadd.f32 %v5526, %v5622
          %v5663 = vadd.f32 %v5527, %v5623
          %v5664 = vadd.f32 %v5528, %v5624
          %v5665 = vadd.f32 %v5529, %v5625
          %v5666 = vadd.f32 %v5530, %v5626
          %v5667 = vadd.f32 %v5531, %v5627
          %v5668 = vadd.f32 %v5532, %v5628
          %v5669 = vadd.f32 %v5533, %v5629
          %v5670 = vadd.f32 %v5534, %v5630
          %v5671 = vadd.f32 %v5535, %v5631
          %v5672 = vadd.f32 %v5536, %v5632
          %v5673 = vadd.f32 %v5537, %v5633
          %v5674 = vlaneseq
          %v5675 = vshrl.u32 %v5674, 7
          %v5676 = vsub.s32 2, %v5675
          %v5677 = vrot.slane %v2344, %v5676
          %v5678 = vlaneseq
          %v5679 = vshrl.u32 %v5678, 7
          %v5680 = vsub.s32 6, %v5679
          %v5681 = vrot.slane %v2344, %v5680
          %v5682 = vlaneseq
          %v5683 = vshrl.u32 %v5682, 7
          %v5684 = vsub.s32 2, %v5683
          %v5685 = vrot.slane %v2348, %v5684
          %v5686 = vlaneseq
          %v5687 = vshrl.u32 %v5686, 7
          %v5688 = vsub.s32 6, %v5687
          %v5689 = vrot.slane %v2348, %v5688
          %v5694 = vlaneseq
          %v5695 = vshrl.u32 %v5694, 7
          %v5696 = vsub.s32 2, %v5695
          %v5697 = vrot.slane %v5677, %v5696
          %v5698 = vlaneseq
          %v5699 = vshrl.u32 %v5698, 7
          %v5700 = vsub.s32 2, %v5699
          %v5701 = vrot.slane %v5681, %v5700
          %v5702 = vlaneseq
          %v5703 = vshrl.u32 %v5702, 7
          %v5704 = vsub.s32 2, %v5703
          %v5705 = vrot.slane %v5685, %v5704
          %v5706 = vlaneseq
          %v5707 = vshrl.u32 %v5706, 7
          %v5708 = vsub.s32 2, %v5707
          %v5709 = vrot.slane %v5689, %v5708
          %v5710 = vmul.f32 %v4948, %v5697
          %v5711 = vmul.f32 %v4949, %v5701
          %v5712 = vmul.f32 %v4950, %v5697
          %v5713 = vmul.f32 %v4951, %v5701
          %v5714 = vmul.f32 %v4952, %v5697
          %v5715 = vmul.f32 %v4953, %v5701
          %v5716 = vmul.f32 %v4954, %v5697
          %v5717 = vmul.f32 %v4955, %v5701
          %v5718 = vmul.f32 %v4956, %v5697
          %v5719 = vmul.f32 %v4957, %v5701
          %v5720 = vmul.f32 %v4964, %v5705
          %v5721 = vmul.f32 %v4965, %v5709
          %v5722 = vmul.f32 %v4966, %v5705
          %v5723 = vmul.f32 %v4967, %v5709
          %v5724 = vmul.f32 %v4968, %v5705
          %v5725 = vmul.f32 %v4969, %v5709
          %v5726 = vmul.f32 %v4970, %v5705
          %v5727 = vmul.f32 %v4971, %v5709
          %v5728 = vmul.f32 %v4972, %v5705
          %v5729 = vmul.f32 %v4973, %v5709
          %v5750 = vrot.slane %v5710, 2
          %v5751 = vrot.slane %v5711, 2
          %v5752 = vrot.slane %v5712, 2
          %v5753 = vrot.slane %v5713, 2
          %v5754 = vrot.slane %v5714, 2
          %v5755 = vrot.slane %v5715, 2
          %v5756 = vrot.slane %v5716, 2
          %v5757 = vrot.slane %v5717, 2
          %v5758 = vrot.slane %v5718, 2
          %v5759 = vrot.slane %v5719, 2
          %v5760 = vrot.slane %v5720, 2
          %v5761 = vrot.slane %v5721, 2
          %v5762 = vrot.slane %v5722, 2
          %v5763 = vrot.slane %v5723, 2
          %v5764 = vrot.slane %v5724, 2
          %v5765 = vrot.slane %v5725, 2
          %v5766 = vrot.slane %v5726, 2
          %v5767 = vrot.slane %v5727, 2
          %v5768 = vrot.slane %v5728, 2
          %v5769 = vrot.slane %v5729, 2
          %v5790 = vadd.f32 %v5654, %v5750
          %v5791 = vadd.f32 %v5655, %v5751
          %v5792 = vadd.f32 %v5656, %v5752
          %v5793 = vadd.f32 %v5657, %v5753
          %v5794 = vadd.f32 %v5658, %v5754
          %v5795 = vadd.f32 %v5659, %v5755
          %v5796 = vadd.f32 %v5660, %v5756
          %v5797 = vadd.f32 %v5661, %v5757
          %v5798 = vadd.f32 %v5662, %v5758
          %v5799 = vadd.f32 %v5663, %v5759
          %v5800 = vadd.f32 %v5664, %v5760
          %v5801 = vadd.f32 %v5665, %v5761
          %v5802 = vadd.f32 %v5666, %v5762
          %v5803 = vadd.f32 %v5667, %v5763
          %v5804 = vadd.f32 %v5668, %v5764
          %v5805 = vadd.f32 %v5669, %v5765
          %v5806 = vadd.f32 %v5670, %v5766
          %v5807 = vadd.f32 %v5671, %v5767
          %v5808 = vadd.f32 %v5672, %v5768
          %v5809 = vadd.f32 %v5673, %v5769
          %v5810 = vlaneseq
          %v5811 = vshrl.u32 %v5810, 7
          %v5812 = vsub.s32 3, %v5811
          %v5813 = vrot.slane %v2344, %v5812
          %v5814 = vlaneseq
          %v5815 = vshrl.u32 %v5814, 7
          %v5816 = vsub.s32 7, %v5815
          %v5817 = vrot.slane %v2344, %v5816
          %v5818 = vlaneseq
          %v5819 = vshrl.u32 %v5818, 7
          %v5820 = vsub.s32 3, %v5819
          %v5821 = vrot.slane %v2348, %v5820
          %v5822 = vlaneseq
          %v5823 = vshrl.u32 %v5822, 7
          %v5824 = vsub.s32 7, %v5823
          %v5825 = vrot.slane %v2348, %v5824
          %v5830 = vlaneseq
          %v5831 = vshrl.u32 %v5830, 7
          %v5832 = vsub.s32 3, %v5831
          %v5833 = vrot.slane %v5813, %v5832
          %v5834 = vlaneseq
          %v5835 = vshrl.u32 %v5834, 7
          %v5836 = vsub.s32 3, %v5835
          %v5837 = vrot.slane %v5817, %v5836
          %v5838 = vlaneseq
          %v5839 = vshrl.u32 %v5838, 7
          %v5840 = vsub.s32 3, %v5839
          %v5841 = vrot.slane %v5821, %v5840
          %v5842 = vlaneseq
          %v5843 = vshrl.u32 %v5842, 7
          %v5844 = vsub.s32 3, %v5843
          %v5845 = vrot.slane %v5825, %v5844
          %v5846 = vmul.f32 %v4948, %v5833
          %v5847 = vmul.f32 %v4949, %v5837
          %v5848 = vmul.f32 %v4950, %v5833
          %v5849 = vmul.f32 %v4951, %v5837
          %v5850 = vmul.f32 %v4952, %v5833
          %v5851 = vmul.f32 %v4953, %v5837
          %v5852 = vmul.f32 %v4954, %v5833
          %v5853 = vmul.f32 %v4955, %v5837
          %v5854 = vmul.f32 %v4956, %v5833
          %v5855 = vmul.f32 %v4957, %v5837
          %v5856 = vmul.f32 %v4964, %v5841
          %v5857 = vmul.f32 %v4965, %v5845
          %v5858 = vmul.f32 %v4966, %v5841
          %v5859 = vmul.f32 %v4967, %v5845
          %v5860 = vmul.f32 %v4968, %v5841
          %v5861 = vmul.f32 %v4969, %v5845
          %v5862 = vmul.f32 %v4970, %v5841
          %v5863 = vmul.f32 %v4971, %v5845
          %v5864 = vmul.f32 %v4972, %v5841
          %v5865 = vmul.f32 %v4973, %v5845
          %v5886 = vrot.slane %v5846, 3
          %v5887 = vrot.slane %v5847, 3
          %v5888 = vrot.slane %v5848, 3
          %v5889 = vrot.slane %v5849, 3
          %v5890 = vrot.slane %v5850, 3
          %v5891 = vrot.slane %v5851, 3
          %v5892 = vrot.slane %v5852, 3
          %v5893 = vrot.slane %v5853, 3
          %v5894 = vrot.slane %v5854, 3
          %v5895 = vrot.slane %v5855, 3
          %v5896 = vrot.slane %v5856, 3
          %v5897 = vrot.slane %v5857, 3
          %v5898 = vrot.slane %v5858, 3
          %v5899 = vrot.slane %v5859, 3
          %v5900 = vrot.slane %v5860, 3
          %v5901 = vrot.slane %v5861, 3
          %v5902 = vrot.slane %v5862, 3
          %v5903 = vrot.slane %v5863, 3
          %v5904 = vrot.slane %v5864, 3
          %v5905 = vrot.slane %v5865, 3
          %v5926 = vadd.f32 %v5790, %v5886
          %v5927 = vadd.f32 %v5791, %v5887
          %v5928 = vadd.f32 %v5792, %v5888
          %v5929 = vadd.f32 %v5793, %v5889
          %v5930 = vadd.f32 %v5794, %v5890
          %v5931 = vadd.f32 %v5795, %v5891
          %v5932 = vadd.f32 %v5796, %v5892
          %v5933 = vadd.f32 %v5797, %v5893
          %v5934 = vadd.f32 %v5798, %v5894
          %v5935 = vadd.f32 %v5799, %v5895
          %v5936 = vadd.f32 %v5800, %v5896
          %v5937 = vadd.f32 %v5801, %v5897
          %v5938 = vadd.f32 %v5802, %v5898
          %v5939 = vadd.f32 %v5803, %v5899
          %v5940 = vadd.f32 %v5804, %v5900
          %v5941 = vadd.f32 %v5805, %v5901
          %v5942 = vadd.f32 %v5806, %v5902
          %v5943 = vadd.f32 %v5807, %v5903
          %v5944 = vadd.f32 %v5808, %v5904
          %v5945 = vadd.f32 %v5809, %v5905
          %v5946 = vlaneseq
          %v5947 = vshrl.u32 %v5946, 7
          %v5948 = vsub.s32 0, %v5947
          %v5949 = vrot.slane %v2345, %v5948
          %v5950 = vlaneseq
          %v5951 = vshrl.u32 %v5950, 7
          %v5952 = vsub.s32 4, %v5951
          %v5953 = vrot.slane %v2345, %v5952
          %v5954 = vlaneseq
          %v5955 = vshrl.u32 %v5954, 7
          %v5956 = vsub.s32 0, %v5955
          %v5957 = vrot.slane %v2349, %v5956
          %v5958 = vlaneseq
          %v5959 = vshrl.u32 %v5958, 7
          %v5960 = vsub.s32 4, %v5959
          %v5961 = vrot.slane %v2349, %v5960
          %v5966 = vlaneseq
          %v5967 = vshrl.u32 %v5966, 7
          %v5968 = vsub.s32 0, %v5967
          %v5969 = vrot.slane %v5949, %v5968
          %v5970 = vlaneseq
          %v5971 = vshrl.u32 %v5970, 7
          %v5972 = vsub.s32 0, %v5971
          %v5973 = vrot.slane %v5953, %v5972
          %v5974 = vlaneseq
          %v5975 = vshrl.u32 %v5974, 7
          %v5976 = vsub.s32 0, %v5975
          %v5977 = vrot.slane %v5957, %v5976
          %v5978 = vlaneseq
          %v5979 = vshrl.u32 %v5978, 7
          %v5980 = vsub.s32 0, %v5979
          %v5981 = vrot.slane %v5961, %v5980
          %v5982 = vmul.f32 %v4950, %v5969
          %v5983 = vmul.f32 %v4951, %v5973
          %v5984 = vmul.f32 %v4952, %v5969
          %v5985 = vmul.f32 %v4953, %v5973
          %v5986 = vmul.f32 %v4954, %v5969
          %v5987 = vmul.f32 %v4955, %v5973
          %v5988 = vmul.f32 %v4956, %v5969
          %v5989 = vmul.f32 %v4957, %v5973
          %v5990 = vmul.f32 %v4958, %v5969
          %v5991 = vmul.f32 %v4959, %v5973
          %v5992 = vmul.f32 %v4966, %v5977
          %v5993 = vmul.f32 %v4967, %v5981
          %v5994 = vmul.f32 %v4968, %v5977
          %v5995 = vmul.f32 %v4969, %v5981
          %v5996 = vmul.f32 %v4970, %v5977
          %v5997 = vmul.f32 %v4971, %v5981
          %v5998 = vmul.f32 %v4972, %v5977
          %v5999 = vmul.f32 %v4973, %v5981
          %v6000 = vmul.f32 %v4974, %v5977
          %v6001 = vmul.f32 %v4975, %v5981
          %v6002 = vadd.f32 %v5926, %v5982
          %v6003 = vadd.f32 %v5927, %v5983
          %v6004 = vadd.f32 %v5928, %v5984
          %v6005 = vadd.f32 %v5929, %v5985
          %v6006 = vadd.f32 %v5930, %v5986
          %v6007 = vadd.f32 %v5931, %v5987
          %v6008 = vadd.f32 %v5932, %v5988
          %v6009 = vadd.f32 %v5933, %v5989
          %v6010 = vadd.f32 %v5934, %v5990
          %v6011 = vadd.f32 %v5935, %v5991
          %v6012 = vadd.f32 %v5936, %v5992
          %v6013 = vadd.f32 %v5937, %v5993
          %v6014 = vadd.f32 %v5938, %v5994
          %v6015 = vadd.f32 %v5939, %v5995
          %v6016 = vadd.f32 %v5940, %v5996
          %v6017 = vadd.f32 %v5941, %v5997
          %v6018 = vadd.f32 %v5942, %v5998
          %v6019 = vadd.f32 %v5943, %v5999
          %v6020 = vadd.f32 %v5944, %v6000
          %v6021 = vadd.f32 %v5945, %v6001
          %v6022 = vlaneseq
          %v6023 = vshrl.u32 %v6022, 7
          %v6024 = vsub.s32 1, %v6023
          %v6025 = vrot.slane %v2345, %v6024
          %v6026 = vlaneseq
          %v6027 = vshrl.u32 %v6026, 7
          %v6028 = vsub.s32 5, %v6027
          %v6029 = vrot.slane %v2345, %v6028
          %v6030 = vlaneseq
          %v6031 = vshrl.u32 %v6030, 7
          %v6032 = vsub.s32 1, %v6031
          %v6033 = vrot.slane %v2349, %v6032
          %v6034 = vlaneseq
          %v6035 = vshrl.u32 %v6034, 7
          %v6036 = vsub.s32 5, %v6035
          %v6037 = vrot.slane %v2349, %v6036
          %v6042 = vlaneseq
          %v6043 = vshrl.u32 %v6042, 7
          %v6044 = vsub.s32 1, %v6043
          %v6045 = vrot.slane %v6025, %v6044
          %v6046 = vlaneseq
          %v6047 = vshrl.u32 %v6046, 7
          %v6048 = vsub.s32 1, %v6047
          %v6049 = vrot.slane %v6029, %v6048
          %v6050 = vlaneseq
          %v6051 = vshrl.u32 %v6050, 7
          %v6052 = vsub.s32 1, %v6051
          %v6053 = vrot.slane %v6033, %v6052
          %v6054 = vlaneseq
          %v6055 = vshrl.u32 %v6054, 7
          %v6056 = vsub.s32 1, %v6055
          %v6057 = vrot.slane %v6037, %v6056
          %v6058 = vmul.f32 %v4950, %v6045
          %v6059 = vmul.f32 %v4951, %v6049
          %v6060 = vmul.f32 %v4952, %v6045
          %v6061 = vmul.f32 %v4953, %v6049
          %v6062 = vmul.f32 %v4954, %v6045
          %v6063 = vmul.f32 %v4955, %v6049
          %v6064 = vmul.f32 %v4956, %v6045
          %v6065 = vmul.f32 %v4957, %v6049
          %v6066 = vmul.f32 %v4958, %v6045
          %v6067 = vmul.f32 %v4959, %v6049
          %v6068 = vmul.f32 %v4966, %v6053
          %v6069 = vmul.f32 %v4967, %v6057
          %v6070 = vmul.f32 %v4968, %v6053
          %v6071 = vmul.f32 %v4969, %v6057
          %v6072 = vmul.f32 %v4970, %v6053
          %v6073 = vmul.f32 %v4971, %v6057
          %v6074 = vmul.f32 %v4972, %v6053
          %v6075 = vmul.f32 %v4973, %v6057
          %v6076 = vmul.f32 %v4974, %v6053
          %v6077 = vmul.f32 %v4975, %v6057
          %v6098 = vrot.slane %v6058, 1
          %v6099 = vrot.slane %v6059, 1
          %v6100 = vrot.slane %v6060, 1
          %v6101 = vrot.slane %v6061, 1
          %v6102 = vrot.slane %v6062, 1
          %v6103 = vrot.slane %v6063, 1
          %v6104 = vrot.slane %v6064, 1
          %v6105 = vrot.slane %v6065, 1
          %v6106 = vrot.slane %v6066, 1
          %v6107 = vrot.slane %v6067, 1
          %v6108 = vrot.slane %v6068, 1
          %v6109 = vrot.slane %v6069, 1
          %v6110 = vrot.slane %v6070, 1
          %v6111 = vrot.slane %v6071, 1
          %v6112 = vrot.slane %v6072, 1
          %v6113 = vrot.slane %v6073, 1
          %v6114 = vrot.slane %v6074, 1
          %v6115 = vrot.slane %v6075, 1
          %v6116 = vrot.slane %v6076, 1
          %v6117 = vrot.slane %v6077, 1
          %v6138 = vadd.f32 %v6002, %v6098
          %v6139 = vadd.f32 %v6003, %v6099
          %v6140 = vadd.f32 %v6004, %v6100
          %v6141 = vadd.f32 %v6005, %v6101
          %v6142 = vadd.f32 %v6006, %v6102
          %v6143 = vadd.f32 %v6007, %v6103
          %v6144 = vadd.f32 %v6008, %v6104
          %v6145 = vadd.f32 %v6009, %v6105
          %v6146 = vadd.f32 %v6010, %v6106
          %v6147 = vadd.f32 %v6011, %v6107
          %v6148 = vadd.f32 %v6012, %v6108
          %v6149 = vadd.f32 %v6013, %v6109
          %v6150 = vadd.f32 %v6014, %v6110
          %v6151 = vadd.f32 %v6015, %v6111
          %v6152 = vadd.f32 %v6016, %v6112
          %v6153 = vadd.f32 %v6017, %v6113
          %v6154 = vadd.f32 %v6018, %v6114
          %v6155 = vadd.f32 %v6019, %v6115
          %v6156 = vadd.f32 %v6020, %v6116
          %v6157 = vadd.f32 %v6021, %v6117
          %v6158 = vlaneseq
          %v6159 = vshrl.u32 %v6158, 7
          %v6160 = vsub.s32 2, %v6159
          %v6161 = vrot.slane %v2345, %v6160
          %v6162 = vlaneseq
          %v6163 = vshrl.u32 %v6162, 7
          %v6164 = vsub.s32 6, %v6163
          %v6165 = vrot.slane %v2345, %v6164
          %v6166 = vlaneseq
          %v6167 = vshrl.u32 %v6166, 7
          %v6168 = vsub.s32 2, %v6167
          %v6169 = vrot.slane %v2349, %v6168
          %v6170 = vlaneseq
          %v6171 = vshrl.u32 %v6170, 7
          %v6172 = vsub.s32 6, %v6171
          %v6173 = vrot.slane %v2349, %v6172
          %v6178 = vlaneseq
          %v6179 = vshrl.u32 %v6178, 7
          %v6180 = vsub.s32 2, %v6179
          %v6181 = vrot.slane %v6161, %v6180
          %v6182 = vlaneseq
          %v6183 = vshrl.u32 %v6182, 7
          %v6184 = vsub.s32 2, %v6183
          %v6185 = vrot.slane %v6165, %v6184
          %v6186 = vlaneseq
          %v6187 = vshrl.u32 %v6186, 7
          %v6188 = vsub.s32 2, %v6187
          %v6189 = vrot.slane %v6169, %v6188
          %v6190 = vlaneseq
          %v6191 = vshrl.u32 %v6190, 7
          %v6192 = vsub.s32 2, %v6191
          %v6193 = vrot.slane %v6173, %v6192
          %v6194 = vmul.f32 %v4950, %v6181
          %v6195 = vmul.f32 %v4951, %v6185
          %v6196 = vmul.f32 %v4952, %v6181
          %v6197 = vmul.f32 %v4953, %v6185
          %v6198 = vmul.f32 %v4954, %v6181
          %v6199 = vmul.f32 %v4955, %v6185
          %v6200 = vmul.f32 %v4956, %v6181
          %v6201 = vmul.f32 %v4957, %v6185
          %v6202 = vmul.f32 %v4958, %v6181
          %v6203 = vmul.f32 %v4959, %v6185
          %v6204 = vmul.f32 %v4966, %v6189
          %v6205 = vmul.f32 %v4967, %v6193
          %v6206 = vmul.f32 %v4968, %v6189
          %v6207 = vmul.f32 %v4969, %v6193
          %v6208 = vmul.f32 %v4970, %v6189
          %v6209 = vmul.f32 %v4971, %v6193
          %v6210 = vmul.f32 %v4972, %v6189
          %v6211 = vmul.f32 %v4973, %v6193
          %v6212 = vmul.f32 %v4974, %v6189
          %v6213 = vmul.f32 %v4975, %v6193
          %v6234 = vrot.slane %v6194, 2
          %v6235 = vrot.slane %v6195, 2
          %v6236 = vrot.slane %v6196, 2
          %v6237 = vrot.slane %v6197, 2
          %v6238 = vrot.slane %v6198, 2
          %v6239 = vrot.slane %v6199, 2
          %v6240 = vrot.slane %v6200, 2
          %v6241 = vrot.slane %v6201, 2
          %v6242 = vrot.slane %v6202, 2
          %v6243 = vrot.slane %v6203, 2
          %v6244 = vrot.slane %v6204, 2
          %v6245 = vrot.slane %v6205, 2
          %v6246 = vrot.slane %v6206, 2
          %v6247 = vrot.slane %v6207, 2
          %v6248 = vrot.slane %v6208, 2
          %v6249 = vrot.slane %v6209, 2
          %v6250 = vrot.slane %v6210, 2
          %v6251 = vrot.slane %v6211, 2
          %v6252 = vrot.slane %v6212, 2
          %v6253 = vrot.slane %v6213, 2
          %v6274 = vadd.f32 %v6138, %v6234
          %v6275 = vadd.f32 %v6139, %v6235
          %v6276 = vadd.f32 %v6140, %v6236
          %v6277 = vadd.f32 %v6141, %v6237
          %v6278 = vadd.f32 %v6142, %v6238
          %v6279 = vadd.f32 %v6143, %v6239
          %v6280 = vadd.f32 %v6144, %v6240
          %v6281 = vadd.f32 %v6145, %v6241
          %v6282 = vadd.f32 %v6146, %v6242
          %v6283 = vadd.f32 %v6147, %v6243
          %v6284 = vadd.f32 %v6148, %v6244
          %v6285 = vadd.f32 %v6149, %v6245
          %v6286 = vadd.f32 %v6150, %v6246
          %v6287 = vadd.f32 %v6151, %v6247
          %v6288 = vadd.f32 %v6152, %v6248
          %v6289 = vadd.f32 %v6153, %v6249
          %v6290 = vadd.f32 %v6154, %v6250
          %v6291 = vadd.f32 %v6155, %v6251
          %v6292 = vadd.f32 %v6156, %v6252
          %v6293 = vadd.f32 %v6157, %v6253
          %v6294 = vlaneseq
          %v6295 = vshrl.u32 %v6294, 7
          %v6296 = vsub.s32 3, %v6295
          %v6297 = vrot.slane %v2345, %v6296
          %v6298 = vlaneseq
          %v6299 = vshrl.u32 %v6298, 7
          %v6300 = vsub.s32 7, %v6299
          %v6301 = vrot.slane %v2345, %v6300
          %v6302 = vlaneseq
          %v6303 = vshrl.u32 %v6302, 7
          %v6304 = vsub.s32 3, %v6303
          %v6305 = vrot.slane %v2349, %v6304
          %v6306 = vlaneseq
          %v6307 = vshrl.u32 %v6306, 7
          %v6308 = vsub.s32 7, %v6307
          %v6309 = vrot.slane %v2349, %v6308
          %v6314 = vlaneseq
          %v6315 = vshrl.u32 %v6314, 7
          %v6316 = vsub.s32 3, %v6315
          %v6317 = vrot.slane %v6297, %v6316
          %v6318 = vlaneseq
          %v6319 = vshrl.u32 %v6318, 7
          %v6320 = vsub.s32 3, %v6319
          %v6321 = vrot.slane %v6301, %v6320
          %v6322 = vlaneseq
          %v6323 = vshrl.u32 %v6322, 7
          %v6324 = vsub.s32 3, %v6323
          %v6325 = vrot.slane %v6305, %v6324
          %v6326 = vlaneseq
          %v6327 = vshrl.u32 %v6326, 7
          %v6328 = vsub.s32 3, %v6327
          %v6329 = vrot.slane %v6309, %v6328
          %v6330 = vmul.f32 %v4950, %v6317
          %v6331 = vmul.f32 %v4951, %v6321
          %v6332 = vmul.f32 %v4952, %v6317
          %v6333 = vmul.f32 %v4953, %v6321
          %v6334 = vmul.f32 %v4954, %v6317
          %v6335 = vmul.f32 %v4955, %v6321
          %v6336 = vmul.f32 %v4956, %v6317
          %v6337 = vmul.f32 %v4957, %v6321
          %v6338 = vmul.f32 %v4958, %v6317
          %v6339 = vmul.f32 %v4959, %v6321
          %v6340 = vmul.f32 %v4966, %v6325
          %v6341 = vmul.f32 %v4967, %v6329
          %v6342 = vmul.f32 %v4968, %v6325
          %v6343 = vmul.f32 %v4969, %v6329
          %v6344 = vmul.f32 %v4970, %v6325
          %v6345 = vmul.f32 %v4971, %v6329
          %v6346 = vmul.f32 %v4972, %v6325
          %v6347 = vmul.f32 %v4973, %v6329
          %v6348 = vmul.f32 %v4974, %v6325
          %v6349 = vmul.f32 %v4975, %v6329
          %v6370 = vrot.slane %v6330, 3
          %v6371 = vrot.slane %v6331, 3
          %v6372 = vrot.slane %v6332, 3
          %v6373 = vrot.slane %v6333, 3
          %v6374 = vrot.slane %v6334, 3
          %v6375 = vrot.slane %v6335, 3
          %v6376 = vrot.slane %v6336, 3
          %v6377 = vrot.slane %v6337, 3
          %v6378 = vrot.slane %v6338, 3
          %v6379 = vrot.slane %v6339, 3
          %v6380 = vrot.slane %v6340, 3
          %v6381 = vrot.slane %v6341, 3
          %v6382 = vrot.slane %v6342, 3
          %v6383 = vrot.slane %v6343, 3
          %v6384 = vrot.slane %v6344, 3
          %v6385 = vrot.slane %v6345, 3
          %v6386 = vrot.slane %v6346, 3
          %v6387 = vrot.slane %v6347, 3
          %v6388 = vrot.slane %v6348, 3
          %v6389 = vrot.slane %v6349, 3
          %v6410 = vadd.f32 %v6274, %v6370
          %v6411 = vadd.f32 %v6275, %v6371
          %v6412 = vadd.f32 %v6276, %v6372
          %v6413 = vadd.f32 %v6277, %v6373
          %v6414 = vadd.f32 %v6278, %v6374
          %v6415 = vadd.f32 %v6279, %v6375
          %v6416 = vadd.f32 %v6280, %v6376
          %v6417 = vadd.f32 %v6281, %v6377
          %v6418 = vadd.f32 %v6282, %v6378
          %v6419 = vadd.f32 %v6283, %v6379
          %v6420 = vadd.f32 %v6284, %v6380
          %v6421 = vadd.f32 %v6285, %v6381
          %v6422 = vadd.f32 %v6286, %v6382
          %v6423 = vadd.f32 %v6287, %v6383
          %v6424 = vadd.f32 %v6288, %v6384
          %v6425 = vadd.f32 %v6289, %v6385
          %v6426 = vadd.f32 %v6290, %v6386
          %v6427 = vadd.f32 %v6291, %v6387
          %v6428 = vadd.f32 %v6292, %v6388
          %v6429 = vadd.f32 %v6293, %v6389
          %v6430 = vlaneseq
          %v6431 = vshrl.u32 %v6430, 7
          %v6432 = vsub.s32 0, %v6431
          %v6433 = vrot.slane %v2346, %v6432
          %v6434 = vlaneseq
          %v6435 = vshrl.u32 %v6434, 7
          %v6436 = vsub.s32 4, %v6435
          %v6437 = vrot.slane %v2346, %v6436
          %v6438 = vlaneseq
          %v6439 = vshrl.u32 %v6438, 7
          %v6440 = vsub.s32 0, %v6439
          %v6441 = vrot.slane %v2350, %v6440
          %v6442 = vlaneseq
          %v6443 = vshrl.u32 %v6442, 7
          %v6444 = vsub.s32 4, %v6443
          %v6445 = vrot.slane %v2350, %v6444
          %v6450 = vlaneseq
          %v6451 = vshrl.u32 %v6450, 7
          %v6452 = vsub.s32 0, %v6451
          %v6453 = vrot.slane %v6433, %v6452
          %v6454 = vlaneseq
          %v6455 = vshrl.u32 %v6454, 7
          %v6456 = vsub.s32 0, %v6455
          %v6457 = vrot.slane %v6437, %v6456
          %v6458 = vlaneseq
          %v6459 = vshrl.u32 %v6458, 7
          %v6460 = vsub.s32 0, %v6459
          %v6461 = vrot.slane %v6441, %v6460
          %v6462 = vlaneseq
          %v6463 = vshrl.u32 %v6462, 7
          %v6464 = vsub.s32 0, %v6463
          %v6465 = vrot.slane %v6445, %v6464
          %v6466 = vmul.f32 %v4952, %v6453
          %v6467 = vmul.f32 %v4953, %v6457
          %v6468 = vmul.f32 %v4954, %v6453
          %v6469 = vmul.f32 %v4955, %v6457
          %v6470 = vmul.f32 %v4956, %v6453
          %v6471 = vmul.f32 %v4957, %v6457
          %v6472 = vmul.f32 %v4958, %v6453
          %v6473 = vmul.f32 %v4959, %v6457
          %v6474 = vmul.f32 %v4960, %v6453
          %v6475 = vmul.f32 %v4961, %v6457
          %v6476 = vmul.f32 %v4968, %v6461
          %v6477 = vmul.f32 %v4969, %v6465
          %v6478 = vmul.f32 %v4970, %v6461
          %v6479 = vmul.f32 %v4971, %v6465
          %v6480 = vmul.f32 %v4972, %v6461
          %v6481 = vmul.f32 %v4973, %v6465
          %v6482 = vmul.f32 %v4974, %v6461
          %v6483 = vmul.f32 %v4975, %v6465
          %v6484 = vmul.f32 %v4976, %v6461
          %v6485 = vmul.f32 %v4977, %v6465
          %v6486 = vadd.f32 %v6410, %v6466
          %v6487 = vadd.f32 %v6411, %v6467
          %v6488 = vadd.f32 %v6412, %v6468
          %v6489 = vadd.f32 %v6413, %v6469
          %v6490 = vadd.f32 %v6414, %v6470
          %v6491 = vadd.f32 %v6415, %v6471
          %v6492 = vadd.f32 %v6416, %v6472
          %v6493 = vadd.f32 %v6417, %v6473
          %v6494 = vadd.f32 %v6418, %v6474
          %v6495 = vadd.f32 %v6419, %v6475
          %v6496 = vadd.f32 %v6420, %v6476
          %v6497 = vadd.f32 %v6421, %v6477
          %v6498 = vadd.f32 %v6422, %v6478
          %v6499 = vadd.f32 %v6423, %v6479
          %v6500 = vadd.f32 %v6424, %v6480
          %v6501 = vadd.f32 %v6425, %v6481
          %v6502 = vadd.f32 %v6426, %v6482
          %v6503 = vadd.f32 %v6427, %v6483
          %v6504 = vadd.f32 %v6428, %v6484
          %v6505 = vadd.f32 %v6429, %v6485
          %v6506 = vlaneseq
          %v6507 = vshrl.u32 %v6506, 7
          %v6508 = vsub.s32 1, %v6507
          %v6509 = vrot.slane %v2346, %v6508
          %v6510 = vlaneseq
          %v6511 = vshrl.u32 %v6510, 7
          %v6512 = vsub.s32 5, %v6511
          %v6513 = vrot.slane %v2346, %v6512
          %v6514 = vlaneseq
          %v6515 = vshrl.u32 %v6514, 7
          %v6516 = vsub.s32 1, %v6515
          %v6517 = vrot.slane %v2350, %v6516
          %v6518 = vlaneseq
          %v6519 = vshrl.u32 %v6518, 7
          %v6520 = vsub.s32 5, %v6519
          %v6521 = vrot.slane %v2350, %v6520
          %v6526 = vlaneseq
          %v6527 = vshrl.u32 %v6526, 7
          %v6528 = vsub.s32 1, %v6527
          %v6529 = vrot.slane %v6509, %v6528
          %v6530 = vlaneseq
          %v6531 = vshrl.u32 %v6530, 7
          %v6532 = vsub.s32 1, %v6531
          %v6533 = vrot.slane %v6513, %v6532
          %v6534 = vlaneseq
          %v6535 = vshrl.u32 %v6534, 7
          %v6536 = vsub.s32 1, %v6535
          %v6537 = vrot.slane %v6517, %v6536
          %v6538 = vlaneseq
          %v6539 = vshrl.u32 %v6538, 7
          %v6540 = vsub.s32 1, %v6539
          %v6541 = vrot.slane %v6521, %v6540
          %v6542 = vmul.f32 %v4952, %v6529
          %v6543 = vmul.f32 %v4953, %v6533
          %v6544 = vmul.f32 %v4954, %v6529
          %v6545 = vmul.f32 %v4955, %v6533
          %v6546 = vmul.f32 %v4956, %v6529
          %v6547 = vmul.f32 %v4957, %v6533
          %v6548 = vmul.f32 %v4958, %v6529
          %v6549 = vmul.f32 %v4959, %v6533
          %v6550 = vmul.f32 %v4960, %v6529
          %v6551 = vmul.f32 %v4961, %v6533
          %v6552 = vmul.f32 %v4968, %v6537
          %v6553 = vmul.f32 %v4969, %v6541
          %v6554 = vmul.f32 %v4970, %v6537
          %v6555 = vmul.f32 %v4971, %v6541
          %v6556 = vmul.f32 %v4972, %v6537
          %v6557 = vmul.f32 %v4973, %v6541
          %v6558 = vmul.f32 %v4974, %v6537
          %v6559 = vmul.f32 %v4975, %v6541
          %v6560 = vmul.f32 %v4976, %v6537
          %v6561 = vmul.f32 %v4977, %v6541
          %v6582 = vrot.slane %v6542, 1
          %v6583 = vrot.slane %v6543, 1
          %v6584 = vrot.slane %v6544, 1
          %v6585 = vrot.slane %v6545, 1
          %v6586 = vrot.slane %v6546, 1
          %v6587 = vrot.slane %v6547, 1
          %v6588 = vrot.slane %v6548, 1
          %v6589 = vrot.slane %v6549, 1
          %v6590 = vrot.slane %v6550, 1
          %v6591 = vrot.slane %v6551, 1
          %v6592 = vrot.slane %v6552, 1
          %v6593 = vrot.slane %v6553, 1
          %v6594 = vrot.slane %v6554, 1
          %v6595 = vrot.slane %v6555, 1
          %v6596 = vrot.slane %v6556, 1
          %v6597 = vrot.slane %v6557, 1
          %v6598 = vrot.slane %v6558, 1
          %v6599 = vrot.slane %v6559, 1
          %v6600 = vrot.slane %v6560, 1
          %v6601 = vrot.slane %v6561, 1
          %v6622 = vadd.f32 %v6486, %v6582
          %v6623 = vadd.f32 %v6487, %v6583
          %v6624 = vadd.f32 %v6488, %v6584
          %v6625 = vadd.f32 %v6489, %v6585
          %v6626 = vadd.f32 %v6490, %v6586
          %v6627 = vadd.f32 %v6491, %v6587
          %v6628 = vadd.f32 %v6492, %v6588
          %v6629 = vadd.f32 %v6493, %v6589
          %v6630 = vadd.f32 %v6494, %v6590
          %v6631 = vadd.f32 %v6495, %v6591
          %v6632 = vadd.f32 %v6496, %v6592
          %v6633 = vadd.f32 %v6497, %v6593
          %v6634 = vadd.f32 %v6498, %v6594
          %v6635 = vadd.f32 %v6499, %v6595
          %v6636 = vadd.f32 %v6500, %v6596
          %v6637 = vadd.f32 %v6501, %v6597
          %v6638 = vadd.f32 %v6502, %v6598
          %v6639 = vadd.f32 %v6503, %v6599
          %v6640 = vadd.f32 %v6504, %v6600
          %v6641 = vadd.f32 %v6505, %v6601
          %v6642 = vlaneseq
          %v6643 = vshrl.u32 %v6642, 7
          %v6644 = vsub.s32 2, %v6643
          %v6645 = vrot.slane %v2346, %v6644
          %v6646 = vlaneseq
          %v6647 = vshrl.u32 %v6646, 7
          %v6648 = vsub.s32 6, %v6647
          %v6649 = vrot.slane %v2346, %v6648
          %v6650 = vlaneseq
          %v6651 = vshrl.u32 %v6650, 7
          %v6652 = vsub.s32 2, %v6651
          %v6653 = vrot.slane %v2350, %v6652
          %v6654 = vlaneseq
          %v6655 = vshrl.u32 %v6654, 7
          %v6656 = vsub.s32 6, %v6655
          %v6657 = vrot.slane %v2350, %v6656
          %v6662 = vlaneseq
          %v6663 = vshrl.u32 %v6662, 7
          %v6664 = vsub.s32 2, %v6663
          %v6665 = vrot.slane %v6645, %v6664
          %v6666 = vlaneseq
          %v6667 = vshrl.u32 %v6666, 7
          %v6668 = vsub.s32 2, %v6667
          %v6669 = vrot.slane %v6649, %v6668
          %v6670 = vlaneseq
          %v6671 = vshrl.u32 %v6670, 7
          %v6672 = vsub.s32 2, %v6671
          %v6673 = vrot.slane %v6653, %v6672
          %v6674 = vlaneseq
          %v6675 = vshrl.u32 %v6674, 7
          %v6676 = vsub.s32 2, %v6675
          %v6677 = vrot.slane %v6657, %v6676
          %v6678 = vmul.f32 %v4952, %v6665
          %v6679 = vmul.f32 %v4953, %v6669
          %v6680 = vmul.f32 %v4954, %v6665
          %v6681 = vmul.f32 %v4955, %v6669
          %v6682 = vmul.f32 %v4956, %v6665
          %v6683 = vmul.f32 %v4957, %v6669
          %v6684 = vmul.f32 %v4958, %v6665
          %v6685 = vmul.f32 %v4959, %v6669
          %v6686 = vmul.f32 %v4960, %v6665
          %v6687 = vmul.f32 %v4961, %v6669
          %v6688 = vmul.f32 %v4968, %v6673
          %v6689 = vmul.f32 %v4969, %v6677
          %v6690 = vmul.f32 %v4970, %v6673
          %v6691 = vmul.f32 %v4971, %v6677
          %v6692 = vmul.f32 %v4972, %v6673
          %v6693 = vmul.f32 %v4973, %v6677
          %v6694 = vmul.f32 %v4974, %v6673
          %v6695 = vmul.f32 %v4975, %v6677
          %v6696 = vmul.f32 %v4976, %v6673
          %v6697 = vmul.f32 %v4977, %v6677
          %v6718 = vrot.slane %v6678, 2
          %v6719 = vrot.slane %v6679, 2
          %v6720 = vrot.slane %v6680, 2
          %v6721 = vrot.slane %v6681, 2
          %v6722 = vrot.slane %v6682, 2
          %v6723 = vrot.slane %v6683, 2
          %v6724 = vrot.slane %v6684, 2
          %v6725 = vrot.slane %v6685, 2
          %v6726 = vrot.slane %v6686, 2
          %v6727 = vrot.slane %v6687, 2
          %v6728 = vrot.slane %v6688, 2
          %v6729 = vrot.slane %v6689, 2
          %v6730 = vrot.slane %v6690, 2
          %v6731 = vrot.slane %v6691, 2
          %v6732 = vrot.slane %v6692, 2
          %v6733 = vrot.slane %v6693, 2
          %v6734 = vrot.slane %v6694, 2
          %v6735 = vrot.slane %v6695, 2
          %v6736 = vrot.slane %v6696, 2
          %v6737 = vrot.slane %v6697, 2
          %v6758 = vadd.f32 %v6622, %v6718
          %v6759 = vadd.f32 %v6623, %v6719
          %v6760 = vadd.f32 %v6624, %v6720
          %v6761 = vadd.f32 %v6625, %v6721
          %v6762 = vadd.f32 %v6626, %v6722
          %v6763 = vadd.f32 %v6627, %v6723
          %v6764 = vadd.f32 %v6628, %v6724
          %v6765 = vadd.f32 %v6629, %v6725
          %v6766 = vadd.f32 %v6630, %v6726
          %v6767 = vadd.f32 %v6631, %v6727
          %v6768 = vadd.f32 %v6632, %v6728
          %v6769 = vadd.f32 %v6633, %v6729
          %v6770 = vadd.f32 %v6634, %v6730
          %v6771 = vadd.f32 %v6635, %v6731
          %v6772 = vadd.f32 %v6636, %v6732
          %v6773 = vadd.f32 %v6637, %v6733
          %v6774 = vadd.f32 %v6638, %v6734
          %v6775 = vadd.f32 %v6639, %v6735
          %v6776 = vadd.f32 %v6640, %v6736
          %v6777 = vadd.f32 %v6641, %v6737
          %v6778 = vlaneseq
          %v6779 = vshrl.u32 %v6778, 7
          %v6780 = vsub.s32 3, %v6779
          %v6781 = vrot.slane %v2346, %v6780
          %v6782 = vlaneseq
          %v6783 = vshrl.u32 %v6782, 7
          %v6784 = vsub.s32 7, %v6783
          %v6785 = vrot.slane %v2346, %v6784
          %v6786 = vlaneseq
          %v6787 = vshrl.u32 %v6786, 7
          %v6788 = vsub.s32 3, %v6787
          %v6789 = vrot.slane %v2350, %v6788
          %v6790 = vlaneseq
          %v6791 = vshrl.u32 %v6790, 7
          %v6792 = vsub.s32 7, %v6791
          %v6793 = vrot.slane %v2350, %v6792
          %v6798 = vlaneseq
          %v6799 = vshrl.u32 %v6798, 7
          %v6800 = vsub.s32 3, %v6799
          %v6801 = vrot.slane %v6781, %v6800
          %v6802 = vlaneseq
          %v6803 = vshrl.u32 %v6802, 7
          %v6804 = vsub.s32 3, %v6803
          %v6805 = vrot.slane %v6785, %v6804
          %v6806 = vlaneseq
          %v6807 = vshrl.u32 %v6806, 7
          %v6808 = vsub.s32 3, %v6807
          %v6809 = vrot.slane %v6789, %v6808
          %v6810 = vlaneseq
          %v6811 = vshrl.u32 %v6810, 7
          %v6812 = vsub.s32 3, %v6811
          %v6813 = vrot.slane %v6793, %v6812
          %v6814 = vmul.f32 %v4952, %v6801
          %v6815 = vmul.f32 %v4953, %v6805
          %v6816 = vmul.f32 %v4954, %v6801
          %v6817 = vmul.f32 %v4955, %v6805
          %v6818 = vmul.f32 %v4956, %v6801
          %v6819 = vmul.f32 %v4957, %v6805
          %v6820 = vmul.f32 %v4958, %v6801
          %v6821 = vmul.f32 %v4959, %v6805
          %v6822 = vmul.f32 %v4960, %v6801
          %v6823 = vmul.f32 %v4961, %v6805
          %v6824 = vmul.f32 %v4968, %v6809
          %v6825 = vmul.f32 %v4969, %v6813
          %v6826 = vmul.f32 %v4970, %v6809
          %v6827 = vmul.f32 %v4971, %v6813
          %v6828 = vmul.f32 %v4972, %v6809
          %v6829 = vmul.f32 %v4973, %v6813
          %v6830 = vmul.f32 %v4974, %v6809
          %v6831 = vmul.f32 %v4975, %v6813
          %v6832 = vmul.f32 %v4976, %v6809
          %v6833 = vmul.f32 %v4977, %v6813
          %v6854 = vrot.slane %v6814, 3
          %v6855 = vrot.slane %v6815, 3
          %v6856 = vrot.slane %v6816, 3
          %v6857 = vrot.slane %v6817, 3
          %v6858 = vrot.slane %v6818, 3
          %v6859 = vrot.slane %v6819, 3
          %v6860 = vrot.slane %v6820, 3
          %v6861 = vrot.slane %v6821, 3
          %v6862 = vrot.slane %v6822, 3
          %v6863 = vrot.slane %v6823, 3
          %v6864 = vrot.slane %v6824, 3
          %v6865 = vrot.slane %v6825, 3
          %v6866 = vrot.slane %v6826, 3
          %v6867 = vrot.slane %v6827, 3
          %v6868 = vrot.slane %v6828, 3
          %v6869 = vrot.slane %v6829, 3
          %v6870 = vrot.slane %v6830, 3
          %v6871 = vrot.slane %v6831, 3
          %v6872 = vrot.slane %v6832, 3
          %v6873 = vrot.slane %v6833, 3
          %v6894 = vadd.f32 %v6758, %v6854
          %v6895 = vadd.f32 %v6759, %v6855
          %v6896 = vadd.f32 %v6760, %v6856
          %v6897 = vadd.f32 %v6761, %v6857
          %v6898 = vadd.f32 %v6762, %v6858
          %v6899 = vadd.f32 %v6763, %v6859
          %v6900 = vadd.f32 %v6764, %v6860
          %v6901 = vadd.f32 %v6765, %v6861
          %v6902 = vadd.f32 %v6766, %v6862
          %v6903 = vadd.f32 %v6767, %v6863
          %v6904 = vadd.f32 %v6768, %v6864
          %v6905 = vadd.f32 %v6769, %v6865
          %v6906 = vadd.f32 %v6770, %v6866
          %v6907 = vadd.f32 %v6771, %v6867
          %v6908 = vadd.f32 %v6772, %v6868
          %v6909 = vadd.f32 %v6773, %v6869
          %v6910 = vadd.f32 %v6774, %v6870
          %v6911 = vadd.f32 %v6775, %v6871
          %v6912 = vadd.f32 %v6776, %v6872
          %v6913 = vadd.f32 %v6777, %v6873
          %v6934 = vcombine.low %v6894, %v6895
          %v6935 = vcombine.high %v6894, %v6895
          %v6937 = vunpack.c.l.s4 1966171168
          %v6938 = vunpack.c.0.s8 %v6937
          %v6939 = vlaneseq
          %v6940 = vshrl.u32 %v6939, 7
          %v6941 = vsub.s32 %v6938, %v6940
          %v6942 = vrot.slane %v6934, %v6941
          %v6944 = vunpack.c.l.s4 1966171168
          %v6945 = vunpack.c.0.s8 %v6944
          %v6946 = vlaneseq
          %v6947 = vshrl.u32 %v6946, 7
          %v6948 = vsub.s32 %v6945, %v6947
          %v6949 = vrot.slane %v6935, %v6948
          %v6950 = vcombine.high %v6942, %v6942
          %v6952 = vunpack.c.l.s4 1966171168
          %v6953 = vunpack.c.0.s8 %v6952
          %v6954 = vlaneseq
          %v6955 = vshrl.u32 %v6954, 7
          %v6956 = vsub.s32 %v6953, %v6955
          %v6957 = vrot.slane %v6942, %v6956
          %v6959 = vunpack.c.l.s4 1966171168
          %v6960 = vunpack.c.0.s8 %v6959
          %v6961 = vlaneseq
          %v6962 = vshrl.u32 %v6961, 7
          %v6963 = vsub.s32 %v6960, %v6962
          %v6964 = vrot.slane %v6949, %v6963
          %v6966 = vunpack.c.l.s4 1966171168
          %v6967 = vunpack.c.0.s8 %v6966
          %v6968 = vlaneseq
          %v6969 = vshrl.u32 %v6968, 7
          %v6970 = vsub.s32 %v6967, %v6969
          %v6971 = vrot.slane %v6950, %v6970
          %v6972 = vcombine.high %v6957, %v6957
          %v6973 = vcombine.high %v6971, %v6971
          %v6974 = vcombine.low %v6896, %v6897
          %v6975 = vcombine.high %v6896, %v6897
          %v6977 = vunpack.c.l.s4 1966171168
          %v6978 = vunpack.c.0.s8 %v6977
          %v6979 = vlaneseq
          %v6980 = vshrl.u32 %v6979, 7
          %v6981 = vsub.s32 %v6978, %v6980
          %v6982 = vrot.slane %v6974, %v6981
          %v6984 = vunpack.c.l.s4 1966171168
          %v6985 = vunpack.c.0.s8 %v6984
          %v6986 = vlaneseq
          %v6987 = vshrl.u32 %v6986, 7
          %v6988 = vsub.s32 %v6985, %v6987
          %v6989 = vrot.slane %v6975, %v6988
          %v6990 = vcombine.high %v6982, %v6982
          %v6992 = vunpack.c.l.s4 1966171168
          %v6993 = vunpack.c.0.s8 %v6992
          %v6994 = vlaneseq
          %v6995 = vshrl.u32 %v6994, 7
          %v6996 = vsub.s32 %v6993, %v6995
          %v6997 = vrot.slane %v6982, %v6996
          %v6999 = vunpack.c.l.s4 1966171168
          %v7000 = vunpack.c.0.s8 %v6999
          %v7001 = vlaneseq
          %v7002 = vshrl.u32 %v7001, 7
          %v7003 = vsub.s32 %v7000, %v7002
          %v7004 = vrot.slane %v6989, %v7003
          %v7006 = vunpack.c.l.s4 1966171168
          %v7007 = vunpack.c.0.s8 %v7006
          %v7008 = vlaneseq
          %v7009 = vshrl.u32 %v7008, 7
          %v7010 = vsub.s32 %v7007, %v7009
          %v7011 = vrot.slane %v6990, %v7010
          %v7012 = vcombine.high %v6997, %v6997
          %v7013 = vcombine.high %v7011, %v7011
          %v7014 = vcombine.low %v6898, %v6899
          %v7015 = vcombine.high %v6898, %v6899
          %v7017 = vunpack.c.l.s4 1966171168
          %v7018 = vunpack.c.0.s8 %v7017
          %v7019 = vlaneseq
          %v7020 = vshrl.u32 %v7019, 7
          %v7021 = vsub.s32 %v7018, %v7020
          %v7022 = vrot.slane %v7014, %v7021
          %v7024 = vunpack.c.l.s4 1966171168
          %v7025 = vunpack.c.0.s8 %v7024
          %v7026 = vlaneseq
          %v7027 = vshrl.u32 %v7026, 7
          %v7028 = vsub.s32 %v7025, %v7027
          %v7029 = vrot.slane %v7015, %v7028
          %v7030 = vcombine.high %v7022, %v7022
          %v7032 = vunpack.c.l.s4 1966171168
          %v7033 = vunpack.c.0.s8 %v7032
          %v7034 = vlaneseq
          %v7035 = vshrl.u32 %v7034, 7
          %v7036 = vsub.s32 %v7033, %v7035
          %v7037 = vrot.slane %v7022, %v7036
          %v7039 = vunpack.c.l.s4 1966171168
          %v7040 = vunpack.c.0.s8 %v7039
          %v7041 = vlaneseq
          %v7042 = vshrl.u32 %v7041, 7
          %v7043 = vsub.s32 %v7040, %v7042
          %v7044 = vrot.slane %v7029, %v7043
          %v7046 = vunpack.c.l.s4 1966171168
          %v7047 = vunpack.c.0.s8 %v7046
          %v7048 = vlaneseq
          %v7049 = vshrl.u32 %v7048, 7
          %v7050 = vsub.s32 %v7047, %v7049
          %v7051 = vrot.slane %v7030, %v7050
          %v7052 = vcombine.high %v7037, %v7037
          %v7053 = vcombine.high %v7051, %v7051
          %v7054 = vcombine.low %v6900, %v6901
          %v7055 = vcombine.high %v6900, %v6901
          %v7057 = vunpack.c.l.s4 1966171168
          %v7058 = vunpack.c.0.s8 %v7057
          %v7059 = vlaneseq
          %v7060 = vshrl.u32 %v7059, 7
          %v7061 = vsub.s32 %v7058, %v7060
          %v7062 = vrot.slane %v7054, %v7061
          %v7064 = vunpack.c.l.s4 1966171168
          %v7065 = vunpack.c.0.s8 %v7064
          %v7066 = vlaneseq
          %v7067 = vshrl.u32 %v7066, 7
          %v7068 = vsub.s32 %v7065, %v7067
          %v7069 = vrot.slane %v7055, %v7068
          %v7070 = vcombine.high %v7062, %v7062
          %v7072 = vunpack.c.l.s4 1966171168
          %v7073 = vunpack.c.0.s8 %v7072
          %v7074 = vlaneseq
          %v7075 = vshrl.u32 %v7074, 7
          %v7076 = vsub.s32 %v7073, %v7075
          %v7077 = vrot.slane %v7062, %v7076
          %v7079 = vunpack.c.l.s4 1966171168
          %v7080 = vunpack.c.0.s8 %v7079
          %v7081 = vlaneseq
          %v7082 = vshrl.u32 %v7081, 7
          %v7083 = vsub.s32 %v7080, %v7082
          %v7084 = vrot.slane %v7069, %v7083
          %v7086 = vunpack.c.l.s4 1966171168
          %v7087 = vunpack.c.0.s8 %v7086
          %v7088 = vlaneseq
          %v7089 = vshrl.u32 %v7088, 7
          %v7090 = vsub.s32 %v7087, %v7089
          %v7091 = vrot.slane %v7070, %v7090
          %v7092 = vcombine.high %v7077, %v7077
          %v7093 = vcombine.high %v7091, %v7091
          %v7094 = vcombine.low %v6902, %v6903
          %v7095 = vcombine.high %v6902, %v6903
          %v7097 = vunpack.c.l.s4 1966171168
          %v7098 = vunpack.c.0.s8 %v7097
          %v7099 = vlaneseq
          %v7100 = vshrl.u32 %v7099, 7
          %v7101 = vsub.s32 %v7098, %v7100
          %v7102 = vrot.slane %v7094, %v7101
          %v7104 = vunpack.c.l.s4 1966171168
          %v7105 = vunpack.c.0.s8 %v7104
          %v7106 = vlaneseq
          %v7107 = vshrl.u32 %v7106, 7
          %v7108 = vsub.s32 %v7105, %v7107
          %v7109 = vrot.slane %v7095, %v7108
          %v7110 = vcombine.high %v7102, %v7102
          %v7112 = vunpack.c.l.s4 1966171168
          %v7113 = vunpack.c.0.s8 %v7112
          %v7114 = vlaneseq
          %v7115 = vshrl.u32 %v7114, 7
          %v7116 = vsub.s32 %v7113, %v7115
          %v7117 = vrot.slane %v7102, %v7116
          %v7119 = vunpack.c.l.s4 1966171168
          %v7120 = vunpack.c.0.s8 %v7119
          %v7121 = vlaneseq
          %v7122 = vshrl.u32 %v7121, 7
          %v7123 = vsub.s32 %v7120, %v7122
          %v7124 = vrot.slane %v7109, %v7123
          %v7126 = vunpack.c.l.s4 1966171168
          %v7127 = vunpack.c.0.s8 %v7126
          %v7128 = vlaneseq
          %v7129 = vshrl.u32 %v7128, 7
          %v7130 = vsub.s32 %v7127, %v7129
          %v7131 = vrot.slane %v7110, %v7130
          %v7132 = vcombine.high %v7117, %v7117
          %v7133 = vcombine.high %v7131, %v7131
          %v7134 = vcombine.low %v6904, %v6905
          %v7135 = vcombine.high %v6904, %v6905
          %v7137 = vunpack.c.l.s4 1966171168
          %v7138 = vunpack.c.0.s8 %v7137
          %v7139 = vlaneseq
          %v7140 = vshrl.u32 %v7139, 7
          %v7141 = vsub.s32 %v7138, %v7140
          %v7142 = vrot.slane %v7134, %v7141
          %v7144 = vunpack.c.l.s4 1966171168
          %v7145 = vunpack.c.0.s8 %v7144
          %v7146 = vlaneseq
          %v7147 = vshrl.u32 %v7146, 7
          %v7148 = vsub.s32 %v7145, %v7147
          %v7149 = vrot.slane %v7135, %v7148
          %v7150 = vcombine.high %v7142, %v7142
          %v7152 = vunpack.c.l.s4 1966171168
          %v7153 = vunpack.c.0.s8 %v7152
          %v7154 = vlaneseq
          %v7155 = vshrl.u32 %v7154, 7
          %v7156 = vsub.s32 %v7153, %v7155
          %v7157 = vrot.slane %v7142, %v7156
          %v7159 = vunpack.c.l.s4 1966171168
          %v7160 = vunpack.c.0.s8 %v7159
          %v7161 = vlaneseq
          %v7162 = vshrl.u32 %v7161, 7
          %v7163 = vsub.s32 %v7160, %v7162
          %v7164 = vrot.slane %v7149, %v7163
          %v7166 = vunpack.c.l.s4 1966171168
          %v7167 = vunpack.c.0.s8 %v7166
          %v7168 = vlaneseq
          %v7169 = vshrl.u32 %v7168, 7
          %v7170 = vsub.s32 %v7167, %v7169
          %v7171 = vrot.slane %v7150, %v7170
          %v7172 = vcombine.high %v7157, %v7157
          %v7173 = vcombine.high %v7171, %v7171
          %v7174 = vcombine.low %v6906, %v6907
          %v7175 = vcombine.high %v6906, %v6907
          %v7177 = vunpack.c.l.s4 1966171168
          %v7178 = vunpack.c.0.s8 %v7177
          %v7179 = vlaneseq
          %v7180 = vshrl.u32 %v7179, 7
          %v7181 = vsub.s32 %v7178, %v7180
          %v7182 = vrot.slane %v7174, %v7181
          %v7184 = vunpack.c.l.s4 1966171168
          %v7185 = vunpack.c.0.s8 %v7184
          %v7186 = vlaneseq
          %v7187 = vshrl.u32 %v7186, 7
          %v7188 = vsub.s32 %v7185, %v7187
          %v7189 = vrot.slane %v7175, %v7188
          %v7190 = vcombine.high %v7182, %v7182
          %v7192 = vunpack.c.l.s4 1966171168
          %v7193 = vunpack.c.0.s8 %v7192
          %v7194 = vlaneseq
          %v7195 = vshrl.u32 %v7194, 7
          %v7196 = vsub.s32 %v7193, %v7195
          %v7197 = vrot.slane %v7182, %v7196
          %v7199 = vunpack.c.l.s4 1966171168
          %v7200 = vunpack.c.0.s8 %v7199
          %v7201 = vlaneseq
          %v7202 = vshrl.u32 %v7201, 7
          %v7203 = vsub.s32 %v7200, %v7202
          %v7204 = vrot.slane %v7189, %v7203
          %v7206 = vunpack.c.l.s4 1966171168
          %v7207 = vunpack.c.0.s8 %v7206
          %v7208 = vlaneseq
          %v7209 = vshrl.u32 %v7208, 7
          %v7210 = vsub.s32 %v7207, %v7209
          %v7211 = vrot.slane %v7190, %v7210
          %v7212 = vcombine.high %v7197, %v7197
          %v7213 = vcombine.high %v7211, %v7211
          %v7214 = vcombine.low %v6908, %v6909
          %v7215 = vcombine.high %v6908, %v6909
          %v7217 = vunpack.c.l.s4 1966171168
          %v7218 = vunpack.c.0.s8 %v7217
          %v7219 = vlaneseq
          %v7220 = vshrl.u32 %v7219, 7
          %v7221 = vsub.s32 %v7218, %v7220
          %v7222 = vrot.slane %v7214, %v7221
          %v7224 = vunpack.c.l.s4 1966171168
          %v7225 = vunpack.c.0.s8 %v7224
          %v7226 = vlaneseq
          %v7227 = vshrl.u32 %v7226, 7
          %v7228 = vsub.s32 %v7225, %v7227
          %v7229 = vrot.slane %v7215, %v7228
          %v7230 = vcombine.high %v7222, %v7222
          %v7232 = vunpack.c.l.s4 1966171168
          %v7233 = vunpack.c.0.s8 %v7232
          %v7234 = vlaneseq
          %v7235 = vshrl.u32 %v7234, 7
          %v7236 = vsub.s32 %v7233, %v7235
          %v7237 = vrot.slane %v7222, %v7236
          %v7239 = vunpack.c.l.s4 1966171168
          %v7240 = vunpack.c.0.s8 %v7239
          %v7241 = vlaneseq
          %v7242 = vshrl.u32 %v7241, 7
          %v7243 = vsub.s32 %v7240, %v7242
          %v7244 = vrot.slane %v7229, %v7243
          %v7246 = vunpack.c.l.s4 1966171168
          %v7247 = vunpack.c.0.s8 %v7246
          %v7248 = vlaneseq
          %v7249 = vshrl.u32 %v7248, 7
          %v7250 = vsub.s32 %v7247, %v7249
          %v7251 = vrot.slane %v7230, %v7250
          %v7252 = vcombine.high %v7237, %v7237
          %v7253 = vcombine.high %v7251, %v7251
          %v7254 = vcombine.low %v6910, %v6911
          %v7255 = vcombine.high %v6910, %v6911
          %v7257 = vunpack.c.l.s4 1966171168
          %v7258 = vunpack.c.0.s8 %v7257
          %v7259 = vlaneseq
          %v7260 = vshrl.u32 %v7259, 7
          %v7261 = vsub.s32 %v7258, %v7260
          %v7262 = vrot.slane %v7254, %v7261
          %v7264 = vunpack.c.l.s4 1966171168
          %v7265 = vunpack.c.0.s8 %v7264
          %v7266 = vlaneseq
          %v7267 = vshrl.u32 %v7266, 7
          %v7268 = vsub.s32 %v7265, %v7267
          %v7269 = vrot.slane %v7255, %v7268
          %v7270 = vcombine.high %v7262, %v7262
          %v7272 = vunpack.c.l.s4 1966171168
          %v7273 = vunpack.c.0.s8 %v7272
          %v7274 = vlaneseq
          %v7275 = vshrl.u32 %v7274, 7
          %v7276 = vsub.s32 %v7273, %v7275
          %v7277 = vrot.slane %v7262, %v7276
          %v7279 = vunpack.c.l.s4 1966171168
          %v7280 = vunpack.c.0.s8 %v7279
          %v7281 = vlaneseq
          %v7282 = vshrl.u32 %v7281, 7
          %v7283 = vsub.s32 %v7280, %v7282
          %v7284 = vrot.slane %v7269, %v7283
          %v7286 = vunpack.c.l.s4 1966171168
          %v7287 = vunpack.c.0.s8 %v7286
          %v7288 = vlaneseq
          %v7289 = vshrl.u32 %v7288, 7
          %v7290 = vsub.s32 %v7287, %v7289
          %v7291 = vrot.slane %v7270, %v7290
          %v7292 = vcombine.high %v7277, %v7277
          %v7293 = vcombine.high %v7291, %v7291
          %v7294 = vcombine.low %v6912, %v6913
          %v7295 = vcombine.high %v6912, %v6913
          %v7297 = vunpack.c.l.s4 1966171168
          %v7298 = vunpack.c.0.s8 %v7297
          %v7299 = vlaneseq
          %v7300 = vshrl.u32 %v7299, 7
          %v7301 = vsub.s32 %v7298, %v7300
          %v7302 = vrot.slane %v7294, %v7301
          %v7304 = vunpack.c.l.s4 1966171168
          %v7305 = vunpack.c.0.s8 %v7304
          %v7306 = vlaneseq
          %v7307 = vshrl.u32 %v7306, 7
          %v7308 = vsub.s32 %v7305, %v7307
          %v7309 = vrot.slane %v7295, %v7308
          %v7310 = vcombine.high %v7302, %v7302
          %v7312 = vunpack.c.l.s4 1966171168
          %v7313 = vunpack.c.0.s8 %v7312
          %v7314 = vlaneseq
          %v7315 = vshrl.u32 %v7314, 7
          %v7316 = vsub.s32 %v7313, %v7315
          %v7317 = vrot.slane %v7302, %v7316
          %v7319 = vunpack.c.l.s4 1966171168
          %v7320 = vunpack.c.0.s8 %v7319
          %v7321 = vlaneseq
          %v7322 = vshrl.u32 %v7321, 7
          %v7323 = vsub.s32 %v7320, %v7322
          %v7324 = vrot.slane %v7309, %v7323
          %v7326 = vunpack.c.l.s4 1966171168
          %v7327 = vunpack.c.0.s8 %v7326
          %v7328 = vlaneseq
          %v7329 = vshrl.u32 %v7328, 7
          %v7330 = vsub.s32 %v7327, %v7329
          %v7331 = vrot.slane %v7310, %v7330
          %v7332 = vcombine.high %v7317, %v7317
          %v7333 = vcombine.high %v7331, %v7331
          %v7334 = vcombine.low %v6957, %v6971
          %v7335 = vcombine.low %v6972, %v6973
          %v7336 = vcombine.low %v6964, %v6997
          %v7337 = vcombine.low %v7011, %v7012
          %v7339 = vunpack.c.l.s4 1966171168
          %v7340 = vunpack.c.0.s8 %v7339
          %v7341 = vlaneseq
          %v7342 = vshrl.u32 %v7341, 7
          %v7343 = vsub.s32 %v7340, %v7342
          %v7344 = vrot.slane %v7334, %v7343
          %v7346 = vunpack.c.l.s4 1966171168
          %v7347 = vunpack.c.0.s8 %v7346
          %v7348 = vlaneseq
          %v7349 = vshrl.u32 %v7348, 7
          %v7350 = vsub.s32 %v7347, %v7349
          %v7351 = vrot.slane %v7335, %v7350
          %v7353 = vunpack.c.l.s4 1966171168
          %v7354 = vunpack.c.0.s8 %v7353
          %v7355 = vlaneseq
          %v7356 = vshrl.u32 %v7355, 7
          %v7357 = vsub.s32 %v7354, %v7356
          %v7358 = vrot.slane %v7336, %v7357
          %v7360 = vunpack.c.l.s4 1966171168
          %v7361 = vunpack.c.0.s8 %v7360
          %v7362 = vlaneseq
          %v7363 = vshrl.u32 %v7362, 7
          %v7364 = vsub.s32 %v7361, %v7363
          %v7365 = vrot.slane %v7337, %v7364
          %v7366 = vcombine.low %v7344, %v7351
          %v7367 = vcombine.high %v7344, %v7351
          %v7368 = vcombine.low %v7358, %v7365
          %v7369 = vcombine.high %v7358, %v7365
          %v7371 = vunpack.c.l.s4 1966171168
          %v7372 = vunpack.c.0.s8 %v7371
          %v7373 = vlaneseq
          %v7374 = vshrl.u32 %v7373, 7
          %v7375 = vsub.s32 %v7372, %v7374
          %v7376 = vrot.slane %v7366, %v7375
          %v7378 = vunpack.c.l.s4 1966171168
          %v7379 = vunpack.c.0.s8 %v7378
          %v7380 = vlaneseq
          %v7381 = vshrl.u32 %v7380, 7
          %v7382 = vsub.s32 %v7379, %v7381
          %v7383 = vrot.slane %v7367, %v7382
          %v7385 = vunpack.c.l.s4 1966171168
          %v7386 = vunpack.c.0.s8 %v7385
          %v7387 = vlaneseq
          %v7388 = vshrl.u32 %v7387, 7
          %v7389 = vsub.s32 %v7386, %v7388
          %v7390 = vrot.slane %v7368, %v7389
          %v7392 = vunpack.c.l.s4 1966171168
          %v7393 = vunpack.c.0.s8 %v7392
          %v7394 = vlaneseq
          %v7395 = vshrl.u32 %v7394, 7
          %v7396 = vsub.s32 %v7393, %v7395
          %v7397 = vrot.slane %v7369, %v7396
          %v7398 = vcombine.low %v7376, %v7390
          %v7399 = vcombine.low %v7383, %v7397
          %v7400 = vcombine.low %v7013, %v7004
          %v7401 = vcombine.low %v7037, %v7051
          %v7402 = vcombine.low %v7052, %v7053
          %v7403 = vcombine.low %v7044, %v7077
          %v7405 = vunpack.c.l.s4 1966171168
          %v7406 = vunpack.c.0.s8 %v7405
          %v7407 = vlaneseq
          %v7408 = vshrl.u32 %v7407, 7
          %v7409 = vsub.s32 %v7406, %v7408
          %v7410 = vrot.slane %v7400, %v7409
          %v7412 = vunpack.c.l.s4 1966171168
          %v7413 = vunpack.c.0.s8 %v7412
          %v7414 = vlaneseq
          %v7415 = vshrl.u32 %v7414, 7
          %v7416 = vsub.s32 %v7413, %v7415
          %v7417 = vrot.slane %v7401, %v7416
          %v7419 = vunpack.c.l.s4 1966171168
          %v7420 = vunpack.c.0.s8 %v7419
          %v7421 = vlaneseq
          %v7422 = vshrl.u32 %v7421, 7
          %v7423 = vsub.s32 %v7420, %v7422
          %v7424 = vrot.slane %v7402, %v7423
          %v7426 = vunpack.c.l.s4 1966171168
          %v7427 = vunpack.c.0.s8 %v7426
          %v7428 = vlaneseq
          %v7429 = vshrl.u32 %v7428, 7
          %v7430 = vsub.s32 %v7427, %v7429
          %v7431 = vrot.slane %v7403, %v7430
          %v7432 = vcombine.low %v7410, %v7417
          %v7433 = vcombine.high %v7410, %v7417
          %v7434 = vcombine.low %v7424, %v7431
          %v7435 = vcombine.high %v7424, %v7431
          %v7437 = vunpack.c.l.s4 1966171168
          %v7438 = vunpack.c.0.s8 %v7437
          %v7439 = vlaneseq
          %v7440 = vshrl.u32 %v7439, 7
          %v7441 = vsub.s32 %v7438, %v7440
          %v7442 = vrot.slane %v7432, %v7441
          %v7444 = vunpack.c.l.s4 1966171168
          %v7445 = vunpack.c.0.s8 %v7444
          %v7446 = vlaneseq
          %v7447 = vshrl.u32 %v7446, 7
          %v7448 = vsub.s32 %v7445, %v7447
          %v7449 = vrot.slane %v7433, %v7448
          %v7451 = vunpack.c.l.s4 1966171168
          %v7452 = vunpack.c.0.s8 %v7451
          %v7453 = vlaneseq
          %v7454 = vshrl.u32 %v7453, 7
          %v7455 = vsub.s32 %v7452, %v7454
          %v7456 = vrot.slane %v7434, %v7455
          %v7458 = vunpack.c.l.s4 1966171168
          %v7459 = vunpack.c.0.s8 %v7458
          %v7460 = vlaneseq
          %v7461 = vshrl.u32 %v7460, 7
          %v7462 = vsub.s32 %v7459, %v7461
          %v7463 = vrot.slane %v7435, %v7462
          %v7464 = vcombine.low %v7442, %v7456
          %v7465 = vcombine.low %v7449, %v7463
          %v7466 = vcombine.low %v7091, %v7092
          %v7467 = vcombine.low %v7093, %v7084
          %v7468 = vcombine.low %v7117, %v7131
          %v7469 = vcombine.low %v7132, %v7133
          %v7471 = vunpack.c.l.s4 1966171168
          %v7472 = vunpack.c.0.s8 %v7471
          %v7473 = vlaneseq
          %v7474 = vshrl.u32 %v7473, 7
          %v7475 = vsub.s32 %v7472, %v7474
          %v7476 = vrot.slane %v7466, %v7475
          %v7478 = vunpack.c.l.s4 1966171168
          %v7479 = vunpack.c.0.s8 %v7478
          %v7480 = vlaneseq
          %v7481 = vshrl.u32 %v7480, 7
          %v7482 = vsub.s32 %v7479, %v7481
          %v7483 = vrot.slane %v7467, %v7482
          %v7485 = vunpack.c.l.s4 1966171168
          %v7486 = vunpack.c.0.s8 %v7485
          %v7487 = vlaneseq
          %v7488 = vshrl.u32 %v7487, 7
          %v7489 = vsub.s32 %v7486, %v7488
          %v7490 = vrot.slane %v7468, %v7489
          %v7492 = vunpack.c.l.s4 1966171168
          %v7493 = vunpack.c.0.s8 %v7492
          %v7494 = vlaneseq
          %v7495 = vshrl.u32 %v7494, 7
          %v7496 = vsub.s32 %v7493, %v7495
          %v7497 = vrot.slane %v7469, %v7496
          %v7498 = vcombine.low %v7476, %v7483
          %v7499 = vcombine.high %v7476, %v7483
          %v7500 = vcombine.low %v7490, %v7497
          %v7501 = vcombine.high %v7490, %v7497
          %v7503 = vunpack.c.l.s4 1966171168
          %v7504 = vunpack.c.0.s8 %v7503
          %v7505 = vlaneseq
          %v7506 = vshrl.u32 %v7505, 7
          %v7507 = vsub.s32 %v7504, %v7506
          %v7508 = vrot.slane %v7498, %v7507
          %v7510 = vunpack.c.l.s4 1966171168
          %v7511 = vunpack.c.0.s8 %v7510
          %v7512 = vlaneseq
          %v7513 = vshrl.u32 %v7512, 7
          %v7514 = vsub.s32 %v7511, %v7513
          %v7515 = vrot.slane %v7499, %v7514
          %v7517 = vunpack.c.l.s4 1966171168
          %v7518 = vunpack.c.0.s8 %v7517
          %v7519 = vlaneseq
          %v7520 = vshrl.u32 %v7519, 7
          %v7521 = vsub.s32 %v7518, %v7520
          %v7522 = vrot.slane %v7500, %v7521
          %v7524 = vunpack.c.l.s4 1966171168
          %v7525 = vunpack.c.0.s8 %v7524
          %v7526 = vlaneseq
          %v7527 = vshrl.u32 %v7526, 7
          %v7528 = vsub.s32 %v7525, %v7527
          %v7529 = vrot.slane %v7501, %v7528
          %v7530 = vcombine.low %v7508, %v7522
          %v7531 = vcombine.low %v7515, %v7529
          %v7532 = vcombine.low %v7124, %v7157
          %v7533 = vcombine.low %v7171, %v7172
          %v7534 = vcombine.low %v7173, %v7164
          %v7535 = vcombine.low %v7197, %v7211
          %v7537 = vunpack.c.l.s4 1966171168
          %v7538 = vunpack.c.0.s8 %v7537
          %v7539 = vlaneseq
          %v7540 = vshrl.u32 %v7539, 7
          %v7541 = vsub.s32 %v7538, %v7540
          %v7542 = vrot.slane %v7532, %v7541
          %v7544 = vunpack.c.l.s4 1966171168
          %v7545 = vunpack.c.0.s8 %v7544
          %v7546 = vlaneseq
          %v7547 = vshrl.u32 %v7546, 7
          %v7548 = vsub.s32 %v7545, %v7547
          %v7549 = vrot.slane %v7533, %v7548
          %v7551 = vunpack.c.l.s4 1966171168
          %v7552 = vunpack.c.0.s8 %v7551
          %v7553 = vlaneseq
          %v7554 = vshrl.u32 %v7553, 7
          %v7555 = vsub.s32 %v7552, %v7554
          %v7556 = vrot.slane %v7534, %v7555
          %v7558 = vunpack.c.l.s4 1966171168
          %v7559 = vunpack.c.0.s8 %v7558
          %v7560 = vlaneseq
          %v7561 = vshrl.u32 %v7560, 7
          %v7562 = vsub.s32 %v7559, %v7561
          %v7563 = vrot.slane %v7535, %v7562
          %v7564 = vcombine.low %v7542, %v7549
          %v7565 = vcombine.high %v7542, %v7549
          %v7566 = vcombine.low %v7556, %v7563
          %v7567 = vcombine.high %v7556, %v7563
          %v7569 = vunpack.c.l.s4 1966171168
          %v7570 = vunpack.c.0.s8 %v7569
          %v7571 = vlaneseq
          %v7572 = vshrl.u32 %v7571, 7
          %v7573 = vsub.s32 %v7570, %v7572
          %v7574 = vrot.slane %v7564, %v7573
          %v7576 = vunpack.c.l.s4 1966171168
          %v7577 = vunpack.c.0.s8 %v7576
          %v7578 = vlaneseq
          %v7579 = vshrl.u32 %v7578, 7
          %v7580 = vsub.s32 %v7577, %v7579
          %v7581 = vrot.slane %v7565, %v7580
          %v7583 = vunpack.c.l.s4 1966171168
          %v7584 = vunpack.c.0.s8 %v7583
          %v7585 = vlaneseq
          %v7586 = vshrl.u32 %v7585, 7
          %v7587 = vsub.s32 %v7584, %v7586
          %v7588 = vrot.slane %v7566, %v7587
          %v7590 = vunpack.c.l.s4 1966171168
          %v7591 = vunpack.c.0.s8 %v7590
          %v7592 = vlaneseq
          %v7593 = vshrl.u32 %v7592, 7
          %v7594 = vsub.s32 %v7591, %v7593
          %v7595 = vrot.slane %v7567, %v7594
          %v7596 = vcombine.low %v7574, %v7588
          %v7597 = vcombine.low %v7581, %v7595
          %v7598 = vcombine.low %v7212, %v7213
          %v7599 = vcombine.low %v7204, %v7237
          %v7600 = vcombine.low %v7251, %v7252
          %v7601 = vcombine.low %v7253, %v7244
          %v7603 = vunpack.c.l.s4 1966171168
          %v7604 = vunpack.c.0.s8 %v7603
          %v7605 = vlaneseq
          %v7606 = vshrl.u32 %v7605, 7
          %v7607 = vsub.s32 %v7604, %v7606
          %v7608 = vrot.slane %v7598, %v7607
          %v7610 = vunpack.c.l.s4 1966171168
          %v7611 = vunpack.c.0.s8 %v7610
          %v7612 = vlaneseq
          %v7613 = vshrl.u32 %v7612, 7
          %v7614 = vsub.s32 %v7611, %v7613
          %v7615 = vrot.slane %v7599, %v7614
          %v7617 = vunpack.c.l.s4 1966171168
          %v7618 = vunpack.c.0.s8 %v7617
          %v7619 = vlaneseq
          %v7620 = vshrl.u32 %v7619, 7
          %v7621 = vsub.s32 %v7618, %v7620
          %v7622 = vrot.slane %v7600, %v7621
          %v7624 = vunpack.c.l.s4 1966171168
          %v7625 = vunpack.c.0.s8 %v7624
          %v7626 = vlaneseq
          %v7627 = vshrl.u32 %v7626, 7
          %v7628 = vsub.s32 %v7625, %v7627
          %v7629 = vrot.slane %v7601, %v7628
          %v7630 = vcombine.low %v7608, %v7615
          %v7631 = vcombine.high %v7608, %v7615
          %v7632 = vcombine.low %v7622, %v7629
          %v7633 = vcombine.high %v7622, %v7629
          %v7635 = vunpack.c.l.s4 1966171168
          %v7636 = vunpack.c.0.s8 %v7635
          %v7637 = vlaneseq
          %v7638 = vshrl.u32 %v7637, 7
          %v7639 = vsub.s32 %v7636, %v7638
          %v7640 = vrot.slane %v7630, %v7639
          %v7642 = vunpack.c.l.s4 1966171168
          %v7643 = vunpack.c.0.s8 %v7642
          %v7644 = vlaneseq
          %v7645 = vshrl.u32 %v7644, 7
          %v7646 = vsub.s32 %v7643, %v7645
          %v7647 = vrot.slane %v7631, %v7646
          %v7649 = vunpack.c.l.s4 1966171168
          %v7650 = vunpack.c.0.s8 %v7649
          %v7651 = vlaneseq
          %v7652 = vshrl.u32 %v7651, 7
          %v7653 = vsub.s32 %v7650, %v7652
          %v7654 = vrot.slane %v7632, %v7653
          %v7656 = vunpack.c.l.s4 1966171168
          %v7657 = vunpack.c.0.s8 %v7656
          %v7658 = vlaneseq
          %v7659 = vshrl.u32 %v7658, 7
          %v7660 = vsub.s32 %v7657, %v7659
          %v7661 = vrot.slane %v7633, %v7660
          %v7662 = vcombine.low %v7640, %v7654
          %v7663 = vcombine.low %v7647, %v7661
          %v7664 = vcombine.low %v7277, %v7291
          %v7665 = vcombine.low %v7292, %v7293
          %v7666 = vcombine.low %v7284, %v7317
          %v7667 = vcombine.low %v7331, %v7332
          %v7669 = vunpack.c.l.s4 1966171168
          %v7670 = vunpack.c.0.s8 %v7669
          %v7671 = vlaneseq
          %v7672 = vshrl.u32 %v7671, 7
          %v7673 = vsub.s32 %v7670, %v7672
          %v7674 = vrot.slane %v7664, %v7673
          %v7676 = vunpack.c.l.s4 1966171168
          %v7677 = vunpack.c.0.s8 %v7676
          %v7678 = vlaneseq
          %v7679 = vshrl.u32 %v7678, 7
          %v7680 = vsub.s32 %v7677, %v7679
          %v7681 = vrot.slane %v7665, %v7680
          %v7683 = vunpack.c.l.s4 1966171168
          %v7684 = vunpack.c.0.s8 %v7683
          %v7685 = vlaneseq
          %v7686 = vshrl.u32 %v7685, 7
          %v7687 = vsub.s32 %v7684, %v7686
          %v7688 = vrot.slane %v7666, %v7687
          %v7690 = vunpack.c.l.s4 1966171168
          %v7691 = vunpack.c.0.s8 %v7690
          %v7692 = vlaneseq
          %v7693 = vshrl.u32 %v7692, 7
          %v7694 = vsub.s32 %v7691, %v7693
          %v7695 = vrot.slane %v7667, %v7694
          %v7696 = vcombine.low %v7674, %v7681
          %v7697 = vcombine.high %v7674, %v7681
          %v7698 = vcombine.low %v7688, %v7695
          %v7699 = vcombine.high %v7688, %v7695
          %v7701 = vunpack.c.l.s4 1966171168
          %v7702 = vunpack.c.0.s8 %v7701
          %v7703 = vlaneseq
          %v7704 = vshrl.u32 %v7703, 7
          %v7705 = vsub.s32 %v7702, %v7704
          %v7706 = vrot.slane %v7696, %v7705
          %v7708 = vunpack.c.l.s4 1966171168
          %v7709 = vunpack.c.0.s8 %v7708
          %v7710 = vlaneseq
          %v7711 = vshrl.u32 %v7710, 7
          %v7712 = vsub.s32 %v7709, %v7711
          %v7713 = vrot.slane %v7697, %v7712
          %v7715 = vunpack.c.l.s4 1966171168
          %v7716 = vunpack.c.0.s8 %v7715
          %v7717 = vlaneseq
          %v7718 = vshrl.u32 %v7717, 7
          %v7719 = vsub.s32 %v7716, %v7718
          %v7720 = vrot.slane %v7698, %v7719
          %v7722 = vunpack.c.l.s4 1966171168
          %v7723 = vunpack.c.0.s8 %v7722
          %v7724 = vlaneseq
          %v7725 = vshrl.u32 %v7724, 7
          %v7726 = vsub.s32 %v7723, %v7725
          %v7727 = vrot.slane %v7699, %v7726
          %v7728 = vcombine.low %v7706, %v7720
          %v7729 = vcombine.low %v7713, %v7727
          %v7730 = vcombine.low %v7333, %v7324
          %v7732 = vunpack.c.l.s4 1966171168
          %v7733 = vunpack.c.0.s8 %v7732
          %v7734 = vlaneseq
          %v7735 = vshrl.u32 %v7734, 7
          %v7736 = vsub.s32 %v7733, %v7735
          %v7737 = vrot.slane %v7730, %v7736
          %v7738 = vcombine.high %v7737, %v7737
          %v7740 = vunpack.c.l.s4 1966171168
          %v7741 = vunpack.c.0.s8 %v7740
          %v7742 = vlaneseq
          %v7743 = vshrl.u32 %v7742, 7
          %v7744 = vsub.s32 %v7741, %v7743
          %v7745 = vrot.slane %v7737, %v7744
          %v7747 = vunpack.c.l.s4 1966171168
          %v7748 = vunpack.c.0.s8 %v7747
          %v7749 = vlaneseq
          %v7750 = vshrl.u32 %v7749, 7
          %v7751 = vsub.s32 %v7748, %v7750
          %v7752 = vrot.slane %v7738, %v7751
          %v7767 = vsel %vm709, %v7745, 0.0
          %v7768 = vsel %vm709, %v7752, 0.0
          %v7769 = vld [vmem:[#allocation13] sm:$0xff]
          %v7770 = vld [vmem:[#allocation13 + $0x8] sm:$0xff]
          %v7771 = vld [vmem:[#allocation13 + $0x10] sm:$0xff]
          %v7772 = vld [vmem:[#allocation13 + $0x18] sm:$0xff]
          %v7773 = vld [vmem:[#allocation13 + $0x20] sm:$0xff]
          %v7774 = vld [vmem:[#allocation13 + $0x28] sm:$0xff]
          %v7775 = vld [vmem:[#allocation13 + $0x30] sm:$0xff]
          %v7776 = vld [vmem:[#allocation13 + $0x38] sm:$0xff]
          %v7777 = vld [vmem:[#allocation13 + $0x40] sm:$0xff]
          %v7778 = vld [vmem:[#allocation13 + $0x48] sm:$0xff]
          %v7779 = vld [vmem:[#allocation13 + $0x50] sm:$0xff]
          %v7780 = vld [vmem:[#allocation13 + $0x58] sm:$0xff]
          %v7781 = vld [vmem:[#allocation13 + $0x60] sm:$0xff]
          %v7782 = vld [vmem:[#allocation13 + $0x68] sm:$0xff]
          %v7783 = vld [vmem:[#allocation13 + $0x70] sm:$0xff]
          %v7784 = vld [vmem:[#allocation13 + $0x78] sm:$0xff]
          %v7785 = vld [vmem:[#allocation13 + $0x80] sm:$0xff]
          %v7786 = vld [vmem:[#allocation13 + $0x88] sm:$0xff]
          %v7787 = vld [vmem:[#allocation13 + $0x90] sm:$0xff]
          %v7788 = vld [vmem:[#allocation13 + $0x98] sm:$0xff]
          %v7789 = vld [vmem:[#allocation13 + $0xa0] sm:$0xff]
          %v7790 = vld [vmem:[#allocation13 + $0xa8] sm:$0xff]
          %v7791 = vld [vmem:[#allocation13 + $0xb0] sm:$0xff]
          %v7792 = vld [vmem:[#allocation13 + $0xb8] sm:$0xff]
          %v7793 = vld [vmem:[#allocation13 + $0xc0] sm:$0xff]
          %v7794 = vld [vmem:[#allocation13 + $0xc8] sm:$0xff]
          %v7795 = vld [vmem:[#allocation13 + $0xd0] sm:$0xff]
          %v7796 = vld [vmem:[#allocation13 + $0xd8] sm:$0xff]
          %v7797 = vld [vmem:[#allocation13 + $0xe0] sm:$0xff]
          %v7798 = vld [vmem:[#allocation13 + $0xe8] sm:$0xff]
          %v7799 = vld [vmem:[#allocation13 + $0xf0] sm:$0xff]
          %v7800 = vld [vmem:[#allocation13 + $0xf8] sm:$0xff]
          %v7801 = vld [vmem:[#allocation13 + $0x100] sm:$0xff]
          %v7802 = vld [vmem:[#allocation13 + $0x108] sm:$0xff]
          %v7803 = vld [vmem:[#allocation13 + $0x110] sm:$0xff]
          %v7804 = vld [vmem:[#allocation13 + $0x118] sm:$0xff]
          %v7805 = vld [vmem:[#allocation13 + $0x120] sm:$0xff]
          %v7806 = vld [vmem:[#allocation13 + $0x128] sm:$0xff]
          %v7807 = vld [vmem:[#allocation13 + $0x130] sm:$0xff]
          %v7808 = vld [vmem:[#allocation13 + $0x138] sm:$0xff]
          %v7809 = vld [vmem:[#allocation13 + $0x140] sm:$0xff]
          %v7810 = vld [vmem:[#allocation13 + $0x148] sm:$0xff]
          %v7811 = vld [vmem:[#allocation13 + $0x150] sm:$0xff]
          %v7812 = vld [vmem:[#allocation13 + $0x158] sm:$0xff]
          %v7813 = vld [vmem:[#allocation13 + $0x160] sm:$0xff]
          %v7814 = vld [vmem:[#allocation13 + $0x168] sm:$0xff]
          %v7815 = vld [vmem:[#allocation13 + $0x170] sm:$0xff]
          %v7816 = vld [vmem:[#allocation13 + $0x178] sm:$0xff]
          %v7817 = vld [vmem:[#allocation13 + $0x180] sm:$0xff]
          %v7818 = vld [vmem:[#allocation13 + $0x188] sm:$0xff]
          %v7819 = vld [vmem:[#allocation13 + $0x190] sm:$0xff]
          %v7820 = vld [vmem:[#allocation13 + $0x198] sm:$0xff]
          %v7821 = vld [vmem:[#allocation13 + $0x1a0] sm:$0xff]
          %v7822 = vld [vmem:[#allocation13 + $0x1a8] sm:$0xff]
          %v7823 = vld [vmem:[#allocation13 + $0x1b0] sm:$0xff]
          %v7824 = vld [vmem:[#allocation13 + $0x1b8] sm:$0xff]
          %v7825 = vld [vmem:[#allocation13 + $0x1c0] sm:$0xff]
          %v7826 = vld [vmem:[#allocation13 + $0x1c8] sm:$0xff]
          %v7827 = vld [vmem:[#allocation13 + $0x1d0] sm:$0xff]
          %v7828 = vld [vmem:[#allocation13 + $0x1d8] sm:$0xff]
          %v7829 = vld [vmem:[#allocation13 + $0x1e0] sm:$0xff]
          %v7830 = vld [vmem:[#allocation13 + $0x1e8] sm:$0xff]
          %v7831 = vld [vmem:[#allocation13 + $0x1f0] sm:$0xff]
          %v7832 = vld [vmem:[#allocation13 + $0x1f8] sm:$0xff]
          %7833 = vmatprep.subr.mxu0 %v7800
          %7834 = vmatpush1.msra.mxu0 %v7799
          %7835 = vmatprep.subr.mxu0 %v7798
          %7836 = vmatpush1.msra.mxu0 %v7797
          %7837 = vmatprep.subr.mxu0 %v7796
          %7838 = vmatpush1.msra.mxu0 %v7795
          %7839 = vmatprep.subr.mxu0 %v7794
          %7840 = vmatpush1.msra.mxu0 %v7793
          %7841 = vmatprep.subr.mxu0 %v7792
          %7842 = vmatpush1.msra.mxu0 %v7791
          %7843 = vmatprep.subr.mxu0 %v7790
          %7844 = vmatpush1.msra.mxu0 %v7789
          %7845 = vmatprep.subr.mxu0 %v7788
          %7846 = vmatpush1.msra.mxu0 %v7787
          %7847 = vmatprep.subr.mxu0 %v7786
          %7848 = vmatpush1.msra.mxu0 %v7785
          %7849 = vmatprep.subr.mxu0 %v7784
          %7850 = vmatpush1.msra.mxu0 %v7783
          %7851 = vmatprep.subr.mxu0 %v7782
          %7852 = vmatpush1.msra.mxu0 %v7781
          %7853 = vmatprep.subr.mxu0 %v7780
          %7854 = vmatpush1.msra.mxu0 %v7779
          %7855 = vmatprep.subr.mxu0 %v7778
          %7856 = vmatpush1.msra.mxu0 %v7777
          %7857 = vmatprep.subr.mxu0 %v7776
          %7858 = vmatpush1.msra.mxu0 %v7775
          %7859 = vmatprep.subr.mxu0 %v7774
          %7860 = vmatpush1.msra.mxu0 %v7773
          %7861 = vmatprep.subr.mxu0 %v7772
          %7862 = vmatpush1.msra.mxu0 %v7771
          %7863 = vmatprep.subr.mxu0 %v7770
          %7864 = vmatpush1.msra.mxu0 %v7769
          %7865 = vmatprep.subr.mxu0 %v7832
          %7866 = vmatpush2.msra.mxu0 %v7831
          %7867 = vmatprep.subr.mxu0 %v7830
          %7868 = vmatpush2.msra.mxu0 %v7829
          %7869 = vmatprep.subr.mxu0 %v7828
          %7870 = vmatpush2.msra.mxu0 %v7827
          %7871 = vmatprep.subr.mxu0 %v7826
          %7872 = vmatpush2.msra.mxu0 %v7825
          %7873 = vmatprep.subr.mxu0 %v7824
          %7874 = vmatpush2.msra.mxu0 %v7823
          %7875 = vmatprep.subr.mxu0 %v7822
          %7876 = vmatpush2.msra.mxu0 %v7821
          %7877 = vmatprep.subr.mxu0 %v7820
          %7878 = vmatpush2.msra.mxu0 %v7819
          %7879 = vmatprep.subr.mxu0 %v7818
          %7880 = vmatpush2.msra.mxu0 %v7817
          %7881 = vmatprep.subr.mxu0 %v7816
          %7882 = vmatpush2.msra.mxu0 %v7815
          %7883 = vmatprep.subr.mxu0 %v7814
          %7884 = vmatpush2.msra.mxu0 %v7813
          %7885 = vmatprep.subr.mxu0 %v7812
          %7886 = vmatpush2.msra.mxu0 %v7811
          %7887 = vmatprep.subr.mxu0 %v7810
          %7888 = vmatpush2.msra.mxu0 %v7809
          %7889 = vmatprep.subr.mxu0 %v7808
          %7890 = vmatpush2.msra.mxu0 %v7807
          %7891 = vmatprep.subr.mxu0 %v7806
          %7892 = vmatpush2.msra.mxu0 %v7805
          %7893 = vmatprep.subr.mxu0 %v7804
          %7894 = vmatpush2.msra.mxu0 %v7803
          %7895 = vmatprep.subr.mxu0 %v7802
          %7896 = vmatpush2.msra.mxu0 %v7801
          %7897 = vmatprep.mubr.f32.mxu0 %v7399
          %7898 = vmatmul.mubr.f32.gmra.mxu0 %v7398
          %v7899 = vpop.f32.mrf.mxu0
          %v7900 = vadd.f32 0.0, %v7899
          %v7901 = vpop.f32.mrf.mxu0
          %v7902 = vadd.f32 0.0, %v7901
          %7903 = vmatprep.mubr.f32.mxu0 %v7465
          %7904 = vmatmul.mubr.f32.gmra.mxu0 %v7464
          %v7905 = vpop.f32.mrf.mxu0
          %v7906 = vadd.f32 0.0, %v7905
          %v7907 = vpop.f32.mrf.mxu0
          %v7908 = vadd.f32 0.0, %v7907
          %7909 = vmatprep.mubr.f32.mxu0 %v7531
          %7910 = vmatmul.mubr.f32.gmra.mxu0 %v7530
          %v7911 = vpop.f32.mrf.mxu0
          %v7912 = vadd.f32 0.0, %v7911
          %v7913 = vpop.f32.mrf.mxu0
          %v7914 = vadd.f32 0.0, %v7913
          %7915 = vmatprep.mubr.f32.mxu0 %v7597
          %7916 = vmatmul.mubr.f32.gmra.mxu0 %v7596
          %v7917 = vpop.f32.mrf.mxu0
          %v7918 = vadd.f32 0.0, %v7917
          %v7919 = vpop.f32.mrf.mxu0
          %v7920 = vadd.f32 0.0, %v7919
          %7921 = vmatprep.mubr.f32.mxu0 %v7663
          %7922 = vmatmul.mubr.f32.gmra.mxu0 %v7662
          %v7923 = vpop.f32.mrf.mxu0
          %v7924 = vadd.f32 0.0, %v7923
          %v7925 = vpop.f32.mrf.mxu0
          %v7926 = vadd.f32 0.0, %v7925
          %7927 = vmatprep.mubr.f32.mxu0 %v7729
          %7928 = vmatmul.mubr.f32.gmra.mxu0 %v7728
          %v7929 = vpop.f32.mrf.mxu0
          %v7930 = vadd.f32 0.0, %v7929
          %v7931 = vpop.f32.mrf.mxu0
          %v7932 = vadd.f32 0.0, %v7931
          %7933 = vmatprep.mubr.f32.mxu0 %v7768
          %7934 = vmatmul.mubr.f32.gmra.mxu0 %v7767
          %v7935 = vpop.f32.mrf.mxu0
          %v7936 = vadd.f32 0.0, %v7935
          %v7937 = vpop.f32.mrf.mxu0
          %v7938 = vadd.f32 0.0, %v7937
          %7939 = vmatprep.mubr.f32.mxu0 0.0
          %7940 = vmatmul.mubr.f32.gmra.mxu0 0.0
          %v7941 = vpop.f32.mrf.mxu0
          %v7942 = vadd.f32 0.0, %v7941
          %v7943 = vpop.f32.mrf.mxu0
          %v7944 = vadd.f32 0.0, %v7943
          %7945 = vdwg.mxu0
          %v7946 = vld [vmem:[#allocation14] sm:$0x3]
          %v7948 = vlaneseq
          %v7949 = vshrl.u32 %v7948, 7
          %v7950 = vsub.s32 0, %v7949
          %v7951 = vrot.slane %v7946, %v7950
          %v7952 = vlaneseq
          %v7953 = vshrl.u32 %v7952, 7
          %v7954 = vsub.s32 1, %v7953
          %v7955 = vrot.slane %v7946, %v7954
          %v7958 = vmul.f32 %v7900, %v7951
          %v7959 = vmul.f32 %v7902, %v7955
          %v7960 = vmul.f32 %v7906, %v7951
          %v7961 = vmul.f32 %v7908, %v7955
          %v7962 = vmul.f32 %v7912, %v7951
          %v7963 = vmul.f32 %v7914, %v7955
          %v7964 = vmul.f32 %v7918, %v7951
          %v7965 = vmul.f32 %v7920, %v7955
          %v7966 = vmul.f32 %v7924, %v7951
          %v7967 = vmul.f32 %v7926, %v7955
          %v7968 = vmul.f32 %v7930, %v7951
          %v7969 = vmul.f32 %v7932, %v7955
          %v7970 = vmul.f32 %v7936, %v7951
          %v7971 = vmul.f32 %v7938, %v7955
          %v7972 = vmul.f32 %v7942, %v7951
          %v7973 = vmul.f32 %v7944, %v7955
          %v7974 = vld [vmem:[#allocation16] sm:$0x3]
          %v7976 = vlaneseq
          %v7977 = vshrl.u32 %v7976, 7
          %v7978 = vsub.s32 0, %v7977
          %v7979 = vrot.slane %v7974, %v7978
          %v7980 = vlaneseq
          %v7981 = vshrl.u32 %v7980, 7
          %v7982 = vsub.s32 1, %v7981
          %v7983 = vrot.slane %v7974, %v7982
          %v7986 = vadd.f32 %v7958, %v7979
          %v7987 = vadd.f32 %v7959, %v7983
          %v7988 = vadd.f32 %v7960, %v7979
          %v7989 = vadd.f32 %v7961, %v7983
          %v7990 = vadd.f32 %v7962, %v7979
          %v7991 = vadd.f32 %v7963, %v7983
          %v7992 = vadd.f32 %v7964, %v7979
          %v7993 = vadd.f32 %v7965, %v7983
          %v7994 = vadd.f32 %v7966, %v7979
          %v7995 = vadd.f32 %v7967, %v7983
          %v7996 = vadd.f32 %v7968, %v7979
          %v7997 = vadd.f32 %v7969, %v7983
          %v7998 = vadd.f32 %v7970, %v7979
          %v7999 = vadd.f32 %v7971, %v7983
          %v8000 = vadd.f32 %v7972, %v7979
          %v8001 = vadd.f32 %v7973, %v7983
          %v8002 = vmax.f32 %v7986, 0.0
          %v8003 = vmax.f32 %v7987, 0.0
          %v8004 = vmax.f32 %v7988, 0.0
          %v8005 = vmax.f32 %v7989, 0.0
          %v8006 = vmax.f32 %v7990, 0.0
          %v8007 = vmax.f32 %v7991, 0.0
          %v8008 = vmax.f32 %v7992, 0.0
          %v8009 = vmax.f32 %v7993, 0.0
          %v8010 = vmax.f32 %v7994, 0.0
          %v8011 = vmax.f32 %v7995, 0.0
          %v8012 = vmax.f32 %v7996, 0.0
          %v8013 = vmax.f32 %v7997, 0.0
          %v8014 = vmax.f32 %v7998, 0.0
          %v8015 = vmax.f32 %v7999, 0.0
          %v8016 = vmax.f32 %v8000, 0.0
          %v8017 = vmax.f32 %v8001, 0.0
          %8018 = vst [vmem:[#allocation2] sm:$0xff] %v8002
          %8019 = vst [vmem:[#allocation2 + $0x8] sm:$0xff] %v8003
          %8020 = vst [vmem:[#allocation2 + $0x10] sm:$0xff] %v8004
          %8021 = vst [vmem:[#allocation2 + $0x18] sm:$0xff] %v8005
          %8022 = vst [vmem:[#allocation2 + $0x20] sm:$0xff] %v8006
          %8023 = vst [vmem:[#allocation2 + $0x28] sm:$0xff] %v8007
          %8024 = vst [vmem:[#allocation2 + $0x30] sm:$0xff] %v8008
          %8025 = vst [vmem:[#allocation2 + $0x38] sm:$0xff] %v8009
          %8026 = vst [vmem:[#allocation2 + $0x40] sm:$0xff] %v8010
          %8027 = vst [vmem:[#allocation2 + $0x48] sm:$0xff] %v8011
          %8028 = vst [vmem:[#allocation2 + $0x50] sm:$0xff] %v8012
          %8029 = vst [vmem:[#allocation2 + $0x58] sm:$0xff] %v8013
          %8030 = vst [vmem:[#allocation2 + $0x60] sm:$0xff] %v8014
          %8031 = vst [vmem:[#allocation2 + $0x68] sm:$0xff] %v8015
          %8032 = vst [vmem:[#allocation2 + $0x70] sm:$0xff] %v8016
          %8033 = vst [vmem:[#allocation2 + $0x78] sm:$0xff] %v8017
        $region120: #{maskcorr_forward.1} parent=71 // pred_fallthru
          _
        %v8034 = vld [vmem:[#allocation2] sm:$0xff]
        %v8035 = vld [vmem:[#allocation2 + $0x8] sm:$0xff]
        %v8036 = vld [vmem:[#allocation2 + $0x10] sm:$0xff]
        %v8037 = vld [vmem:[#allocation2 + $0x18] sm:$0xff]
        %v8038 = vld [vmem:[#allocation2 + $0x20] sm:$0xff]
        %v8039 = vld [vmem:[#allocation2 + $0x28] sm:$0xff]
        %v8040 = vld [vmem:[#allocation2 + $0x30] sm:$0xff]
        %v8041 = vld [vmem:[#allocation2 + $0x38] sm:$0xff]
        %v8042 = vld [vmem:[#allocation2 + $0x40] sm:$0xff]
        %v8043 = vld [vmem:[#allocation2 + $0x48] sm:$0xff]
        %v8044 = vld [vmem:[#allocation2 + $0x50] sm:$0xff]
        %v8045 = vld [vmem:[#allocation2 + $0x58] sm:$0xff]
        %v8046 = vld [vmem:[#allocation2 + $0x60] sm:$0xff]
        %v8047 = vld [vmem:[#allocation2 + $0x68] sm:$0xff]
        %v8048 = vld [vmem:[#allocation2 + $0x70] sm:$0xff]
        %v8049 = vld [vmem:[#allocation2 + $0x78] sm:$0xff]
        %v8050 = vld [vmem:[%s553] sm:$0xff]
        %v8051 = vld [vmem:[%s553 + $0x8] sm:$0xff]
        %v8052 = vld [vmem:[%s553 + $0x10] sm:$0xff]
        %v8053 = vld [vmem:[%s553 + $0x18] sm:$0xff]
        %v8054 = vld [vmem:[%s553 + $0x20] sm:$0xff]
        %v8055 = vld [vmem:[%s553 + $0x28] sm:$0xff]
        %v8056 = vld [vmem:[%s553 + $0x30] sm:$0xff]
        %v8057 = vld [vmem:[%s553 + $0x38] sm:$0xff]
        %v8058 = vld [vmem:[%s553 + $0x40] sm:$0xff]
        %v8059 = vld [vmem:[%s553 + $0x48] sm:$0xff]
        %v8060 = vld [vmem:[%s553 + $0x50] sm:$0xff]
        %v8061 = vld [vmem:[%s553 + $0x58] sm:$0xff]
        %v8062 = vld [vmem:[%s553 + $0x60] sm:$0xff]
        %v8063 = vld [vmem:[%s553 + $0x68] sm:$0xff]
        %v8064 = vld [vmem:[%s553 + $0x70] sm:$0xff]
        %v8065 = vld [vmem:[%s553 + $0x78] sm:$0xff]
        %v8066 = vld [vmem:[%s553 + $0x80] sm:$0xff]
        %v8067 = vld [vmem:[%s553 + $0x88] sm:$0xff]
        %v8068 = vld [vmem:[%s553 + $0x90] sm:$0xff]
        %v8069 = vld [vmem:[%s553 + $0x98] sm:$0xff]
        %v8070 = vld [vmem:[%s553 + $0xa0] sm:$0xff]
        %v8071 = vld [vmem:[%s553 + $0xa8] sm:$0xff]
        %v8072 = vld [vmem:[%s553 + $0xb0] sm:$0xff]
        %v8073 = vld [vmem:[%s553 + $0xb8] sm:$0xff]
        %v8074 = vld [vmem:[%s553 + $0xc0] sm:$0xff]
        %v8075 = vld [vmem:[%s553 + $0xc8] sm:$0xff]
        %v8076 = vld [vmem:[%s553 + $0xd0] sm:$0xff]
        %v8077 = vld [vmem:[%s553 + $0xd8] sm:$0xff]
        %v8078 = vld [vmem:[%s553 + $0xe0] sm:$0xff]
        %v8079 = vld [vmem:[%s553 + $0xe8] sm:$0xff]
        %v8080 = vld [vmem:[%s553 + $0xf0] sm:$0xff]
        %v8081 = vld [vmem:[%s553 + $0xf8] sm:$0xff]
        %v8082 = vld [vmem:[%s553 + $0x100] sm:$0xff]
        %v8083 = vld [vmem:[%s553 + $0x108] sm:$0xff]
        %v8084 = vld [vmem:[%s553 + $0x110] sm:$0xff]
        %v8085 = vld [vmem:[%s553 + $0x118] sm:$0xff]
        %v8086 = vld [vmem:[%s553 + $0x120] sm:$0xff]
        %v8087 = vld [vmem:[%s553 + $0x128] sm:$0xff]
        %v8088 = vld [vmem:[%s553 + $0x130] sm:$0xff]
        %v8089 = vld [vmem:[%s553 + $0x138] sm:$0xff]
        %v8090 = vld [vmem:[%s553 + $0x140] sm:$0xff]
        %v8091 = vld [vmem:[%s553 + $0x148] sm:$0xff]
        %v8092 = vld [vmem:[%s553 + $0x150] sm:$0xff]
        %v8093 = vld [vmem:[%s553 + $0x158] sm:$0xff]
        %v8094 = vld [vmem:[%s553 + $0x160] sm:$0xff]
        %v8095 = vld [vmem:[%s553 + $0x168] sm:$0xff]
        %v8096 = vld [vmem:[%s553 + $0x170] sm:$0xff]
        %v8097 = vld [vmem:[%s553 + $0x178] sm:$0xff]
        %v8098 = vld [vmem:[%s553 + $0x180] sm:$0xff]
        %v8099 = vld [vmem:[%s553 + $0x188] sm:$0xff]
        %v8100 = vld [vmem:[%s553 + $0x190] sm:$0xff]
        %v8101 = vld [vmem:[%s553 + $0x198] sm:$0xff]
        %v8102 = vld [vmem:[%s553 + $0x1a0] sm:$0xff]
        %v8103 = vld [vmem:[%s553 + $0x1a8] sm:$0xff]
        %v8104 = vld [vmem:[%s553 + $0x1b0] sm:$0xff]
        %v8105 = vld [vmem:[%s553 + $0x1b8] sm:$0xff]
        %v8106 = vld [vmem:[%s553 + $0x1c0] sm:$0xff]
        %v8107 = vld [vmem:[%s553 + $0x1c8] sm:$0xff]
        %v8108 = vld [vmem:[%s553 + $0x1d0] sm:$0xff]
        %v8109 = vld [vmem:[%s553 + $0x1d8] sm:$0xff]
        %v8110 = vld [vmem:[%s553 + $0x1e0] sm:$0xff]
        %v8111 = vld [vmem:[%s553 + $0x1e8] sm:$0xff]
        %v8112 = vld [vmem:[%s553 + $0x1f0] sm:$0xff]
        %v8113 = vld [vmem:[%s553 + $0x1f8] sm:$0xff]
        %v8114 = vld [vmem:[%s553 + $0x200] sm:$0xff]
        %v8115 = vld [vmem:[%s553 + $0x208] sm:$0xff]
        %v8116 = vld [vmem:[%s553 + $0x210] sm:$0xff]
        %v8117 = vld [vmem:[%s553 + $0x218] sm:$0xff]
        %v8118 = vld [vmem:[%s553 + $0x220] sm:$0xff]
        %v8119 = vld [vmem:[%s553 + $0x228] sm:$0xff]
        %v8120 = vld [vmem:[%s553 + $0x230] sm:$0xff]
        %v8121 = vld [vmem:[%s553 + $0x238] sm:$0xff]
        %v8122 = vld [vmem:[%s553 + $0x240] sm:$0xff]
        %v8123 = vld [vmem:[%s553 + $0x248] sm:$0xff]
        %v8124 = vld [vmem:[%s553 + $0x250] sm:$0xff]
        %v8125 = vld [vmem:[%s553 + $0x258] sm:$0xff]
        %v8126 = vld [vmem:[%s553 + $0x260] sm:$0xff]
        %v8127 = vld [vmem:[%s553 + $0x268] sm:$0xff]
        %v8128 = vld [vmem:[%s553 + $0x270] sm:$0xff]
        %v8129 = vld [vmem:[%s553 + $0x278] sm:$0xff]
        %v8130 = vld [vmem:[%s553 + $0x280] sm:$0xff]
        %v8131 = vld [vmem:[%s553 + $0x288] sm:$0xff]
        %v8132 = vld [vmem:[%s553 + $0x290] sm:$0xff]
        %v8133 = vld [vmem:[%s553 + $0x298] sm:$0xff]
        %v8134 = vld [vmem:[%s553 + $0x2a0] sm:$0xff]
        %v8135 = vld [vmem:[%s553 + $0x2a8] sm:$0xff]
        %v8136 = vld [vmem:[%s553 + $0x2b0] sm:$0xff]
        %v8137 = vld [vmem:[%s553 + $0x2b8] sm:$0xff]
        %v8138 = vld [vmem:[%s553 + $0x2c0] sm:$0xff]
        %v8139 = vld [vmem:[%s553 + $0x2c8] sm:$0xff]
        %v8140 = vld [vmem:[%s553 + $0x2d0] sm:$0xff]
        %v8141 = vld [vmem:[%s553 + $0x2d8] sm:$0xff]
        %v8142 = vld [vmem:[%s553 + $0x2e0] sm:$0xff]
        %v8143 = vld [vmem:[%s553 + $0x2e8] sm:$0xff]
        %v8144 = vld [vmem:[%s553 + $0x2f0] sm:$0xff]
        %v8145 = vld [vmem:[%s553 + $0x2f8] sm:$0xff]
        %v8146 = vld [vmem:[%s553 + $0x300] sm:$0xff]
        %v8147 = vld [vmem:[%s553 + $0x308] sm:$0xff]
        %v8148 = vld [vmem:[%s553 + $0x310] sm:$0xff]
        %v8149 = vld [vmem:[%s553 + $0x318] sm:$0xff]
        %v8150 = vld [vmem:[%s553 + $0x320] sm:$0xff]
        %v8151 = vld [vmem:[%s553 + $0x328] sm:$0xff]
        %v8152 = vld [vmem:[%s553 + $0x330] sm:$0xff]
        %v8153 = vld [vmem:[%s553 + $0x338] sm:$0xff]
        %v8154 = vld [vmem:[%s553 + $0x340] sm:$0xff]
        %v8155 = vld [vmem:[%s553 + $0x348] sm:$0xff]
        %v8156 = vld [vmem:[%s553 + $0x350] sm:$0xff]
        %v8157 = vld [vmem:[%s553 + $0x358] sm:$0xff]
        %v8158 = vld [vmem:[%s553 + $0x360] sm:$0xff]
        %v8159 = vld [vmem:[%s553 + $0x368] sm:$0xff]
        %v8160 = vld [vmem:[%s553 + $0x370] sm:$0xff]
        %v8161 = vld [vmem:[%s553 + $0x378] sm:$0xff]
        %v8162 = vld [vmem:[%s553 + $0x380] sm:$0xff]
        %v8163 = vld [vmem:[%s553 + $0x388] sm:$0xff]
        %v8164 = vld [vmem:[%s553 + $0x390] sm:$0xff]
        %v8165 = vld [vmem:[%s553 + $0x398] sm:$0xff]
        %v8166 = vld [vmem:[%s553 + $0x3a0] sm:$0xff]
        %v8167 = vld [vmem:[%s553 + $0x3a8] sm:$0xff]
        %v8168 = vld [vmem:[%s553 + $0x3b0] sm:$0xff]
        %v8169 = vld [vmem:[%s553 + $0x3b8] sm:$0xff]
        %v8170 = vld [vmem:[%s553 + $0x3c0] sm:$0xff]
        %v8171 = vld [vmem:[%s553 + $0x3c8] sm:$0xff]
        %v8172 = vld [vmem:[%s553 + $0x3d0] sm:$0xff]
        %v8173 = vld [vmem:[%s553 + $0x3d8] sm:$0xff]
        %v8174 = vld [vmem:[%s553 + $0x3e0] sm:$0xff]
        %v8175 = vld [vmem:[%s553 + $0x3e8] sm:$0xff]
        %v8176 = vld [vmem:[%s553 + $0x3f0] sm:$0xff]
        %v8177 = vld [vmem:[%s553 + $0x3f8] sm:$0xff]
        %v8178 = vld [vmem:[%s553 + $0x400] sm:$0xff]
        %v8179 = vld [vmem:[%s553 + $0x408] sm:$0xff]
        %v8180 = vld [vmem:[%s553 + $0x410] sm:$0xff]
        %v8181 = vld [vmem:[%s553 + $0x418] sm:$0xff]
        %v8182 = vld [vmem:[%s553 + $0x420] sm:$0xff]
        %v8183 = vld [vmem:[%s553 + $0x428] sm:$0xff]
        %v8184 = vld [vmem:[%s553 + $0x430] sm:$0xff]
        %v8185 = vld [vmem:[%s553 + $0x438] sm:$0xff]
        %v8186 = vld [vmem:[%s553 + $0x440] sm:$0xff]
        %v8187 = vld [vmem:[%s553 + $0x448] sm:$0xff]
        %v8188 = vld [vmem:[%s553 + $0x450] sm:$0xff]
        %v8189 = vld [vmem:[%s553 + $0x458] sm:$0xff]
        %v8190 = vld [vmem:[%s553 + $0x460] sm:$0xff]
        %v8191 = vld [vmem:[%s553 + $0x468] sm:$0xff]
        %v8192 = vld [vmem:[%s553 + $0x470] sm:$0xff]
        %v8193 = vld [vmem:[%s553 + $0x478] sm:$0xff]
        %v8194 = vld [vmem:[%s553 + $0x480] sm:$0xff]
        %v8195 = vld [vmem:[%s553 + $0x488] sm:$0xff]
        %v8196 = vld [vmem:[%s553 + $0x490] sm:$0xff]
        %v8197 = vld [vmem:[%s553 + $0x498] sm:$0xff]
        %v8198 = vld [vmem:[%s553 + $0x4a0] sm:$0xff]
        %v8199 = vld [vmem:[%s553 + $0x4a8] sm:$0xff]
        %v8200 = vld [vmem:[%s553 + $0x4b0] sm:$0xff]
        %v8201 = vld [vmem:[%s553 + $0x4b8] sm:$0xff]
        %v8202 = vld [vmem:[%s553 + $0x4c0] sm:$0xff]
        %v8203 = vld [vmem:[%s553 + $0x4c8] sm:$0xff]
        %v8204 = vld [vmem:[%s553 + $0x4d0] sm:$0xff]
        %v8205 = vld [vmem:[%s553 + $0x4d8] sm:$0xff]
        %v8206 = vld [vmem:[%s553 + $0x4e0] sm:$0xff]
        %v8207 = vld [vmem:[%s553 + $0x4e8] sm:$0xff]
        %v8208 = vld [vmem:[%s553 + $0x4f0] sm:$0xff]
        %v8209 = vld [vmem:[%s553 + $0x4f8] sm:$0xff]
        %v8210 = vld [vmem:[%s553 + $0x500] sm:$0xff]
        %v8211 = vld [vmem:[%s553 + $0x508] sm:$0xff]
        %v8212 = vld [vmem:[%s553 + $0x510] sm:$0xff]
        %v8213 = vld [vmem:[%s553 + $0x518] sm:$0xff]
        %v8214 = vld [vmem:[%s553 + $0x520] sm:$0xff]
        %v8215 = vld [vmem:[%s553 + $0x528] sm:$0xff]
        %v8216 = vld [vmem:[%s553 + $0x530] sm:$0xff]
        %v8217 = vld [vmem:[%s553 + $0x538] sm:$0xff]
        %v8218 = vld [vmem:[%s553 + $0x540] sm:$0xff]
        %v8219 = vld [vmem:[%s553 + $0x548] sm:$0xff]
        %v8220 = vld [vmem:[%s553 + $0x550] sm:$0xff]
        %v8221 = vld [vmem:[%s553 + $0x558] sm:$0xff]
        %v8222 = vld [vmem:[%s553 + $0x560] sm:$0xff]
        %v8223 = vld [vmem:[%s553 + $0x568] sm:$0xff]
        %v8224 = vld [vmem:[%s553 + $0x570] sm:$0xff]
        %v8225 = vld [vmem:[%s553 + $0x578] sm:$0xff]
        %v8226 = vld [vmem:[%s553 + $0x580] sm:$0xff]
        %v8227 = vld [vmem:[%s553 + $0x588] sm:$0xff]
        %v8228 = vld [vmem:[%s553 + $0x590] sm:$0xff]
        %v8229 = vld [vmem:[%s553 + $0x598] sm:$0xff]
        %v8230 = vld [vmem:[%s553 + $0x5a0] sm:$0xff]
        %v8231 = vld [vmem:[%s553 + $0x5a8] sm:$0xff]
        %v8232 = vld [vmem:[%s553 + $0x5b0] sm:$0xff]
        %v8233 = vld [vmem:[%s553 + $0x5b8] sm:$0xff]
        %v8234 = vld [vmem:[%s553 + $0x5c0] sm:$0xff]
        %v8235 = vld [vmem:[%s553 + $0x5c8] sm:$0xff]
        %v8236 = vld [vmem:[%s553 + $0x5d0] sm:$0xff]
        %v8237 = vld [vmem:[%s553 + $0x5d8] sm:$0xff]
        %v8238 = vld [vmem:[%s553 + $0x5e0] sm:$0xff]
        %v8239 = vld [vmem:[%s553 + $0x5e8] sm:$0xff]
        %v8240 = vld [vmem:[%s553 + $0x5f0] sm:$0xff]
        %v8241 = vld [vmem:[%s553 + $0x5f8] sm:$0xff]
        %v8242 = vld [vmem:[%s553 + $0x600] sm:$0xff]
        %v8243 = vld [vmem:[%s553 + $0x608] sm:$0xff]
        %v8244 = vld [vmem:[%s553 + $0x610] sm:$0xff]
        %v8245 = vld [vmem:[%s553 + $0x618] sm:$0xff]
        %v8246 = vld [vmem:[%s553 + $0x620] sm:$0xff]
        %v8247 = vld [vmem:[%s553 + $0x628] sm:$0xff]
        %v8248 = vld [vmem:[%s553 + $0x630] sm:$0xff]
        %v8249 = vld [vmem:[%s553 + $0x638] sm:$0xff]
        %v8250 = vld [vmem:[%s553 + $0x640] sm:$0xff]
        %v8251 = vld [vmem:[%s553 + $0x648] sm:$0xff]
        %v8252 = vld [vmem:[%s553 + $0x650] sm:$0xff]
        %v8253 = vld [vmem:[%s553 + $0x658] sm:$0xff]
        %v8254 = vld [vmem:[%s553 + $0x660] sm:$0xff]
        %v8255 = vld [vmem:[%s553 + $0x668] sm:$0xff]
        %v8256 = vld [vmem:[%s553 + $0x670] sm:$0xff]
        %v8257 = vld [vmem:[%s553 + $0x678] sm:$0xff]
        %v8258 = vld [vmem:[%s553 + $0x680] sm:$0xff]
        %v8259 = vld [vmem:[%s553 + $0x688] sm:$0xff]
        %v8260 = vld [vmem:[%s553 + $0x690] sm:$0xff]
        %v8261 = vld [vmem:[%s553 + $0x698] sm:$0xff]
        %v8262 = vld [vmem:[%s553 + $0x6a0] sm:$0xff]
        %v8263 = vld [vmem:[%s553 + $0x6a8] sm:$0xff]
        %v8264 = vld [vmem:[%s553 + $0x6b0] sm:$0xff]
        %v8265 = vld [vmem:[%s553 + $0x6b8] sm:$0xff]
        %v8266 = vld [vmem:[%s553 + $0x6c0] sm:$0xff]
        %v8267 = vld [vmem:[%s553 + $0x6c8] sm:$0xff]
        %v8268 = vld [vmem:[%s553 + $0x6d0] sm:$0xff]
        %v8269 = vld [vmem:[%s553 + $0x6d8] sm:$0xff]
        %v8270 = vld [vmem:[%s553 + $0x6e0] sm:$0xff]
        %v8271 = vld [vmem:[%s553 + $0x6e8] sm:$0xff]
        %v8272 = vld [vmem:[%s553 + $0x6f0] sm:$0xff]
        %v8273 = vld [vmem:[%s553 + $0x6f8] sm:$0xff]
        %v8274 = vld [vmem:[%s553 + $0x700] sm:$0xff]
        %v8275 = vld [vmem:[%s553 + $0x708] sm:$0xff]
        %v8276 = vld [vmem:[%s553 + $0x710] sm:$0xff]
        %v8277 = vld [vmem:[%s553 + $0x718] sm:$0xff]
        %v8278 = vld [vmem:[%s553 + $0x720] sm:$0xff]
        %v8279 = vld [vmem:[%s553 + $0x728] sm:$0xff]
        %v8280 = vld [vmem:[%s553 + $0x730] sm:$0xff]
        %v8281 = vld [vmem:[%s553 + $0x738] sm:$0xff]
        %v8282 = vld [vmem:[%s553 + $0x740] sm:$0xff]
        %v8283 = vld [vmem:[%s553 + $0x748] sm:$0xff]
        %v8284 = vld [vmem:[%s553 + $0x750] sm:$0xff]
        %v8285 = vld [vmem:[%s553 + $0x758] sm:$0xff]
        %v8286 = vld [vmem:[%s553 + $0x760] sm:$0xff]
        %v8287 = vld [vmem:[%s553 + $0x768] sm:$0xff]
        %v8288 = vld [vmem:[%s553 + $0x770] sm:$0xff]
        %v8289 = vld [vmem:[%s553 + $0x778] sm:$0xff]
        %v8290 = vld [vmem:[%s553 + $0x780] sm:$0xff]
        %v8291 = vld [vmem:[%s553 + $0x788] sm:$0xff]
        %v8292 = vld [vmem:[%s553 + $0x790] sm:$0xff]
        %v8293 = vld [vmem:[%s553 + $0x798] sm:$0xff]
        %v8294 = vld [vmem:[%s553 + $0x7a0] sm:$0xff]
        %v8295 = vld [vmem:[%s553 + $0x7a8] sm:$0xff]
        %v8296 = vld [vmem:[%s553 + $0x7b0] sm:$0xff]
        %v8297 = vld [vmem:[%s553 + $0x7b8] sm:$0xff]
        %v8298 = vld [vmem:[%s553 + $0x7c0] sm:$0xff]
        %v8299 = vld [vmem:[%s553 + $0x7c8] sm:$0xff]
        %v8300 = vld [vmem:[%s553 + $0x7d0] sm:$0xff]
        %v8301 = vld [vmem:[%s553 + $0x7d8] sm:$0xff]
        %v8302 = vld [vmem:[%s553 + $0x7e0] sm:$0xff]
        %v8303 = vld [vmem:[%s553 + $0x7e8] sm:$0xff]
        %v8304 = vld [vmem:[%s553 + $0x7f0] sm:$0xff]
        %v8305 = vld [vmem:[%s553 + $0x7f8] sm:$0xff]
        %v8306 = vld [vmem:[%s562] sm:$0xff]
        %v8308 = vlaneseq
        %v8309 = vshrl.u32 %v8308, 7
        %v8310 = vsub.s32 0, %v8309
        %v8311 = vrot.slane %v8306, %v8310
        %v8312 = vlaneseq
        %v8313 = vshrl.u32 %v8312, 7
        %v8314 = vsub.s32 1, %v8313
        %v8315 = vrot.slane %v8306, %v8314
        %v8316 = vlaneseq
        %v8317 = vshrl.u32 %v8316, 7
        %v8318 = vsub.s32 2, %v8317
        %v8319 = vrot.slane %v8306, %v8318
        %v8320 = vlaneseq
        %v8321 = vshrl.u32 %v8320, 7
        %v8322 = vsub.s32 3, %v8321
        %v8323 = vrot.slane %v8306, %v8322
        %v8324 = vlaneseq
        %v8325 = vshrl.u32 %v8324, 7
        %v8326 = vsub.s32 4, %v8325
        %v8327 = vrot.slane %v8306, %v8326
        %v8328 = vlaneseq
        %v8329 = vshrl.u32 %v8328, 7
        %v8330 = vsub.s32 5, %v8329
        %v8331 = vrot.slane %v8306, %v8330
        %v8332 = vlaneseq
        %v8333 = vshrl.u32 %v8332, 7
        %v8334 = vsub.s32 6, %v8333
        %v8335 = vrot.slane %v8306, %v8334
        %v8336 = vlaneseq
        %v8337 = vshrl.u32 %v8336, 7
        %v8338 = vsub.s32 7, %v8337
        %v8339 = vrot.slane %v8306, %v8338
        %8348 = vmatprep.subr.mxu0 %v8171
        %8349 = vmatpush1.msra.mxu0 %v8170
        %8350 = vmatprep.subr.mxu0 %v8163
        %8351 = vmatpush1.msra.mxu0 %v8162
        %8352 = vmatprep.subr.mxu0 %v8155
        %8353 = vmatpush1.msra.mxu0 %v8154
        %8354 = vmatprep.subr.mxu0 %v8147
        %8355 = vmatpush1.msra.mxu0 %v8146
        %8356 = vmatprep.subr.mxu0 %v8139
        %8357 = vmatpush1.msra.mxu0 %v8138
        %8358 = vmatprep.subr.mxu0 %v8131
        %8359 = vmatpush1.msra.mxu0 %v8130
        %8360 = vmatprep.subr.mxu0 %v8123
        %8361 = vmatpush1.msra.mxu0 %v8122
        %8362 = vmatprep.subr.mxu0 %v8115
        %8363 = vmatpush1.msra.mxu0 %v8114
        %8364 = vmatprep.subr.mxu0 %v8107
        %8365 = vmatpush1.msra.mxu0 %v8106
        %8366 = vmatprep.subr.mxu0 %v8099
        %8367 = vmatpush1.msra.mxu0 %v8098
        %8368 = vmatprep.subr.mxu0 %v8091
        %8369 = vmatpush1.msra.mxu0 %v8090
        %8370 = vmatprep.subr.mxu0 %v8083
        %8371 = vmatpush1.msra.mxu0 %v8082
        %8372 = vmatprep.subr.mxu0 %v8075
        %8373 = vmatpush1.msra.mxu0 %v8074
        %8374 = vmatprep.subr.mxu0 %v8067
        %8375 = vmatpush1.msra.mxu0 %v8066
        %8376 = vmatprep.subr.mxu0 %v8059
        %8377 = vmatpush1.msra.mxu0 %v8058
        %8378 = vmatprep.subr.mxu0 %v8051
        %8379 = vmatpush1.msra.mxu0 %v8050
        %8380 = vmatprep.subr.mxu0 %v8299
        %8381 = vmatpush2.msra.mxu0 %v8298
        %8382 = vmatprep.subr.mxu0 %v8291
        %8383 = vmatpush2.msra.mxu0 %v8290
        %8384 = vmatprep.subr.mxu0 %v8283
        %8385 = vmatpush2.msra.mxu0 %v8282
        %8386 = vmatprep.subr.mxu0 %v8275
        %8387 = vmatpush2.msra.mxu0 %v8274
        %8388 = vmatprep.subr.mxu0 %v8267
        %8389 = vmatpush2.msra.mxu0 %v8266
        %8390 = vmatprep.subr.mxu0 %v8259
        %8391 = vmatpush2.msra.mxu0 %v8258
        %8392 = vmatprep.subr.mxu0 %v8251
        %8393 = vmatpush2.msra.mxu0 %v8250
        %8394 = vmatprep.subr.mxu0 %v8243
        %8395 = vmatpush2.msra.mxu0 %v8242
        %8396 = vmatprep.subr.mxu0 %v8235
        %8397 = vmatpush2.msra.mxu0 %v8234
        %8398 = vmatprep.subr.mxu0 %v8227
        %8399 = vmatpush2.msra.mxu0 %v8226
        %8400 = vmatprep.subr.mxu0 %v8219
        %8401 = vmatpush2.msra.mxu0 %v8218
        %8402 = vmatprep.subr.mxu0 %v8211
        %8403 = vmatpush2.msra.mxu0 %v8210
        %8404 = vmatprep.subr.mxu0 %v8203
        %8405 = vmatpush2.msra.mxu0 %v8202
        %8406 = vmatprep.subr.mxu0 %v8195
        %8407 = vmatpush2.msra.mxu0 %v8194
        %8408 = vmatprep.subr.mxu0 %v8187
        %8409 = vmatpush2.msra.mxu0 %v8186
        %8410 = vmatprep.subr.mxu0 %v8179
        %8411 = vmatpush2.msra.mxu0 %v8178
        %8412 = vmatprep.mubr.f32.mxu0 %v8035
        %8413 = vmatmul.mubr.f32.gmra.mxu0 %v8034
        %v8414 = vpop.f32.mrf.mxu0
        %v8415 = vadd.f32 %v8311, %v8414
        %v8416 = vpop.f32.mrf.mxu0
        %v8417 = vadd.f32 %v8315, %v8416
        %8418 = vmatprep.mubr.f32.mxu0 %v8037
        %8419 = vmatmul.mubr.f32.gmra.mxu0 %v8036
        %v8420 = vpop.f32.mrf.mxu0
        %v8421 = vadd.f32 %v8311, %v8420
        %v8422 = vpop.f32.mrf.mxu0
        %v8423 = vadd.f32 %v8315, %v8422
        %8424 = vmatprep.mubr.f32.mxu0 %v8039
        %8425 = vmatmul.mubr.f32.gmra.mxu0 %v8038
        %v8426 = vpop.f32.mrf.mxu0
        %v8427 = vadd.f32 %v8311, %v8426
        %v8428 = vpop.f32.mrf.mxu0
        %v8429 = vadd.f32 %v8315, %v8428
        %8430 = vmatprep.mubr.f32.mxu0 %v8041
        %8431 = vmatmul.mubr.f32.gmra.mxu0 %v8040
        %v8432 = vpop.f32.mrf.mxu0
        %v8433 = vadd.f32 %v8311, %v8432
        %v8434 = vpop.f32.mrf.mxu0
        %v8435 = vadd.f32 %v8315, %v8434
        %8436 = vmatprep.mubr.f32.mxu0 %v8043
        %8437 = vmatmul.mubr.f32.gmra.mxu0 %v8042
        %v8438 = vpop.f32.mrf.mxu0
        %v8439 = vadd.f32 %v8311, %v8438
        %v8440 = vpop.f32.mrf.mxu0
        %v8441 = vadd.f32 %v8315, %v8440
        %8442 = vmatprep.mubr.f32.mxu0 %v8045
        %8443 = vmatmul.mubr.f32.gmra.mxu0 %v8044
        %v8444 = vpop.f32.mrf.mxu0
        %v8445 = vadd.f32 %v8311, %v8444
        %v8446 = vpop.f32.mrf.mxu0
        %v8447 = vadd.f32 %v8315, %v8446
        %8448 = vmatprep.mubr.f32.mxu0 %v8047
        %8449 = vmatmul.mubr.f32.gmra.mxu0 %v8046
        %v8450 = vpop.f32.mrf.mxu0
        %v8451 = vadd.f32 %v8311, %v8450
        %v8452 = vpop.f32.mrf.mxu0
        %v8453 = vadd.f32 %v8315, %v8452
        %8454 = vmatprep.mubr.f32.mxu0 %v8049
        %8455 = vmatmul.mubr.f32.gmra.mxu0 %v8048
        %v8456 = vpop.f32.mrf.mxu0
        %v8457 = vadd.f32 %v8311, %v8456
        %v8458 = vpop.f32.mrf.mxu0
        %v8459 = vadd.f32 %v8315, %v8458
        %8460 = vdwg.mxu0
        %8461 = vmatprep.subr.mxu0 %v8173
        %8462 = vmatpush1.msra.mxu0 %v8172
        %8463 = vmatprep.subr.mxu0 %v8165
        %8464 = vmatpush1.msra.mxu0 %v8164
        %8465 = vmatprep.subr.mxu0 %v8157
        %8466 = vmatpush1.msra.mxu0 %v8156
        %8467 = vmatprep.subr.mxu0 %v8149
        %8468 = vmatpush1.msra.mxu0 %v8148
        %8469 = vmatprep.subr.mxu0 %v8141
        %8470 = vmatpush1.msra.mxu0 %v8140
        %8471 = vmatprep.subr.mxu0 %v8133
        %8472 = vmatpush1.msra.mxu0 %v8132
        %8473 = vmatprep.subr.mxu0 %v8125
        %8474 = vmatpush1.msra.mxu0 %v8124
        %8475 = vmatprep.subr.mxu0 %v8117
        %8476 = vmatpush1.msra.mxu0 %v8116
        %8477 = vmatprep.subr.mxu0 %v8109
        %8478 = vmatpush1.msra.mxu0 %v8108
        %8479 = vmatprep.subr.mxu0 %v8101
        %8480 = vmatpush1.msra.mxu0 %v8100
        %8481 = vmatprep.subr.mxu0 %v8093
        %8482 = vmatpush1.msra.mxu0 %v8092
        %8483 = vmatprep.subr.mxu0 %v8085
        %8484 = vmatpush1.msra.mxu0 %v8084
        %8485 = vmatprep.subr.mxu0 %v8077
        %8486 = vmatpush1.msra.mxu0 %v8076
        %8487 = vmatprep.subr.mxu0 %v8069
        %8488 = vmatpush1.msra.mxu0 %v8068
        %8489 = vmatprep.subr.mxu0 %v8061
        %8490 = vmatpush1.msra.mxu0 %v8060
        %8491 = vmatprep.subr.mxu0 %v8053
        %8492 = vmatpush1.msra.mxu0 %v8052
        %8493 = vmatprep.subr.mxu0 %v8301
        %8494 = vmatpush2.msra.mxu0 %v8300
        %8495 = vmatprep.subr.mxu0 %v8293
        %8496 = vmatpush2.msra.mxu0 %v8292
        %8497 = vmatprep.subr.mxu0 %v8285
        %8498 = vmatpush2.msra.mxu0 %v8284
        %8499 = vmatprep.subr.mxu0 %v8277
        %8500 = vmatpush2.msra.mxu0 %v8276
        %8501 = vmatprep.subr.mxu0 %v8269
        %8502 = vmatpush2.msra.mxu0 %v8268
        %8503 = vmatprep.subr.mxu0 %v8261
        %8504 = vmatpush2.msra.mxu0 %v8260
        %8505 = vmatprep.subr.mxu0 %v8253
        %8506 = vmatpush2.msra.mxu0 %v8252
        %8507 = vmatprep.subr.mxu0 %v8245
        %8508 = vmatpush2.msra.mxu0 %v8244
        %8509 = vmatprep.subr.mxu0 %v8237
        %8510 = vmatpush2.msra.mxu0 %v8236
        %8511 = vmatprep.subr.mxu0 %v8229
        %8512 = vmatpush2.msra.mxu0 %v8228
        %8513 = vmatprep.subr.mxu0 %v8221
        %8514 = vmatpush2.msra.mxu0 %v8220
        %8515 = vmatprep.subr.mxu0 %v8213
        %8516 = vmatpush2.msra.mxu0 %v8212
        %8517 = vmatprep.subr.mxu0 %v8205
        %8518 = vmatpush2.msra.mxu0 %v8204
        %8519 = vmatprep.subr.mxu0 %v8197
        %8520 = vmatpush2.msra.mxu0 %v8196
        %8521 = vmatprep.subr.mxu0 %v8189
        %8522 = vmatpush2.msra.mxu0 %v8188
        %8523 = vmatprep.subr.mxu0 %v8181
        %8524 = vmatpush2.msra.mxu0 %v8180
        %8525 = vmatprep.mubr.f32.mxu0 %v8035
        %8526 = vmatmul.mubr.f32.gmra.mxu0 %v8034
        %v8527 = vpop.f32.mrf.mxu0
        %v8528 = vadd.f32 %v8319, %v8527
        %v8529 = vpop.f32.mrf.mxu0
        %v8530 = vadd.f32 %v8323, %v8529
        %8531 = vmatprep.mubr.f32.mxu0 %v8037
        %8532 = vmatmul.mubr.f32.gmra.mxu0 %v8036
        %v8533 = vpop.f32.mrf.mxu0
        %v8534 = vadd.f32 %v8319, %v8533
        %v8535 = vpop.f32.mrf.mxu0
        %v8536 = vadd.f32 %v8323, %v8535
        %8537 = vmatprep.mubr.f32.mxu0 %v8039
        %8538 = vmatmul.mubr.f32.gmra.mxu0 %v8038
        %v8539 = vpop.f32.mrf.mxu0
        %v8540 = vadd.f32 %v8319, %v8539
        %v8541 = vpop.f32.mrf.mxu0
        %v8542 = vadd.f32 %v8323, %v8541
        %8543 = vmatprep.mubr.f32.mxu0 %v8041
        %8544 = vmatmul.mubr.f32.gmra.mxu0 %v8040
        %v8545 = vpop.f32.mrf.mxu0
        %v8546 = vadd.f32 %v8319, %v8545
        %v8547 = vpop.f32.mrf.mxu0
        %v8548 = vadd.f32 %v8323, %v8547
        %8549 = vmatprep.mubr.f32.mxu0 %v8043
        %8550 = vmatmul.mubr.f32.gmra.mxu0 %v8042
        %v8551 = vpop.f32.mrf.mxu0
        %v8552 = vadd.f32 %v8319, %v8551
        %v8553 = vpop.f32.mrf.mxu0
        %v8554 = vadd.f32 %v8323, %v8553
        %8555 = vmatprep.mubr.f32.mxu0 %v8045
        %8556 = vmatmul.mubr.f32.gmra.mxu0 %v8044
        %v8557 = vpop.f32.mrf.mxu0
        %v8558 = vadd.f32 %v8319, %v8557
        %v8559 = vpop.f32.mrf.mxu0
        %v8560 = vadd.f32 %v8323, %v8559
        %8561 = vmatprep.mubr.f32.mxu0 %v8047
        %8562 = vmatmul.mubr.f32.gmra.mxu0 %v8046
        %v8563 = vpop.f32.mrf.mxu0
        %v8564 = vadd.f32 %v8319, %v8563
        %v8565 = vpop.f32.mrf.mxu0
        %v8566 = vadd.f32 %v8323, %v8565
        %8567 = vmatprep.mubr.f32.mxu0 %v8049
        %8568 = vmatmul.mubr.f32.gmra.mxu0 %v8048
        %v8569 = vpop.f32.mrf.mxu0
        %v8570 = vadd.f32 %v8319, %v8569
        %v8571 = vpop.f32.mrf.mxu0
        %v8572 = vadd.f32 %v8323, %v8571
        %8573 = vdwg.mxu0
        %8574 = vmatprep.subr.mxu0 %v8175
        %8575 = vmatpush1.msra.mxu0 %v8174
        %8576 = vmatprep.subr.mxu0 %v8167
        %8577 = vmatpush1.msra.mxu0 %v8166
        %8578 = vmatprep.subr.mxu0 %v8159
        %8579 = vmatpush1.msra.mxu0 %v8158
        %8580 = vmatprep.subr.mxu0 %v8151
        %8581 = vmatpush1.msra.mxu0 %v8150
        %8582 = vmatprep.subr.mxu0 %v8143
        %8583 = vmatpush1.msra.mxu0 %v8142
        %8584 = vmatprep.subr.mxu0 %v8135
        %8585 = vmatpush1.msra.mxu0 %v8134
        %8586 = vmatprep.subr.mxu0 %v8127
        %8587 = vmatpush1.msra.mxu0 %v8126
        %8588 = vmatprep.subr.mxu0 %v8119
        %8589 = vmatpush1.msra.mxu0 %v8118
        %8590 = vmatprep.subr.mxu0 %v8111
        %8591 = vmatpush1.msra.mxu0 %v8110
        %8592 = vmatprep.subr.mxu0 %v8103
        %8593 = vmatpush1.msra.mxu0 %v8102
        %8594 = vmatprep.subr.mxu0 %v8095
        %8595 = vmatpush1.msra.mxu0 %v8094
        %8596 = vmatprep.subr.mxu0 %v8087
        %8597 = vmatpush1.msra.mxu0 %v8086
        %8598 = vmatprep.subr.mxu0 %v8079
        %8599 = vmatpush1.msra.mxu0 %v8078
        %8600 = vmatprep.subr.mxu0 %v8071
        %8601 = vmatpush1.msra.mxu0 %v8070
        %8602 = vmatprep.subr.mxu0 %v8063
        %8603 = vmatpush1.msra.mxu0 %v8062
        %8604 = vmatprep.subr.mxu0 %v8055
        %8605 = vmatpush1.msra.mxu0 %v8054
        %8606 = vmatprep.subr.mxu0 %v8303
        %8607 = vmatpush2.msra.mxu0 %v8302
        %8608 = vmatprep.subr.mxu0 %v8295
        %8609 = vmatpush2.msra.mxu0 %v8294
        %8610 = vmatprep.subr.mxu0 %v8287
        %8611 = vmatpush2.msra.mxu0 %v8286
        %8612 = vmatprep.subr.mxu0 %v8279
        %8613 = vmatpush2.msra.mxu0 %v8278
        %8614 = vmatprep.subr.mxu0 %v8271
        %8615 = vmatpush2.msra.mxu0 %v8270
        %8616 = vmatprep.subr.mxu0 %v8263
        %8617 = vmatpush2.msra.mxu0 %v8262
        %8618 = vmatprep.subr.mxu0 %v8255
        %8619 = vmatpush2.msra.mxu0 %v8254
        %8620 = vmatprep.subr.mxu0 %v8247
        %8621 = vmatpush2.msra.mxu0 %v8246
        %8622 = vmatprep.subr.mxu0 %v8239
        %8623 = vmatpush2.msra.mxu0 %v8238
        %8624 = vmatprep.subr.mxu0 %v8231
        %8625 = vmatpush2.msra.mxu0 %v8230
        %8626 = vmatprep.subr.mxu0 %v8223
        %8627 = vmatpush2.msra.mxu0 %v8222
        %8628 = vmatprep.subr.mxu0 %v8215
        %8629 = vmatpush2.msra.mxu0 %v8214
        %8630 = vmatprep.subr.mxu0 %v8207
        %8631 = vmatpush2.msra.mxu0 %v8206
        %8632 = vmatprep.subr.mxu0 %v8199
        %8633 = vmatpush2.msra.mxu0 %v8198
        %8634 = vmatprep.subr.mxu0 %v8191
        %8635 = vmatpush2.msra.mxu0 %v8190
        %8636 = vmatprep.subr.mxu0 %v8183
        %8637 = vmatpush2.msra.mxu0 %v8182
        %8638 = vmatprep.mubr.f32.mxu0 %v8035
        %8639 = vmatmul.mubr.f32.gmra.mxu0 %v8034
        %v8640 = vpop.f32.mrf.mxu0
        %v8641 = vadd.f32 %v8327, %v8640
        %v8642 = vpop.f32.mrf.mxu0
        %v8643 = vadd.f32 %v8331, %v8642
        %8644 = vmatprep.mubr.f32.mxu0 %v8037
        %8645 = vmatmul.mubr.f32.gmra.mxu0 %v8036
        %v8646 = vpop.f32.mrf.mxu0
        %v8647 = vadd.f32 %v8327, %v8646
        %v8648 = vpop.f32.mrf.mxu0
        %v8649 = vadd.f32 %v8331, %v8648
        %8650 = vmatprep.mubr.f32.mxu0 %v8039
        %8651 = vmatmul.mubr.f32.gmra.mxu0 %v8038
        %v8652 = vpop.f32.mrf.mxu0
        %v8653 = vadd.f32 %v8327, %v8652
        %v8654 = vpop.f32.mrf.mxu0
        %v8655 = vadd.f32 %v8331, %v8654
        %8656 = vmatprep.mubr.f32.mxu0 %v8041
        %8657 = vmatmul.mubr.f32.gmra.mxu0 %v8040
        %v8658 = vpop.f32.mrf.mxu0
        %v8659 = vadd.f32 %v8327, %v8658
        %v8660 = vpop.f32.mrf.mxu0
        %v8661 = vadd.f32 %v8331, %v8660
        %8662 = vmatprep.mubr.f32.mxu0 %v8043
        %8663 = vmatmul.mubr.f32.gmra.mxu0 %v8042
        %v8664 = vpop.f32.mrf.mxu0
        %v8665 = vadd.f32 %v8327, %v8664
        %v8666 = vpop.f32.mrf.mxu0
        %v8667 = vadd.f32 %v8331, %v8666
        %8668 = vmatprep.mubr.f32.mxu0 %v8045
        %8669 = vmatmul.mubr.f32.gmra.mxu0 %v8044
        %v8670 = vpop.f32.mrf.mxu0
        %v8671 = vadd.f32 %v8327, %v8670
        %v8672 = vpop.f32.mrf.mxu0
        %v8673 = vadd.f32 %v8331, %v8672
        %8674 = vmatprep.mubr.f32.mxu0 %v8047
        %8675 = vmatmul.mubr.f32.gmra.mxu0 %v8046
        %v8676 = vpop.f32.mrf.mxu0
        %v8677 = vadd.f32 %v8327, %v8676
        %v8678 = vpop.f32.mrf.mxu0
        %v8679 = vadd.f32 %v8331, %v8678
        %8680 = vmatprep.mubr.f32.mxu0 %v8049
        %8681 = vmatmul.mubr.f32.gmra.mxu0 %v8048
        %v8682 = vpop.f32.mrf.mxu0
        %v8683 = vadd.f32 %v8327, %v8682
        %v8684 = vpop.f32.mrf.mxu0
        %v8685 = vadd.f32 %v8331, %v8684
        %8686 = vdwg.mxu0
        %8687 = vmatprep.subr.mxu0 %v8177
        %8688 = vmatpush1.msra.mxu0 %v8176
        %8689 = vmatprep.subr.mxu0 %v8169
        %8690 = vmatpush1.msra.mxu0 %v8168
        %8691 = vmatprep.subr.mxu0 %v8161
        %8692 = vmatpush1.msra.mxu0 %v8160
        %8693 = vmatprep.subr.mxu0 %v8153
        %8694 = vmatpush1.msra.mxu0 %v8152
        %8695 = vmatprep.subr.mxu0 %v8145
        %8696 = vmatpush1.msra.mxu0 %v8144
        %8697 = vmatprep.subr.mxu0 %v8137
        %8698 = vmatpush1.msra.mxu0 %v8136
        %8699 = vmatprep.subr.mxu0 %v8129
        %8700 = vmatpush1.msra.mxu0 %v8128
        %8701 = vmatprep.subr.mxu0 %v8121
        %8702 = vmatpush1.msra.mxu0 %v8120
        %8703 = vmatprep.subr.mxu0 %v8113
        %8704 = vmatpush1.msra.mxu0 %v8112
        %8705 = vmatprep.subr.mxu0 %v8105
        %8706 = vmatpush1.msra.mxu0 %v8104
        %8707 = vmatprep.subr.mxu0 %v8097
        %8708 = vmatpush1.msra.mxu0 %v8096
        %8709 = vmatprep.subr.mxu0 %v8089
        %8710 = vmatpush1.msra.mxu0 %v8088
        %8711 = vmatprep.subr.mxu0 %v8081
        %8712 = vmatpush1.msra.mxu0 %v8080
        %8713 = vmatprep.subr.mxu0 %v8073
        %8714 = vmatpush1.msra.mxu0 %v8072
        %8715 = vmatprep.subr.mxu0 %v8065
        %8716 = vmatpush1.msra.mxu0 %v8064
        %8717 = vmatprep.subr.mxu0 %v8057
        %8718 = vmatpush1.msra.mxu0 %v8056
        %8719 = vmatprep.subr.mxu0 %v8305
        %8720 = vmatpush2.msra.mxu0 %v8304
        %8721 = vmatprep.subr.mxu0 %v8297
        %8722 = vmatpush2.msra.mxu0 %v8296
        %8723 = vmatprep.subr.mxu0 %v8289
        %8724 = vmatpush2.msra.mxu0 %v8288
        %8725 = vmatprep.subr.mxu0 %v8281
        %8726 = vmatpush2.msra.mxu0 %v8280
        %8727 = vmatprep.subr.mxu0 %v8273
        %8728 = vmatpush2.msra.mxu0 %v8272
        %8729 = vmatprep.subr.mxu0 %v8265
        %8730 = vmatpush2.msra.mxu0 %v8264
        %8731 = vmatprep.subr.mxu0 %v8257
        %8732 = vmatpush2.msra.mxu0 %v8256
        %8733 = vmatprep.subr.mxu0 %v8249
        %8734 = vmatpush2.msra.mxu0 %v8248
        %8735 = vmatprep.subr.mxu0 %v8241
        %8736 = vmatpush2.msra.mxu0 %v8240
        %8737 = vmatprep.subr.mxu0 %v8233
        %8738 = vmatpush2.msra.mxu0 %v8232
        %8739 = vmatprep.subr.mxu0 %v8225
        %8740 = vmatpush2.msra.mxu0 %v8224
        %8741 = vmatprep.subr.mxu0 %v8217
        %8742 = vmatpush2.msra.mxu0 %v8216
        %8743 = vmatprep.subr.mxu0 %v8209
        %8744 = vmatpush2.msra.mxu0 %v8208
        %8745 = vmatprep.subr.mxu0 %v8201
        %8746 = vmatpush2.msra.mxu0 %v8200
        %8747 = vmatprep.subr.mxu0 %v8193
        %8748 = vmatpush2.msra.mxu0 %v8192
        %8749 = vmatprep.subr.mxu0 %v8185
        %8750 = vmatpush2.msra.mxu0 %v8184
        %8751 = vmatprep.mubr.f32.mxu0 %v8035
        %8752 = vmatmul.mubr.f32.gmra.mxu0 %v8034
        %v8753 = vpop.f32.mrf.mxu0
        %v8754 = vadd.f32 %v8335, %v8753
        %v8755 = vpop.f32.mrf.mxu0
        %v8756 = vadd.f32 %v8339, %v8755
        %8757 = vmatprep.mubr.f32.mxu0 %v8037
        %8758 = vmatmul.mubr.f32.gmra.mxu0 %v8036
        %v8759 = vpop.f32.mrf.mxu0
        %v8760 = vadd.f32 %v8335, %v8759
        %v8761 = vpop.f32.mrf.mxu0
        %v8762 = vadd.f32 %v8339, %v8761
        %8763 = vmatprep.mubr.f32.mxu0 %v8039
        %8764 = vmatmul.mubr.f32.gmra.mxu0 %v8038
        %v8765 = vpop.f32.mrf.mxu0
        %v8766 = vadd.f32 %v8335, %v8765
        %v8767 = vpop.f32.mrf.mxu0
        %v8768 = vadd.f32 %v8339, %v8767
        %8769 = vmatprep.mubr.f32.mxu0 %v8041
        %8770 = vmatmul.mubr.f32.gmra.mxu0 %v8040
        %v8771 = vpop.f32.mrf.mxu0
        %v8772 = vadd.f32 %v8335, %v8771
        %v8773 = vpop.f32.mrf.mxu0
        %v8774 = vadd.f32 %v8339, %v8773
        %8775 = vmatprep.mubr.f32.mxu0 %v8043
        %8776 = vmatmul.mubr.f32.gmra.mxu0 %v8042
        %v8777 = vpop.f32.mrf.mxu0
        %v8778 = vadd.f32 %v8335, %v8777
        %v8779 = vpop.f32.mrf.mxu0
        %v8780 = vadd.f32 %v8339, %v8779
        %8781 = vmatprep.mubr.f32.mxu0 %v8045
        %8782 = vmatmul.mubr.f32.gmra.mxu0 %v8044
        %v8783 = vpop.f32.mrf.mxu0
        %v8784 = vadd.f32 %v8335, %v8783
        %v8785 = vpop.f32.mrf.mxu0
        %v8786 = vadd.f32 %v8339, %v8785
        %8787 = vmatprep.mubr.f32.mxu0 %v8047
        %8788 = vmatmul.mubr.f32.gmra.mxu0 %v8046
        %v8789 = vpop.f32.mrf.mxu0
        %v8790 = vadd.f32 %v8335, %v8789
        %v8791 = vpop.f32.mrf.mxu0
        %v8792 = vadd.f32 %v8339, %v8791
        %8793 = vmatprep.mubr.f32.mxu0 %v8049
        %8794 = vmatmul.mubr.f32.gmra.mxu0 %v8048
        %v8795 = vpop.f32.mrf.mxu0
        %v8796 = vadd.f32 %v8335, %v8795
        %v8797 = vpop.f32.mrf.mxu0
        %v8798 = vadd.f32 %v8339, %v8797
        %8799 = vdwg.mxu0
        %8800 = vst [vmem:[%s608] sm:$0xff] %v8415
        %8801 = vst [vmem:[%s608 + $0x8] sm:$0xff] %v8417
        %8802 = vst [vmem:[%s608 + $0x10] sm:$0xff] %v8528
        %8803 = vst [vmem:[%s608 + $0x18] sm:$0xff] %v8530
        %8804 = vst [vmem:[%s608 + $0x20] sm:$0xff] %v8641
        %8805 = vst [vmem:[%s608 + $0x28] sm:$0xff] %v8643
        %8806 = vst [vmem:[%s608 + $0x30] sm:$0xff] %v8754
        %8807 = vst [vmem:[%s608 + $0x38] sm:$0xff] %v8756
        %8808 = vst [vmem:[%s608 + $0x40] sm:$0xff] %v8421
        %8809 = vst [vmem:[%s608 + $0x48] sm:$0xff] %v8423
        %8810 = vst [vmem:[%s608 + $0x50] sm:$0xff] %v8534
        %8811 = vst [vmem:[%s608 + $0x58] sm:$0xff] %v8536
        %8812 = vst [vmem:[%s608 + $0x60] sm:$0xff] %v8647
        %8813 = vst [vmem:[%s608 + $0x68] sm:$0xff] %v8649
        %8814 = vst [vmem:[%s608 + $0x70] sm:$0xff] %v8760
        %8815 = vst [vmem:[%s608 + $0x78] sm:$0xff] %v8762
        %8816 = vst [vmem:[%s608 + $0x80] sm:$0xff] %v8427
        %8817 = vst [vmem:[%s608 + $0x88] sm:$0xff] %v8429
        %8818 = vst [vmem:[%s608 + $0x90] sm:$0xff] %v8540
        %8819 = vst [vmem:[%s608 + $0x98] sm:$0xff] %v8542
        %8820 = vst [vmem:[%s608 + $0xa0] sm:$0xff] %v8653
        %8821 = vst [vmem:[%s608 + $0xa8] sm:$0xff] %v8655
        %8822 = vst [vmem:[%s608 + $0xb0] sm:$0xff] %v8766
        %8823 = vst [vmem:[%s608 + $0xb8] sm:$0xff] %v8768
        %8824 = vst [vmem:[%s608 + $0xc0] sm:$0xff] %v8433
        %8825 = vst [vmem:[%s608 + $0xc8] sm:$0xff] %v8435
        %8826 = vst [vmem:[%s608 + $0xd0] sm:$0xff] %v8546
        %8827 = vst [vmem:[%s608 + $0xd8] sm:$0xff] %v8548
        %8828 = vst [vmem:[%s608 + $0xe0] sm:$0xff] %v8659
        %8829 = vst [vmem:[%s608 + $0xe8] sm:$0xff] %v8661
        %8830 = vst [vmem:[%s608 + $0xf0] sm:$0xff] %v8772
        %8831 = vst [vmem:[%s608 + $0xf8] sm:$0xff] %v8774
        %8832 = vst [vmem:[%s608 + $0x100] sm:$0xff] %v8439
        %8833 = vst [vmem:[%s608 + $0x108] sm:$0xff] %v8441
        %8834 = vst [vmem:[%s608 + $0x110] sm:$0xff] %v8552
        %8835 = vst [vmem:[%s608 + $0x118] sm:$0xff] %v8554
        %8836 = vst [vmem:[%s608 + $0x120] sm:$0xff] %v8665
        %8837 = vst [vmem:[%s608 + $0x128] sm:$0xff] %v8667
        %8838 = vst [vmem:[%s608 + $0x130] sm:$0xff] %v8778
        %8839 = vst [vmem:[%s608 + $0x138] sm:$0xff] %v8780
        %8840 = vst [vmem:[%s608 + $0x140] sm:$0xff] %v8445
        %8841 = vst [vmem:[%s608 + $0x148] sm:$0xff] %v8447
        %8842 = vst [vmem:[%s608 + $0x150] sm:$0xff] %v8558
        %8843 = vst [vmem:[%s608 + $0x158] sm:$0xff] %v8560
        %8844 = vst [vmem:[%s608 + $0x160] sm:$0xff] %v8671
        %8845 = vst [vmem:[%s608 + $0x168] sm:$0xff] %v8673
        %8846 = vst [vmem:[%s608 + $0x170] sm:$0xff] %v8784
        %8847 = vst [vmem:[%s608 + $0x178] sm:$0xff] %v8786
        %8848 = vst [vmem:[%s608 + $0x180] sm:$0xff] %v8451
        %8849 = vst [vmem:[%s608 + $0x188] sm:$0xff] %v8453
        %8850 = vst [vmem:[%s608 + $0x190] sm:$0xff] %v8564
        %8851 = vst [vmem:[%s608 + $0x198] sm:$0xff] %v8566
        %8852 = vst [vmem:[%s608 + $0x1a0] sm:$0xff] %v8677
        %8853 = vst [vmem:[%s608 + $0x1a8] sm:$0xff] %v8679
        %8854 = vst [vmem:[%s608 + $0x1b0] sm:$0xff] %v8790
        %8855 = vst [vmem:[%s608 + $0x1b8] sm:$0xff] %v8792
        %8856 = vst [vmem:[%s608 + $0x1c0] sm:$0xff] %v8457
        %8857 = vst [vmem:[%s608 + $0x1c8] sm:$0xff] %v8459
        %8858 = vst [vmem:[%s608 + $0x1d0] sm:$0xff] %v8570
        %8859 = vst [vmem:[%s608 + $0x1d8] sm:$0xff] %v8572
        %8860 = vst [vmem:[%s608 + $0x1e0] sm:$0xff] %v8683
        %8861 = vst [vmem:[%s608 + $0x1e8] sm:$0xff] %v8685
        %8862 = vst [vmem:[%s608 + $0x1f0] sm:$0xff] %v8796
        %8863 = vst [vmem:[%s608 + $0x1f8] sm:$0xff] %v8798
        %s8864 = sand.u32 %s323, 1
        %s8865 = sand.u32 %s323, 1
        %s8866 = smul.addr %s8865, 512
        %s8867 = scalar_lea.vmem [#allocation20], %s8866
        // Predicated region
        $region121: #{maskcorr_forward.1} parent=71 // pred_check
          %p8868 = pneg %p333
        $region122: #{maskcorr_forward.1} parent=71 // pred_check_branch
          %8870 = sbr.rel (%p8868) target = $region124
        $region123: #{maskcorr_forward.1} parent=71 // pred_region
          %s8871 = smul.u32 8, %s32
          %s8872 = smul.addr %s8871, 8
          %s8873 = scalar_lea.vmem %s13, %s8872
          // Predicated region
          $region125: #{maskcorr_forward.1} parent=123 // pred_check
            _
          $region126: #{maskcorr_forward.1} parent=123 // pred_check_branch
            %8875 = sbr.rel (0) target = $region128
          $region127: #{maskcorr_forward.1} parent=123 // pred_region
            // Predicated region
            $region129: #{maskcorr_forward.1} parent=127 // pred_check
              _
            $region130: #{maskcorr_forward.1} parent=127 // pred_check_branch
              %8877 = sbr.rel (0) target = $region132
            $region131: #{maskcorr_forward.1} parent=127 // pred_region
              loop: start=0, step=1, limit=1
              $region133: #{maskcorr_forward.1} parent=131 // loop_pre_header
                _
              $region134: #{maskcorr_forward.1} parent=131 // loop_header
                %s8879 = sphi 0, %s8883
                %p8880 = scmp.ge.s32.totalorder %s8879, 1
                %s8884 = sphi %s8867, %s8867
                %s8885 = sphi %s8873, %s8873
              $region135: #{maskcorr_forward.1} parent=131 // loop_header_branch
                %8882 = sbr.rel (%p8880) target = $region139
              $region136: #{maskcorr_forward.1} parent=131 // loop_body
                %v8886 = vld [vmem:[%s8884] sm:$0xff]
                %8887 = vst [vmem:[%s8885] sm:$0xff] %v8886
                %v8888 = vld [vmem:[%s8884 + $0x8] sm:$0xff]
                %8889 = vst [vmem:[%s8885 + $0x8] sm:$0xff] %v8888
                %v8890 = vld [vmem:[%s8884 + $0x10] sm:$0xff]
                %8891 = vst [vmem:[%s8885 + $0x10] sm:$0xff] %v8890
                %v8892 = vld [vmem:[%s8884 + $0x18] sm:$0xff]
                %8893 = vst [vmem:[%s8885 + $0x18] sm:$0xff] %v8892
                %v8894 = vld [vmem:[%s8884 + $0x20] sm:$0xff]
                %8895 = vst [vmem:[%s8885 + $0x20] sm:$0xff] %v8894
                %v8896 = vld [vmem:[%s8884 + $0x28] sm:$0xff]
                %8897 = vst [vmem:[%s8885 + $0x28] sm:$0xff] %v8896
                %v8898 = vld [vmem:[%s8884 + $0x30] sm:$0xff]
                %8899 = vst [vmem:[%s8885 + $0x30] sm:$0xff] %v8898
                %v8900 = vld [vmem:[%s8884 + $0x38] sm:$0xff]
                %8901 = vst [vmem:[%s8885 + $0x38] sm:$0xff] %v8900
                %v8902 = vld [vmem:[%s8884 + $0x40] sm:$0xff]
                %8903 = vst [vmem:[%s8885 + $0x100] sm:$0xff] %v8902
                %v8904 = vld [vmem:[%s8884 + $0x48] sm:$0xff]
                %8905 = vst [vmem:[%s8885 + $0x108] sm:$0xff] %v8904
                %v8906 = vld [vmem:[%s8884 + $0x50] sm:$0xff]
                %8907 = vst [vmem:[%s8885 + $0x110] sm:$0xff] %v8906
                %v8908 = vld [vmem:[%s8884 + $0x58] sm:$0xff]
                %8909 = vst [vmem:[%s8885 + $0x118] sm:$0xff] %v8908
                %v8910 = vld [vmem:[%s8884 + $0x60] sm:$0xff]
                %8911 = vst [vmem:[%s8885 + $0x120] sm:$0xff] %v8910
                %v8912 = vld [vmem:[%s8884 + $0x68] sm:$0xff]
                %8913 = vst [vmem:[%s8885 + $0x128] sm:$0xff] %v8912
                %v8914 = vld [vmem:[%s8884 + $0x70] sm:$0xff]
                %8915 = vst [vmem:[%s8885 + $0x130] sm:$0xff] %v8914
                %v8916 = vld [vmem:[%s8884 + $0x78] sm:$0xff]
                %8917 = vst [vmem:[%s8885 + $0x138] sm:$0xff] %v8916
                %v8918 = vld [vmem:[%s8884 + $0x80] sm:$0xff]
                %8919 = vst [vmem:[%s8885 + $0x200] sm:$0xff] %v8918
                %v8920 = vld [vmem:[%s8884 + $0x88] sm:$0xff]
                %8921 = vst [vmem:[%s8885 + $0x208] sm:$0xff] %v8920
                %v8922 = vld [vmem:[%s8884 + $0x90] sm:$0xff]
                %8923 = vst [vmem:[%s8885 + $0x210] sm:$0xff] %v8922
                %v8924 = vld [vmem:[%s8884 + $0x98] sm:$0xff]
                %8925 = vst [vmem:[%s8885 + $0x218] sm:$0xff] %v8924
                %v8926 = vld [vmem:[%s8884 + $0xa0] sm:$0xff]
                %8927 = vst [vmem:[%s8885 + $0x220] sm:$0xff] %v8926
                %v8928 = vld [vmem:[%s8884 + $0xa8] sm:$0xff]
                %8929 = vst [vmem:[%s8885 + $0x228] sm:$0xff] %v8928
                %v8930 = vld [vmem:[%s8884 + $0xb0] sm:$0xff]
                %8931 = vst [vmem:[%s8885 + $0x230] sm:$0xff] %v8930
                %v8932 = vld [vmem:[%s8884 + $0xb8] sm:$0xff]
                %8933 = vst [vmem:[%s8885 + $0x238] sm:$0xff] %v8932
                %v8934 = vld [vmem:[%s8884 + $0xc0] sm:$0xff]
                %8935 = vst [vmem:[%s8885 + $0x300] sm:$0xff] %v8934
                %v8936 = vld [vmem:[%s8884 + $0xc8] sm:$0xff]
                %8937 = vst [vmem:[%s8885 + $0x308] sm:$0xff] %v8936
                %v8938 = vld [vmem:[%s8884 + $0xd0] sm:$0xff]
                %8939 = vst [vmem:[%s8885 + $0x310] sm:$0xff] %v8938
                %v8940 = vld [vmem:[%s8884 + $0xd8] sm:$0xff]
                %8941 = vst [vmem:[%s8885 + $0x318] sm:$0xff] %v8940
                %v8942 = vld [vmem:[%s8884 + $0xe0] sm:$0xff]
                %8943 = vst [vmem:[%s8885 + $0x320] sm:$0xff] %v8942
                %v8944 = vld [vmem:[%s8884 + $0xe8] sm:$0xff]
                %8945 = vst [vmem:[%s8885 + $0x328] sm:$0xff] %v8944
                %v8946 = vld [vmem:[%s8884 + $0xf0] sm:$0xff]
                %8947 = vst [vmem:[%s8885 + $0x330] sm:$0xff] %v8946
                %v8948 = vld [vmem:[%s8884 + $0xf8] sm:$0xff]
                %8949 = vst [vmem:[%s8885 + $0x338] sm:$0xff] %v8948
                %v8950 = vld [vmem:[%s8884 + $0x100] sm:$0xff]
                %8951 = vst [vmem:[%s8885 + $0x400] sm:$0xff] %v8950
                %v8952 = vld [vmem:[%s8884 + $0x108] sm:$0xff]
                %8953 = vst [vmem:[%s8885 + $0x408] sm:$0xff] %v8952
                %v8954 = vld [vmem:[%s8884 + $0x110] sm:$0xff]
                %8955 = vst [vmem:[%s8885 + $0x410] sm:$0xff] %v8954
                %v8956 = vld [vmem:[%s8884 + $0x118] sm:$0xff]
                %8957 = vst [vmem:[%s8885 + $0x418] sm:$0xff] %v8956
                %v8958 = vld [vmem:[%s8884 + $0x120] sm:$0xff]
                %8959 = vst [vmem:[%s8885 + $0x420] sm:$0xff] %v8958
                %v8960 = vld [vmem:[%s8884 + $0x128] sm:$0xff]
                %8961 = vst [vmem:[%s8885 + $0x428] sm:$0xff] %v8960
                %v8962 = vld [vmem:[%s8884 + $0x130] sm:$0xff]
                %8963 = vst [vmem:[%s8885 + $0x430] sm:$0xff] %v8962
                %v8964 = vld [vmem:[%s8884 + $0x138] sm:$0xff]
                %8965 = vst [vmem:[%s8885 + $0x438] sm:$0xff] %v8964
                %v8966 = vld [vmem:[%s8884 + $0x140] sm:$0xff]
                %8967 = vst [vmem:[%s8885 + $0x500] sm:$0xff] %v8966
                %v8968 = vld [vmem:[%s8884 + $0x148] sm:$0xff]
                %8969 = vst [vmem:[%s8885 + $0x508] sm:$0xff] %v8968
                %v8970 = vld [vmem:[%s8884 + $0x150] sm:$0xff]
                %8971 = vst [vmem:[%s8885 + $0x510] sm:$0xff] %v8970
                %v8972 = vld [vmem:[%s8884 + $0x158] sm:$0xff]
                %8973 = vst [vmem:[%s8885 + $0x518] sm:$0xff] %v8972
                %v8974 = vld [vmem:[%s8884 + $0x160] sm:$0xff]
                %8975 = vst [vmem:[%s8885 + $0x520] sm:$0xff] %v8974
                %v8976 = vld [vmem:[%s8884 + $0x168] sm:$0xff]
                %8977 = vst [vmem:[%s8885 + $0x528] sm:$0xff] %v8976
                %v8978 = vld [vmem:[%s8884 + $0x170] sm:$0xff]
                %8979 = vst [vmem:[%s8885 + $0x530] sm:$0xff] %v8978
                %v8980 = vld [vmem:[%s8884 + $0x178] sm:$0xff]
                %8981 = vst [vmem:[%s8885 + $0x538] sm:$0xff] %v8980
                %v8982 = vld [vmem:[%s8884 + $0x180] sm:$0xff]
                %8983 = vst [vmem:[%s8885 + $0x600] sm:$0xff] %v8982
                %v8984 = vld [vmem:[%s8884 + $0x188] sm:$0xff]
                %8985 = vst [vmem:[%s8885 + $0x608] sm:$0xff] %v8984
                %v8986 = vld [vmem:[%s8884 + $0x190] sm:$0xff]
                %8987 = vst [vmem:[%s8885 + $0x610] sm:$0xff] %v8986
                %v8988 = vld [vmem:[%s8884 + $0x198] sm:$0xff]
                %8989 = vst [vmem:[%s8885 + $0x618] sm:$0xff] %v8988
                %v8990 = vld [vmem:[%s8884 + $0x1a0] sm:$0xff]
                %8991 = vst [vmem:[%s8885 + $0x620] sm:$0xff] %v8990
                %v8992 = vld [vmem:[%s8884 + $0x1a8] sm:$0xff]
                %8993 = vst [vmem:[%s8885 + $0x628] sm:$0xff] %v8992
                %v8994 = vld [vmem:[%s8884 + $0x1b0] sm:$0xff]
                %8995 = vst [vmem:[%s8885 + $0x630] sm:$0xff] %v8994
                %v8996 = vld [vmem:[%s8884 + $0x1b8] sm:$0xff]
                %8997 = vst [vmem:[%s8885 + $0x638] sm:$0xff] %v8996
                %v8998 = vld [vmem:[%s8884 + $0x1c0] sm:$0xff]
                %8999 = vst [vmem:[%s8885 + $0x700] sm:$0xff] %v8998
                %v9000 = vld [vmem:[%s8884 + $0x1c8] sm:$0xff]
                %9001 = vst [vmem:[%s8885 + $0x708] sm:$0xff] %v9000
                %v9002 = vld [vmem:[%s8884 + $0x1d0] sm:$0xff]
                %9003 = vst [vmem:[%s8885 + $0x710] sm:$0xff] %v9002
                %v9004 = vld [vmem:[%s8884 + $0x1d8] sm:$0xff]
                %9005 = vst [vmem:[%s8885 + $0x718] sm:$0xff] %v9004
                %v9006 = vld [vmem:[%s8884 + $0x1e0] sm:$0xff]
                %9007 = vst [vmem:[%s8885 + $0x720] sm:$0xff] %v9006
                %v9008 = vld [vmem:[%s8884 + $0x1e8] sm:$0xff]
                %9009 = vst [vmem:[%s8885 + $0x728] sm:$0xff] %v9008
                %v9010 = vld [vmem:[%s8884 + $0x1f0] sm:$0xff]
                %9011 = vst [vmem:[%s8885 + $0x730] sm:$0xff] %v9010
                %v9012 = vld [vmem:[%s8884 + $0x1f8] sm:$0xff]
                %9013 = vst [vmem:[%s8885 + $0x738] sm:$0xff] %v9012
              $region137: #{maskcorr_forward.1} parent=131 // loop_footer
                %s8883 = sadd.s32 1, %s8879
              $region138: #{maskcorr_forward.1} parent=131 // loop_footer_branch
                %8878 = sbr.rel target = $region134
              $region139: #{maskcorr_forward.1} parent=131 // loop_exit
                _
            $region132: #{maskcorr_forward.1} parent=127 // pred_fallthru
              _
            // Predicated region
            $region140: #{maskcorr_forward.1} parent=127 // pred_check
              _
            $region141: #{maskcorr_forward.1} parent=127 // pred_check_branch
              %9015 = sbr.rel target = $region143
            $region142: #{maskcorr_forward.1} parent=127 // pred_region
              _
            $region143: #{maskcorr_forward.1} parent=127 // pred_fallthru
              _
          $region128: #{maskcorr_forward.1} parent=123 // pred_fallthru
            _
          %9016 = vnop
        $region124: #{maskcorr_forward.1} parent=71 // pred_fallthru
          _
      $region72: #{maskcorr_forward.1} parent=5 // pred_fallthru
        _
      %p9017 = scmp.le.s32.totalorder 2, %s27
      // Predicated region
      $region144: #{maskcorr_forward.1} parent=5 // pred_check
        %p9018 = pneg %p9017
      $region145: #{maskcorr_forward.1} parent=5 // pred_check_branch
        %9020 = sbr.rel (%p9018) target = $region147
      $region146: #{maskcorr_forward.1} parent=5 // pred_region
        %s9021 = ssub.s32 %s27, 2
        // Predicated region
        $region148: #{maskcorr_forward.1} parent=146 // pred_check
          %p9022 = pneg %p339
        $region149: #{maskcorr_forward.1} parent=146 // pred_check_branch
          %9024 = sbr.rel (%p9022) target = $region151
        $region150: #{maskcorr_forward.1} parent=146 // pred_region
          %s9025 = sand.u32 %s324, 1
          %s9026 = sand.u32 %s324, 1
          %s9027 = smul.addr %s9026, 512
          %s9028 = scalar_lea.vmem [#allocation20], %s9027
        $region151: #{maskcorr_forward.1} parent=146 // pred_fallthru
          _
      $region147: #{maskcorr_forward.1} parent=5 // pred_fallthru
        _
    $region6: #{maskcorr_forward.1} parent=1 // loop_footer
      %s31 = sadd.s32 1, %s27
    $region7: #{maskcorr_forward.1} parent=1 // loop_footer_branch
      %26 = sbr.rel target = $region3
    $region8: #{maskcorr_forward.1} parent=1 // loop_exit
      _
    %9029 = vsyncpa [#allocation4], 1
    %s9030 = scalar_lea.sflag [#allocation4], 1
    %9031 = vsyncpa %s9030, 1
    %9032 = vsyncpa [#allocation6], 1
    %9033 = vsyncpa [#allocation9], 1
    %9034 = vsyncpa [#allocation12], 1
    %9035 = vsyncpa [#allocation15], 1
    %9036 = vsyncpa [#allocation18], 1
    %s9037 = scalar_lea.sflag [#allocation18], 1
    %9038 = vsyncpa %s9037, 1

</llo_original>
